<compile_context>
chip_gen: v7x
topology: tpu7x:2x2x1
jax: 0.10.0
libtpu: 0.0.40
codegen_flags: <defaults>
</compile_context>

<pallas_src>
import functools

import jax
import jax.numpy as jnp
from jax.experimental import pallas as pl
from jax.experimental.pallas import tpu as pltpu

OUT_PAD = 128        # lane-dense classifier width; sliced back to n_classes in the wrapper
CONV1_K_PAD = 32     # conv1 im2col K (=27) zero-padded to 32


def _maxpool2x2(act_sc, B, H, W, C):
    """2x2 / stride-2 max pool of act_sc (B,H,W,C) ref -> (B,H/2,W/2,C) value."""
    ev = act_sc[:, :, pl.ds(0, W // 2, 2), :]   # w = 0, 2, 4, ...
    od = act_sc[:, :, pl.ds(1, W // 2, 2), :]   # w = 1, 3, 5, ...
    mw = jnp.maximum(ev, od)                    # (B, H, W/2, C)
    # split H (a leading dim) and reduce over the pair -> (B, H/2, W/2, C)
    return jnp.max(mw.reshape(B, H // 2, 2, W // 2, C), axis=2)


def _tfcnn_kernel(Bt,
                  x1col_ref, w1_ref, b1_ref, w2_ref, b2_ref, w3_ref, b3_ref, wc_ref,
                  code_ref, logits_ref,
                  act1_sc, xpad2_sc, col2_sc, act2_sc, xpad3_sc, col3_sc, act3_sc):
    f32 = jnp.float32

    # ---- block 1: conv(3->32) + ReLU; input already im2col'd in the wrapper ----------
    a1 = jnp.dot(x1col_ref[...], w1_ref[...], preferred_element_type=f32)   # (Bt*1024, 32)
    a1 = jnp.maximum(a1 + b1_ref[...], 0.0)
    act1_sc[...] = a1.reshape(Bt, 32, 32, 32)

    # pool -> interior of zero-padded conv2 input
    xpad2_sc[...] = jnp.zeros(xpad2_sc.shape, xpad2_sc.dtype)
    xpad2_sc[:, 1:17, 1:17, :] = _maxpool2x2(act1_sc, Bt, 32, 32, 32)       # (Bt,16,16,32)

    # ---- block 2: im2col (9 shifted copies) + one (Bt*256, 288)@(288, 64) matmul -----
    for k in range(9):
        dy, dx = divmod(k, 3)
        col2_sc[:, :, :, k * 32:(k + 1) * 32] = xpad2_sc[:, dy:dy + 16, dx:dx + 16, :]
    a2 = jnp.dot(col2_sc[...].reshape(Bt * 256, 9 * 32), w2_ref[...],
                 preferred_element_type=f32)                                # (Bt*256, 64)
    a2 = jnp.maximum(a2 + b2_ref[...], 0.0)
    act2_sc[...] = a2.reshape(Bt, 16, 16, 64)

    xpad3_sc[...] = jnp.zeros(xpad3_sc.shape, xpad3_sc.dtype)
    xpad3_sc[:, 1:9, 1:9, :] = _maxpool2x2(act2_sc, Bt, 16, 16, 64)         # (Bt,8,8,64)

    # ---- block 3: im2col + one (Bt*64, 576)@(576, 64) matmul -------------------------
    for k in range(9):
        dy, dx = divmod(k, 3)
        col3_sc[:, :, :, k * 64:(k + 1) * 64] = xpad3_sc[:, dy:dy + 8, dx:dx + 8, :]
    a3 = jnp.dot(col3_sc[...].reshape(Bt * 64, 9 * 64), w3_ref[...],
                 preferred_element_type=f32)                                # (Bt*64, 64)
    a3 = jnp.maximum(a3 + b3_ref[...], 0.0)
    act3_sc[...] = a3.reshape(Bt, 8, 8, 64)

    p3 = _maxpool2x2(act3_sc, Bt, 8, 8, 64)                                 # (Bt,4,4,64)

    # ---- lane-dense code output, (h, w, c)-major ------------------------------------
    for h in range(4):
        for w in range(4):
            j = (h * 4 + w) * 64
            code_ref[:, j:j + 64] = p3[:, h, w, :]

    # ---- classifier (bias=False): single (Bt, 1024) @ (1024, OUT_PAD) matmul ---------
    logits_ref[...] = jnp.dot(code_ref[...], wc_ref[...], preferred_element_type=f32)


def tfcnn_forward(x_nchw, params, batch_tile=None):
    """x_nchw: (B, 3, 32, 32) float32. Returns (code (B,1024), logits (B,n_classes))."""
    B = x_nchw.shape[0]
    n_classes = params["wc"].shape[0]
    if batch_tile is None:
        batch_tile = 8 if (B % 8 == 0) else B
    assert B % batch_tile == 0
    Bt = batch_tile

    # ---------------- layout glue in the wrapper (XLA) ----------------
    # conv1 im2col: (B*1024, 27) patch matrix, K padded to 32; column = (dy*3+dx)*3 + c.
    x = jnp.transpose(x_nchw, (0, 2, 3, 1)).astype(jnp.float32)         # (B,32,32,3)
    xp = jnp.pad(x, ((0, 0), (1, 1), (1, 1), (0, 0)))                   # (B,34,34,3)
    cols = [xp[:, dy:dy + 32, dx:dx + 32, :] for dy in range(3) for dx in range(3)]
    x1col = jnp.concatenate(cols, axis=-1).reshape(B * 1024, 27)
    x1col = jnp.pad(x1col, ((0, 0), (0, CONV1_K_PAD - 27)))             # (B*1024, 32)

    def conv_w(w, cin, k_pad=None):
        cout = w.shape[0]
        wr = jnp.transpose(w, (2, 3, 1, 0)).reshape(9 * cin, cout).astype(jnp.float32)
        if k_pad is not None and k_pad > 9 * cin:
            wr = jnp.pad(wr, ((0, k_pad - 9 * cin), (0, 0)))
        return wr                                                        # row = (dy,dx,cin)

    w1 = conv_w(params["w1"], 3, CONV1_K_PAD)                            # (32, 32)
    w2 = conv_w(params["w2"], 32)                                        # (288, 64)
    w3 = conv_w(params["w3"], 64)                                        # (576, 64)
    b1 = params["b1"].reshape(1, -1).astype(jnp.float32)
    b2 = params["b2"].reshape(1, -1).astype(jnp.float32)
    b3 = params["b3"].reshape(1, -1).astype(jnp.float32)

    # classifier weight: torch (n_classes, 64*4*4), column = c*16 + h*4 + w (NCHW flatten)
    # -> (1024, OUT_PAD) with row = h*256 + w*64 + c to match the kernel's code layout.
    wc = params["wc"].reshape(n_classes, 64, 4, 4)
    wc = jnp.transpose(wc, (2, 3, 1, 0)).reshape(1024, n_classes).astype(jnp.float32)
    wc = jnp.pad(wc, ((0, 0), (0, OUT_PAD - n_classes)))                 # (1024, 128)

    kernel = functools.partial(_tfcnn_kernel, Bt)

    code_hwc, logits_pad = pl.pallas_call(
        kernel,
        out_shape=(jax.ShapeDtypeStruct((B, 1024), jnp.float32),
                   jax.ShapeDtypeStruct((B, OUT_PAD), jnp.float32)),
        grid_spec=pltpu.PrefetchScalarGridSpec(
            num_scalar_prefetch=0,
            grid=(B // Bt,),
            in_specs=[
                pl.BlockSpec((Bt * 1024, CONV1_K_PAD), lambda i: (i, 0)),  # conv1 patches
                pl.BlockSpec((CONV1_K_PAD, 32), lambda i: (0, 0)),         # w1
                pl.BlockSpec((1, 32), lambda i: (0, 0)),                   # b1
                pl.BlockSpec((9 * 32, 64), lambda i: (0, 0)),              # w2
                pl.BlockSpec((1, 64), lambda i: (0, 0)),                   # b2
                pl.BlockSpec((9 * 64, 64), lambda i: (0, 0)),              # w3
                pl.BlockSpec((1, 64), lambda i: (0, 0)),                   # b3
                pl.BlockSpec((1024, OUT_PAD), lambda i: (0, 0)),           # wc
            ],
            out_specs=[
                pl.BlockSpec((Bt, 1024), lambda i: (i, 0)),                # code (h,w,c)-major
                pl.BlockSpec((Bt, OUT_PAD), lambda i: (i, 0)),             # logits (padded)
            ],
            scratch_shapes=[
                pltpu.VMEM((Bt, 32, 32, 32), jnp.float32),    # conv1 output
                pltpu.VMEM((Bt, 18, 18, 32), jnp.float32),    # padded pool1
                pltpu.VMEM((Bt, 16, 16, 9 * 32), jnp.float32),  # im2col for conv2
                pltpu.VMEM((Bt, 16, 16, 64), jnp.float32),    # conv2 output
                pltpu.VMEM((Bt, 10, 10, 64), jnp.float32),    # padded pool2
                pltpu.VMEM((Bt, 8, 8, 9 * 64), jnp.float32),  # im2col for conv3
                pltpu.VMEM((Bt, 8, 8, 64), jnp.float32),      # conv3 output
            ],
        ),
        compiler_params=pltpu.CompilerParams(
            dimension_semantics=("parallel",),
            vmem_limit_bytes=48 * 1024 * 1024,   # safe on v7x (64 MiB), above v6e default
        ),
    )(x1col, w1, b1, w2, b2, w3, b3, wc)

    # Present `code` in PyTorch flatten order (NCHW, c-major).
    code = jnp.transpose(code_hwc.reshape(B, 4, 4, 64), (0, 3, 1, 2)).reshape(B, 1024)
    logits = logits_pad[:, :n_classes]
    return code, logits


def reference_forward(x, params):
    dn = ("NCHW", "OIHW", "NCHW")

    def block(h, w, b):
        y = jax.lax.conv_general_dilated(h, w, (1, 1), ((1, 1), (1, 1)),
                                         dimension_numbers=dn,
                                         precision=jax.lax.Precision.HIGHEST)
        y = jnp.maximum(y + b[None, :, None, None], 0.0)
        return jax.lax.reduce_window(y, -jnp.inf, jax.lax.max,
                                     (1, 1, 2, 2), (1, 1, 2, 2), "VALID")

    h = block(x, params["w1"], params["b1"])
    h = block(h, params["w2"], params["b2"])
    h = block(h, params["w3"], params["b3"])
    code = h.reshape(h.shape[0], -1)
    logits = jnp.dot(code, params["wc"].T, precision=jax.lax.Precision.HIGHEST)
    return code, logits


def init_params(key, n_classes):
    ks = jax.random.split(key, 7)

    def conv_init(k, cout, cin):
        scale = 1.0 / jnp.sqrt(cin * 9.0)
        return scale * jax.random.normal(k, (cout, cin, 3, 3), jnp.float32)

    return {
        "w1": conv_init(ks[0], 32, 3),
        "b1": 0.1 * jax.random.normal(ks[1], (32,), jnp.float32),
        "w2": conv_init(ks[2], 64, 32),
        "b2": 0.1 * jax.random.normal(ks[3], (64,), jnp.float32),
        "w3": conv_init(ks[4], 64, 64),
        "b3": 0.1 * jax.random.normal(ks[5], (64,), jnp.float32),
        "wc": (1.0 / 32.0) * jax.random.normal(ks[6], (n_classes, 64 * 4 * 4), jnp.float32),
    }


if __name__ == "__main__":
    key = jax.random.PRNGKey(0)
    n_classes = 10
    B = 2
    pkey, xkey = jax.random.split(key)
    params = init_params(pkey, n_classes)
    x = jax.random.normal(xkey, (B, 3, 32, 32), jnp.float32)

    fwd = jax.jit(tfcnn_forward)
    code, logits = jax.block_until_ready(fwd(x, params))
    code_ref, logits_ref = jax.block_until_ready(reference_forward(x, params))

    assert code.shape == (B, 64 * 4 * 4) and logits.shape == (B, n_classes)
    assert jnp.allclose(code, code_ref, rtol=5e-3, atol=5e-3), \
        f"code max abs err {float(jnp.max(jnp.abs(code - code_ref)))}"
    assert jnp.allclose(logits, logits_ref, rtol=5e-3, atol=5e-3), \
        f"logits max abs err {float(jnp.max(jnp.abs(logits - logits_ref)))}"
    print("KERNEL_OK")
</pallas_src>

<mosaic_0001>
module attributes {stable_mosaic.version = 11 : i64} {
  func.func @_tfcnn_kernel(%arg0: i32, %arg1: memref<2048x32xf32, #tpu.memory_space<vmem>>, %arg2: memref<32x32xf32, #tpu.memory_space<vmem>>, %arg3: memref<1x32xf32, #tpu.memory_space<vmem>>, %arg4: memref<288x64xf32, #tpu.memory_space<vmem>>, %arg5: memref<1x64xf32, #tpu.memory_space<vmem>>, %arg6: memref<576x64xf32, #tpu.memory_space<vmem>>, %arg7: memref<1x64xf32, #tpu.memory_space<vmem>>, %arg8: memref<1024x128xf32, #tpu.memory_space<vmem>>, %arg9: memref<2x1024xf32, #tpu.memory_space<vmem>>, %arg10: memref<2x128xf32, #tpu.memory_space<vmem>>, %arg11: memref<2x32x32x32xf32, #tpu.memory_space<vmem>>, %arg12: memref<2x18x18x32xf32, #tpu.memory_space<vmem>>, %arg13: memref<2x16x16x288xf32, #tpu.memory_space<vmem>>, %arg14: memref<2x16x16x64xf32, #tpu.memory_space<vmem>>, %arg15: memref<2x10x10x64xf32, #tpu.memory_space<vmem>>, %arg16: memref<2x8x8x576xf32, #tpu.memory_space<vmem>>, %arg17: memref<2x8x8x64xf32, #tpu.memory_space<vmem>>) attributes {dimension_semantics = [#tpu.dimension_semantics<parallel>], iteration_bounds = array<i64: 1>, scalar_prefetch = 0 : i64, scratch_operands = 7 : i64, tpu.core_type = #tpu.core_type<tc>, window_params = [{transform_indices = @transform_0, window_bounds = array<i64: 2048, 32>}, {pipeline_mode = #tpu.pipeline_mode<synchronous>, transform_indices = @transform_1, window_bounds = array<i64: 32, 32>}, {pipeline_mode = #tpu.pipeline_mode<synchronous>, transform_indices = @transform_2, window_bounds = array<i64: 1, 32>}, {pipeline_mode = #tpu.pipeline_mode<synchronous>, transform_indices = @transform_3, window_bounds = array<i64: 288, 64>}, {pipeline_mode = #tpu.pipeline_mode<synchronous>, transform_indices = @transform_4, window_bounds = array<i64: 1, 64>}, {pipeline_mode = #tpu.pipeline_mode<synchronous>, transform_indices = @transform_5, window_bounds = array<i64: 576, 64>}, {pipeline_mode = #tpu.pipeline_mode<synchronous>, transform_indices = @transform_6, window_bounds = array<i64: 1, 64>}, {pipeline_mode = #tpu.pipeline_mode<synchronous>, transform_indices = @transform_7, window_bounds = array<i64: 1024, 128>}, {transform_indices = @transform_8, window_bounds = array<i64: 2, 1024>}, {transform_indices = @transform_9, window_bounds = array<i64: 2, 128>}]} {
    %c0 = arith.constant 0 : index
    %c0_0 = arith.constant 0 : index
    %0 = vector.load %arg1[%c0, %c0_0] : memref<2048x32xf32, #tpu.memory_space<vmem>>, vector<2048x32xf32>
    %c0_1 = arith.constant 0 : index
    %c0_2 = arith.constant 0 : index
    %1 = vector.load %arg2[%c0_1, %c0_2] : memref<32x32xf32, #tpu.memory_space<vmem>>, vector<32x32xf32>
    %cst = arith.constant dense<0.000000e+00> : vector<2048x32xf32>
    %2 = tpu.matmul %0, %1, %cst {dimension_numbers = #tpu.dot_dimension_numbers<[1], [0], [0], [1], [0, 0, 1, 1], [], []>} : vector<2048x32xf32>, vector<32x32xf32>, vector<2048x32xf32> -> vector<2048x32xf32>
    %c0_3 = arith.constant 0 : index
    %c0_4 = arith.constant 0 : index
    %3 = vector.load %arg3[%c0_3, %c0_4] : memref<1x32xf32, #tpu.memory_space<vmem>>, vector<1x32xf32>
    %4 = vector.broadcast %3 : vector<1x32xf32> to vector<2048x32xf32>
    %5 = arith.addf %2, %4 : vector<2048x32xf32>
    %cst_5 = arith.constant 0.000000e+00 : f32
    %6 = vector.broadcast %cst_5 : f32 to vector<2048x32xf32>
    %7 = arith.maximumf %5, %6 : vector<2048x32xf32>
    %8 = vector.shape_cast %7 : vector<2048x32xf32> to vector<2x32x32x32xf32>
    %c0_6 = arith.constant 0 : index
    %c0_7 = arith.constant 0 : index
    %c0_8 = arith.constant 0 : index
    %c0_9 = arith.constant 0 : index
    %9 = vector.load %arg11[%c0_6, %c0_7, %c0_8, %c0_9] : memref<2x32x32x32xf32, #tpu.memory_space<vmem>>, vector<2x32x32x32xf32>
    tpu.vector_store %arg11[%c0_6, %c0_7, %c0_8, %c0_9], %8 {strides = array<i32>} : memref<2x32x32x32xf32, #tpu.memory_space<vmem>>, vector<2x32x32x32xf32>,
    %cst_10 = arith.constant 0.000000e+00 : f32
    %10 = vector.broadcast %cst_10 : f32 to vector<2x18x18x32xf32>
    %c0_11 = arith.constant 0 : index
    %c0_12 = arith.constant 0 : index
    %c0_13 = arith.constant 0 : index
    %c0_14 = arith.constant 0 : index
    %11 = vector.load %arg12[%c0_11, %c0_12, %c0_13, %c0_14] : memref<2x18x18x32xf32, #tpu.memory_space<vmem>>, vector<2x18x18x32xf32>
    tpu.vector_store %arg12[%c0_11, %c0_12, %c0_13, %c0_14], %10 {strides = array<i32>} : memref<2x18x18x32xf32, #tpu.memory_space<vmem>>, vector<2x18x18x32xf32>,
    %c0_15 = arith.constant 0 : index
    %c0_16 = arith.constant 0 : index
    %c0_17 = arith.constant 0 : index
    %c0_18 = arith.constant 0 : index
    %12 = tpu.strided_load %arg11[%c0_15, %c0_16, %c0_17, %c0_18] {strides = array<i32: 1, 1, 2, 1>} : memref<2x32x32x32xf32, #tpu.memory_space<vmem>>, vector<2x32x16x32xf32>
    %c0_19 = arith.constant 0 : index
    %c0_20 = arith.constant 0 : index
    %c1 = arith.constant 1 : index
    %c0_21 = arith.constant 0 : index
    %13 = tpu.strided_load %arg11[%c0_19, %c0_20, %c1, %c0_21] {strides = array<i32: 1, 1, 2, 1>} : memref<2x32x32x32xf32, #tpu.memory_space<vmem>>, vector<2x32x16x32xf32>
    %14 = arith.maximumf %12, %13 : vector<2x32x16x32xf32>
    %15 = vector.shape_cast %14 : vector<2x32x16x32xf32> to vector<2x16x2x16x32xf32>
    %cst_22 = arith.constant dense<0xFF800000> : vector<2x16x16x32xf32>
    %16 = vector.multi_reduction <maximumf>, %15, %cst_22 [2] : vector<2x16x2x16x32xf32> to vector<2x16x16x32xf32>
    %c0_23 = arith.constant 0 : index
    %c1_24 = arith.constant 1 : index
    %c1_25 = arith.constant 1 : index
    %c0_26 = arith.constant 0 : index
    %17 = vector.load %arg12[%c0_23, %c1_24, %c1_25, %c0_26] : memref<2x18x18x32xf32, #tpu.memory_space<vmem>>, vector<2x16x16x32xf32>
    tpu.vector_store %arg12[%c0_23, %c1_24, %c1_25, %c0_26], %16 {strides = array<i32>} : memref<2x18x18x32xf32, #tpu.memory_space<vmem>>, vector<2x16x16x32xf32>,
    %c0_27 = arith.constant 0 : index
    %c0_28 = arith.constant 0 : index
    %c0_29 = arith.constant 0 : index
    %c0_30 = arith.constant 0 : index
    %18 = vector.load %arg12[%c0_27, %c0_28, %c0_29, %c0_30] : memref<2x18x18x32xf32, #tpu.memory_space<vmem>>, vector<2x16x16x32xf32>
    %c0_31 = arith.constant 0 : index
    %c0_32 = arith.constant 0 : index
    %c0_33 = arith.constant 0 : index
    %c0_34 = arith.constant 0 : index
    %19 = vector.load %arg13[%c0_31, %c0_32, %c0_33, %c0_34] : memref<2x16x16x288xf32, #tpu.memory_space<vmem>>, vector<2x16x16x32xf32>
    tpu.vector_store %arg13[%c0_31, %c0_32, %c0_33, %c0_34], %18 {strides = array<i32>} : memref<2x16x16x288xf32, #tpu.memory_space<vmem>>, vector<2x16x16x32xf32>,
    %c0_35 = arith.constant 0 : index
    %c0_36 = arith.constant 0 : index
    %c1_37 = arith.constant 1 : index
    %c0_38 = arith.constant 0 : index
    %20 = vector.load %arg12[%c0_35, %c0_36, %c1_37, %c0_38] : memref<2x18x18x32xf32, #tpu.memory_space<vmem>>, vector<2x16x16x32xf32>
    %c0_39 = arith.constant 0 : index
    %c0_40 = arith.constant 0 : index
    %c0_41 = arith.constant 0 : index
    %c32 = arith.constant 32 : index
    %21 = vector.load %arg13[%c0_39, %c0_40, %c0_41, %c32] : memref<2x16x16x288xf32, #tpu.memory_space<vmem>>, vector<2x16x16x32xf32>
    tpu.vector_store %arg13[%c0_39, %c0_40, %c0_41, %c32], %20 {strides = array<i32>} : memref<2x16x16x288xf32, #tpu.memory_space<vmem>>, vector<2x16x16x32xf32>,
    %c0_42 = arith.constant 0 : index
    %c0_43 = arith.constant 0 : index
    %c2 = arith.constant 2 : index
    %c0_44 = arith.constant 0 : index
    %22 = vector.load %arg12[%c0_42, %c0_43, %c2, %c0_44] : memref<2x18x18x32xf32, #tpu.memory_space<vmem>>, vector<2x16x16x32xf32>
    %c0_45 = arith.constant 0 : index
    %c0_46 = arith.constant 0 : index
    %c0_47 = arith.constant 0 : index
    %c64 = arith.constant 64 : index
    %23 = vector.load %arg13[%c0_45, %c0_46, %c0_47, %c64] : memref<2x16x16x288xf32, #tpu.memory_space<vmem>>, vector<2x16x16x32xf32>
    tpu.vector_store %arg13[%c0_45, %c0_46, %c0_47, %c64], %22 {strides = array<i32>} : memref<2x16x16x288xf32, #tpu.memory_space<vmem>>, vector<2x16x16x32xf32>,
    %c0_48 = arith.constant 0 : index
    %c1_49 = arith.constant 1 : index
    %c0_50 = arith.constant 0 : index
    %c0_51 = arith.constant 0 : index
    %24 = vector.load %arg12[%c0_48, %c1_49, %c0_50, %c0_51] : memref<2x18x18x32xf32, #tpu.memory_space<vmem>>, vector<2x16x16x32xf32>
    %c0_52 = arith.constant 0 : index
    %c0_53 = arith.constant 0 : index
    %c0_54 = arith.constant 0 : index
    %c96 = arith.constant 96 : index
    %25 = vector.load %arg13[%c0_52, %c0_53, %c0_54, %c96] : memref<2x16x16x288xf32, #tpu.memory_space<vmem>>, vector<2x16x16x32xf32>
    tpu.vector_store %arg13[%c0_52, %c0_53, %c0_54, %c96], %24 {strides = array<i32>} : memref<2x16x16x288xf32, #tpu.memory_space<vmem>>, vector<2x16x16x32xf32>,
    %c0_55 = arith.constant 0 : index
    %c1_56 = arith.constant 1 : index
    %c1_57 = arith.constant 1 : index
    %c0_58 = arith.constant 0 : index
    %26 = vector.load %arg12[%c0_55, %c1_56, %c1_57, %c0_58] : memref<2x18x18x32xf32, #tpu.memory_space<vmem>>, vector<2x16x16x32xf32>
    %c0_59 = arith.constant 0 : index
    %c0_60 = arith.constant 0 : index
    %c0_61 = arith.constant 0 : index
    %c128 = arith.constant 128 : index
    %27 = vector.load %arg13[%c0_59, %c0_60, %c0_61, %c128] : memref<2x16x16x288xf32, #tpu.memory_space<vmem>>, vector<2x16x16x32xf32>
    tpu.vector_store %arg13[%c0_59, %c0_60, %c0_61, %c128], %26 {strides = array<i32>} : memref<2x16x16x288xf32, #tpu.memory_space<vmem>>, vector<2x16x16x32xf32>,
    %c0_62 = arith.constant 0 : index
    %c1_63 = arith.constant 1 : index
    %c2_64 = arith.constant 2 : index
    %c0_65 = arith.constant 0 : index
    %28 = vector.load %arg12[%c0_62, %c1_63, %c2_64, %c0_65] : memref<2x18x18x32xf32, #tpu.memory_space<vmem>>, vector<2x16x16x32xf32>
    %c0_66 = arith.constant 0 : index
    %c0_67 = arith.constant 0 : index
    %c0_68 = arith.constant 0 : index
    %c160 = arith.constant 160 : index
    %29 = vector.load %arg13[%c0_66, %c0_67, %c0_68, %c160] : memref<2x16x16x288xf32, #tpu.memory_space<vmem>>, vector<2x16x16x32xf32>
    tpu.vector_store %arg13[%c0_66, %c0_67, %c0_68, %c160], %28 {strides = array<i32>} : memref<2x16x16x288xf32, #tpu.memory_space<vmem>>, vector<2x16x16x32xf32>,
    %c0_69 = arith.constant 0 : index
    %c2_70 = arith.constant 2 : index
    %c0_71 = arith.constant 0 : index
    %c0_72 = arith.constant 0 : index
    %30 = vector.load %arg12[%c0_69, %c2_70, %c0_71, %c0_72] : memref<2x18x18x32xf32, #tpu.memory_space<vmem>>, vector<2x16x16x32xf32>
    %c0_73 = arith.constant 0 : index
    %c0_74 = arith.constant 0 : index
    %c0_75 = arith.constant 0 : index
    %c192 = arith.constant 192 : index
    %31 = vector.load %arg13[%c0_73, %c0_74, %c0_75, %c192] : memref<2x16x16x288xf32, #tpu.memory_space<vmem>>, vector<2x16x16x32xf32>
    tpu.vector_store %arg13[%c0_73, %c0_74, %c0_75, %c192], %30 {strides = array<i32>} : memref<2x16x16x288xf32, #tpu.memory_space<vmem>>, vector<2x16x16x32xf32>,
    %c0_76 = arith.constant 0 : index
    %c2_77 = arith.constant 2 : index
    %c1_78 = arith.constant 1 : index
    %c0_79 = arith.constant 0 : index
    %32 = vector.load %arg12[%c0_76, %c2_77, %c1_78, %c0_79] : memref<2x18x18x32xf32, #tpu.memory_space<vmem>>, vector<2x16x16x32xf32>
    %c0_80 = arith.constant 0 : index
    %c0_81 = arith.constant 0 : index
    %c0_82 = arith.constant 0 : index
    %c224 = arith.constant 224 : index
    %33 = vector.load %arg13[%c0_80, %c0_81, %c0_82, %c224] : memref<2x16x16x288xf32, #tpu.memory_space<vmem>>, vector<2x16x16x32xf32>
    tpu.vector_store %arg13[%c0_80, %c0_81, %c0_82, %c224], %32 {strides = array<i32>} : memref<2x16x16x288xf32, #tpu.memory_space<vmem>>, vector<2x16x16x32xf32>,
    %c0_83 = arith.constant 0 : index
    %c2_84 = arith.constant 2 : index
    %c2_85 = arith.constant 2 : index
    %c0_86 = arith.constant 0 : index
    %34 = vector.load %arg12[%c0_83, %c2_84, %c2_85, %c0_86] : memref<2x18x18x32xf32, #tpu.memory_space<vmem>>, vector<2x16x16x32xf32>
    %c0_87 = arith.constant 0 : index
    %c0_88 = arith.constant 0 : index
    %c0_89 = arith.constant 0 : index
    %c256 = arith.constant 256 : index
    %35 = vector.load %arg13[%c0_87, %c0_88, %c0_89, %c256] : memref<2x16x16x288xf32, #tpu.memory_space<vmem>>, vector<2x16x16x32xf32>
    tpu.vector_store %arg13[%c0_87, %c0_88, %c0_89, %c256], %34 {strides = array<i32>} : memref<2x16x16x288xf32, #tpu.memory_space<vmem>>, vector<2x16x16x32xf32>,
    %c0_90 = arith.constant 0 : index
    %c0_91 = arith.constant 0 : index
    %c0_92 = arith.constant 0 : index
    %c0_93 = arith.constant 0 : index
    %36 = vector.load %arg13[%c0_90, %c0_91, %c0_92, %c0_93] : memref<2x16x16x288xf32, #tpu.memory_space<vmem>>, vector<2x16x16x288xf32>
    %37 = vector.shape_cast %36 : vector<2x16x16x288xf32> to vector<512x288xf32>
    %c0_94 = arith.constant 0 : index
    %c0_95 = arith.constant 0 : index
    %38 = vector.load %arg4[%c0_94, %c0_95] : memref<288x64xf32, #tpu.memory_space<vmem>>, vector<288x64xf32>
    %cst_96 = arith.constant dense<0.000000e+00> : vector<512x64xf32>
    %39 = tpu.matmul %37, %38, %cst_96 {dimension_numbers = #tpu.dot_dimension_numbers<[1], [0], [0], [1], [0, 0, 1, 1], [], []>} : vector<512x288xf32>, vector<288x64xf32>, vector<512x64xf32> -> vector<512x64xf32>
    %c0_97 = arith.constant 0 : index
    %c0_98 = arith.constant 0 : index
    %40 = vector.load %arg5[%c0_97, %c0_98] : memref<1x64xf32, #tpu.memory_space<vmem>>, vector<1x64xf32>
    %41 = vector.broadcast %40 : vector<1x64xf32> to vector<512x64xf32>
    %42 = arith.addf %39, %41 : vector<512x64xf32>
    %cst_99 = arith.constant 0.000000e+00 : f32
    %43 = vector.broadcast %cst_99 : f32 to vector<512x64xf32>
    %44 = arith.maximumf %42, %43 : vector<512x64xf32>
    %45 = vector.shape_cast %44 : vector<512x64xf32> to vector<2x16x16x64xf32>
    %c0_100 = arith.constant 0 : index
    %c0_101 = arith.constant 0 : index
    %c0_102 = arith.constant 0 : index
    %c0_103 = arith.constant 0 : index
    %46 = vector.load %arg14[%c0_100, %c0_101, %c0_102, %c0_103] : memref<2x16x16x64xf32, #tpu.memory_space<vmem>>, vector<2x16x16x64xf32>
    tpu.vector_store %arg14[%c0_100, %c0_101, %c0_102, %c0_103], %45 {strides = array<i32>} : memref<2x16x16x64xf32, #tpu.memory_space<vmem>>, vector<2x16x16x64xf32>,
    %cst_104 = arith.constant 0.000000e+00 : f32
    %47 = vector.broadcast %cst_104 : f32 to vector<2x10x10x64xf32>
    %c0_105 = arith.constant 0 : index
    %c0_106 = arith.constant 0 : index
    %c0_107 = arith.constant 0 : index
    %c0_108 = arith.constant 0 : index
    %48 = vector.load %arg15[%c0_105, %c0_106, %c0_107, %c0_108] : memref<2x10x10x64xf32, #tpu.memory_space<vmem>>, vector<2x10x10x64xf32>
    tpu.vector_store %arg15[%c0_105, %c0_106, %c0_107, %c0_108], %47 {strides = array<i32>} : memref<2x10x10x64xf32, #tpu.memory_space<vmem>>, vector<2x10x10x64xf32>,
    %c0_109 = arith.constant 0 : index
    %c0_110 = arith.constant 0 : index
    %c0_111 = arith.constant 0 : index
    %c0_112 = arith.constant 0 : index
    %49 = tpu.strided_load %arg14[%c0_109, %c0_110, %c0_111, %c0_112] {strides = array<i32: 1, 1, 2, 1>} : memref<2x16x16x64xf32, #tpu.memory_space<vmem>>, vector<2x16x8x64xf32>
    %c0_113 = arith.constant 0 : index
    %c0_114 = arith.constant 0 : index
    %c1_115 = arith.constant 1 : index
    %c0_116 = arith.constant 0 : index
    %50 = tpu.strided_load %arg14[%c0_113, %c0_114, %c1_115, %c0_116] {strides = array<i32: 1, 1, 2, 1>} : memref<2x16x16x64xf32, #tpu.memory_space<vmem>>, vector<2x16x8x64xf32>
    %51 = arith.maximumf %49, %50 : vector<2x16x8x64xf32>
    %52 = vector.shape_cast %51 : vector<2x16x8x64xf32> to vector<2x8x2x8x64xf32>
    %cst_117 = arith.constant dense<0xFF800000> : vector<2x8x8x64xf32>
    %53 = vector.multi_reduction <maximumf>, %52, %cst_117 [2] : vector<2x8x2x8x64xf32> to vector<2x8x8x64xf32>
    %c0_118 = arith.constant 0 : index
    %c1_119 = arith.constant 1 : index
    %c1_120 = arith.constant 1 : index
    %c0_121 = arith.constant 0 : index
    %54 = vector.load %arg15[%c0_118, %c1_119, %c1_120, %c0_121] : memref<2x10x10x64xf32, #tpu.memory_space<vmem>>, vector<2x8x8x64xf32>
    tpu.vector_store %arg15[%c0_118, %c1_119, %c1_120, %c0_121], %53 {strides = array<i32>} : memref<2x10x10x64xf32, #tpu.memory_space<vmem>>, vector<2x8x8x64xf32>,
    %c0_122 = arith.constant 0 : index
    %c0_123 = arith.constant 0 : index
    %c0_124 = arith.constant 0 : index
    %c0_125 = arith.constant 0 : index
    %55 = vector.load %arg15[%c0_122, %c0_123, %c0_124, %c0_125] : memref<2x10x10x64xf32, #tpu.memory_space<vmem>>, vector<2x8x8x64xf32>
    %c0_126 = arith.constant 0 : index
    %c0_127 = arith.constant 0 : index
    %c0_128 = arith.constant 0 : index
    %c0_129 = arith.constant 0 : index
    %56 = vector.load %arg16[%c0_126, %c0_127, %c0_128, %c0_129] : memref<2x8x8x576xf32, #tpu.memory_space<vmem>>, vector<2x8x8x64xf32>
    tpu.vector_store %arg16[%c0_126, %c0_127, %c0_128, %c0_129], %55 {strides = array<i32>} : memref<2x8x8x576xf32, #tpu.memory_space<vmem>>, vector<2x8x8x64xf32>,
    %c0_130 = arith.constant 0 : index
    %c0_131 = arith.constant 0 : index
    %c1_132 = arith.constant 1 : index
    %c0_133 = arith.constant 0 : index
    %57 = vector.load %arg15[%c0_130, %c0_131, %c1_132, %c0_133] : memref<2x10x10x64xf32, #tpu.memory_space<vmem>>, vector<2x8x8x64xf32>
    %c0_134 = arith.constant 0 : index
    %c0_135 = arith.constant 0 : index
    %c0_136 = arith.constant 0 : index
    %c64_137 = arith.constant 64 : index
    %58 = vector.load %arg16[%c0_134, %c0_135, %c0_136, %c64_137] : memref<2x8x8x576xf32, #tpu.memory_space<vmem>>, vector<2x8x8x64xf32>
    tpu.vector_store %arg16[%c0_134, %c0_135, %c0_136, %c64_137], %57 {strides = array<i32>} : memref<2x8x8x576xf32, #tpu.memory_space<vmem>>, vector<2x8x8x64xf32>,
    %c0_138 = arith.constant 0 : index
    %c0_139 = arith.constant 0 : index
    %c2_140 = arith.constant 2 : index
    %c0_141 = arith.constant 0 : index
    %59 = vector.load %arg15[%c0_138, %c0_139, %c2_140, %c0_141] : memref<2x10x10x64xf32, #tpu.memory_space<vmem>>, vector<2x8x8x64xf32>
    %c0_142 = arith.constant 0 : index
    %c0_143 = arith.constant 0 : index
    %c0_144 = arith.constant 0 : index
    %c128_145 = arith.constant 128 : index
    %60 = vector.load %arg16[%c0_142, %c0_143, %c0_144, %c128_145] : memref<2x8x8x576xf32, #tpu.memory_space<vmem>>, vector<2x8x8x64xf32>
    tpu.vector_store %arg16[%c0_142, %c0_143, %c0_144, %c128_145], %59 {strides = array<i32>} : memref<2x8x8x576xf32, #tpu.memory_space<vmem>>, vector<2x8x8x64xf32>,
    %c0_146 = arith.constant 0 : index
    %c1_147 = arith.constant 1 : index
    %c0_148 = arith.constant 0 : index
    %c0_149 = arith.constant 0 : index
    %61 = vector.load %arg15[%c0_146, %c1_147, %c0_148, %c0_149] : memref<2x10x10x64xf32, #tpu.memory_space<vmem>>, vector<2x8x8x64xf32>
    %c0_150 = arith.constant 0 : index
    %c0_151 = arith.constant 0 : index
    %c0_152 = arith.constant 0 : index
    %c192_153 = arith.constant 192 : index
    %62 = vector.load %arg16[%c0_150, %c0_151, %c0_152, %c192_153] : memref<2x8x8x576xf32, #tpu.memory_space<vmem>>, vector<2x8x8x64xf32>
    tpu.vector_store %arg16[%c0_150, %c0_151, %c0_152, %c192_153], %61 {strides = array<i32>} : memref<2x8x8x576xf32, #tpu.memory_space<vmem>>, vector<2x8x8x64xf32>,
    %c0_154 = arith.constant 0 : index
    %c1_155 = arith.constant 1 : index
    %c1_156 = arith.constant 1 : index
    %c0_157 = arith.constant 0 : index
    %63 = vector.load %arg15[%c0_154, %c1_155, %c1_156, %c0_157] : memref<2x10x10x64xf32, #tpu.memory_space<vmem>>, vector<2x8x8x64xf32>
    %c0_158 = arith.constant 0 : index
    %c0_159 = arith.constant 0 : index
    %c0_160 = arith.constant 0 : index
    %c256_161 = arith.constant 256 : index
    %64 = vector.load %arg16[%c0_158, %c0_159, %c0_160, %c256_161] : memref<2x8x8x576xf32, #tpu.memory_space<vmem>>, vector<2x8x8x64xf32>
    tpu.vector_store %arg16[%c0_158, %c0_159, %c0_160, %c256_161], %63 {strides = array<i32>} : memref<2x8x8x576xf32, #tpu.memory_space<vmem>>, vector<2x8x8x64xf32>,
    %c0_162 = arith.constant 0 : index
    %c1_163 = arith.constant 1 : index
    %c2_164 = arith.constant 2 : index
    %c0_165 = arith.constant 0 : index
    %65 = vector.load %arg15[%c0_162, %c1_163, %c2_164, %c0_165] : memref<2x10x10x64xf32, #tpu.memory_space<vmem>>, vector<2x8x8x64xf32>
    %c0_166 = arith.constant 0 : index
    %c0_167 = arith.constant 0 : index
    %c0_168 = arith.constant 0 : index
    %c320 = arith.constant 320 : index
    %66 = vector.load %arg16[%c0_166, %c0_167, %c0_168, %c320] : memref<2x8x8x576xf32, #tpu.memory_space<vmem>>, vector<2x8x8x64xf32>
    tpu.vector_store %arg16[%c0_166, %c0_167, %c0_168, %c320], %65 {strides = array<i32>} : memref<2x8x8x576xf32, #tpu.memory_space<vmem>>, vector<2x8x8x64xf32>,
    %c0_169 = arith.constant 0 : index
    %c2_170 = arith.constant 2 : index
    %c0_171 = arith.constant 0 : index
    %c0_172 = arith.constant 0 : index
    %67 = vector.load %arg15[%c0_169, %c2_170, %c0_171, %c0_172] : memref<2x10x10x64xf32, #tpu.memory_space<vmem>>, vector<2x8x8x64xf32>
    %c0_173 = arith.constant 0 : index
    %c0_174 = arith.constant 0 : index
    %c0_175 = arith.constant 0 : index
    %c384 = arith.constant 384 : index
    %68 = vector.load %arg16[%c0_173, %c0_174, %c0_175, %c384] : memref<2x8x8x576xf32, #tpu.memory_space<vmem>>, vector<2x8x8x64xf32>
    tpu.vector_store %arg16[%c0_173, %c0_174, %c0_175, %c384], %67 {strides = array<i32>} : memref<2x8x8x576xf32, #tpu.memory_space<vmem>>, vector<2x8x8x64xf32>,
    %c0_176 = arith.constant 0 : index
    %c2_177 = arith.constant 2 : index
    %c1_178 = arith.constant 1 : index
    %c0_179 = arith.constant 0 : index
    %69 = vector.load %arg15[%c0_176, %c2_177, %c1_178, %c0_179] : memref<2x10x10x64xf32, #tpu.memory_space<vmem>>, vector<2x8x8x64xf32>
    %c0_180 = arith.constant 0 : index
    %c0_181 = arith.constant 0 : index
    %c0_182 = arith.constant 0 : index
    %c448 = arith.constant 448 : index
    %70 = vector.load %arg16[%c0_180, %c0_181, %c0_182, %c448] : memref<2x8x8x576xf32, #tpu.memory_space<vmem>>, vector<2x8x8x64xf32>
    tpu.vector_store %arg16[%c0_180, %c0_181, %c0_182, %c448], %69 {strides = array<i32>} : memref<2x8x8x576xf32, #tpu.memory_space<vmem>>, vector<2x8x8x64xf32>,
    %c0_183 = arith.constant 0 : index
    %c2_184 = arith.constant 2 : index
    %c2_185 = arith.constant 2 : index
    %c0_186 = arith.constant 0 : index
    %71 = vector.load %arg15[%c0_183, %c2_184, %c2_185, %c0_186] : memref<2x10x10x64xf32, #tpu.memory_space<vmem>>, vector<2x8x8x64xf32>
    %c0_187 = arith.constant 0 : index
    %c0_188 = arith.constant 0 : index
    %c0_189 = arith.constant 0 : index
    %c512 = arith.constant 512 : index
    %72 = vector.load %arg16[%c0_187, %c0_188, %c0_189, %c512] : memref<2x8x8x576xf32, #tpu.memory_space<vmem>>, vector<2x8x8x64xf32>
    tpu.vector_store %arg16[%c0_187, %c0_188, %c0_189, %c512], %71 {strides = array<i32>} : memref<2x8x8x576xf32, #tpu.memory_space<vmem>>, vector<2x8x8x64xf32>,
    %c0_190 = arith.constant 0 : index
    %c0_191 = arith.constant 0 : index
    %c0_192 = arith.constant 0 : index
    %c0_193 = arith.constant 0 : index
    %73 = vector.load %arg16[%c0_190, %c0_191, %c0_192, %c0_193] : memref<2x8x8x576xf32, #tpu.memory_space<vmem>>, vector<2x8x8x576xf32>
    %74 = vector.shape_cast %73 : vector<2x8x8x576xf32> to vector<128x576xf32>
    %c0_194 = arith.constant 0 : index
    %c0_195 = arith.constant 0 : index
    %75 = vector.load %arg6[%c0_194, %c0_195] : memref<576x64xf32, #tpu.memory_space<vmem>>, vector<576x64xf32>
    %cst_196 = arith.constant dense<0.000000e+00> : vector<128x64xf32>
    %76 = tpu.matmul %74, %75, %cst_196 {dimension_numbers = #tpu.dot_dimension_numbers<[1], [0], [0], [1], [0, 0, 1, 1], [], []>} : vector<128x576xf32>, vector<576x64xf32>, vector<128x64xf32> -> vector<128x64xf32>
    %c0_197 = arith.constant 0 : index
    %c0_198 = arith.constant 0 : index
    %77 = vector.load %arg7[%c0_197, %c0_198] : memref<1x64xf32, #tpu.memory_space<vmem>>, vector<1x64xf32>
    %78 = vector.broadcast %77 : vector<1x64xf32> to vector<128x64xf32>
    %79 = arith.addf %76, %78 : vector<128x64xf32>
    %cst_199 = arith.constant 0.000000e+00 : f32
    %80 = vector.broadcast %cst_199 : f32 to vector<128x64xf32>
    %81 = arith.maximumf %79, %80 : vector<128x64xf32>
    %82 = vector.shape_cast %81 : vector<128x64xf32> to vector<2x8x8x64xf32>
    %c0_200 = arith.constant 0 : index
    %c0_201 = arith.constant 0 : index
    %c0_202 = arith.constant 0 : index
    %c0_203 = arith.constant 0 : index
    %83 = vector.load %arg17[%c0_200, %c0_201, %c0_202, %c0_203] : memref<2x8x8x64xf32, #tpu.memory_space<vmem>>, vector<2x8x8x64xf32>
    tpu.vector_store %arg17[%c0_200, %c0_201, %c0_202, %c0_203], %82 {strides = array<i32>} : memref<2x8x8x64xf32, #tpu.memory_space<vmem>>, vector<2x8x8x64xf32>,
    %c0_204 = arith.constant 0 : index
    %c0_205 = arith.constant 0 : index
    %c0_206 = arith.constant 0 : index
    %c0_207 = arith.constant 0 : index
    %84 = tpu.strided_load %arg17[%c0_204, %c0_205, %c0_206, %c0_207] {strides = array<i32: 1, 1, 2, 1>} : memref<2x8x8x64xf32, #tpu.memory_space<vmem>>, vector<2x8x4x64xf32>
    %c0_208 = arith.constant 0 : index
    %c0_209 = arith.constant 0 : index
    %c1_210 = arith.constant 1 : index
    %c0_211 = arith.constant 0 : index
    %85 = tpu.strided_load %arg17[%c0_208, %c0_209, %c1_210, %c0_211] {strides = array<i32: 1, 1, 2, 1>} : memref<2x8x8x64xf32, #tpu.memory_space<vmem>>, vector<2x8x4x64xf32>
    %86 = arith.maximumf %84, %85 : vector<2x8x4x64xf32>
    %87 = vector.shape_cast %86 : vector<2x8x4x64xf32> to vector<2x4x2x4x64xf32>
    %cst_212 = arith.constant dense<0xFF800000> : vector<2x4x4x64xf32>
    %88 = vector.multi_reduction <maximumf>, %87, %cst_212 [2] : vector<2x4x2x4x64xf32> to vector<2x4x4x64xf32>
    %89 = vector.extract_strided_slice %88 {offsets = [0, 0, 0, 0], sizes = [2, 1, 1, 64], strides = [1, 1, 1, 1]} : vector<2x4x4x64xf32> to vector<2x1x1x64xf32>
    %90 = vector.shape_cast %89 : vector<2x1x1x64xf32> to vector<2x64xf32>
    %c0_213 = arith.constant 0 : index
    %c0_214 = arith.constant 0 : index
    %91 = vector.load %arg9[%c0_213, %c0_214] : memref<2x1024xf32, #tpu.memory_space<vmem>>, vector<2x64xf32>
    tpu.vector_store %arg9[%c0_213, %c0_214], %90 {strides = array<i32>} : memref<2x1024xf32, #tpu.memory_space<vmem>>, vector<2x64xf32>,
    %92 = vector.extract_strided_slice %88 {offsets = [0, 0, 1, 0], sizes = [2, 1, 1, 64], strides = [1, 1, 1, 1]} : vector<2x4x4x64xf32> to vector<2x1x1x64xf32>
    %93 = vector.shape_cast %92 : vector<2x1x1x64xf32> to vector<2x64xf32>
    %c0_215 = arith.constant 0 : index
    %c64_216 = arith.constant 64 : index
    %94 = vector.load %arg9[%c0_215, %c64_216] : memref<2x1024xf32, #tpu.memory_space<vmem>>, vector<2x64xf32>
    tpu.vector_store %arg9[%c0_215, %c64_216], %93 {strides = array<i32>} : memref<2x1024xf32, #tpu.memory_space<vmem>>, vector<2x64xf32>,
    %95 = vector.extract_strided_slice %88 {offsets = [0, 0, 2, 0], sizes = [2, 1, 1, 64], strides = [1, 1, 1, 1]} : vector<2x4x4x64xf32> to vector<2x1x1x64xf32>
    %96 = vector.shape_cast %95 : vector<2x1x1x64xf32> to vector<2x64xf32>
    %c0_217 = arith.constant 0 : index
    %c128_218 = arith.constant 128 : index
    %97 = vector.load %arg9[%c0_217, %c128_218] : memref<2x1024xf32, #tpu.memory_space<vmem>>, vector<2x64xf32>
    tpu.vector_store %arg9[%c0_217, %c128_218], %96 {strides = array<i32>} : memref<2x1024xf32, #tpu.memory_space<vmem>>, vector<2x64xf32>,
    %98 = vector.extract_strided_slice %88 {offsets = [0, 0, 3, 0], sizes = [2, 1, 1, 64], strides = [1, 1, 1, 1]} : vector<2x4x4x64xf32> to vector<2x1x1x64xf32>
    %99 = vector.shape_cast %98 : vector<2x1x1x64xf32> to vector<2x64xf32>
    %c0_219 = arith.constant 0 : index
    %c192_220 = arith.constant 192 : index
    %100 = vector.load %arg9[%c0_219, %c192_220] : memref<2x1024xf32, #tpu.memory_space<vmem>>, vector<2x64xf32>
    tpu.vector_store %arg9[%c0_219, %c192_220], %99 {strides = array<i32>} : memref<2x1024xf32, #tpu.memory_space<vmem>>, vector<2x64xf32>,
    %101 = vector.extract_strided_slice %88 {offsets = [0, 1, 0, 0], sizes = [2, 1, 1, 64], strides = [1, 1, 1, 1]} : vector<2x4x4x64xf32> to vector<2x1x1x64xf32>
    %102 = vector.shape_cast %101 : vector<2x1x1x64xf32> to vector<2x64xf32>
    %c0_221 = arith.constant 0 : index
    %c256_222 = arith.constant 256 : index
    %103 = vector.load %arg9[%c0_221, %c256_222] : memref<2x1024xf32, #tpu.memory_space<vmem>>, vector<2x64xf32>
    tpu.vector_store %arg9[%c0_221, %c256_222], %102 {strides = array<i32>} : memref<2x1024xf32, #tpu.memory_space<vmem>>, vector<2x64xf32>,
    %104 = vector.extract_strided_slice %88 {offsets = [0, 1, 1, 0], sizes = [2, 1, 1, 64], strides = [1, 1, 1, 1]} : vector<2x4x4x64xf32> to vector<2x1x1x64xf32>
    %105 = vector.shape_cast %104 : vector<2x1x1x64xf32> to vector<2x64xf32>
    %c0_223 = arith.constant 0 : index
    %c320_224 = arith.constant 320 : index
    %106 = vector.load %arg9[%c0_223, %c320_224] : memref<2x1024xf32, #tpu.memory_space<vmem>>, vector<2x64xf32>
    tpu.vector_store %arg9[%c0_223, %c320_224], %105 {strides = array<i32>} : memref<2x1024xf32, #tpu.memory_space<vmem>>, vector<2x64xf32>,
    %107 = vector.extract_strided_slice %88 {offsets = [0, 1, 2, 0], sizes = [2, 1, 1, 64], strides = [1, 1, 1, 1]} : vector<2x4x4x64xf32> to vector<2x1x1x64xf32>
    %108 = vector.shape_cast %107 : vector<2x1x1x64xf32> to vector<2x64xf32>
    %c0_225 = arith.constant 0 : index
    %c384_226 = arith.constant 384 : index
    %109 = vector.load %arg9[%c0_225, %c384_226] : memref<2x1024xf32, #tpu.memory_space<vmem>>, vector<2x64xf32>
    tpu.vector_store %arg9[%c0_225, %c384_226], %108 {strides = array<i32>} : memref<2x1024xf32, #tpu.memory_space<vmem>>, vector<2x64xf32>,
    %110 = vector.extract_strided_slice %88 {offsets = [0, 1, 3, 0], sizes = [2, 1, 1, 64], strides = [1, 1, 1, 1]} : vector<2x4x4x64xf32> to vector<2x1x1x64xf32>
    %111 = vector.shape_cast %110 : vector<2x1x1x64xf32> to vector<2x64xf32>
    %c0_227 = arith.constant 0 : index
    %c448_228 = arith.constant 448 : index
    %112 = vector.load %arg9[%c0_227, %c448_228] : memref<2x1024xf32, #tpu.memory_space<vmem>>, vector<2x64xf32>
    tpu.vector_store %arg9[%c0_227, %c448_228], %111 {strides = array<i32>} : memref<2x1024xf32, #tpu.memory_space<vmem>>, vector<2x64xf32>,
    %113 = vector.extract_strided_slice %88 {offsets = [0, 2, 0, 0], sizes = [2, 1, 1, 64], strides = [1, 1, 1, 1]} : vector<2x4x4x64xf32> to vector<2x1x1x64xf32>
    %114 = vector.shape_cast %113 : vector<2x1x1x64xf32> to vector<2x64xf32>
    %c0_229 = arith.constant 0 : index
    %c512_230 = arith.constant 512 : index
    %115 = vector.load %arg9[%c0_229, %c512_230] : memref<2x1024xf32, #tpu.memory_space<vmem>>, vector<2x64xf32>
    tpu.vector_store %arg9[%c0_229, %c512_230], %114 {strides = array<i32>} : memref<2x1024xf32, #tpu.memory_space<vmem>>, vector<2x64xf32>,
    %116 = vector.extract_strided_slice %88 {offsets = [0, 2, 1, 0], sizes = [2, 1, 1, 64], strides = [1, 1, 1, 1]} : vector<2x4x4x64xf32> to vector<2x1x1x64xf32>
    %117 = vector.shape_cast %116 : vector<2x1x1x64xf32> to vector<2x64xf32>
    %c0_231 = arith.constant 0 : index
    %c576 = arith.constant 576 : index
    %118 = vector.load %arg9[%c0_231, %c576] : memref<2x1024xf32, #tpu.memory_space<vmem>>, vector<2x64xf32>
    tpu.vector_store %arg9[%c0_231, %c576], %117 {strides = array<i32>} : memref<2x1024xf32, #tpu.memory_space<vmem>>, vector<2x64xf32>,
    %119 = vector.extract_strided_slice %88 {offsets = [0, 2, 2, 0], sizes = [2, 1, 1, 64], strides = [1, 1, 1, 1]} : vector<2x4x4x64xf32> to vector<2x1x1x64xf32>
    %120 = vector.shape_cast %119 : vector<2x1x1x64xf32> to vector<2x64xf32>
    %c0_232 = arith.constant 0 : index
    %c640 = arith.constant 640 : index
    %121 = vector.load %arg9[%c0_232, %c640] : memref<2x1024xf32, #tpu.memory_space<vmem>>, vector<2x64xf32>
    tpu.vector_store %arg9[%c0_232, %c640], %120 {strides = array<i32>} : memref<2x1024xf32, #tpu.memory_space<vmem>>, vector<2x64xf32>,
    %122 = vector.extract_strided_slice %88 {offsets = [0, 2, 3, 0], sizes = [2, 1, 1, 64], strides = [1, 1, 1, 1]} : vector<2x4x4x64xf32> to vector<2x1x1x64xf32>
    %123 = vector.shape_cast %122 : vector<2x1x1x64xf32> to vector<2x64xf32>
    %c0_233 = arith.constant 0 : index
    %c704 = arith.constant 704 : index
    %124 = vector.load %arg9[%c0_233, %c704] : memref<2x1024xf32, #tpu.memory_space<vmem>>, vector<2x64xf32>
    tpu.vector_store %arg9[%c0_233, %c704], %123 {strides = array<i32>} : memref<2x1024xf32, #tpu.memory_space<vmem>>, vector<2x64xf32>,
    %125 = vector.extract_strided_slice %88 {offsets = [0, 3, 0, 0], sizes = [2, 1, 1, 64], strides = [1, 1, 1, 1]} : vector<2x4x4x64xf32> to vector<2x1x1x64xf32>
    %126 = vector.shape_cast %125 : vector<2x1x1x64xf32> to vector<2x64xf32>
    %c0_234 = arith.constant 0 : index
    %c768 = arith.constant 768 : index
    %127 = vector.load %arg9[%c0_234, %c768] : memref<2x1024xf32, #tpu.memory_space<vmem>>, vector<2x64xf32>
    tpu.vector_store %arg9[%c0_234, %c768], %126 {strides = array<i32>} : memref<2x1024xf32, #tpu.memory_space<vmem>>, vector<2x64xf32>,
    %128 = vector.extract_strided_slice %88 {offsets = [0, 3, 1, 0], sizes = [2, 1, 1, 64], strides = [1, 1, 1, 1]} : vector<2x4x4x64xf32> to vector<2x1x1x64xf32>
    %129 = vector.shape_cast %128 : vector<2x1x1x64xf32> to vector<2x64xf32>
    %c0_235 = arith.constant 0 : index
    %c832 = arith.constant 832 : index
    %130 = vector.load %arg9[%c0_235, %c832] : memref<2x1024xf32, #tpu.memory_space<vmem>>, vector<2x64xf32>
    tpu.vector_store %arg9[%c0_235, %c832], %129 {strides = array<i32>} : memref<2x1024xf32, #tpu.memory_space<vmem>>, vector<2x64xf32>,
    %131 = vector.extract_strided_slice %88 {offsets = [0, 3, 2, 0], sizes = [2, 1, 1, 64], strides = [1, 1, 1, 1]} : vector<2x4x4x64xf32> to vector<2x1x1x64xf32>
    %132 = vector.shape_cast %131 : vector<2x1x1x64xf32> to vector<2x64xf32>
    %c0_236 = arith.constant 0 : index
    %c896 = arith.constant 896 : index
    %133 = vector.load %arg9[%c0_236, %c896] : memref<2x1024xf32, #tpu.memory_space<vmem>>, vector<2x64xf32>
    tpu.vector_store %arg9[%c0_236, %c896], %132 {strides = array<i32>} : memref<2x1024xf32, #tpu.memory_space<vmem>>, vector<2x64xf32>,
    %134 = vector.extract_strided_slice %88 {offsets = [0, 3, 3, 0], sizes = [2, 1, 1, 64], strides = [1, 1, 1, 1]} : vector<2x4x4x64xf32> to vector<2x1x1x64xf32>
    %135 = vector.shape_cast %134 : vector<2x1x1x64xf32> to vector<2x64xf32>
    %c0_237 = arith.constant 0 : index
    %c960 = arith.constant 960 : index
    %136 = vector.load %arg9[%c0_237, %c960] : memref<2x1024xf32, #tpu.memory_space<vmem>>, vector<2x64xf32>
    tpu.vector_store %arg9[%c0_237, %c960], %135 {strides = array<i32>} : memref<2x1024xf32, #tpu.memory_space<vmem>>, vector<2x64xf32>,
    %c0_238 = arith.constant 0 : index
    %c0_239 = arith.constant 0 : index
    %137 = vector.load %arg9[%c0_238, %c0_239] : memref<2x1024xf32, #tpu.memory_space<vmem>>, vector<2x1024xf32>
    %c0_240 = arith.constant 0 : index
    %c0_241 = arith.constant 0 : index
    %138 = vector.load %arg8[%c0_240, %c0_241] : memref<1024x128xf32, #tpu.memory_space<vmem>>, vector<1024x128xf32>
    %cst_242 = arith.constant dense<0.000000e+00> : vector<2x128xf32>
    %139 = tpu.matmul %137, %138, %cst_242 {dimension_numbers = #tpu.dot_dimension_numbers<[1], [0], [0], [1], [0, 0, 1, 1], [], []>} : vector<2x1024xf32>, vector<1024x128xf32>, vector<2x128xf32> -> vector<2x128xf32>
    %c0_243 = arith.constant 0 : index
    %c0_244 = arith.constant 0 : index
    %140 = vector.load %arg10[%c0_243, %c0_244] : memref<2x128xf32, #tpu.memory_space<vmem>>, vector<2x128xf32>
    tpu.vector_store %arg10[%c0_243, %c0_244], %139 {strides = array<i32>} : memref<2x128xf32, #tpu.memory_space<vmem>>, vector<2x128xf32>,
    return
  }
  func.func @transform_0(%arg0: i32) -> (i32, i32) {
    %c0_i32 = arith.constant 0 : i32
    %c0_i32_0 = arith.constant 0 : i32
    return %arg0, %c0_i32 : i32, i32
  }
  func.func @transform_1(%arg0: i32) -> (i32, i32) {
    %c0_i32 = arith.constant 0 : i32
    %c0_i32_0 = arith.constant 0 : i32
    %c0_i32_1 = arith.constant 0 : i32
    return %c0_i32, %c0_i32_0 : i32, i32
  }
  func.func @transform_2(%arg0: i32) -> (i32, i32) {
    %c0_i32 = arith.constant 0 : i32
    %c0_i32_0 = arith.constant 0 : i32
    %c0_i32_1 = arith.constant 0 : i32
    return %c0_i32, %c0_i32_0 : i32, i32
  }
  func.func @transform_3(%arg0: i32) -> (i32, i32) {
    %c0_i32 = arith.constant 0 : i32
    %c0_i32_0 = arith.constant 0 : i32
    %c0_i32_1 = arith.constant 0 : i32
    return %c0_i32, %c0_i32_0 : i32, i32
  }
  func.func @transform_4(%arg0: i32) -> (i32, i32) {
    %c0_i32 = arith.constant 0 : i32
    %c0_i32_0 = arith.constant 0 : i32
    %c0_i32_1 = arith.constant 0 : i32
    return %c0_i32, %c0_i32_0 : i32, i32
  }
  func.func @transform_5(%arg0: i32) -> (i32, i32) {
    %c0_i32 = arith.constant 0 : i32
    %c0_i32_0 = arith.constant 0 : i32
    %c0_i32_1 = arith.constant 0 : i32
    return %c0_i32, %c0_i32_0 : i32, i32
  }
  func.func @transform_6(%arg0: i32) -> (i32, i32) {
    %c0_i32 = arith.constant 0 : i32
    %c0_i32_0 = arith.constant 0 : i32
    %c0_i32_1 = arith.constant 0 : i32
    return %c0_i32, %c0_i32_0 : i32, i32
  }
  func.func @transform_7(%arg0: i32) -> (i32, i32) {
    %c0_i32 = arith.constant 0 : i32
    %c0_i32_0 = arith.constant 0 : i32
    %c0_i32_1 = arith.constant 0 : i32
    return %c0_i32, %c0_i32_0 : i32, i32
  }
  func.func @transform_8(%arg0: i32) -> (i32, i32) {
    %c0_i32 = arith.constant 0 : i32
    %c0_i32_0 = arith.constant 0 : i32
    return %arg0, %c0_i32 : i32, i32
  }
  func.func @transform_9(%arg0: i32) -> (i32, i32) {
    %c0_i32 = arith.constant 0 : i32
    %c0_i32_0 = arith.constant 0 : i32
    return %arg0, %c0_i32 : i32, i32
  }
}

</mosaic_0001>

<llo_original>
// kernel: tfcnn_forward.1
$region0: #{tfcnn_forward.1}
  #allocation0 [shape = 'u32[]', space=smem, size = 0x4, offset = 0x4, fixed_abs, tag = 'smem constant byte address 0x4 - core index']
  #allocation1 [shape = 'u32[144,128]{1,0:T(1,128)}', space=vmem, size = 0x12000, scoped, tag = 'internal scratch']
  #allocation2 [shape = 'f32[2,32,32,32]{3,2,1,0:T(8,128)}', space=vmem, size = 0x100000, scoped, tag = 'scratch operand']
  #allocation3 [shape = 'f32[2,18,18,32]{3,2,1,0:T(8,128)}', space=vmem, size = 0x6c000, scoped, tag = 'scratch operand']
  #allocation4 [shape = 'f32[2,16,16,288]{3,2,1,0:T(8,128)}', space=vmem, size = 0xc0000, scoped, tag = 'scratch operand']
  #allocation5 [shape = 'f32[2,16,16,64]{3,2,1,0:T(8,128)}', space=vmem, size = 0x40000, scoped, tag = 'scratch operand']
  #allocation6 [shape = 'f32[2,10,10,64]{3,2,1,0:T(8,128)}', space=vmem, size = 0x28000, scoped, tag = 'scratch operand']
  #allocation7 [shape = 'f32[2,8,8,576]{3,2,1,0:T(8,128)}', space=vmem, size = 0x50000, scoped, tag = 'scratch operand']
  #allocation8 [shape = 'f32[2,8,8,64]{3,2,1,0:T(8,128)}', space=vmem, size = 0x10000, scoped, tag = 'scratch operand']
  %s0 = inlined_call_operand.vmem [shape: f32[2048,32], index: 0, kind: input, shape index: {}]
  %s1 = inlined_call_operand.vmem [shape: f32[32,32], index: 1, kind: input, shape index: {}]
  %s2 = inlined_call_operand.vmem [shape: f32[1,32], index: 2, kind: input, shape index: {}]
  %s3 = inlined_call_operand.vmem [shape: f32[288,64], index: 3, kind: input, shape index: {}]
  %s4 = inlined_call_operand.vmem [shape: f32[1,64], index: 4, kind: input, shape index: {}]
  %s5 = inlined_call_operand.vmem [shape: f32[576,64], index: 5, kind: input, shape index: {}]
  %s6 = inlined_call_operand.vmem [shape: f32[1,64], index: 6, kind: input, shape index: {}]
  %s7 = inlined_call_operand.vmem [shape: f32[1024,128], index: 7, kind: input, shape index: {}]
  %s8 = inlined_call_operand.vmem [shape: f32[2,1024], index: 8, kind: output, shape index: {0}]
  %s9 = inlined_call_operand.hbm [shape: f32[2,128], index: 9, kind: output, shape index: {1}]
  %10 = xla_tuple %s8, %s9
  %s11 = sld [smem:[#allocation0]]
  $region50: #{tfcnn_forward.1} parent=0
    _
  %s13 = ssub.s32 1, %s11
  %s14 = scalar_select 0, %s13, %s11
  $region1: #{tfcnn_forward.1} parent=0
    #allocation9 [shape = 'u8[1024]{0}', space=vmem, size = 0x400, scoped, tag = 'output window, operand 1, single buffered']
    #allocation10 [shape = 's32[1]{0}', space=sflag, size = 0x4, scoped, tag = 'scoped memory for tfcnn_forward.1']
    %15 = vsyncpa [#allocation10], 0
    // Predicated region
    $region2: #{tfcnn_forward.1} parent=1 // pred_check
      _
    $region3: #{tfcnn_forward.1} parent=1 // pred_check_branch
      %17 = sbr.rel (0) target = $region5
    $region4: #{tfcnn_forward.1} parent=1 // pred_region
      _
    $region5: #{tfcnn_forward.1} parent=1 // pred_fallthru
      _
    // Predicated region
    $region6: #{tfcnn_forward.1} parent=1 // pred_check
      _
    $region7: #{tfcnn_forward.1} parent=1 // pred_check_branch
      %19 = sbr.rel (0) target = $region9
    $region8: #{tfcnn_forward.1} parent=1 // pred_region
      _
    $region9: #{tfcnn_forward.1} parent=1 // pred_fallthru
      _
    // Predicated region
    $region10: #{tfcnn_forward.1} parent=1 // pred_check
      _
    $region11: #{tfcnn_forward.1} parent=1 // pred_check_branch
      %21 = sbr.rel (0) target = $region13
    $region12: #{tfcnn_forward.1} parent=1 // pred_region
      _
    $region13: #{tfcnn_forward.1} parent=1 // pred_fallthru
      _
    // Predicated region
    $region14: #{tfcnn_forward.1} parent=1 // pred_check
      _
    $region15: #{tfcnn_forward.1} parent=1 // pred_check_branch
      %23 = sbr.rel (0) target = $region17
    $region16: #{tfcnn_forward.1} parent=1 // pred_region
      _
    $region17: #{tfcnn_forward.1} parent=1 // pred_fallthru
      _
    // Predicated region
    $region18: #{tfcnn_forward.1} parent=1 // pred_check
      _
    $region19: #{tfcnn_forward.1} parent=1 // pred_check_branch
      %25 = sbr.rel (0) target = $region21
    $region20: #{tfcnn_forward.1} parent=1 // pred_region
      _
    $region21: #{tfcnn_forward.1} parent=1 // pred_fallthru
      _
    // Predicated region
    $region22: #{tfcnn_forward.1} parent=1 // pred_check
      _
    $region23: #{tfcnn_forward.1} parent=1 // pred_check_branch
      %27 = sbr.rel (0) target = $region25
    $region24: #{tfcnn_forward.1} parent=1 // pred_region
      _
    $region25: #{tfcnn_forward.1} parent=1 // pred_fallthru
      _
    // Predicated region
    $region26: #{tfcnn_forward.1} parent=1 // pred_check
      _
    $region27: #{tfcnn_forward.1} parent=1 // pred_check_branch
      %29 = sbr.rel (0) target = $region29
    $region28: #{tfcnn_forward.1} parent=1 // pred_region
      _
    $region29: #{tfcnn_forward.1} parent=1 // pred_fallthru
      _
    // Predicated region
    $region30: #{tfcnn_forward.1} parent=1 // pred_check
      _
    $region31: #{tfcnn_forward.1} parent=1 // pred_check_branch
      %31 = sbr.rel (0) target = $region33
    $region32: #{tfcnn_forward.1} parent=1 // pred_region
      _
    $region33: #{tfcnn_forward.1} parent=1 // pred_fallthru
      _
    %v32 = vld [vmem:[%s0] sm:$0xff]
    %v33 = vld [vmem:[%s0 + $0x8] sm:$0xff]
    %v34 = vld [vmem:[%s0 + $0x10] sm:$0xff]
    %v35 = vld [vmem:[%s0 + $0x18] sm:$0xff]
    %v36 = vld [vmem:[%s0 + $0x20] sm:$0xff]
    %v37 = vld [vmem:[%s0 + $0x28] sm:$0xff]
    %v38 = vld [vmem:[%s0 + $0x30] sm:$0xff]
    %v39 = vld [vmem:[%s0 + $0x38] sm:$0xff]
    %v40 = vld [vmem:[%s0 + $0x40] sm:$0xff]
    %v41 = vld [vmem:[%s0 + $0x48] sm:$0xff]
    %v42 = vld [vmem:[%s0 + $0x50] sm:$0xff]
    %v43 = vld [vmem:[%s0 + $0x58] sm:$0xff]
    %v44 = vld [vmem:[%s0 + $0x60] sm:$0xff]
    %v45 = vld [vmem:[%s0 + $0x68] sm:$0xff]
    %v46 = vld [vmem:[%s0 + $0x70] sm:$0xff]
    %v47 = vld [vmem:[%s0 + $0x78] sm:$0xff]
    %v48 = vld [vmem:[%s0 + $0x80] sm:$0xff]
    %v49 = vld [vmem:[%s0 + $0x88] sm:$0xff]
    %v50 = vld [vmem:[%s0 + $0x90] sm:$0xff]
    %v51 = vld [vmem:[%s0 + $0x98] sm:$0xff]
    %v52 = vld [vmem:[%s0 + $0xa0] sm:$0xff]
    %v53 = vld [vmem:[%s0 + $0xa8] sm:$0xff]
    %v54 = vld [vmem:[%s0 + $0xb0] sm:$0xff]
    %v55 = vld [vmem:[%s0 + $0xb8] sm:$0xff]
    %v56 = vld [vmem:[%s0 + $0xc0] sm:$0xff]
    %v57 = vld [vmem:[%s0 + $0xc8] sm:$0xff]
    %v58 = vld [vmem:[%s0 + $0xd0] sm:$0xff]
    %v59 = vld [vmem:[%s0 + $0xd8] sm:$0xff]
    %v60 = vld [vmem:[%s0 + $0xe0] sm:$0xff]
    %v61 = vld [vmem:[%s0 + $0xe8] sm:$0xff]
    %v62 = vld [vmem:[%s0 + $0xf0] sm:$0xff]
    %v63 = vld [vmem:[%s0 + $0xf8] sm:$0xff]
    %v64 = vld [vmem:[%s0 + $0x100] sm:$0xff]
    %v65 = vld [vmem:[%s0 + $0x108] sm:$0xff]
    %v66 = vld [vmem:[%s0 + $0x110] sm:$0xff]
    %v67 = vld [vmem:[%s0 + $0x118] sm:$0xff]
    %v68 = vld [vmem:[%s0 + $0x120] sm:$0xff]
    %v69 = vld [vmem:[%s0 + $0x128] sm:$0xff]
    %v70 = vld [vmem:[%s0 + $0x130] sm:$0xff]
    %v71 = vld [vmem:[%s0 + $0x138] sm:$0xff]
    %v72 = vld [vmem:[%s0 + $0x140] sm:$0xff]
    %v73 = vld [vmem:[%s0 + $0x148] sm:$0xff]
    %v74 = vld [vmem:[%s0 + $0x150] sm:$0xff]
    %v75 = vld [vmem:[%s0 + $0x158] sm:$0xff]
    %v76 = vld [vmem:[%s0 + $0x160] sm:$0xff]
    %v77 = vld [vmem:[%s0 + $0x168] sm:$0xff]
    %v78 = vld [vmem:[%s0 + $0x170] sm:$0xff]
    %v79 = vld [vmem:[%s0 + $0x178] sm:$0xff]
    %v80 = vld [vmem:[%s0 + $0x180] sm:$0xff]
    %v81 = vld [vmem:[%s0 + $0x188] sm:$0xff]
    %v82 = vld [vmem:[%s0 + $0x190] sm:$0xff]
    %v83 = vld [vmem:[%s0 + $0x198] sm:$0xff]
    %v84 = vld [vmem:[%s0 + $0x1a0] sm:$0xff]
    %v85 = vld [vmem:[%s0 + $0x1a8] sm:$0xff]
    %v86 = vld [vmem:[%s0 + $0x1b0] sm:$0xff]
    %v87 = vld [vmem:[%s0 + $0x1b8] sm:$0xff]
    %v88 = vld [vmem:[%s0 + $0x1c0] sm:$0xff]
    %v89 = vld [vmem:[%s0 + $0x1c8] sm:$0xff]
    %v90 = vld [vmem:[%s0 + $0x1d0] sm:$0xff]
    %v91 = vld [vmem:[%s0 + $0x1d8] sm:$0xff]
    %v92 = vld [vmem:[%s0 + $0x1e0] sm:$0xff]
    %v93 = vld [vmem:[%s0 + $0x1e8] sm:$0xff]
    %v94 = vld [vmem:[%s0 + $0x1f0] sm:$0xff]
    %v95 = vld [vmem:[%s0 + $0x1f8] sm:$0xff]
    %v96 = vld [vmem:[%s0 + $0x200] sm:$0xff]
    %v97 = vld [vmem:[%s0 + $0x208] sm:$0xff]
    %v98 = vld [vmem:[%s0 + $0x210] sm:$0xff]
    %v99 = vld [vmem:[%s0 + $0x218] sm:$0xff]
    %v100 = vld [vmem:[%s0 + $0x220] sm:$0xff]
    %v101 = vld [vmem:[%s0 + $0x228] sm:$0xff]
    %v102 = vld [vmem:[%s0 + $0x230] sm:$0xff]
    %v103 = vld [vmem:[%s0 + $0x238] sm:$0xff]
    %v104 = vld [vmem:[%s0 + $0x240] sm:$0xff]
    %v105 = vld [vmem:[%s0 + $0x248] sm:$0xff]
    %v106 = vld [vmem:[%s0 + $0x250] sm:$0xff]
    %v107 = vld [vmem:[%s0 + $0x258] sm:$0xff]
    %v108 = vld [vmem:[%s0 + $0x260] sm:$0xff]
    %v109 = vld [vmem:[%s0 + $0x268] sm:$0xff]
    %v110 = vld [vmem:[%s0 + $0x270] sm:$0xff]
    %v111 = vld [vmem:[%s0 + $0x278] sm:$0xff]
    %v112 = vld [vmem:[%s0 + $0x280] sm:$0xff]
    %v113 = vld [vmem:[%s0 + $0x288] sm:$0xff]
    %v114 = vld [vmem:[%s0 + $0x290] sm:$0xff]
    %v115 = vld [vmem:[%s0 + $0x298] sm:$0xff]
    %v116 = vld [vmem:[%s0 + $0x2a0] sm:$0xff]
    %v117 = vld [vmem:[%s0 + $0x2a8] sm:$0xff]
    %v118 = vld [vmem:[%s0 + $0x2b0] sm:$0xff]
    %v119 = vld [vmem:[%s0 + $0x2b8] sm:$0xff]
    %v120 = vld [vmem:[%s0 + $0x2c0] sm:$0xff]
    %v121 = vld [vmem:[%s0 + $0x2c8] sm:$0xff]
    %v122 = vld [vmem:[%s0 + $0x2d0] sm:$0xff]
    %v123 = vld [vmem:[%s0 + $0x2d8] sm:$0xff]
    %v124 = vld [vmem:[%s0 + $0x2e0] sm:$0xff]
    %v125 = vld [vmem:[%s0 + $0x2e8] sm:$0xff]
    %v126 = vld [vmem:[%s0 + $0x2f0] sm:$0xff]
    %v127 = vld [vmem:[%s0 + $0x2f8] sm:$0xff]
    %v128 = vld [vmem:[%s0 + $0x300] sm:$0xff]
    %v129 = vld [vmem:[%s0 + $0x308] sm:$0xff]
    %v130 = vld [vmem:[%s0 + $0x310] sm:$0xff]
    %v131 = vld [vmem:[%s0 + $0x318] sm:$0xff]
    %v132 = vld [vmem:[%s0 + $0x320] sm:$0xff]
    %v133 = vld [vmem:[%s0 + $0x328] sm:$0xff]
    %v134 = vld [vmem:[%s0 + $0x330] sm:$0xff]
    %v135 = vld [vmem:[%s0 + $0x338] sm:$0xff]
    %v136 = vld [vmem:[%s0 + $0x340] sm:$0xff]
    %v137 = vld [vmem:[%s0 + $0x348] sm:$0xff]
    %v138 = vld [vmem:[%s0 + $0x350] sm:$0xff]
    %v139 = vld [vmem:[%s0 + $0x358] sm:$0xff]
    %v140 = vld [vmem:[%s0 + $0x360] sm:$0xff]
    %v141 = vld [vmem:[%s0 + $0x368] sm:$0xff]
    %v142 = vld [vmem:[%s0 + $0x370] sm:$0xff]
    %v143 = vld [vmem:[%s0 + $0x378] sm:$0xff]
    %v144 = vld [vmem:[%s0 + $0x380] sm:$0xff]
    %v145 = vld [vmem:[%s0 + $0x388] sm:$0xff]
    %v146 = vld [vmem:[%s0 + $0x390] sm:$0xff]
    %v147 = vld [vmem:[%s0 + $0x398] sm:$0xff]
    %v148 = vld [vmem:[%s0 + $0x3a0] sm:$0xff]
    %v149 = vld [vmem:[%s0 + $0x3a8] sm:$0xff]
    %v150 = vld [vmem:[%s0 + $0x3b0] sm:$0xff]
    %v151 = vld [vmem:[%s0 + $0x3b8] sm:$0xff]
    %v152 = vld [vmem:[%s0 + $0x3c0] sm:$0xff]
    %v153 = vld [vmem:[%s0 + $0x3c8] sm:$0xff]
    %v154 = vld [vmem:[%s0 + $0x3d0] sm:$0xff]
    %v155 = vld [vmem:[%s0 + $0x3d8] sm:$0xff]
    %v156 = vld [vmem:[%s0 + $0x3e0] sm:$0xff]
    %v157 = vld [vmem:[%s0 + $0x3e8] sm:$0xff]
    %v158 = vld [vmem:[%s0 + $0x3f0] sm:$0xff]
    %v159 = vld [vmem:[%s0 + $0x3f8] sm:$0xff]
    %v160 = vld [vmem:[%s0 + $0x400] sm:$0xff]
    %v161 = vld [vmem:[%s0 + $0x408] sm:$0xff]
    %v162 = vld [vmem:[%s0 + $0x410] sm:$0xff]
    %v163 = vld [vmem:[%s0 + $0x418] sm:$0xff]
    %v164 = vld [vmem:[%s0 + $0x420] sm:$0xff]
    %v165 = vld [vmem:[%s0 + $0x428] sm:$0xff]
    %v166 = vld [vmem:[%s0 + $0x430] sm:$0xff]
    %v167 = vld [vmem:[%s0 + $0x438] sm:$0xff]
    %v168 = vld [vmem:[%s0 + $0x440] sm:$0xff]
    %v169 = vld [vmem:[%s0 + $0x448] sm:$0xff]
    %v170 = vld [vmem:[%s0 + $0x450] sm:$0xff]
    %v171 = vld [vmem:[%s0 + $0x458] sm:$0xff]
    %v172 = vld [vmem:[%s0 + $0x460] sm:$0xff]
    %v173 = vld [vmem:[%s0 + $0x468] sm:$0xff]
    %v174 = vld [vmem:[%s0 + $0x470] sm:$0xff]
    %v175 = vld [vmem:[%s0 + $0x478] sm:$0xff]
    %v176 = vld [vmem:[%s0 + $0x480] sm:$0xff]
    %v177 = vld [vmem:[%s0 + $0x488] sm:$0xff]
    %v178 = vld [vmem:[%s0 + $0x490] sm:$0xff]
    %v179 = vld [vmem:[%s0 + $0x498] sm:$0xff]
    %v180 = vld [vmem:[%s0 + $0x4a0] sm:$0xff]
    %v181 = vld [vmem:[%s0 + $0x4a8] sm:$0xff]
    %v182 = vld [vmem:[%s0 + $0x4b0] sm:$0xff]
    %v183 = vld [vmem:[%s0 + $0x4b8] sm:$0xff]
    %v184 = vld [vmem:[%s0 + $0x4c0] sm:$0xff]
    %v185 = vld [vmem:[%s0 + $0x4c8] sm:$0xff]
    %v186 = vld [vmem:[%s0 + $0x4d0] sm:$0xff]
    %v187 = vld [vmem:[%s0 + $0x4d8] sm:$0xff]
    %v188 = vld [vmem:[%s0 + $0x4e0] sm:$0xff]
    %v189 = vld [vmem:[%s0 + $0x4e8] sm:$0xff]
    %v190 = vld [vmem:[%s0 + $0x4f0] sm:$0xff]
    %v191 = vld [vmem:[%s0 + $0x4f8] sm:$0xff]
    %v192 = vld [vmem:[%s0 + $0x500] sm:$0xff]
    %v193 = vld [vmem:[%s0 + $0x508] sm:$0xff]
    %v194 = vld [vmem:[%s0 + $0x510] sm:$0xff]
    %v195 = vld [vmem:[%s0 + $0x518] sm:$0xff]
    %v196 = vld [vmem:[%s0 + $0x520] sm:$0xff]
    %v197 = vld [vmem:[%s0 + $0x528] sm:$0xff]
    %v198 = vld [vmem:[%s0 + $0x530] sm:$0xff]
    %v199 = vld [vmem:[%s0 + $0x538] sm:$0xff]
    %v200 = vld [vmem:[%s0 + $0x540] sm:$0xff]
    %v201 = vld [vmem:[%s0 + $0x548] sm:$0xff]
    %v202 = vld [vmem:[%s0 + $0x550] sm:$0xff]
    %v203 = vld [vmem:[%s0 + $0x558] sm:$0xff]
    %v204 = vld [vmem:[%s0 + $0x560] sm:$0xff]
    %v205 = vld [vmem:[%s0 + $0x568] sm:$0xff]
    %v206 = vld [vmem:[%s0 + $0x570] sm:$0xff]
    %v207 = vld [vmem:[%s0 + $0x578] sm:$0xff]
    %v208 = vld [vmem:[%s0 + $0x580] sm:$0xff]
    %v209 = vld [vmem:[%s0 + $0x588] sm:$0xff]
    %v210 = vld [vmem:[%s0 + $0x590] sm:$0xff]
    %v211 = vld [vmem:[%s0 + $0x598] sm:$0xff]
    %v212 = vld [vmem:[%s0 + $0x5a0] sm:$0xff]
    %v213 = vld [vmem:[%s0 + $0x5a8] sm:$0xff]
    %v214 = vld [vmem:[%s0 + $0x5b0] sm:$0xff]
    %v215 = vld [vmem:[%s0 + $0x5b8] sm:$0xff]
    %v216 = vld [vmem:[%s0 + $0x5c0] sm:$0xff]
    %v217 = vld [vmem:[%s0 + $0x5c8] sm:$0xff]
    %v218 = vld [vmem:[%s0 + $0x5d0] sm:$0xff]
    %v219 = vld [vmem:[%s0 + $0x5d8] sm:$0xff]
    %v220 = vld [vmem:[%s0 + $0x5e0] sm:$0xff]
    %v221 = vld [vmem:[%s0 + $0x5e8] sm:$0xff]
    %v222 = vld [vmem:[%s0 + $0x5f0] sm:$0xff]
    %v223 = vld [vmem:[%s0 + $0x5f8] sm:$0xff]
    %v224 = vld [vmem:[%s0 + $0x600] sm:$0xff]
    %v225 = vld [vmem:[%s0 + $0x608] sm:$0xff]
    %v226 = vld [vmem:[%s0 + $0x610] sm:$0xff]
    %v227 = vld [vmem:[%s0 + $0x618] sm:$0xff]
    %v228 = vld [vmem:[%s0 + $0x620] sm:$0xff]
    %v229 = vld [vmem:[%s0 + $0x628] sm:$0xff]
    %v230 = vld [vmem:[%s0 + $0x630] sm:$0xff]
    %v231 = vld [vmem:[%s0 + $0x638] sm:$0xff]
    %v232 = vld [vmem:[%s0 + $0x640] sm:$0xff]
    %v233 = vld [vmem:[%s0 + $0x648] sm:$0xff]
    %v234 = vld [vmem:[%s0 + $0x650] sm:$0xff]
    %v235 = vld [vmem:[%s0 + $0x658] sm:$0xff]
    %v236 = vld [vmem:[%s0 + $0x660] sm:$0xff]
    %v237 = vld [vmem:[%s0 + $0x668] sm:$0xff]
    %v238 = vld [vmem:[%s0 + $0x670] sm:$0xff]
    %v239 = vld [vmem:[%s0 + $0x678] sm:$0xff]
    %v240 = vld [vmem:[%s0 + $0x680] sm:$0xff]
    %v241 = vld [vmem:[%s0 + $0x688] sm:$0xff]
    %v242 = vld [vmem:[%s0 + $0x690] sm:$0xff]
    %v243 = vld [vmem:[%s0 + $0x698] sm:$0xff]
    %v244 = vld [vmem:[%s0 + $0x6a0] sm:$0xff]
    %v245 = vld [vmem:[%s0 + $0x6a8] sm:$0xff]
    %v246 = vld [vmem:[%s0 + $0x6b0] sm:$0xff]
    %v247 = vld [vmem:[%s0 + $0x6b8] sm:$0xff]
    %v248 = vld [vmem:[%s0 + $0x6c0] sm:$0xff]
    %v249 = vld [vmem:[%s0 + $0x6c8] sm:$0xff]
    %v250 = vld [vmem:[%s0 + $0x6d0] sm:$0xff]
    %v251 = vld [vmem:[%s0 + $0x6d8] sm:$0xff]
    %v252 = vld [vmem:[%s0 + $0x6e0] sm:$0xff]
    %v253 = vld [vmem:[%s0 + $0x6e8] sm:$0xff]
    %v254 = vld [vmem:[%s0 + $0x6f0] sm:$0xff]
    %v255 = vld [vmem:[%s0 + $0x6f8] sm:$0xff]
    %v256 = vld [vmem:[%s0 + $0x700] sm:$0xff]
    %v257 = vld [vmem:[%s0 + $0x708] sm:$0xff]
    %v258 = vld [vmem:[%s0 + $0x710] sm:$0xff]
    %v259 = vld [vmem:[%s0 + $0x718] sm:$0xff]
    %v260 = vld [vmem:[%s0 + $0x720] sm:$0xff]
    %v261 = vld [vmem:[%s0 + $0x728] sm:$0xff]
    %v262 = vld [vmem:[%s0 + $0x730] sm:$0xff]
    %v263 = vld [vmem:[%s0 + $0x738] sm:$0xff]
    %v264 = vld [vmem:[%s0 + $0x740] sm:$0xff]
    %v265 = vld [vmem:[%s0 + $0x748] sm:$0xff]
    %v266 = vld [vmem:[%s0 + $0x750] sm:$0xff]
    %v267 = vld [vmem:[%s0 + $0x758] sm:$0xff]
    %v268 = vld [vmem:[%s0 + $0x760] sm:$0xff]
    %v269 = vld [vmem:[%s0 + $0x768] sm:$0xff]
    %v270 = vld [vmem:[%s0 + $0x770] sm:$0xff]
    %v271 = vld [vmem:[%s0 + $0x778] sm:$0xff]
    %v272 = vld [vmem:[%s0 + $0x780] sm:$0xff]
    %v273 = vld [vmem:[%s0 + $0x788] sm:$0xff]
    %v274 = vld [vmem:[%s0 + $0x790] sm:$0xff]
    %v275 = vld [vmem:[%s0 + $0x798] sm:$0xff]
    %v276 = vld [vmem:[%s0 + $0x7a0] sm:$0xff]
    %v277 = vld [vmem:[%s0 + $0x7a8] sm:$0xff]
    %v278 = vld [vmem:[%s0 + $0x7b0] sm:$0xff]
    %v279 = vld [vmem:[%s0 + $0x7b8] sm:$0xff]
    %v280 = vld [vmem:[%s0 + $0x7c0] sm:$0xff]
    %v281 = vld [vmem:[%s0 + $0x7c8] sm:$0xff]
    %v282 = vld [vmem:[%s0 + $0x7d0] sm:$0xff]
    %v283 = vld [vmem:[%s0 + $0x7d8] sm:$0xff]
    %v284 = vld [vmem:[%s0 + $0x7e0] sm:$0xff]
    %v285 = vld [vmem:[%s0 + $0x7e8] sm:$0xff]
    %v286 = vld [vmem:[%s0 + $0x7f0] sm:$0xff]
    %v287 = vld [vmem:[%s0 + $0x7f8] sm:$0xff]
    %v288 = vld [vmem:[%s1] sm:$0xff]
    %v289 = vld [vmem:[%s1 + $0x8] sm:$0xff]
    %v290 = vld [vmem:[%s1 + $0x10] sm:$0xff]
    %v291 = vld [vmem:[%s1 + $0x18] sm:$0xff]
    %v292 = vld [vmem:[%s2] sm:$0x1]
    %v294 = vlaneseq
    %v295 = vshrl.u32 %v294, 7
    %v296 = vsub.s32 0, %v295
    %v297 = vrot.slane %v292, %v296
    %vm299 = vcmask 261120
    %v301 = vsel %vm299, %v32, 0
    %v304 = vsel %vm299, %v33, 0
    %v307 = vsel %vm299, %v34, 0
    %v310 = vsel %vm299, %v35, 0
    %v313 = vsel %vm299, %v36, 0
    %v316 = vsel %vm299, %v37, 0
    %v319 = vsel %vm299, %v38, 0
    %v322 = vsel %vm299, %v39, 0
    %v325 = vsel %vm299, %v40, 0
    %v328 = vsel %vm299, %v41, 0
    %v331 = vsel %vm299, %v42, 0
    %v334 = vsel %vm299, %v43, 0
    %v337 = vsel %vm299, %v44, 0
    %v340 = vsel %vm299, %v45, 0
    %v343 = vsel %vm299, %v46, 0
    %v346 = vsel %vm299, %v47, 0
    %v349 = vsel %vm299, %v48, 0
    %v352 = vsel %vm299, %v49, 0
    %v355 = vsel %vm299, %v50, 0
    %v358 = vsel %vm299, %v51, 0
    %v361 = vsel %vm299, %v52, 0
    %v364 = vsel %vm299, %v53, 0
    %v367 = vsel %vm299, %v54, 0
    %v370 = vsel %vm299, %v55, 0
    %v373 = vsel %vm299, %v56, 0
    %v376 = vsel %vm299, %v57, 0
    %v379 = vsel %vm299, %v58, 0
    %v382 = vsel %vm299, %v59, 0
    %v385 = vsel %vm299, %v60, 0
    %v388 = vsel %vm299, %v61, 0
    %v391 = vsel %vm299, %v62, 0
    %v394 = vsel %vm299, %v63, 0
    %v397 = vsel %vm299, %v64, 0
    %v400 = vsel %vm299, %v65, 0
    %v403 = vsel %vm299, %v66, 0
    %v406 = vsel %vm299, %v67, 0
    %v409 = vsel %vm299, %v68, 0
    %v412 = vsel %vm299, %v69, 0
    %v415 = vsel %vm299, %v70, 0
    %v418 = vsel %vm299, %v71, 0
    %v421 = vsel %vm299, %v72, 0
    %v424 = vsel %vm299, %v73, 0
    %v427 = vsel %vm299, %v74, 0
    %v430 = vsel %vm299, %v75, 0
    %v433 = vsel %vm299, %v76, 0
    %v436 = vsel %vm299, %v77, 0
    %v439 = vsel %vm299, %v78, 0
    %v442 = vsel %vm299, %v79, 0
    %v445 = vsel %vm299, %v80, 0
    %v448 = vsel %vm299, %v81, 0
    %v451 = vsel %vm299, %v82, 0
    %v454 = vsel %vm299, %v83, 0
    %v457 = vsel %vm299, %v84, 0
    %v460 = vsel %vm299, %v85, 0
    %v463 = vsel %vm299, %v86, 0
    %v466 = vsel %vm299, %v87, 0
    %v469 = vsel %vm299, %v88, 0
    %v472 = vsel %vm299, %v89, 0
    %v475 = vsel %vm299, %v90, 0
    %v478 = vsel %vm299, %v91, 0
    %v481 = vsel %vm299, %v92, 0
    %v484 = vsel %vm299, %v93, 0
    %v487 = vsel %vm299, %v94, 0
    %v490 = vsel %vm299, %v95, 0
    %v493 = vsel %vm299, %v96, 0
    %v496 = vsel %vm299, %v97, 0
    %v499 = vsel %vm299, %v98, 0
    %v502 = vsel %vm299, %v99, 0
    %v505 = vsel %vm299, %v100, 0
    %v508 = vsel %vm299, %v101, 0
    %v511 = vsel %vm299, %v102, 0
    %v514 = vsel %vm299, %v103, 0
    %v517 = vsel %vm299, %v104, 0
    %v520 = vsel %vm299, %v105, 0
    %v523 = vsel %vm299, %v106, 0
    %v526 = vsel %vm299, %v107, 0
    %v529 = vsel %vm299, %v108, 0
    %v532 = vsel %vm299, %v109, 0
    %v535 = vsel %vm299, %v110, 0
    %v538 = vsel %vm299, %v111, 0
    %v541 = vsel %vm299, %v112, 0
    %v544 = vsel %vm299, %v113, 0
    %v547 = vsel %vm299, %v114, 0
    %v550 = vsel %vm299, %v115, 0
    %v553 = vsel %vm299, %v116, 0
    %v556 = vsel %vm299, %v117, 0
    %v559 = vsel %vm299, %v118, 0
    %v562 = vsel %vm299, %v119, 0
    %v565 = vsel %vm299, %v120, 0
    %v568 = vsel %vm299, %v121, 0
    %v571 = vsel %vm299, %v122, 0
    %v574 = vsel %vm299, %v123, 0
    %v577 = vsel %vm299, %v124, 0
    %v580 = vsel %vm299, %v125, 0
    %v583 = vsel %vm299, %v126, 0
    %v586 = vsel %vm299, %v127, 0
    %v589 = vsel %vm299, %v128, 0
    %v592 = vsel %vm299, %v129, 0
    %v595 = vsel %vm299, %v130, 0
    %v598 = vsel %vm299, %v131, 0
    %v601 = vsel %vm299, %v132, 0
    %v604 = vsel %vm299, %v133, 0
    %v607 = vsel %vm299, %v134, 0
    %v610 = vsel %vm299, %v135, 0
    %v613 = vsel %vm299, %v136, 0
    %v616 = vsel %vm299, %v137, 0
    %v619 = vsel %vm299, %v138, 0
    %v622 = vsel %vm299, %v139, 0
    %v625 = vsel %vm299, %v140, 0
    %v628 = vsel %vm299, %v141, 0
    %v631 = vsel %vm299, %v142, 0
    %v634 = vsel %vm299, %v143, 0
    %v637 = vsel %vm299, %v144, 0
    %v640 = vsel %vm299, %v145, 0
    %v643 = vsel %vm299, %v146, 0
    %v646 = vsel %vm299, %v147, 0
    %v649 = vsel %vm299, %v148, 0
    %v652 = vsel %vm299, %v149, 0
    %v655 = vsel %vm299, %v150, 0
    %v658 = vsel %vm299, %v151, 0
    %v661 = vsel %vm299, %v152, 0
    %v664 = vsel %vm299, %v153, 0
    %v667 = vsel %vm299, %v154, 0
    %v670 = vsel %vm299, %v155, 0
    %v673 = vsel %vm299, %v156, 0
    %v676 = vsel %vm299, %v157, 0
    %v679 = vsel %vm299, %v158, 0
    %v682 = vsel %vm299, %v159, 0
    %v685 = vsel %vm299, %v160, 0
    %v688 = vsel %vm299, %v161, 0
    %v691 = vsel %vm299, %v162, 0
    %v694 = vsel %vm299, %v163, 0
    %v697 = vsel %vm299, %v164, 0
    %v700 = vsel %vm299, %v165, 0
    %v703 = vsel %vm299, %v166, 0
    %v706 = vsel %vm299, %v167, 0
    %v709 = vsel %vm299, %v168, 0
    %v712 = vsel %vm299, %v169, 0
    %v715 = vsel %vm299, %v170, 0
    %v718 = vsel %vm299, %v171, 0
    %v721 = vsel %vm299, %v172, 0
    %v724 = vsel %vm299, %v173, 0
    %v727 = vsel %vm299, %v174, 0
    %v730 = vsel %vm299, %v175, 0
    %v733 = vsel %vm299, %v176, 0
    %v736 = vsel %vm299, %v177, 0
    %v739 = vsel %vm299, %v178, 0
    %v742 = vsel %vm299, %v179, 0
    %v745 = vsel %vm299, %v180, 0
    %v748 = vsel %vm299, %v181, 0
    %v751 = vsel %vm299, %v182, 0
    %v754 = vsel %vm299, %v183, 0
    %v757 = vsel %vm299, %v184, 0
    %v760 = vsel %vm299, %v185, 0
    %v763 = vsel %vm299, %v186, 0
    %v766 = vsel %vm299, %v187, 0
    %v769 = vsel %vm299, %v188, 0
    %v772 = vsel %vm299, %v189, 0
    %v775 = vsel %vm299, %v190, 0
    %v778 = vsel %vm299, %v191, 0
    %v781 = vsel %vm299, %v192, 0
    %v784 = vsel %vm299, %v193, 0
    %v787 = vsel %vm299, %v194, 0
    %v790 = vsel %vm299, %v195, 0
    %v793 = vsel %vm299, %v196, 0
    %v796 = vsel %vm299, %v197, 0
    %v799 = vsel %vm299, %v198, 0
    %v802 = vsel %vm299, %v199, 0
    %v805 = vsel %vm299, %v200, 0
    %v808 = vsel %vm299, %v201, 0
    %v811 = vsel %vm299, %v202, 0
    %v814 = vsel %vm299, %v203, 0
    %v817 = vsel %vm299, %v204, 0
    %v820 = vsel %vm299, %v205, 0
    %v823 = vsel %vm299, %v206, 0
    %v826 = vsel %vm299, %v207, 0
    %v829 = vsel %vm299, %v208, 0
    %v832 = vsel %vm299, %v209, 0
    %v835 = vsel %vm299, %v210, 0
    %v838 = vsel %vm299, %v211, 0
    %v841 = vsel %vm299, %v212, 0
    %v844 = vsel %vm299, %v213, 0
    %v847 = vsel %vm299, %v214, 0
    %v850 = vsel %vm299, %v215, 0
    %v853 = vsel %vm299, %v216, 0
    %v856 = vsel %vm299, %v217, 0
    %v859 = vsel %vm299, %v218, 0
    %v862 = vsel %vm299, %v219, 0
    %v865 = vsel %vm299, %v220, 0
    %v868 = vsel %vm299, %v221, 0
    %v871 = vsel %vm299, %v222, 0
    %v874 = vsel %vm299, %v223, 0
    %v877 = vsel %vm299, %v224, 0
    %v880 = vsel %vm299, %v225, 0
    %v883 = vsel %vm299, %v226, 0
    %v886 = vsel %vm299, %v227, 0
    %v889 = vsel %vm299, %v228, 0
    %v892 = vsel %vm299, %v229, 0
    %v895 = vsel %vm299, %v230, 0
    %v898 = vsel %vm299, %v231, 0
    %v901 = vsel %vm299, %v232, 0
    %v904 = vsel %vm299, %v233, 0
    %v907 = vsel %vm299, %v234, 0
    %v910 = vsel %vm299, %v235, 0
    %v913 = vsel %vm299, %v236, 0
    %v916 = vsel %vm299, %v237, 0
    %v919 = vsel %vm299, %v238, 0
    %v922 = vsel %vm299, %v239, 0
    %v925 = vsel %vm299, %v240, 0
    %v928 = vsel %vm299, %v241, 0
    %v931 = vsel %vm299, %v242, 0
    %v934 = vsel %vm299, %v243, 0
    %v937 = vsel %vm299, %v244, 0
    %v940 = vsel %vm299, %v245, 0
    %v943 = vsel %vm299, %v246, 0
    %v946 = vsel %vm299, %v247, 0
    %v949 = vsel %vm299, %v248, 0
    %v952 = vsel %vm299, %v249, 0
    %v955 = vsel %vm299, %v250, 0
    %v958 = vsel %vm299, %v251, 0
    %v961 = vsel %vm299, %v252, 0
    %v964 = vsel %vm299, %v253, 0
    %v967 = vsel %vm299, %v254, 0
    %v970 = vsel %vm299, %v255, 0
    %v973 = vsel %vm299, %v256, 0
    %v976 = vsel %vm299, %v257, 0
    %v979 = vsel %vm299, %v258, 0
    %v982 = vsel %vm299, %v259, 0
    %v985 = vsel %vm299, %v260, 0
    %v988 = vsel %vm299, %v261, 0
    %v991 = vsel %vm299, %v262, 0
    %v994 = vsel %vm299, %v263, 0
    %v997 = vsel %vm299, %v264, 0
    %v1000 = vsel %vm299, %v265, 0
    %v1003 = vsel %vm299, %v266, 0
    %v1006 = vsel %vm299, %v267, 0
    %v1009 = vsel %vm299, %v268, 0
    %v1012 = vsel %vm299, %v269, 0
    %v1015 = vsel %vm299, %v270, 0
    %v1018 = vsel %vm299, %v271, 0
    %v1021 = vsel %vm299, %v272, 0
    %v1024 = vsel %vm299, %v273, 0
    %v1027 = vsel %vm299, %v274, 0
    %v1030 = vsel %vm299, %v275, 0
    %v1033 = vsel %vm299, %v276, 0
    %v1036 = vsel %vm299, %v277, 0
    %v1039 = vsel %vm299, %v278, 0
    %v1042 = vsel %vm299, %v279, 0
    %v1045 = vsel %vm299, %v280, 0
    %v1048 = vsel %vm299, %v281, 0
    %v1051 = vsel %vm299, %v282, 0
    %v1054 = vsel %vm299, %v283, 0
    %v1057 = vsel %vm299, %v284, 0
    %v1060 = vsel %vm299, %v285, 0
    %v1063 = vsel %vm299, %v286, 0
    %v1066 = vsel %vm299, %v287, 0
    %1068 = vmatprep.subr.mxu0 0.0
    %1069 = vmatpush1.msra.mxu0 %v288
    %1070 = vmatprep.subr.mxu0 0.0
    %1071 = vmatpush1.msra.mxu0 %v289
    %1072 = vmatprep.subr.mxu0 0.0
    %1073 = vmatpush1.msra.mxu0 %v290
    %1074 = vmatprep.subr.mxu0 0.0
    %1075 = vmatpush1.msra.mxu0 %v291
    %1076 = vmatprep.subr.mxu0 0.0
    %1077 = vmatpush1.msra.mxu0 0.0
    %1078 = vmatprep.subr.mxu0 0.0
    %1079 = vmatpush1.msra.mxu0 0.0
    %1080 = vmatprep.subr.mxu0 0.0
    %1081 = vmatpush1.msra.mxu0 0.0
    %1082 = vmatprep.subr.mxu0 0.0
    %1083 = vmatpush1.msra.mxu0 0.0
    %1084 = vmatprep.subr.mxu0 0.0
    %1085 = vmatpush1.msra.mxu0 0.0
    %1086 = vmatprep.subr.mxu0 0.0
    %1087 = vmatpush1.msra.mxu0 0.0
    %1088 = vmatprep.subr.mxu0 0.0
    %1089 = vmatpush1.msra.mxu0 0.0
    %1090 = vmatprep.subr.mxu0 0.0
    %1091 = vmatpush1.msra.mxu0 0.0
    %1092 = vmatprep.subr.mxu0 0.0
    %1093 = vmatpush1.msra.mxu0 0.0
    %1094 = vmatprep.subr.mxu0 0.0
    %1095 = vmatpush1.msra.mxu0 0.0
    %1096 = vmatprep.subr.mxu0 0.0
    %1097 = vmatpush1.msra.mxu0 0.0
    %1098 = vmatprep.subr.mxu0 0.0
    %1099 = vmatpush1.msra.mxu0 0.0
    %1100 = vmatprep.subr.mxu0 0.0
    %1101 = vmatpush1.msra.mxu0 0.0
    %1102 = vmatprep.subr.mxu0 0.0
    %1103 = vmatpush1.msra.mxu0 0.0
    %1104 = vmatprep.subr.mxu0 0.0
    %1105 = vmatpush1.msra.mxu0 0.0
    %1106 = vmatprep.subr.mxu0 0.0
    %1107 = vmatpush1.msra.mxu0 0.0
    %1108 = vmatprep.subr.mxu0 0.0
    %1109 = vmatpush1.msra.mxu0 0.0
    %1110 = vmatprep.subr.mxu0 0.0
    %1111 = vmatpush1.msra.mxu0 0.0
    %1112 = vmatprep.subr.mxu0 0.0
    %1113 = vmatpush1.msra.mxu0 0.0
    %1114 = vmatprep.subr.mxu0 0.0
    %1115 = vmatpush1.msra.mxu0 0.0
    %1116 = vmatprep.subr.mxu0 0.0
    %1117 = vmatpush1.msra.mxu0 0.0
    %1118 = vmatprep.subr.mxu0 0.0
    %1119 = vmatpush1.msra.mxu0 0.0
    %1120 = vmatprep.subr.mxu0 0.0
    %1121 = vmatpush1.msra.mxu0 0.0
    %1122 = vmatprep.subr.mxu0 0.0
    %1123 = vmatpush1.msra.mxu0 0.0
    %1124 = vmatprep.subr.mxu0 0.0
    %1125 = vmatpush1.msra.mxu0 0.0
    %1126 = vmatprep.subr.mxu0 0.0
    %1127 = vmatpush1.msra.mxu0 0.0
    %1128 = vmatprep.subr.mxu0 0.0
    %1129 = vmatpush1.msra.mxu0 0.0
    %1130 = vmatprep.subr.mxu0 0.0
    %1131 = vmatpush1.msra.mxu0 0.0
    %1132 = vmatprep.mubr.f32.mxu0 0.0
    %1133 = vmatmul.mubr.f32.gmra.mrb[0].mxu0 %v301
    %v1134 = vpop.f32.mrb[0].mxu0
    %v1135 = vadd.f32 %v297, %v1134
    %v1136 = vpop.f32.mrb[0].mxu0
    %1137 = vmatprep.mubr.f32.mxu0 0.0
    %1138 = vmatmul.mubr.f32.gmra.mrb[0].mxu0 %v304
    %v1139 = vpop.f32.mrb[0].mxu0
    %v1140 = vadd.f32 %v297, %v1139
    %v1141 = vpop.f32.mrb[0].mxu0
    %1142 = vmatprep.mubr.f32.mxu0 0.0
    %1143 = vmatmul.mubr.f32.gmra.mrb[0].mxu0 %v307
    %v1144 = vpop.f32.mrb[0].mxu0
    %v1145 = vadd.f32 %v297, %v1144
    %v1146 = vpop.f32.mrb[0].mxu0
    %1147 = vmatprep.mubr.f32.mxu0 0.0
    %1148 = vmatmul.mubr.f32.gmra.mrb[0].mxu0 %v310
    %v1149 = vpop.f32.mrb[0].mxu0
    %v1150 = vadd.f32 %v297, %v1149
    %v1151 = vpop.f32.mrb[0].mxu0
    %1152 = vmatprep.mubr.f32.mxu0 0.0
    %1153 = vmatmul.mubr.f32.gmra.mrb[0].mxu0 %v313
    %v1154 = vpop.f32.mrb[0].mxu0
    %v1155 = vadd.f32 %v297, %v1154
    %v1156 = vpop.f32.mrb[0].mxu0
    %1157 = vmatprep.mubr.f32.mxu0 0.0
    %1158 = vmatmul.mubr.f32.gmra.mrb[0].mxu0 %v316
    %v1159 = vpop.f32.mrb[0].mxu0
    %v1160 = vadd.f32 %v297, %v1159
    %v1161 = vpop.f32.mrb[0].mxu0
    %1162 = vmatprep.mubr.f32.mxu0 0.0
    %1163 = vmatmul.mubr.f32.gmra.mrb[0].mxu0 %v319
    %v1164 = vpop.f32.mrb[0].mxu0
    %v1165 = vadd.f32 %v297, %v1164
    %v1166 = vpop.f32.mrb[0].mxu0
    %1167 = vmatprep.mubr.f32.mxu0 0.0
    %1168 = vmatmul.mubr.f32.gmra.mrb[0].mxu0 %v322
    %v1169 = vpop.f32.mrb[0].mxu0
    %v1170 = vadd.f32 %v297, %v1169
    %v1171 = vpop.f32.mrb[0].mxu0
    %1172 = vmatprep.mubr.f32.mxu0 0.0
    %1173 = vmatmul.mubr.f32.gmra.mrb[0].mxu0 %v325
    %v1174 = vpop.f32.mrb[0].mxu0
    %v1175 = vadd.f32 %v297, %v1174
    %v1176 = vpop.f32.mrb[0].mxu0
    %1177 = vmatprep.mubr.f32.mxu0 0.0
    %1178 = vmatmul.mubr.f32.gmra.mrb[0].mxu0 %v328
    %v1179 = vpop.f32.mrb[0].mxu0
    %v1180 = vadd.f32 %v297, %v1179
    %v1181 = vpop.f32.mrb[0].mxu0
    %1182 = vmatprep.mubr.f32.mxu0 0.0
    %1183 = vmatmul.mubr.f32.gmra.mrb[0].mxu0 %v331
    %v1184 = vpop.f32.mrb[0].mxu0
    %v1185 = vadd.f32 %v297, %v1184
    %v1186 = vpop.f32.mrb[0].mxu0
    %1187 = vmatprep.mubr.f32.mxu0 0.0
    %1188 = vmatmul.mubr.f32.gmra.mrb[0].mxu0 %v334
    %v1189 = vpop.f32.mrb[0].mxu0
    %v1190 = vadd.f32 %v297, %v1189
    %v1191 = vpop.f32.mrb[0].mxu0
    %1192 = vmatprep.mubr.f32.mxu0 0.0
    %1193 = vmatmul.mubr.f32.gmra.mrb[0].mxu0 %v337
    %v1194 = vpop.f32.mrb[0].mxu0
    %v1195 = vadd.f32 %v297, %v1194
    %v1196 = vpop.f32.mrb[0].mxu0
    %1197 = vmatprep.mubr.f32.mxu0 0.0
    %1198 = vmatmul.mubr.f32.gmra.mrb[0].mxu0 %v340
    %v1199 = vpop.f32.mrb[0].mxu0
    %v1200 = vadd.f32 %v297, %v1199
    %v1201 = vpop.f32.mrb[0].mxu0
    %1202 = vmatprep.mubr.f32.mxu0 0.0
    %1203 = vmatmul.mubr.f32.gmra.mrb[0].mxu0 %v343
    %v1204 = vpop.f32.mrb[0].mxu0
    %v1205 = vadd.f32 %v297, %v1204
    %v1206 = vpop.f32.mrb[0].mxu0
    %1207 = vmatprep.mubr.f32.mxu0 0.0
    %1208 = vmatmul.mubr.f32.gmra.mrb[0].mxu0 %v346
    %v1209 = vpop.f32.mrb[0].mxu0
    %v1210 = vadd.f32 %v297, %v1209
    %v1211 = vpop.f32.mrb[0].mxu0
    %1212 = vmatprep.mubr.f32.mxu0 0.0
    %1213 = vmatmul.mubr.f32.gmra.mrb[0].mxu0 %v349
    %v1214 = vpop.f32.mrb[0].mxu0
    %v1215 = vadd.f32 %v297, %v1214
    %v1216 = vpop.f32.mrb[0].mxu0
    %1217 = vmatprep.mubr.f32.mxu0 0.0
    %1218 = vmatmul.mubr.f32.gmra.mrb[0].mxu0 %v352
    %v1219 = vpop.f32.mrb[0].mxu0
    %v1220 = vadd.f32 %v297, %v1219
    %v1221 = vpop.f32.mrb[0].mxu0
    %1222 = vmatprep.mubr.f32.mxu0 0.0
    %1223 = vmatmul.mubr.f32.gmra.mrb[0].mxu0 %v355
    %v1224 = vpop.f32.mrb[0].mxu0
    %v1225 = vadd.f32 %v297, %v1224
    %v1226 = vpop.f32.mrb[0].mxu0
    %1227 = vmatprep.mubr.f32.mxu0 0.0
    %1228 = vmatmul.mubr.f32.gmra.mrb[0].mxu0 %v358
    %v1229 = vpop.f32.mrb[0].mxu0
    %v1230 = vadd.f32 %v297, %v1229
    %v1231 = vpop.f32.mrb[0].mxu0
    %1232 = vmatprep.mubr.f32.mxu0 0.0
    %1233 = vmatmul.mubr.f32.gmra.mrb[0].mxu0 %v361
    %v1234 = vpop.f32.mrb[0].mxu0
    %v1235 = vadd.f32 %v297, %v1234
    %v1236 = vpop.f32.mrb[0].mxu0
    %1237 = vmatprep.mubr.f32.mxu0 0.0
    %1238 = vmatmul.mubr.f32.gmra.mrb[0].mxu0 %v364
    %v1239 = vpop.f32.mrb[0].mxu0
    %v1240 = vadd.f32 %v297, %v1239
    %v1241 = vpop.f32.mrb[0].mxu0
    %1242 = vmatprep.mubr.f32.mxu0 0.0
    %1243 = vmatmul.mubr.f32.gmra.mrb[0].mxu0 %v367
    %v1244 = vpop.f32.mrb[0].mxu0
    %v1245 = vadd.f32 %v297, %v1244
    %v1246 = vpop.f32.mrb[0].mxu0
    %1247 = vmatprep.mubr.f32.mxu0 0.0
    %1248 = vmatmul.mubr.f32.gmra.mrb[0].mxu0 %v370
    %v1249 = vpop.f32.mrb[0].mxu0
    %v1250 = vadd.f32 %v297, %v1249
    %v1251 = vpop.f32.mrb[0].mxu0
    %1252 = vmatprep.mubr.f32.mxu0 0.0
    %1253 = vmatmul.mubr.f32.gmra.mrb[0].mxu0 %v373
    %v1254 = vpop.f32.mrb[0].mxu0
    %v1255 = vadd.f32 %v297, %v1254
    %v1256 = vpop.f32.mrb[0].mxu0
    %1257 = vmatprep.mubr.f32.mxu0 0.0
    %1258 = vmatmul.mubr.f32.gmra.mrb[0].mxu0 %v376
    %v1259 = vpop.f32.mrb[0].mxu0
    %v1260 = vadd.f32 %v297, %v1259
    %v1261 = vpop.f32.mrb[0].mxu0
    %1262 = vmatprep.mubr.f32.mxu0 0.0
    %1263 = vmatmul.mubr.f32.gmra.mrb[0].mxu0 %v379
    %v1264 = vpop.f32.mrb[0].mxu0
    %v1265 = vadd.f32 %v297, %v1264
    %v1266 = vpop.f32.mrb[0].mxu0
    %1267 = vmatprep.mubr.f32.mxu0 0.0
    %1268 = vmatmul.mubr.f32.gmra.mrb[0].mxu0 %v382
    %v1269 = vpop.f32.mrb[0].mxu0
    %v1270 = vadd.f32 %v297, %v1269
    %v1271 = vpop.f32.mrb[0].mxu0
    %1272 = vmatprep.mubr.f32.mxu0 0.0
    %1273 = vmatmul.mubr.f32.gmra.mrb[0].mxu0 %v385
    %v1274 = vpop.f32.mrb[0].mxu0
    %v1275 = vadd.f32 %v297, %v1274
    %v1276 = vpop.f32.mrb[0].mxu0
    %1277 = vmatprep.mubr.f32.mxu0 0.0
    %1278 = vmatmul.mubr.f32.gmra.mrb[0].mxu0 %v388
    %v1279 = vpop.f32.mrb[0].mxu0
    %v1280 = vadd.f32 %v297, %v1279
    %v1281 = vpop.f32.mrb[0].mxu0
    %1282 = vmatprep.mubr.f32.mxu0 0.0
    %1283 = vmatmul.mubr.f32.gmra.mrb[0].mxu0 %v391
    %v1284 = vpop.f32.mrb[0].mxu0
    %v1285 = vadd.f32 %v297, %v1284
    %v1286 = vpop.f32.mrb[0].mxu0
    %1287 = vmatprep.mubr.f32.mxu0 0.0
    %1288 = vmatmul.mubr.f32.gmra.mrb[0].mxu0 %v394
    %v1289 = vpop.f32.mrb[0].mxu0
    %v1290 = vadd.f32 %v297, %v1289
    %v1291 = vpop.f32.mrb[0].mxu0
    %1292 = vmatprep.mubr.f32.mxu0 0.0
    %1293 = vmatmul.mubr.f32.gmra.mrb[0].mxu0 %v397
    %v1294 = vpop.f32.mrb[0].mxu0
    %v1295 = vadd.f32 %v297, %v1294
    %v1296 = vpop.f32.mrb[0].mxu0
    %1297 = vmatprep.mubr.f32.mxu0 0.0
    %1298 = vmatmul.mubr.f32.gmra.mrb[0].mxu0 %v400
    %v1299 = vpop.f32.mrb[0].mxu0
    %v1300 = vadd.f32 %v297, %v1299
    %v1301 = vpop.f32.mrb[0].mxu0
    %1302 = vmatprep.mubr.f32.mxu0 0.0
    %1303 = vmatmul.mubr.f32.gmra.mrb[0].mxu0 %v403
    %v1304 = vpop.f32.mrb[0].mxu0
    %v1305 = vadd.f32 %v297, %v1304
    %v1306 = vpop.f32.mrb[0].mxu0
    %1307 = vmatprep.mubr.f32.mxu0 0.0
    %1308 = vmatmul.mubr.f32.gmra.mrb[0].mxu0 %v406
    %v1309 = vpop.f32.mrb[0].mxu0
    %v1310 = vadd.f32 %v297, %v1309
    %v1311 = vpop.f32.mrb[0].mxu0
    %1312 = vmatprep.mubr.f32.mxu0 0.0
    %1313 = vmatmul.mubr.f32.gmra.mrb[0].mxu0 %v409
    %v1314 = vpop.f32.mrb[0].mxu0
    %v1315 = vadd.f32 %v297, %v1314
    %v1316 = vpop.f32.mrb[0].mxu0
    %1317 = vmatprep.mubr.f32.mxu0 0.0
    %1318 = vmatmul.mubr.f32.gmra.mrb[0].mxu0 %v412
    %v1319 = vpop.f32.mrb[0].mxu0
    %v1320 = vadd.f32 %v297, %v1319
    %v1321 = vpop.f32.mrb[0].mxu0
    %1322 = vmatprep.mubr.f32.mxu0 0.0
    %1323 = vmatmul.mubr.f32.gmra.mrb[0].mxu0 %v415
    %v1324 = vpop.f32.mrb[0].mxu0
    %v1325 = vadd.f32 %v297, %v1324
    %v1326 = vpop.f32.mrb[0].mxu0
    %1327 = vmatprep.mubr.f32.mxu0 0.0
    %1328 = vmatmul.mubr.f32.gmra.mrb[0].mxu0 %v418
    %v1329 = vpop.f32.mrb[0].mxu0
    %v1330 = vadd.f32 %v297, %v1329
    %v1331 = vpop.f32.mrb[0].mxu0
    %1332 = vmatprep.mubr.f32.mxu0 0.0
    %1333 = vmatmul.mubr.f32.gmra.mrb[0].mxu0 %v421
    %v1334 = vpop.f32.mrb[0].mxu0
    %v1335 = vadd.f32 %v297, %v1334
    %v1336 = vpop.f32.mrb[0].mxu0
    %1337 = vmatprep.mubr.f32.mxu0 0.0
    %1338 = vmatmul.mubr.f32.gmra.mrb[0].mxu0 %v424
    %v1339 = vpop.f32.mrb[0].mxu0
    %v1340 = vadd.f32 %v297, %v1339
    %v1341 = vpop.f32.mrb[0].mxu0
    %1342 = vmatprep.mubr.f32.mxu0 0.0
    %1343 = vmatmul.mubr.f32.gmra.mrb[0].mxu0 %v427
    %v1344 = vpop.f32.mrb[0].mxu0
    %v1345 = vadd.f32 %v297, %v1344
    %v1346 = vpop.f32.mrb[0].mxu0
    %1347 = vmatprep.mubr.f32.mxu0 0.0
    %1348 = vmatmul.mubr.f32.gmra.mrb[0].mxu0 %v430
    %v1349 = vpop.f32.mrb[0].mxu0
    %v1350 = vadd.f32 %v297, %v1349
    %v1351 = vpop.f32.mrb[0].mxu0
    %1352 = vmatprep.mubr.f32.mxu0 0.0
    %1353 = vmatmul.mubr.f32.gmra.mrb[0].mxu0 %v433
    %v1354 = vpop.f32.mrb[0].mxu0
    %v1355 = vadd.f32 %v297, %v1354
    %v1356 = vpop.f32.mrb[0].mxu0
    %1357 = vmatprep.mubr.f32.mxu0 0.0
    %1358 = vmatmul.mubr.f32.gmra.mrb[0].mxu0 %v436
    %v1359 = vpop.f32.mrb[0].mxu0
    %v1360 = vadd.f32 %v297, %v1359
    %v1361 = vpop.f32.mrb[0].mxu0
    %1362 = vmatprep.mubr.f32.mxu0 0.0
    %1363 = vmatmul.mubr.f32.gmra.mrb[0].mxu0 %v439
    %v1364 = vpop.f32.mrb[0].mxu0
    %v1365 = vadd.f32 %v297, %v1364
    %v1366 = vpop.f32.mrb[0].mxu0
    %1367 = vmatprep.mubr.f32.mxu0 0.0
    %1368 = vmatmul.mubr.f32.gmra.mrb[0].mxu0 %v442
    %v1369 = vpop.f32.mrb[0].mxu0
    %v1370 = vadd.f32 %v297, %v1369
    %v1371 = vpop.f32.mrb[0].mxu0
    %1372 = vmatprep.mubr.f32.mxu0 0.0
    %1373 = vmatmul.mubr.f32.gmra.mrb[0].mxu0 %v445
    %v1374 = vpop.f32.mrb[0].mxu0
    %v1375 = vadd.f32 %v297, %v1374
    %v1376 = vpop.f32.mrb[0].mxu0
    %1377 = vmatprep.mubr.f32.mxu0 0.0
    %1378 = vmatmul.mubr.f32.gmra.mrb[0].mxu0 %v448
    %v1379 = vpop.f32.mrb[0].mxu0
    %v1380 = vadd.f32 %v297, %v1379
    %v1381 = vpop.f32.mrb[0].mxu0
    %1382 = vmatprep.mubr.f32.mxu0 0.0
    %1383 = vmatmul.mubr.f32.gmra.mrb[0].mxu0 %v451
    %v1384 = vpop.f32.mrb[0].mxu0
    %v1385 = vadd.f32 %v297, %v1384
    %v1386 = vpop.f32.mrb[0].mxu0
    %1387 = vmatprep.mubr.f32.mxu0 0.0
    %1388 = vmatmul.mubr.f32.gmra.mrb[0].mxu0 %v454
    %v1389 = vpop.f32.mrb[0].mxu0
    %v1390 = vadd.f32 %v297, %v1389
    %v1391 = vpop.f32.mrb[0].mxu0
    %1392 = vmatprep.mubr.f32.mxu0 0.0
    %1393 = vmatmul.mubr.f32.gmra.mrb[0].mxu0 %v457
    %v1394 = vpop.f32.mrb[0].mxu0
    %v1395 = vadd.f32 %v297, %v1394
    %v1396 = vpop.f32.mrb[0].mxu0
    %1397 = vmatprep.mubr.f32.mxu0 0.0
    %1398 = vmatmul.mubr.f32.gmra.mrb[0].mxu0 %v460
    %v1399 = vpop.f32.mrb[0].mxu0
    %v1400 = vadd.f32 %v297, %v1399
    %v1401 = vpop.f32.mrb[0].mxu0
    %1402 = vmatprep.mubr.f32.mxu0 0.0
    %1403 = vmatmul.mubr.f32.gmra.mrb[0].mxu0 %v463
    %v1404 = vpop.f32.mrb[0].mxu0
    %v1405 = vadd.f32 %v297, %v1404
    %v1406 = vpop.f32.mrb[0].mxu0
    %1407 = vmatprep.mubr.f32.mxu0 0.0
    %1408 = vmatmul.mubr.f32.gmra.mrb[0].mxu0 %v466
    %v1409 = vpop.f32.mrb[0].mxu0
    %v1410 = vadd.f32 %v297, %v1409
    %v1411 = vpop.f32.mrb[0].mxu0
    %1412 = vmatprep.mubr.f32.mxu0 0.0
    %1413 = vmatmul.mubr.f32.gmra.mrb[0].mxu0 %v469
    %v1414 = vpop.f32.mrb[0].mxu0
    %v1415 = vadd.f32 %v297, %v1414
    %v1416 = vpop.f32.mrb[0].mxu0
    %1417 = vmatprep.mubr.f32.mxu0 0.0
    %1418 = vmatmul.mubr.f32.gmra.mrb[0].mxu0 %v472
    %v1419 = vpop.f32.mrb[0].mxu0
    %v1420 = vadd.f32 %v297, %v1419
    %v1421 = vpop.f32.mrb[0].mxu0
    %1422 = vmatprep.mubr.f32.mxu0 0.0
    %1423 = vmatmul.mubr.f32.gmra.mrb[0].mxu0 %v475
    %v1424 = vpop.f32.mrb[0].mxu0
    %v1425 = vadd.f32 %v297, %v1424
    %v1426 = vpop.f32.mrb[0].mxu0
    %1427 = vmatprep.mubr.f32.mxu0 0.0
    %1428 = vmatmul.mubr.f32.gmra.mrb[0].mxu0 %v478
    %v1429 = vpop.f32.mrb[0].mxu0
    %v1430 = vadd.f32 %v297, %v1429
    %v1431 = vpop.f32.mrb[0].mxu0
    %1432 = vmatprep.mubr.f32.mxu0 0.0
    %1433 = vmatmul.mubr.f32.gmra.mrb[0].mxu0 %v481
    %v1434 = vpop.f32.mrb[0].mxu0
    %v1435 = vadd.f32 %v297, %v1434
    %v1436 = vpop.f32.mrb[0].mxu0
    %1437 = vmatprep.mubr.f32.mxu0 0.0
    %1438 = vmatmul.mubr.f32.gmra.mrb[0].mxu0 %v484
    %v1439 = vpop.f32.mrb[0].mxu0
    %v1440 = vadd.f32 %v297, %v1439
    %v1441 = vpop.f32.mrb[0].mxu0
    %1442 = vmatprep.mubr.f32.mxu0 0.0
    %1443 = vmatmul.mubr.f32.gmra.mrb[0].mxu0 %v487
    %v1444 = vpop.f32.mrb[0].mxu0
    %v1445 = vadd.f32 %v297, %v1444
    %v1446 = vpop.f32.mrb[0].mxu0
    %1447 = vmatprep.mubr.f32.mxu0 0.0
    %1448 = vmatmul.mubr.f32.gmra.mrb[0].mxu0 %v490
    %v1449 = vpop.f32.mrb[0].mxu0
    %v1450 = vadd.f32 %v297, %v1449
    %v1451 = vpop.f32.mrb[0].mxu0
    %1452 = vmatprep.mubr.f32.mxu0 0.0
    %1453 = vmatmul.mubr.f32.gmra.mrb[0].mxu0 %v493
    %v1454 = vpop.f32.mrb[0].mxu0
    %v1455 = vadd.f32 %v297, %v1454
    %v1456 = vpop.f32.mrb[0].mxu0
    %1457 = vmatprep.mubr.f32.mxu0 0.0
    %1458 = vmatmul.mubr.f32.gmra.mrb[0].mxu0 %v496
    %v1459 = vpop.f32.mrb[0].mxu0
    %v1460 = vadd.f32 %v297, %v1459
    %v1461 = vpop.f32.mrb[0].mxu0
    %1462 = vmatprep.mubr.f32.mxu0 0.0
    %1463 = vmatmul.mubr.f32.gmra.mrb[0].mxu0 %v499
    %v1464 = vpop.f32.mrb[0].mxu0
    %v1465 = vadd.f32 %v297, %v1464
    %v1466 = vpop.f32.mrb[0].mxu0
    %1467 = vmatprep.mubr.f32.mxu0 0.0
    %1468 = vmatmul.mubr.f32.gmra.mrb[0].mxu0 %v502
    %v1469 = vpop.f32.mrb[0].mxu0
    %v1470 = vadd.f32 %v297, %v1469
    %v1471 = vpop.f32.mrb[0].mxu0
    %1472 = vmatprep.mubr.f32.mxu0 0.0
    %1473 = vmatmul.mubr.f32.gmra.mrb[0].mxu0 %v505
    %v1474 = vpop.f32.mrb[0].mxu0
    %v1475 = vadd.f32 %v297, %v1474
    %v1476 = vpop.f32.mrb[0].mxu0
    %1477 = vmatprep.mubr.f32.mxu0 0.0
    %1478 = vmatmul.mubr.f32.gmra.mrb[0].mxu0 %v508
    %v1479 = vpop.f32.mrb[0].mxu0
    %v1480 = vadd.f32 %v297, %v1479
    %v1481 = vpop.f32.mrb[0].mxu0
    %1482 = vmatprep.mubr.f32.mxu0 0.0
    %1483 = vmatmul.mubr.f32.gmra.mrb[0].mxu0 %v511
    %v1484 = vpop.f32.mrb[0].mxu0
    %v1485 = vadd.f32 %v297, %v1484
    %v1486 = vpop.f32.mrb[0].mxu0
    %1487 = vmatprep.mubr.f32.mxu0 0.0
    %1488 = vmatmul.mubr.f32.gmra.mrb[0].mxu0 %v514
    %v1489 = vpop.f32.mrb[0].mxu0
    %v1490 = vadd.f32 %v297, %v1489
    %v1491 = vpop.f32.mrb[0].mxu0
    %1492 = vmatprep.mubr.f32.mxu0 0.0
    %1493 = vmatmul.mubr.f32.gmra.mrb[0].mxu0 %v517
    %v1494 = vpop.f32.mrb[0].mxu0
    %v1495 = vadd.f32 %v297, %v1494
    %v1496 = vpop.f32.mrb[0].mxu0
    %1497 = vmatprep.mubr.f32.mxu0 0.0
    %1498 = vmatmul.mubr.f32.gmra.mrb[0].mxu0 %v520
    %v1499 = vpop.f32.mrb[0].mxu0
    %v1500 = vadd.f32 %v297, %v1499
    %v1501 = vpop.f32.mrb[0].mxu0
    %1502 = vmatprep.mubr.f32.mxu0 0.0
    %1503 = vmatmul.mubr.f32.gmra.mrb[0].mxu0 %v523
    %v1504 = vpop.f32.mrb[0].mxu0
    %v1505 = vadd.f32 %v297, %v1504
    %v1506 = vpop.f32.mrb[0].mxu0
    %1507 = vmatprep.mubr.f32.mxu0 0.0
    %1508 = vmatmul.mubr.f32.gmra.mrb[0].mxu0 %v526
    %v1509 = vpop.f32.mrb[0].mxu0
    %v1510 = vadd.f32 %v297, %v1509
    %v1511 = vpop.f32.mrb[0].mxu0
    %1512 = vmatprep.mubr.f32.mxu0 0.0
    %1513 = vmatmul.mubr.f32.gmra.mrb[0].mxu0 %v529
    %v1514 = vpop.f32.mrb[0].mxu0
    %v1515 = vadd.f32 %v297, %v1514
    %v1516 = vpop.f32.mrb[0].mxu0
    %1517 = vmatprep.mubr.f32.mxu0 0.0
    %1518 = vmatmul.mubr.f32.gmra.mrb[0].mxu0 %v532
    %v1519 = vpop.f32.mrb[0].mxu0
    %v1520 = vadd.f32 %v297, %v1519
    %v1521 = vpop.f32.mrb[0].mxu0
    %1522 = vmatprep.mubr.f32.mxu0 0.0
    %1523 = vmatmul.mubr.f32.gmra.mrb[0].mxu0 %v535
    %v1524 = vpop.f32.mrb[0].mxu0
    %v1525 = vadd.f32 %v297, %v1524
    %v1526 = vpop.f32.mrb[0].mxu0
    %1527 = vmatprep.mubr.f32.mxu0 0.0
    %1528 = vmatmul.mubr.f32.gmra.mrb[0].mxu0 %v538
    %v1529 = vpop.f32.mrb[0].mxu0
    %v1530 = vadd.f32 %v297, %v1529
    %v1531 = vpop.f32.mrb[0].mxu0
    %1532 = vmatprep.mubr.f32.mxu0 0.0
    %1533 = vmatmul.mubr.f32.gmra.mrb[0].mxu0 %v541
    %v1534 = vpop.f32.mrb[0].mxu0
    %v1535 = vadd.f32 %v297, %v1534
    %v1536 = vpop.f32.mrb[0].mxu0
    %1537 = vmatprep.mubr.f32.mxu0 0.0
    %1538 = vmatmul.mubr.f32.gmra.mrb[0].mxu0 %v544
    %v1539 = vpop.f32.mrb[0].mxu0
    %v1540 = vadd.f32 %v297, %v1539
    %v1541 = vpop.f32.mrb[0].mxu0
    %1542 = vmatprep.mubr.f32.mxu0 0.0
    %1543 = vmatmul.mubr.f32.gmra.mrb[0].mxu0 %v547
    %v1544 = vpop.f32.mrb[0].mxu0
    %v1545 = vadd.f32 %v297, %v1544
    %v1546 = vpop.f32.mrb[0].mxu0
    %1547 = vmatprep.mubr.f32.mxu0 0.0
    %1548 = vmatmul.mubr.f32.gmra.mrb[0].mxu0 %v550
    %v1549 = vpop.f32.mrb[0].mxu0
    %v1550 = vadd.f32 %v297, %v1549
    %v1551 = vpop.f32.mrb[0].mxu0
    %1552 = vmatprep.mubr.f32.mxu0 0.0
    %1553 = vmatmul.mubr.f32.gmra.mrb[0].mxu0 %v553
    %v1554 = vpop.f32.mrb[0].mxu0
    %v1555 = vadd.f32 %v297, %v1554
    %v1556 = vpop.f32.mrb[0].mxu0
    %1557 = vmatprep.mubr.f32.mxu0 0.0
    %1558 = vmatmul.mubr.f32.gmra.mrb[0].mxu0 %v556
    %v1559 = vpop.f32.mrb[0].mxu0
    %v1560 = vadd.f32 %v297, %v1559
    %v1561 = vpop.f32.mrb[0].mxu0
    %1562 = vmatprep.mubr.f32.mxu0 0.0
    %1563 = vmatmul.mubr.f32.gmra.mrb[0].mxu0 %v559
    %v1564 = vpop.f32.mrb[0].mxu0
    %v1565 = vadd.f32 %v297, %v1564
    %v1566 = vpop.f32.mrb[0].mxu0
    %1567 = vmatprep.mubr.f32.mxu0 0.0
    %1568 = vmatmul.mubr.f32.gmra.mrb[0].mxu0 %v562
    %v1569 = vpop.f32.mrb[0].mxu0
    %v1570 = vadd.f32 %v297, %v1569
    %v1571 = vpop.f32.mrb[0].mxu0
    %1572 = vmatprep.mubr.f32.mxu0 0.0
    %1573 = vmatmul.mubr.f32.gmra.mrb[0].mxu0 %v565
    %v1574 = vpop.f32.mrb[0].mxu0
    %v1575 = vadd.f32 %v297, %v1574
    %v1576 = vpop.f32.mrb[0].mxu0
    %1577 = vmatprep.mubr.f32.mxu0 0.0
    %1578 = vmatmul.mubr.f32.gmra.mrb[0].mxu0 %v568
    %v1579 = vpop.f32.mrb[0].mxu0
    %v1580 = vadd.f32 %v297, %v1579
    %v1581 = vpop.f32.mrb[0].mxu0
    %1582 = vmatprep.mubr.f32.mxu0 0.0
    %1583 = vmatmul.mubr.f32.gmra.mrb[0].mxu0 %v571
    %v1584 = vpop.f32.mrb[0].mxu0
    %v1585 = vadd.f32 %v297, %v1584
    %v1586 = vpop.f32.mrb[0].mxu0
    %1587 = vmatprep.mubr.f32.mxu0 0.0
    %1588 = vmatmul.mubr.f32.gmra.mrb[0].mxu0 %v574
    %v1589 = vpop.f32.mrb[0].mxu0
    %v1590 = vadd.f32 %v297, %v1589
    %v1591 = vpop.f32.mrb[0].mxu0
    %1592 = vmatprep.mubr.f32.mxu0 0.0
    %1593 = vmatmul.mubr.f32.gmra.mrb[0].mxu0 %v577
    %v1594 = vpop.f32.mrb[0].mxu0
    %v1595 = vadd.f32 %v297, %v1594
    %v1596 = vpop.f32.mrb[0].mxu0
    %1597 = vmatprep.mubr.f32.mxu0 0.0
    %1598 = vmatmul.mubr.f32.gmra.mrb[0].mxu0 %v580
    %v1599 = vpop.f32.mrb[0].mxu0
    %v1600 = vadd.f32 %v297, %v1599
    %v1601 = vpop.f32.mrb[0].mxu0
    %1602 = vmatprep.mubr.f32.mxu0 0.0
    %1603 = vmatmul.mubr.f32.gmra.mrb[0].mxu0 %v583
    %v1604 = vpop.f32.mrb[0].mxu0
    %v1605 = vadd.f32 %v297, %v1604
    %v1606 = vpop.f32.mrb[0].mxu0
    %1607 = vmatprep.mubr.f32.mxu0 0.0
    %1608 = vmatmul.mubr.f32.gmra.mrb[0].mxu0 %v586
    %v1609 = vpop.f32.mrb[0].mxu0
    %v1610 = vadd.f32 %v297, %v1609
    %v1611 = vpop.f32.mrb[0].mxu0
    %1612 = vmatprep.mubr.f32.mxu0 0.0
    %1613 = vmatmul.mubr.f32.gmra.mrb[0].mxu0 %v589
    %v1614 = vpop.f32.mrb[0].mxu0
    %v1615 = vadd.f32 %v297, %v1614
    %v1616 = vpop.f32.mrb[0].mxu0
    %1617 = vmatprep.mubr.f32.mxu0 0.0
    %1618 = vmatmul.mubr.f32.gmra.mrb[0].mxu0 %v592
    %v1619 = vpop.f32.mrb[0].mxu0
    %v1620 = vadd.f32 %v297, %v1619
    %v1621 = vpop.f32.mrb[0].mxu0
    %1622 = vmatprep.mubr.f32.mxu0 0.0
    %1623 = vmatmul.mubr.f32.gmra.mrb[0].mxu0 %v595
    %v1624 = vpop.f32.mrb[0].mxu0
    %v1625 = vadd.f32 %v297, %v1624
    %v1626 = vpop.f32.mrb[0].mxu0
    %1627 = vmatprep.mubr.f32.mxu0 0.0
    %1628 = vmatmul.mubr.f32.gmra.mrb[0].mxu0 %v598
    %v1629 = vpop.f32.mrb[0].mxu0
    %v1630 = vadd.f32 %v297, %v1629
    %v1631 = vpop.f32.mrb[0].mxu0
    %1632 = vmatprep.mubr.f32.mxu0 0.0
    %1633 = vmatmul.mubr.f32.gmra.mrb[0].mxu0 %v601
    %v1634 = vpop.f32.mrb[0].mxu0
    %v1635 = vadd.f32 %v297, %v1634
    %v1636 = vpop.f32.mrb[0].mxu0
    %1637 = vmatprep.mubr.f32.mxu0 0.0
    %1638 = vmatmul.mubr.f32.gmra.mrb[0].mxu0 %v604
    %v1639 = vpop.f32.mrb[0].mxu0
    %v1640 = vadd.f32 %v297, %v1639
    %v1641 = vpop.f32.mrb[0].mxu0
    %1642 = vmatprep.mubr.f32.mxu0 0.0
    %1643 = vmatmul.mubr.f32.gmra.mrb[0].mxu0 %v607
    %v1644 = vpop.f32.mrb[0].mxu0
    %v1645 = vadd.f32 %v297, %v1644
    %v1646 = vpop.f32.mrb[0].mxu0
    %1647 = vmatprep.mubr.f32.mxu0 0.0
    %1648 = vmatmul.mubr.f32.gmra.mrb[0].mxu0 %v610
    %v1649 = vpop.f32.mrb[0].mxu0
    %v1650 = vadd.f32 %v297, %v1649
    %v1651 = vpop.f32.mrb[0].mxu0
    %1652 = vmatprep.mubr.f32.mxu0 0.0
    %1653 = vmatmul.mubr.f32.gmra.mrb[0].mxu0 %v613
    %v1654 = vpop.f32.mrb[0].mxu0
    %v1655 = vadd.f32 %v297, %v1654
    %v1656 = vpop.f32.mrb[0].mxu0
    %1657 = vmatprep.mubr.f32.mxu0 0.0
    %1658 = vmatmul.mubr.f32.gmra.mrb[0].mxu0 %v616
    %v1659 = vpop.f32.mrb[0].mxu0
    %v1660 = vadd.f32 %v297, %v1659
    %v1661 = vpop.f32.mrb[0].mxu0
    %1662 = vmatprep.mubr.f32.mxu0 0.0
    %1663 = vmatmul.mubr.f32.gmra.mrb[0].mxu0 %v619
    %v1664 = vpop.f32.mrb[0].mxu0
    %v1665 = vadd.f32 %v297, %v1664
    %v1666 = vpop.f32.mrb[0].mxu0
    %1667 = vmatprep.mubr.f32.mxu0 0.0
    %1668 = vmatmul.mubr.f32.gmra.mrb[0].mxu0 %v622
    %v1669 = vpop.f32.mrb[0].mxu0
    %v1670 = vadd.f32 %v297, %v1669
    %v1671 = vpop.f32.mrb[0].mxu0
    %1672 = vmatprep.mubr.f32.mxu0 0.0
    %1673 = vmatmul.mubr.f32.gmra.mrb[0].mxu0 %v625
    %v1674 = vpop.f32.mrb[0].mxu0
    %v1675 = vadd.f32 %v297, %v1674
    %v1676 = vpop.f32.mrb[0].mxu0
    %1677 = vmatprep.mubr.f32.mxu0 0.0
    %1678 = vmatmul.mubr.f32.gmra.mrb[0].mxu0 %v628
    %v1679 = vpop.f32.mrb[0].mxu0
    %v1680 = vadd.f32 %v297, %v1679
    %v1681 = vpop.f32.mrb[0].mxu0
    %1682 = vmatprep.mubr.f32.mxu0 0.0
    %1683 = vmatmul.mubr.f32.gmra.mrb[0].mxu0 %v631
    %v1684 = vpop.f32.mrb[0].mxu0
    %v1685 = vadd.f32 %v297, %v1684
    %v1686 = vpop.f32.mrb[0].mxu0
    %1687 = vmatprep.mubr.f32.mxu0 0.0
    %1688 = vmatmul.mubr.f32.gmra.mrb[0].mxu0 %v634
    %v1689 = vpop.f32.mrb[0].mxu0
    %v1690 = vadd.f32 %v297, %v1689
    %v1691 = vpop.f32.mrb[0].mxu0
    %1692 = vmatprep.mubr.f32.mxu0 0.0
    %1693 = vmatmul.mubr.f32.gmra.mrb[0].mxu0 %v637
    %v1694 = vpop.f32.mrb[0].mxu0
    %v1695 = vadd.f32 %v297, %v1694
    %v1696 = vpop.f32.mrb[0].mxu0
    %1697 = vmatprep.mubr.f32.mxu0 0.0
    %1698 = vmatmul.mubr.f32.gmra.mrb[0].mxu0 %v640
    %v1699 = vpop.f32.mrb[0].mxu0
    %v1700 = vadd.f32 %v297, %v1699
    %v1701 = vpop.f32.mrb[0].mxu0
    %1702 = vmatprep.mubr.f32.mxu0 0.0
    %1703 = vmatmul.mubr.f32.gmra.mrb[0].mxu0 %v643
    %v1704 = vpop.f32.mrb[0].mxu0
    %v1705 = vadd.f32 %v297, %v1704
    %v1706 = vpop.f32.mrb[0].mxu0
    %1707 = vmatprep.mubr.f32.mxu0 0.0
    %1708 = vmatmul.mubr.f32.gmra.mrb[0].mxu0 %v646
    %v1709 = vpop.f32.mrb[0].mxu0
    %v1710 = vadd.f32 %v297, %v1709
    %v1711 = vpop.f32.mrb[0].mxu0
    %1712 = vmatprep.mubr.f32.mxu0 0.0
    %1713 = vmatmul.mubr.f32.gmra.mrb[0].mxu0 %v649
    %v1714 = vpop.f32.mrb[0].mxu0
    %v1715 = vadd.f32 %v297, %v1714
    %v1716 = vpop.f32.mrb[0].mxu0
    %1717 = vmatprep.mubr.f32.mxu0 0.0
    %1718 = vmatmul.mubr.f32.gmra.mrb[0].mxu0 %v652
    %v1719 = vpop.f32.mrb[0].mxu0
    %v1720 = vadd.f32 %v297, %v1719
    %v1721 = vpop.f32.mrb[0].mxu0
    %1722 = vmatprep.mubr.f32.mxu0 0.0
    %1723 = vmatmul.mubr.f32.gmra.mrb[0].mxu0 %v655
    %v1724 = vpop.f32.mrb[0].mxu0
    %v1725 = vadd.f32 %v297, %v1724
    %v1726 = vpop.f32.mrb[0].mxu0
    %1727 = vmatprep.mubr.f32.mxu0 0.0
    %1728 = vmatmul.mubr.f32.gmra.mrb[0].mxu0 %v658
    %v1729 = vpop.f32.mrb[0].mxu0
    %v1730 = vadd.f32 %v297, %v1729
    %v1731 = vpop.f32.mrb[0].mxu0
    %1732 = vmatprep.mubr.f32.mxu0 0.0
    %1733 = vmatmul.mubr.f32.gmra.mrb[0].mxu0 %v661
    %v1734 = vpop.f32.mrb[0].mxu0
    %v1735 = vadd.f32 %v297, %v1734
    %v1736 = vpop.f32.mrb[0].mxu0
    %1737 = vmatprep.mubr.f32.mxu0 0.0
    %1738 = vmatmul.mubr.f32.gmra.mrb[0].mxu0 %v664
    %v1739 = vpop.f32.mrb[0].mxu0
    %v1740 = vadd.f32 %v297, %v1739
    %v1741 = vpop.f32.mrb[0].mxu0
    %1742 = vmatprep.mubr.f32.mxu0 0.0
    %1743 = vmatmul.mubr.f32.gmra.mrb[0].mxu0 %v667
    %v1744 = vpop.f32.mrb[0].mxu0
    %v1745 = vadd.f32 %v297, %v1744
    %v1746 = vpop.f32.mrb[0].mxu0
    %1747 = vmatprep.mubr.f32.mxu0 0.0
    %1748 = vmatmul.mubr.f32.gmra.mrb[0].mxu0 %v670
    %v1749 = vpop.f32.mrb[0].mxu0
    %v1750 = vadd.f32 %v297, %v1749
    %v1751 = vpop.f32.mrb[0].mxu0
    %1752 = vmatprep.mubr.f32.mxu0 0.0
    %1753 = vmatmul.mubr.f32.gmra.mrb[0].mxu0 %v673
    %v1754 = vpop.f32.mrb[0].mxu0
    %v1755 = vadd.f32 %v297, %v1754
    %v1756 = vpop.f32.mrb[0].mxu0
    %1757 = vmatprep.mubr.f32.mxu0 0.0
    %1758 = vmatmul.mubr.f32.gmra.mrb[0].mxu0 %v676
    %v1759 = vpop.f32.mrb[0].mxu0
    %v1760 = vadd.f32 %v297, %v1759
    %v1761 = vpop.f32.mrb[0].mxu0
    %1762 = vmatprep.mubr.f32.mxu0 0.0
    %1763 = vmatmul.mubr.f32.gmra.mrb[0].mxu0 %v679
    %v1764 = vpop.f32.mrb[0].mxu0
    %v1765 = vadd.f32 %v297, %v1764
    %v1766 = vpop.f32.mrb[0].mxu0
    %1767 = vmatprep.mubr.f32.mxu0 0.0
    %1768 = vmatmul.mubr.f32.gmra.mrb[0].mxu0 %v682
    %v1769 = vpop.f32.mrb[0].mxu0
    %v1770 = vadd.f32 %v297, %v1769
    %v1771 = vpop.f32.mrb[0].mxu0
    %1772 = vmatprep.mubr.f32.mxu0 0.0
    %1773 = vmatmul.mubr.f32.gmra.mrb[0].mxu0 %v685
    %v1774 = vpop.f32.mrb[0].mxu0
    %v1775 = vadd.f32 %v297, %v1774
    %v1776 = vpop.f32.mrb[0].mxu0
    %1777 = vmatprep.mubr.f32.mxu0 0.0
    %1778 = vmatmul.mubr.f32.gmra.mrb[0].mxu0 %v688
    %v1779 = vpop.f32.mrb[0].mxu0
    %v1780 = vadd.f32 %v297, %v1779
    %v1781 = vpop.f32.mrb[0].mxu0
    %1782 = vmatprep.mubr.f32.mxu0 0.0
    %1783 = vmatmul.mubr.f32.gmra.mrb[0].mxu0 %v691
    %v1784 = vpop.f32.mrb[0].mxu0
    %v1785 = vadd.f32 %v297, %v1784
    %v1786 = vpop.f32.mrb[0].mxu0
    %1787 = vmatprep.mubr.f32.mxu0 0.0
    %1788 = vmatmul.mubr.f32.gmra.mrb[0].mxu0 %v694
    %v1789 = vpop.f32.mrb[0].mxu0
    %v1790 = vadd.f32 %v297, %v1789
    %v1791 = vpop.f32.mrb[0].mxu0
    %1792 = vmatprep.mubr.f32.mxu0 0.0
    %1793 = vmatmul.mubr.f32.gmra.mrb[0].mxu0 %v697
    %v1794 = vpop.f32.mrb[0].mxu0
    %v1795 = vadd.f32 %v297, %v1794
    %v1796 = vpop.f32.mrb[0].mxu0
    %1797 = vmatprep.mubr.f32.mxu0 0.0
    %1798 = vmatmul.mubr.f32.gmra.mrb[0].mxu0 %v700
    %v1799 = vpop.f32.mrb[0].mxu0
    %v1800 = vadd.f32 %v297, %v1799
    %v1801 = vpop.f32.mrb[0].mxu0
    %1802 = vmatprep.mubr.f32.mxu0 0.0
    %1803 = vmatmul.mubr.f32.gmra.mrb[0].mxu0 %v703
    %v1804 = vpop.f32.mrb[0].mxu0
    %v1805 = vadd.f32 %v297, %v1804
    %v1806 = vpop.f32.mrb[0].mxu0
    %1807 = vmatprep.mubr.f32.mxu0 0.0
    %1808 = vmatmul.mubr.f32.gmra.mrb[0].mxu0 %v706
    %v1809 = vpop.f32.mrb[0].mxu0
    %v1810 = vadd.f32 %v297, %v1809
    %v1811 = vpop.f32.mrb[0].mxu0
    %1812 = vmatprep.mubr.f32.mxu0 0.0
    %1813 = vmatmul.mubr.f32.gmra.mrb[0].mxu0 %v709
    %v1814 = vpop.f32.mrb[0].mxu0
    %v1815 = vadd.f32 %v297, %v1814
    %v1816 = vpop.f32.mrb[0].mxu0
    %1817 = vmatprep.mubr.f32.mxu0 0.0
    %1818 = vmatmul.mubr.f32.gmra.mrb[0].mxu0 %v712
    %v1819 = vpop.f32.mrb[0].mxu0
    %v1820 = vadd.f32 %v297, %v1819
    %v1821 = vpop.f32.mrb[0].mxu0
    %1822 = vmatprep.mubr.f32.mxu0 0.0
    %1823 = vmatmul.mubr.f32.gmra.mrb[0].mxu0 %v715
    %v1824 = vpop.f32.mrb[0].mxu0
    %v1825 = vadd.f32 %v297, %v1824
    %v1826 = vpop.f32.mrb[0].mxu0
    %1827 = vmatprep.mubr.f32.mxu0 0.0
    %1828 = vmatmul.mubr.f32.gmra.mrb[0].mxu0 %v718
    %v1829 = vpop.f32.mrb[0].mxu0
    %v1830 = vadd.f32 %v297, %v1829
    %v1831 = vpop.f32.mrb[0].mxu0
    %1832 = vmatprep.mubr.f32.mxu0 0.0
    %1833 = vmatmul.mubr.f32.gmra.mrb[0].mxu0 %v721
    %v1834 = vpop.f32.mrb[0].mxu0
    %v1835 = vadd.f32 %v297, %v1834
    %v1836 = vpop.f32.mrb[0].mxu0
    %1837 = vmatprep.mubr.f32.mxu0 0.0
    %1838 = vmatmul.mubr.f32.gmra.mrb[0].mxu0 %v724
    %v1839 = vpop.f32.mrb[0].mxu0
    %v1840 = vadd.f32 %v297, %v1839
    %v1841 = vpop.f32.mrb[0].mxu0
    %1842 = vmatprep.mubr.f32.mxu0 0.0
    %1843 = vmatmul.mubr.f32.gmra.mrb[0].mxu0 %v727
    %v1844 = vpop.f32.mrb[0].mxu0
    %v1845 = vadd.f32 %v297, %v1844
    %v1846 = vpop.f32.mrb[0].mxu0
    %1847 = vmatprep.mubr.f32.mxu0 0.0
    %1848 = vmatmul.mubr.f32.gmra.mrb[0].mxu0 %v730
    %v1849 = vpop.f32.mrb[0].mxu0
    %v1850 = vadd.f32 %v297, %v1849
    %v1851 = vpop.f32.mrb[0].mxu0
    %1852 = vmatprep.mubr.f32.mxu0 0.0
    %1853 = vmatmul.mubr.f32.gmra.mrb[0].mxu0 %v733
    %v1854 = vpop.f32.mrb[0].mxu0
    %v1855 = vadd.f32 %v297, %v1854
    %v1856 = vpop.f32.mrb[0].mxu0
    %1857 = vmatprep.mubr.f32.mxu0 0.0
    %1858 = vmatmul.mubr.f32.gmra.mrb[0].mxu0 %v736
    %v1859 = vpop.f32.mrb[0].mxu0
    %v1860 = vadd.f32 %v297, %v1859
    %v1861 = vpop.f32.mrb[0].mxu0
    %1862 = vmatprep.mubr.f32.mxu0 0.0
    %1863 = vmatmul.mubr.f32.gmra.mrb[0].mxu0 %v739
    %v1864 = vpop.f32.mrb[0].mxu0
    %v1865 = vadd.f32 %v297, %v1864
    %v1866 = vpop.f32.mrb[0].mxu0
    %1867 = vmatprep.mubr.f32.mxu0 0.0
    %1868 = vmatmul.mubr.f32.gmra.mrb[0].mxu0 %v742
    %v1869 = vpop.f32.mrb[0].mxu0
    %v1870 = vadd.f32 %v297, %v1869
    %v1871 = vpop.f32.mrb[0].mxu0
    %1872 = vmatprep.mubr.f32.mxu0 0.0
    %1873 = vmatmul.mubr.f32.gmra.mrb[0].mxu0 %v745
    %v1874 = vpop.f32.mrb[0].mxu0
    %v1875 = vadd.f32 %v297, %v1874
    %v1876 = vpop.f32.mrb[0].mxu0
    %1877 = vmatprep.mubr.f32.mxu0 0.0
    %1878 = vmatmul.mubr.f32.gmra.mrb[0].mxu0 %v748
    %v1879 = vpop.f32.mrb[0].mxu0
    %v1880 = vadd.f32 %v297, %v1879
    %v1881 = vpop.f32.mrb[0].mxu0
    %1882 = vmatprep.mubr.f32.mxu0 0.0
    %1883 = vmatmul.mubr.f32.gmra.mrb[0].mxu0 %v751
    %v1884 = vpop.f32.mrb[0].mxu0
    %v1885 = vadd.f32 %v297, %v1884
    %v1886 = vpop.f32.mrb[0].mxu0
    %1887 = vmatprep.mubr.f32.mxu0 0.0
    %1888 = vmatmul.mubr.f32.gmra.mrb[0].mxu0 %v754
    %v1889 = vpop.f32.mrb[0].mxu0
    %v1890 = vadd.f32 %v297, %v1889
    %v1891 = vpop.f32.mrb[0].mxu0
    %1892 = vmatprep.mubr.f32.mxu0 0.0
    %1893 = vmatmul.mubr.f32.gmra.mrb[0].mxu0 %v757
    %v1894 = vpop.f32.mrb[0].mxu0
    %v1895 = vadd.f32 %v297, %v1894
    %v1896 = vpop.f32.mrb[0].mxu0
    %1897 = vmatprep.mubr.f32.mxu0 0.0
    %1898 = vmatmul.mubr.f32.gmra.mrb[0].mxu0 %v760
    %v1899 = vpop.f32.mrb[0].mxu0
    %v1900 = vadd.f32 %v297, %v1899
    %v1901 = vpop.f32.mrb[0].mxu0
    %1902 = vmatprep.mubr.f32.mxu0 0.0
    %1903 = vmatmul.mubr.f32.gmra.mrb[0].mxu0 %v763
    %v1904 = vpop.f32.mrb[0].mxu0
    %v1905 = vadd.f32 %v297, %v1904
    %v1906 = vpop.f32.mrb[0].mxu0
    %1907 = vmatprep.mubr.f32.mxu0 0.0
    %1908 = vmatmul.mubr.f32.gmra.mrb[0].mxu0 %v766
    %v1909 = vpop.f32.mrb[0].mxu0
    %v1910 = vadd.f32 %v297, %v1909
    %v1911 = vpop.f32.mrb[0].mxu0
    %1912 = vmatprep.mubr.f32.mxu0 0.0
    %1913 = vmatmul.mubr.f32.gmra.mrb[0].mxu0 %v769
    %v1914 = vpop.f32.mrb[0].mxu0
    %v1915 = vadd.f32 %v297, %v1914
    %v1916 = vpop.f32.mrb[0].mxu0
    %1917 = vmatprep.mubr.f32.mxu0 0.0
    %1918 = vmatmul.mubr.f32.gmra.mrb[0].mxu0 %v772
    %v1919 = vpop.f32.mrb[0].mxu0
    %v1920 = vadd.f32 %v297, %v1919
    %v1921 = vpop.f32.mrb[0].mxu0
    %1922 = vmatprep.mubr.f32.mxu0 0.0
    %1923 = vmatmul.mubr.f32.gmra.mrb[0].mxu0 %v775
    %v1924 = vpop.f32.mrb[0].mxu0
    %v1925 = vadd.f32 %v297, %v1924
    %v1926 = vpop.f32.mrb[0].mxu0
    %1927 = vmatprep.mubr.f32.mxu0 0.0
    %1928 = vmatmul.mubr.f32.gmra.mrb[0].mxu0 %v778
    %v1929 = vpop.f32.mrb[0].mxu0
    %v1930 = vadd.f32 %v297, %v1929
    %v1931 = vpop.f32.mrb[0].mxu0
    %1932 = vmatprep.mubr.f32.mxu0 0.0
    %1933 = vmatmul.mubr.f32.gmra.mrb[0].mxu0 %v781
    %v1934 = vpop.f32.mrb[0].mxu0
    %v1935 = vadd.f32 %v297, %v1934
    %v1936 = vpop.f32.mrb[0].mxu0
    %1937 = vmatprep.mubr.f32.mxu0 0.0
    %1938 = vmatmul.mubr.f32.gmra.mrb[0].mxu0 %v784
    %v1939 = vpop.f32.mrb[0].mxu0
    %v1940 = vadd.f32 %v297, %v1939
    %v1941 = vpop.f32.mrb[0].mxu0
    %1942 = vmatprep.mubr.f32.mxu0 0.0
    %1943 = vmatmul.mubr.f32.gmra.mrb[0].mxu0 %v787
    %v1944 = vpop.f32.mrb[0].mxu0
    %v1945 = vadd.f32 %v297, %v1944
    %v1946 = vpop.f32.mrb[0].mxu0
    %1947 = vmatprep.mubr.f32.mxu0 0.0
    %1948 = vmatmul.mubr.f32.gmra.mrb[0].mxu0 %v790
    %v1949 = vpop.f32.mrb[0].mxu0
    %v1950 = vadd.f32 %v297, %v1949
    %v1951 = vpop.f32.mrb[0].mxu0
    %1952 = vmatprep.mubr.f32.mxu0 0.0
    %1953 = vmatmul.mubr.f32.gmra.mrb[0].mxu0 %v793
    %v1954 = vpop.f32.mrb[0].mxu0
    %v1955 = vadd.f32 %v297, %v1954
    %v1956 = vpop.f32.mrb[0].mxu0
    %1957 = vmatprep.mubr.f32.mxu0 0.0
    %1958 = vmatmul.mubr.f32.gmra.mrb[0].mxu0 %v796
    %v1959 = vpop.f32.mrb[0].mxu0
    %v1960 = vadd.f32 %v297, %v1959
    %v1961 = vpop.f32.mrb[0].mxu0
    %1962 = vmatprep.mubr.f32.mxu0 0.0
    %1963 = vmatmul.mubr.f32.gmra.mrb[0].mxu0 %v799
    %v1964 = vpop.f32.mrb[0].mxu0
    %v1965 = vadd.f32 %v297, %v1964
    %v1966 = vpop.f32.mrb[0].mxu0
    %1967 = vmatprep.mubr.f32.mxu0 0.0
    %1968 = vmatmul.mubr.f32.gmra.mrb[0].mxu0 %v802
    %v1969 = vpop.f32.mrb[0].mxu0
    %v1970 = vadd.f32 %v297, %v1969
    %v1971 = vpop.f32.mrb[0].mxu0
    %1972 = vmatprep.mubr.f32.mxu0 0.0
    %1973 = vmatmul.mubr.f32.gmra.mrb[0].mxu0 %v805
    %v1974 = vpop.f32.mrb[0].mxu0
    %v1975 = vadd.f32 %v297, %v1974
    %v1976 = vpop.f32.mrb[0].mxu0
    %1977 = vmatprep.mubr.f32.mxu0 0.0
    %1978 = vmatmul.mubr.f32.gmra.mrb[0].mxu0 %v808
    %v1979 = vpop.f32.mrb[0].mxu0
    %v1980 = vadd.f32 %v297, %v1979
    %v1981 = vpop.f32.mrb[0].mxu0
    %1982 = vmatprep.mubr.f32.mxu0 0.0
    %1983 = vmatmul.mubr.f32.gmra.mrb[0].mxu0 %v811
    %v1984 = vpop.f32.mrb[0].mxu0
    %v1985 = vadd.f32 %v297, %v1984
    %v1986 = vpop.f32.mrb[0].mxu0
    %1987 = vmatprep.mubr.f32.mxu0 0.0
    %1988 = vmatmul.mubr.f32.gmra.mrb[0].mxu0 %v814
    %v1989 = vpop.f32.mrb[0].mxu0
    %v1990 = vadd.f32 %v297, %v1989
    %v1991 = vpop.f32.mrb[0].mxu0
    %1992 = vmatprep.mubr.f32.mxu0 0.0
    %1993 = vmatmul.mubr.f32.gmra.mrb[0].mxu0 %v817
    %v1994 = vpop.f32.mrb[0].mxu0
    %v1995 = vadd.f32 %v297, %v1994
    %v1996 = vpop.f32.mrb[0].mxu0
    %1997 = vmatprep.mubr.f32.mxu0 0.0
    %1998 = vmatmul.mubr.f32.gmra.mrb[0].mxu0 %v820
    %v1999 = vpop.f32.mrb[0].mxu0
    %v2000 = vadd.f32 %v297, %v1999
    %v2001 = vpop.f32.mrb[0].mxu0
    %2002 = vmatprep.mubr.f32.mxu0 0.0
    %2003 = vmatmul.mubr.f32.gmra.mrb[0].mxu0 %v823
    %v2004 = vpop.f32.mrb[0].mxu0
    %v2005 = vadd.f32 %v297, %v2004
    %v2006 = vpop.f32.mrb[0].mxu0
    %2007 = vmatprep.mubr.f32.mxu0 0.0
    %2008 = vmatmul.mubr.f32.gmra.mrb[0].mxu0 %v826
    %v2009 = vpop.f32.mrb[0].mxu0
    %v2010 = vadd.f32 %v297, %v2009
    %v2011 = vpop.f32.mrb[0].mxu0
    %2012 = vmatprep.mubr.f32.mxu0 0.0
    %2013 = vmatmul.mubr.f32.gmra.mrb[0].mxu0 %v829
    %v2014 = vpop.f32.mrb[0].mxu0
    %v2015 = vadd.f32 %v297, %v2014
    %v2016 = vpop.f32.mrb[0].mxu0
    %2017 = vmatprep.mubr.f32.mxu0 0.0
    %2018 = vmatmul.mubr.f32.gmra.mrb[0].mxu0 %v832
    %v2019 = vpop.f32.mrb[0].mxu0
    %v2020 = vadd.f32 %v297, %v2019
    %v2021 = vpop.f32.mrb[0].mxu0
    %2022 = vmatprep.mubr.f32.mxu0 0.0
    %2023 = vmatmul.mubr.f32.gmra.mrb[0].mxu0 %v835
    %v2024 = vpop.f32.mrb[0].mxu0
    %v2025 = vadd.f32 %v297, %v2024
    %v2026 = vpop.f32.mrb[0].mxu0
    %2027 = vmatprep.mubr.f32.mxu0 0.0
    %2028 = vmatmul.mubr.f32.gmra.mrb[0].mxu0 %v838
    %v2029 = vpop.f32.mrb[0].mxu0
    %v2030 = vadd.f32 %v297, %v2029
    %v2031 = vpop.f32.mrb[0].mxu0
    %2032 = vmatprep.mubr.f32.mxu0 0.0
    %2033 = vmatmul.mubr.f32.gmra.mrb[0].mxu0 %v841
    %v2034 = vpop.f32.mrb[0].mxu0
    %v2035 = vadd.f32 %v297, %v2034
    %v2036 = vpop.f32.mrb[0].mxu0
    %2037 = vmatprep.mubr.f32.mxu0 0.0
    %2038 = vmatmul.mubr.f32.gmra.mrb[0].mxu0 %v844
    %v2039 = vpop.f32.mrb[0].mxu0
    %v2040 = vadd.f32 %v297, %v2039
    %v2041 = vpop.f32.mrb[0].mxu0
    %2042 = vmatprep.mubr.f32.mxu0 0.0
    %2043 = vmatmul.mubr.f32.gmra.mrb[0].mxu0 %v847
    %v2044 = vpop.f32.mrb[0].mxu0
    %v2045 = vadd.f32 %v297, %v2044
    %v2046 = vpop.f32.mrb[0].mxu0
    %2047 = vmatprep.mubr.f32.mxu0 0.0
    %2048 = vmatmul.mubr.f32.gmra.mrb[0].mxu0 %v850
    %v2049 = vpop.f32.mrb[0].mxu0
    %v2050 = vadd.f32 %v297, %v2049
    %v2051 = vpop.f32.mrb[0].mxu0
    %2052 = vmatprep.mubr.f32.mxu0 0.0
    %2053 = vmatmul.mubr.f32.gmra.mrb[0].mxu0 %v853
    %v2054 = vpop.f32.mrb[0].mxu0
    %v2055 = vadd.f32 %v297, %v2054
    %v2056 = vpop.f32.mrb[0].mxu0
    %2057 = vmatprep.mubr.f32.mxu0 0.0
    %2058 = vmatmul.mubr.f32.gmra.mrb[0].mxu0 %v856
    %v2059 = vpop.f32.mrb[0].mxu0
    %v2060 = vadd.f32 %v297, %v2059
    %v2061 = vpop.f32.mrb[0].mxu0
    %2062 = vmatprep.mubr.f32.mxu0 0.0
    %2063 = vmatmul.mubr.f32.gmra.mrb[0].mxu0 %v859
    %v2064 = vpop.f32.mrb[0].mxu0
    %v2065 = vadd.f32 %v297, %v2064
    %v2066 = vpop.f32.mrb[0].mxu0
    %2067 = vmatprep.mubr.f32.mxu0 0.0
    %2068 = vmatmul.mubr.f32.gmra.mrb[0].mxu0 %v862
    %v2069 = vpop.f32.mrb[0].mxu0
    %v2070 = vadd.f32 %v297, %v2069
    %v2071 = vpop.f32.mrb[0].mxu0
    %2072 = vmatprep.mubr.f32.mxu0 0.0
    %2073 = vmatmul.mubr.f32.gmra.mrb[0].mxu0 %v865
    %v2074 = vpop.f32.mrb[0].mxu0
    %v2075 = vadd.f32 %v297, %v2074
    %v2076 = vpop.f32.mrb[0].mxu0
    %2077 = vmatprep.mubr.f32.mxu0 0.0
    %2078 = vmatmul.mubr.f32.gmra.mrb[0].mxu0 %v868
    %v2079 = vpop.f32.mrb[0].mxu0
    %v2080 = vadd.f32 %v297, %v2079
    %v2081 = vpop.f32.mrb[0].mxu0
    %2082 = vmatprep.mubr.f32.mxu0 0.0
    %2083 = vmatmul.mubr.f32.gmra.mrb[0].mxu0 %v871
    %v2084 = vpop.f32.mrb[0].mxu0
    %v2085 = vadd.f32 %v297, %v2084
    %v2086 = vpop.f32.mrb[0].mxu0
    %2087 = vmatprep.mubr.f32.mxu0 0.0
    %2088 = vmatmul.mubr.f32.gmra.mrb[0].mxu0 %v874
    %v2089 = vpop.f32.mrb[0].mxu0
    %v2090 = vadd.f32 %v297, %v2089
    %v2091 = vpop.f32.mrb[0].mxu0
    %2092 = vmatprep.mubr.f32.mxu0 0.0
    %2093 = vmatmul.mubr.f32.gmra.mrb[0].mxu0 %v877
    %v2094 = vpop.f32.mrb[0].mxu0
    %v2095 = vadd.f32 %v297, %v2094
    %v2096 = vpop.f32.mrb[0].mxu0
    %2097 = vmatprep.mubr.f32.mxu0 0.0
    %2098 = vmatmul.mubr.f32.gmra.mrb[0].mxu0 %v880
    %v2099 = vpop.f32.mrb[0].mxu0
    %v2100 = vadd.f32 %v297, %v2099
    %v2101 = vpop.f32.mrb[0].mxu0
    %2102 = vmatprep.mubr.f32.mxu0 0.0
    %2103 = vmatmul.mubr.f32.gmra.mrb[0].mxu0 %v883
    %v2104 = vpop.f32.mrb[0].mxu0
    %v2105 = vadd.f32 %v297, %v2104
    %v2106 = vpop.f32.mrb[0].mxu0
    %2107 = vmatprep.mubr.f32.mxu0 0.0
    %2108 = vmatmul.mubr.f32.gmra.mrb[0].mxu0 %v886
    %v2109 = vpop.f32.mrb[0].mxu0
    %v2110 = vadd.f32 %v297, %v2109
    %v2111 = vpop.f32.mrb[0].mxu0
    %2112 = vmatprep.mubr.f32.mxu0 0.0
    %2113 = vmatmul.mubr.f32.gmra.mrb[0].mxu0 %v889
    %v2114 = vpop.f32.mrb[0].mxu0
    %v2115 = vadd.f32 %v297, %v2114
    %v2116 = vpop.f32.mrb[0].mxu0
    %2117 = vmatprep.mubr.f32.mxu0 0.0
    %2118 = vmatmul.mubr.f32.gmra.mrb[0].mxu0 %v892
    %v2119 = vpop.f32.mrb[0].mxu0
    %v2120 = vadd.f32 %v297, %v2119
    %v2121 = vpop.f32.mrb[0].mxu0
    %2122 = vmatprep.mubr.f32.mxu0 0.0
    %2123 = vmatmul.mubr.f32.gmra.mrb[0].mxu0 %v895
    %v2124 = vpop.f32.mrb[0].mxu0
    %v2125 = vadd.f32 %v297, %v2124
    %v2126 = vpop.f32.mrb[0].mxu0
    %2127 = vmatprep.mubr.f32.mxu0 0.0
    %2128 = vmatmul.mubr.f32.gmra.mrb[0].mxu0 %v898
    %v2129 = vpop.f32.mrb[0].mxu0
    %v2130 = vadd.f32 %v297, %v2129
    %v2131 = vpop.f32.mrb[0].mxu0
    %2132 = vmatprep.mubr.f32.mxu0 0.0
    %2133 = vmatmul.mubr.f32.gmra.mrb[0].mxu0 %v901
    %v2134 = vpop.f32.mrb[0].mxu0
    %v2135 = vadd.f32 %v297, %v2134
    %v2136 = vpop.f32.mrb[0].mxu0
    %2137 = vmatprep.mubr.f32.mxu0 0.0
    %2138 = vmatmul.mubr.f32.gmra.mrb[0].mxu0 %v904
    %v2139 = vpop.f32.mrb[0].mxu0
    %v2140 = vadd.f32 %v297, %v2139
    %v2141 = vpop.f32.mrb[0].mxu0
    %2142 = vmatprep.mubr.f32.mxu0 0.0
    %2143 = vmatmul.mubr.f32.gmra.mrb[0].mxu0 %v907
    %v2144 = vpop.f32.mrb[0].mxu0
    %v2145 = vadd.f32 %v297, %v2144
    %v2146 = vpop.f32.mrb[0].mxu0
    %2147 = vmatprep.mubr.f32.mxu0 0.0
    %2148 = vmatmul.mubr.f32.gmra.mrb[0].mxu0 %v910
    %v2149 = vpop.f32.mrb[0].mxu0
    %v2150 = vadd.f32 %v297, %v2149
    %v2151 = vpop.f32.mrb[0].mxu0
    %2152 = vmatprep.mubr.f32.mxu0 0.0
    %2153 = vmatmul.mubr.f32.gmra.mrb[0].mxu0 %v913
    %v2154 = vpop.f32.mrb[0].mxu0
    %v2155 = vadd.f32 %v297, %v2154
    %v2156 = vpop.f32.mrb[0].mxu0
    %2157 = vmatprep.mubr.f32.mxu0 0.0
    %2158 = vmatmul.mubr.f32.gmra.mrb[0].mxu0 %v916
    %v2159 = vpop.f32.mrb[0].mxu0
    %v2160 = vadd.f32 %v297, %v2159
    %v2161 = vpop.f32.mrb[0].mxu0
    %2162 = vmatprep.mubr.f32.mxu0 0.0
    %2163 = vmatmul.mubr.f32.gmra.mrb[0].mxu0 %v919
    %v2164 = vpop.f32.mrb[0].mxu0
    %v2165 = vadd.f32 %v297, %v2164
    %v2166 = vpop.f32.mrb[0].mxu0
    %2167 = vmatprep.mubr.f32.mxu0 0.0
    %2168 = vmatmul.mubr.f32.gmra.mrb[0].mxu0 %v922
    %v2169 = vpop.f32.mrb[0].mxu0
    %v2170 = vadd.f32 %v297, %v2169
    %v2171 = vpop.f32.mrb[0].mxu0
    %2172 = vmatprep.mubr.f32.mxu0 0.0
    %2173 = vmatmul.mubr.f32.gmra.mrb[0].mxu0 %v925
    %v2174 = vpop.f32.mrb[0].mxu0
    %v2175 = vadd.f32 %v297, %v2174
    %v2176 = vpop.f32.mrb[0].mxu0
    %2177 = vmatprep.mubr.f32.mxu0 0.0
    %2178 = vmatmul.mubr.f32.gmra.mrb[0].mxu0 %v928
    %v2179 = vpop.f32.mrb[0].mxu0
    %v2180 = vadd.f32 %v297, %v2179
    %v2181 = vpop.f32.mrb[0].mxu0
    %2182 = vmatprep.mubr.f32.mxu0 0.0
    %2183 = vmatmul.mubr.f32.gmra.mrb[0].mxu0 %v931
    %v2184 = vpop.f32.mrb[0].mxu0
    %v2185 = vadd.f32 %v297, %v2184
    %v2186 = vpop.f32.mrb[0].mxu0
    %2187 = vmatprep.mubr.f32.mxu0 0.0
    %2188 = vmatmul.mubr.f32.gmra.mrb[0].mxu0 %v934
    %v2189 = vpop.f32.mrb[0].mxu0
    %v2190 = vadd.f32 %v297, %v2189
    %v2191 = vpop.f32.mrb[0].mxu0
    %2192 = vmatprep.mubr.f32.mxu0 0.0
    %2193 = vmatmul.mubr.f32.gmra.mrb[0].mxu0 %v937
    %v2194 = vpop.f32.mrb[0].mxu0
    %v2195 = vadd.f32 %v297, %v2194
    %v2196 = vpop.f32.mrb[0].mxu0
    %2197 = vmatprep.mubr.f32.mxu0 0.0
    %2198 = vmatmul.mubr.f32.gmra.mrb[0].mxu0 %v940
    %v2199 = vpop.f32.mrb[0].mxu0
    %v2200 = vadd.f32 %v297, %v2199
    %v2201 = vpop.f32.mrb[0].mxu0
    %2202 = vmatprep.mubr.f32.mxu0 0.0
    %2203 = vmatmul.mubr.f32.gmra.mrb[0].mxu0 %v943
    %v2204 = vpop.f32.mrb[0].mxu0
    %v2205 = vadd.f32 %v297, %v2204
    %v2206 = vpop.f32.mrb[0].mxu0
    %2207 = vmatprep.mubr.f32.mxu0 0.0
    %2208 = vmatmul.mubr.f32.gmra.mrb[0].mxu0 %v946
    %v2209 = vpop.f32.mrb[0].mxu0
    %v2210 = vadd.f32 %v297, %v2209
    %v2211 = vpop.f32.mrb[0].mxu0
    %2212 = vmatprep.mubr.f32.mxu0 0.0
    %2213 = vmatmul.mubr.f32.gmra.mrb[0].mxu0 %v949
    %v2214 = vpop.f32.mrb[0].mxu0
    %v2215 = vadd.f32 %v297, %v2214
    %v2216 = vpop.f32.mrb[0].mxu0
    %2217 = vmatprep.mubr.f32.mxu0 0.0
    %2218 = vmatmul.mubr.f32.gmra.mrb[0].mxu0 %v952
    %v2219 = vpop.f32.mrb[0].mxu0
    %v2220 = vadd.f32 %v297, %v2219
    %v2221 = vpop.f32.mrb[0].mxu0
    %2222 = vmatprep.mubr.f32.mxu0 0.0
    %2223 = vmatmul.mubr.f32.gmra.mrb[0].mxu0 %v955
    %v2224 = vpop.f32.mrb[0].mxu0
    %v2225 = vadd.f32 %v297, %v2224
    %v2226 = vpop.f32.mrb[0].mxu0
    %2227 = vmatprep.mubr.f32.mxu0 0.0
    %2228 = vmatmul.mubr.f32.gmra.mrb[0].mxu0 %v958
    %v2229 = vpop.f32.mrb[0].mxu0
    %v2230 = vadd.f32 %v297, %v2229
    %v2231 = vpop.f32.mrb[0].mxu0
    %2232 = vmatprep.mubr.f32.mxu0 0.0
    %2233 = vmatmul.mubr.f32.gmra.mrb[0].mxu0 %v961
    %v2234 = vpop.f32.mrb[0].mxu0
    %v2235 = vadd.f32 %v297, %v2234
    %v2236 = vpop.f32.mrb[0].mxu0
    %2237 = vmatprep.mubr.f32.mxu0 0.0
    %2238 = vmatmul.mubr.f32.gmra.mrb[0].mxu0 %v964
    %v2239 = vpop.f32.mrb[0].mxu0
    %v2240 = vadd.f32 %v297, %v2239
    %v2241 = vpop.f32.mrb[0].mxu0
    %2242 = vmatprep.mubr.f32.mxu0 0.0
    %2243 = vmatmul.mubr.f32.gmra.mrb[0].mxu0 %v967
    %v2244 = vpop.f32.mrb[0].mxu0
    %v2245 = vadd.f32 %v297, %v2244
    %v2246 = vpop.f32.mrb[0].mxu0
    %2247 = vmatprep.mubr.f32.mxu0 0.0
    %2248 = vmatmul.mubr.f32.gmra.mrb[0].mxu0 %v970
    %v2249 = vpop.f32.mrb[0].mxu0
    %v2250 = vadd.f32 %v297, %v2249
    %v2251 = vpop.f32.mrb[0].mxu0
    %2252 = vmatprep.mubr.f32.mxu0 0.0
    %2253 = vmatmul.mubr.f32.gmra.mrb[0].mxu0 %v973
    %v2254 = vpop.f32.mrb[0].mxu0
    %v2255 = vadd.f32 %v297, %v2254
    %v2256 = vpop.f32.mrb[0].mxu0
    %2257 = vmatprep.mubr.f32.mxu0 0.0
    %2258 = vmatmul.mubr.f32.gmra.mrb[0].mxu0 %v976
    %v2259 = vpop.f32.mrb[0].mxu0
    %v2260 = vadd.f32 %v297, %v2259
    %v2261 = vpop.f32.mrb[0].mxu0
    %2262 = vmatprep.mubr.f32.mxu0 0.0
    %2263 = vmatmul.mubr.f32.gmra.mrb[0].mxu0 %v979
    %v2264 = vpop.f32.mrb[0].mxu0
    %v2265 = vadd.f32 %v297, %v2264
    %v2266 = vpop.f32.mrb[0].mxu0
    %2267 = vmatprep.mubr.f32.mxu0 0.0
    %2268 = vmatmul.mubr.f32.gmra.mrb[0].mxu0 %v982
    %v2269 = vpop.f32.mrb[0].mxu0
    %v2270 = vadd.f32 %v297, %v2269
    %v2271 = vpop.f32.mrb[0].mxu0
    %2272 = vmatprep.mubr.f32.mxu0 0.0
    %2273 = vmatmul.mubr.f32.gmra.mrb[0].mxu0 %v985
    %v2274 = vpop.f32.mrb[0].mxu0
    %v2275 = vadd.f32 %v297, %v2274
    %v2276 = vpop.f32.mrb[0].mxu0
    %2277 = vmatprep.mubr.f32.mxu0 0.0
    %2278 = vmatmul.mubr.f32.gmra.mrb[0].mxu0 %v988
    %v2279 = vpop.f32.mrb[0].mxu0
    %v2280 = vadd.f32 %v297, %v2279
    %v2281 = vpop.f32.mrb[0].mxu0
    %2282 = vmatprep.mubr.f32.mxu0 0.0
    %2283 = vmatmul.mubr.f32.gmra.mrb[0].mxu0 %v991
    %v2284 = vpop.f32.mrb[0].mxu0
    %v2285 = vadd.f32 %v297, %v2284
    %v2286 = vpop.f32.mrb[0].mxu0
    %2287 = vmatprep.mubr.f32.mxu0 0.0
    %2288 = vmatmul.mubr.f32.gmra.mrb[0].mxu0 %v994
    %v2289 = vpop.f32.mrb[0].mxu0
    %v2290 = vadd.f32 %v297, %v2289
    %v2291 = vpop.f32.mrb[0].mxu0
    %2292 = vmatprep.mubr.f32.mxu0 0.0
    %2293 = vmatmul.mubr.f32.gmra.mrb[0].mxu0 %v997
    %v2294 = vpop.f32.mrb[0].mxu0
    %v2295 = vadd.f32 %v297, %v2294
    %v2296 = vpop.f32.mrb[0].mxu0
    %2297 = vmatprep.mubr.f32.mxu0 0.0
    %2298 = vmatmul.mubr.f32.gmra.mrb[0].mxu0 %v1000
    %v2299 = vpop.f32.mrb[0].mxu0
    %v2300 = vadd.f32 %v297, %v2299
    %v2301 = vpop.f32.mrb[0].mxu0
    %2302 = vmatprep.mubr.f32.mxu0 0.0
    %2303 = vmatmul.mubr.f32.gmra.mrb[0].mxu0 %v1003
    %v2304 = vpop.f32.mrb[0].mxu0
    %v2305 = vadd.f32 %v297, %v2304
    %v2306 = vpop.f32.mrb[0].mxu0
    %2307 = vmatprep.mubr.f32.mxu0 0.0
    %2308 = vmatmul.mubr.f32.gmra.mrb[0].mxu0 %v1006
    %v2309 = vpop.f32.mrb[0].mxu0
    %v2310 = vadd.f32 %v297, %v2309
    %v2311 = vpop.f32.mrb[0].mxu0
    %2312 = vmatprep.mubr.f32.mxu0 0.0
    %2313 = vmatmul.mubr.f32.gmra.mrb[0].mxu0 %v1009
    %v2314 = vpop.f32.mrb[0].mxu0
    %v2315 = vadd.f32 %v297, %v2314
    %v2316 = vpop.f32.mrb[0].mxu0
    %2317 = vmatprep.mubr.f32.mxu0 0.0
    %2318 = vmatmul.mubr.f32.gmra.mrb[0].mxu0 %v1012
    %v2319 = vpop.f32.mrb[0].mxu0
    %v2320 = vadd.f32 %v297, %v2319
    %v2321 = vpop.f32.mrb[0].mxu0
    %2322 = vmatprep.mubr.f32.mxu0 0.0
    %2323 = vmatmul.mubr.f32.gmra.mrb[0].mxu0 %v1015
    %v2324 = vpop.f32.mrb[0].mxu0
    %v2325 = vadd.f32 %v297, %v2324
    %v2326 = vpop.f32.mrb[0].mxu0
    %2327 = vmatprep.mubr.f32.mxu0 0.0
    %2328 = vmatmul.mubr.f32.gmra.mrb[0].mxu0 %v1018
    %v2329 = vpop.f32.mrb[0].mxu0
    %v2330 = vadd.f32 %v297, %v2329
    %v2331 = vpop.f32.mrb[0].mxu0
    %2332 = vmatprep.mubr.f32.mxu0 0.0
    %2333 = vmatmul.mubr.f32.gmra.mrb[0].mxu0 %v1021
    %v2334 = vpop.f32.mrb[0].mxu0
    %v2335 = vadd.f32 %v297, %v2334
    %v2336 = vpop.f32.mrb[0].mxu0
    %2337 = vmatprep.mubr.f32.mxu0 0.0
    %2338 = vmatmul.mubr.f32.gmra.mrb[0].mxu0 %v1024
    %v2339 = vpop.f32.mrb[0].mxu0
    %v2340 = vadd.f32 %v297, %v2339
    %v2341 = vpop.f32.mrb[0].mxu0
    %2342 = vmatprep.mubr.f32.mxu0 0.0
    %2343 = vmatmul.mubr.f32.gmra.mrb[0].mxu0 %v1027
    %v2344 = vpop.f32.mrb[0].mxu0
    %v2345 = vadd.f32 %v297, %v2344
    %v2346 = vpop.f32.mrb[0].mxu0
    %2347 = vmatprep.mubr.f32.mxu0 0.0
    %2348 = vmatmul.mubr.f32.gmra.mrb[0].mxu0 %v1030
    %v2349 = vpop.f32.mrb[0].mxu0
    %v2350 = vadd.f32 %v297, %v2349
    %v2351 = vpop.f32.mrb[0].mxu0
    %2352 = vmatprep.mubr.f32.mxu0 0.0
    %2353 = vmatmul.mubr.f32.gmra.mrb[0].mxu0 %v1033
    %v2354 = vpop.f32.mrb[0].mxu0
    %v2355 = vadd.f32 %v297, %v2354
    %v2356 = vpop.f32.mrb[0].mxu0
    %2357 = vmatprep.mubr.f32.mxu0 0.0
    %2358 = vmatmul.mubr.f32.gmra.mrb[0].mxu0 %v1036
    %v2359 = vpop.f32.mrb[0].mxu0
    %v2360 = vadd.f32 %v297, %v2359
    %v2361 = vpop.f32.mrb[0].mxu0
    %2362 = vmatprep.mubr.f32.mxu0 0.0
    %2363 = vmatmul.mubr.f32.gmra.mrb[0].mxu0 %v1039
    %v2364 = vpop.f32.mrb[0].mxu0
    %v2365 = vadd.f32 %v297, %v2364
    %v2366 = vpop.f32.mrb[0].mxu0
    %2367 = vmatprep.mubr.f32.mxu0 0.0
    %2368 = vmatmul.mubr.f32.gmra.mrb[0].mxu0 %v1042
    %v2369 = vpop.f32.mrb[0].mxu0
    %v2370 = vadd.f32 %v297, %v2369
    %v2371 = vpop.f32.mrb[0].mxu0
    %2372 = vmatprep.mubr.f32.mxu0 0.0
    %2373 = vmatmul.mubr.f32.gmra.mrb[0].mxu0 %v1045
    %v2374 = vpop.f32.mrb[0].mxu0
    %v2375 = vadd.f32 %v297, %v2374
    %v2376 = vpop.f32.mrb[0].mxu0
    %2377 = vmatprep.mubr.f32.mxu0 0.0
    %2378 = vmatmul.mubr.f32.gmra.mrb[0].mxu0 %v1048
    %v2379 = vpop.f32.mrb[0].mxu0
    %v2380 = vadd.f32 %v297, %v2379
    %v2381 = vpop.f32.mrb[0].mxu0
    %2382 = vmatprep.mubr.f32.mxu0 0.0
    %2383 = vmatmul.mubr.f32.gmra.mrb[0].mxu0 %v1051
    %v2384 = vpop.f32.mrb[0].mxu0
    %v2385 = vadd.f32 %v297, %v2384
    %v2386 = vpop.f32.mrb[0].mxu0
    %2387 = vmatprep.mubr.f32.mxu0 0.0
    %2388 = vmatmul.mubr.f32.gmra.mrb[0].mxu0 %v1054
    %v2389 = vpop.f32.mrb[0].mxu0
    %v2390 = vadd.f32 %v297, %v2389
    %v2391 = vpop.f32.mrb[0].mxu0
    %2392 = vmatprep.mubr.f32.mxu0 0.0
    %2393 = vmatmul.mubr.f32.gmra.mrb[0].mxu0 %v1057
    %v2394 = vpop.f32.mrb[0].mxu0
    %v2395 = vadd.f32 %v297, %v2394
    %v2396 = vpop.f32.mrb[0].mxu0
    %2397 = vmatprep.mubr.f32.mxu0 0.0
    %2398 = vmatmul.mubr.f32.gmra.mrb[0].mxu0 %v1060
    %v2399 = vpop.f32.mrb[0].mxu0
    %v2400 = vadd.f32 %v297, %v2399
    %v2401 = vpop.f32.mrb[0].mxu0
    %2402 = vmatprep.mubr.f32.mxu0 0.0
    %2403 = vmatmul.mubr.f32.gmra.mrb[0].mxu0 %v1063
    %v2404 = vpop.f32.mrb[0].mxu0
    %v2405 = vadd.f32 %v297, %v2404
    %v2406 = vpop.f32.mrb[0].mxu0
    %2407 = vmatprep.mubr.f32.mxu0 0.0
    %2408 = vmatmul.mubr.f32.gmra.mrb[0].mxu0 %v1066
    %v2409 = vpop.f32.mrb[0].mxu0
    %v2410 = vadd.f32 %v297, %v2409
    %v2411 = vpop.f32.mrb[0].mxu0
    %2412 = vdwg.mxu0
    %v2413 = vmax.f32 %v1135, 0.0
    %v2414 = vmax.f32 %v1140, 0.0
    %v2415 = vmax.f32 %v1145, 0.0
    %v2416 = vmax.f32 %v1150, 0.0
    %v2417 = vmax.f32 %v1155, 0.0
    %v2418 = vmax.f32 %v1160, 0.0
    %v2419 = vmax.f32 %v1165, 0.0
    %v2420 = vmax.f32 %v1170, 0.0
    %v2421 = vmax.f32 %v1175, 0.0
    %v2422 = vmax.f32 %v1180, 0.0
    %v2423 = vmax.f32 %v1185, 0.0
    %v2424 = vmax.f32 %v1190, 0.0
    %v2425 = vmax.f32 %v1195, 0.0
    %v2426 = vmax.f32 %v1200, 0.0
    %v2427 = vmax.f32 %v1205, 0.0
    %v2428 = vmax.f32 %v1210, 0.0
    %v2429 = vmax.f32 %v1215, 0.0
    %v2430 = vmax.f32 %v1220, 0.0
    %v2431 = vmax.f32 %v1225, 0.0
    %v2432 = vmax.f32 %v1230, 0.0
    %v2433 = vmax.f32 %v1235, 0.0
    %v2434 = vmax.f32 %v1240, 0.0
    %v2435 = vmax.f32 %v1245, 0.0
    %v2436 = vmax.f32 %v1250, 0.0
    %v2437 = vmax.f32 %v1255, 0.0
    %v2438 = vmax.f32 %v1260, 0.0
    %v2439 = vmax.f32 %v1265, 0.0
    %v2440 = vmax.f32 %v1270, 0.0
    %v2441 = vmax.f32 %v1275, 0.0
    %v2442 = vmax.f32 %v1280, 0.0
    %v2443 = vmax.f32 %v1285, 0.0
    %v2444 = vmax.f32 %v1290, 0.0
    %v2445 = vmax.f32 %v1295, 0.0
    %v2446 = vmax.f32 %v1300, 0.0
    %v2447 = vmax.f32 %v1305, 0.0
    %v2448 = vmax.f32 %v1310, 0.0
    %v2449 = vmax.f32 %v1315, 0.0
    %v2450 = vmax.f32 %v1320, 0.0
    %v2451 = vmax.f32 %v1325, 0.0
    %v2452 = vmax.f32 %v1330, 0.0
    %v2453 = vmax.f32 %v1335, 0.0
    %v2454 = vmax.f32 %v1340, 0.0
    %v2455 = vmax.f32 %v1345, 0.0
    %v2456 = vmax.f32 %v1350, 0.0
    %v2457 = vmax.f32 %v1355, 0.0
    %v2458 = vmax.f32 %v1360, 0.0
    %v2459 = vmax.f32 %v1365, 0.0
    %v2460 = vmax.f32 %v1370, 0.0
    %v2461 = vmax.f32 %v1375, 0.0
    %v2462 = vmax.f32 %v1380, 0.0
    %v2463 = vmax.f32 %v1385, 0.0
    %v2464 = vmax.f32 %v1390, 0.0
    %v2465 = vmax.f32 %v1395, 0.0
    %v2466 = vmax.f32 %v1400, 0.0
    %v2467 = vmax.f32 %v1405, 0.0
    %v2468 = vmax.f32 %v1410, 0.0
    %v2469 = vmax.f32 %v1415, 0.0
    %v2470 = vmax.f32 %v1420, 0.0
    %v2471 = vmax.f32 %v1425, 0.0
    %v2472 = vmax.f32 %v1430, 0.0
    %v2473 = vmax.f32 %v1435, 0.0
    %v2474 = vmax.f32 %v1440, 0.0
    %v2475 = vmax.f32 %v1445, 0.0
    %v2476 = vmax.f32 %v1450, 0.0
    %v2477 = vmax.f32 %v1455, 0.0
    %v2478 = vmax.f32 %v1460, 0.0
    %v2479 = vmax.f32 %v1465, 0.0
    %v2480 = vmax.f32 %v1470, 0.0
    %v2481 = vmax.f32 %v1475, 0.0
    %v2482 = vmax.f32 %v1480, 0.0
    %v2483 = vmax.f32 %v1485, 0.0
    %v2484 = vmax.f32 %v1490, 0.0
    %v2485 = vmax.f32 %v1495, 0.0
    %v2486 = vmax.f32 %v1500, 0.0
    %v2487 = vmax.f32 %v1505, 0.0
    %v2488 = vmax.f32 %v1510, 0.0
    %v2489 = vmax.f32 %v1515, 0.0
    %v2490 = vmax.f32 %v1520, 0.0
    %v2491 = vmax.f32 %v1525, 0.0
    %v2492 = vmax.f32 %v1530, 0.0
    %v2493 = vmax.f32 %v1535, 0.0
    %v2494 = vmax.f32 %v1540, 0.0
    %v2495 = vmax.f32 %v1545, 0.0
    %v2496 = vmax.f32 %v1550, 0.0
    %v2497 = vmax.f32 %v1555, 0.0
    %v2498 = vmax.f32 %v1560, 0.0
    %v2499 = vmax.f32 %v1565, 0.0
    %v2500 = vmax.f32 %v1570, 0.0
    %v2501 = vmax.f32 %v1575, 0.0
    %v2502 = vmax.f32 %v1580, 0.0
    %v2503 = vmax.f32 %v1585, 0.0
    %v2504 = vmax.f32 %v1590, 0.0
    %v2505 = vmax.f32 %v1595, 0.0
    %v2506 = vmax.f32 %v1600, 0.0
    %v2507 = vmax.f32 %v1605, 0.0
    %v2508 = vmax.f32 %v1610, 0.0
    %v2509 = vmax.f32 %v1615, 0.0
    %v2510 = vmax.f32 %v1620, 0.0
    %v2511 = vmax.f32 %v1625, 0.0
    %v2512 = vmax.f32 %v1630, 0.0
    %v2513 = vmax.f32 %v1635, 0.0
    %v2514 = vmax.f32 %v1640, 0.0
    %v2515 = vmax.f32 %v1645, 0.0
    %v2516 = vmax.f32 %v1650, 0.0
    %v2517 = vmax.f32 %v1655, 0.0
    %v2518 = vmax.f32 %v1660, 0.0
    %v2519 = vmax.f32 %v1665, 0.0
    %v2520 = vmax.f32 %v1670, 0.0
    %v2521 = vmax.f32 %v1675, 0.0
    %v2522 = vmax.f32 %v1680, 0.0
    %v2523 = vmax.f32 %v1685, 0.0
    %v2524 = vmax.f32 %v1690, 0.0
    %v2525 = vmax.f32 %v1695, 0.0
    %v2526 = vmax.f32 %v1700, 0.0
    %v2527 = vmax.f32 %v1705, 0.0
    %v2528 = vmax.f32 %v1710, 0.0
    %v2529 = vmax.f32 %v1715, 0.0
    %v2530 = vmax.f32 %v1720, 0.0
    %v2531 = vmax.f32 %v1725, 0.0
    %v2532 = vmax.f32 %v1730, 0.0
    %v2533 = vmax.f32 %v1735, 0.0
    %v2534 = vmax.f32 %v1740, 0.0
    %v2535 = vmax.f32 %v1745, 0.0
    %v2536 = vmax.f32 %v1750, 0.0
    %v2537 = vmax.f32 %v1755, 0.0
    %v2538 = vmax.f32 %v1760, 0.0
    %v2539 = vmax.f32 %v1765, 0.0
    %v2540 = vmax.f32 %v1770, 0.0
    %v2541 = vmax.f32 %v1775, 0.0
    %v2542 = vmax.f32 %v1780, 0.0
    %v2543 = vmax.f32 %v1785, 0.0
    %v2544 = vmax.f32 %v1790, 0.0
    %v2545 = vmax.f32 %v1795, 0.0
    %v2546 = vmax.f32 %v1800, 0.0
    %v2547 = vmax.f32 %v1805, 0.0
    %v2548 = vmax.f32 %v1810, 0.0
    %v2549 = vmax.f32 %v1815, 0.0
    %v2550 = vmax.f32 %v1820, 0.0
    %v2551 = vmax.f32 %v1825, 0.0
    %v2552 = vmax.f32 %v1830, 0.0
    %v2553 = vmax.f32 %v1835, 0.0
    %v2554 = vmax.f32 %v1840, 0.0
    %v2555 = vmax.f32 %v1845, 0.0
    %v2556 = vmax.f32 %v1850, 0.0
    %v2557 = vmax.f32 %v1855, 0.0
    %v2558 = vmax.f32 %v1860, 0.0
    %v2559 = vmax.f32 %v1865, 0.0
    %v2560 = vmax.f32 %v1870, 0.0
    %v2561 = vmax.f32 %v1875, 0.0
    %v2562 = vmax.f32 %v1880, 0.0
    %v2563 = vmax.f32 %v1885, 0.0
    %v2564 = vmax.f32 %v1890, 0.0
    %v2565 = vmax.f32 %v1895, 0.0
    %v2566 = vmax.f32 %v1900, 0.0
    %v2567 = vmax.f32 %v1905, 0.0
    %v2568 = vmax.f32 %v1910, 0.0
    %v2569 = vmax.f32 %v1915, 0.0
    %v2570 = vmax.f32 %v1920, 0.0
    %v2571 = vmax.f32 %v1925, 0.0
    %v2572 = vmax.f32 %v1930, 0.0
    %v2573 = vmax.f32 %v1935, 0.0
    %v2574 = vmax.f32 %v1940, 0.0
    %v2575 = vmax.f32 %v1945, 0.0
    %v2576 = vmax.f32 %v1950, 0.0
    %v2577 = vmax.f32 %v1955, 0.0
    %v2578 = vmax.f32 %v1960, 0.0
    %v2579 = vmax.f32 %v1965, 0.0
    %v2580 = vmax.f32 %v1970, 0.0
    %v2581 = vmax.f32 %v1975, 0.0
    %v2582 = vmax.f32 %v1980, 0.0
    %v2583 = vmax.f32 %v1985, 0.0
    %v2584 = vmax.f32 %v1990, 0.0
    %v2585 = vmax.f32 %v1995, 0.0
    %v2586 = vmax.f32 %v2000, 0.0
    %v2587 = vmax.f32 %v2005, 0.0
    %v2588 = vmax.f32 %v2010, 0.0
    %v2589 = vmax.f32 %v2015, 0.0
    %v2590 = vmax.f32 %v2020, 0.0
    %v2591 = vmax.f32 %v2025, 0.0
    %v2592 = vmax.f32 %v2030, 0.0
    %v2593 = vmax.f32 %v2035, 0.0
    %v2594 = vmax.f32 %v2040, 0.0
    %v2595 = vmax.f32 %v2045, 0.0
    %v2596 = vmax.f32 %v2050, 0.0
    %v2597 = vmax.f32 %v2055, 0.0
    %v2598 = vmax.f32 %v2060, 0.0
    %v2599 = vmax.f32 %v2065, 0.0
    %v2600 = vmax.f32 %v2070, 0.0
    %v2601 = vmax.f32 %v2075, 0.0
    %v2602 = vmax.f32 %v2080, 0.0
    %v2603 = vmax.f32 %v2085, 0.0
    %v2604 = vmax.f32 %v2090, 0.0
    %v2605 = vmax.f32 %v2095, 0.0
    %v2606 = vmax.f32 %v2100, 0.0
    %v2607 = vmax.f32 %v2105, 0.0
    %v2608 = vmax.f32 %v2110, 0.0
    %v2609 = vmax.f32 %v2115, 0.0
    %v2610 = vmax.f32 %v2120, 0.0
    %v2611 = vmax.f32 %v2125, 0.0
    %v2612 = vmax.f32 %v2130, 0.0
    %v2613 = vmax.f32 %v2135, 0.0
    %v2614 = vmax.f32 %v2140, 0.0
    %v2615 = vmax.f32 %v2145, 0.0
    %v2616 = vmax.f32 %v2150, 0.0
    %v2617 = vmax.f32 %v2155, 0.0
    %v2618 = vmax.f32 %v2160, 0.0
    %v2619 = vmax.f32 %v2165, 0.0
    %v2620 = vmax.f32 %v2170, 0.0
    %v2621 = vmax.f32 %v2175, 0.0
    %v2622 = vmax.f32 %v2180, 0.0
    %v2623 = vmax.f32 %v2185, 0.0
    %v2624 = vmax.f32 %v2190, 0.0
    %v2625 = vmax.f32 %v2195, 0.0
    %v2626 = vmax.f32 %v2200, 0.0
    %v2627 = vmax.f32 %v2205, 0.0
    %v2628 = vmax.f32 %v2210, 0.0
    %v2629 = vmax.f32 %v2215, 0.0
    %v2630 = vmax.f32 %v2220, 0.0
    %v2631 = vmax.f32 %v2225, 0.0
    %v2632 = vmax.f32 %v2230, 0.0
    %v2633 = vmax.f32 %v2235, 0.0
    %v2634 = vmax.f32 %v2240, 0.0
    %v2635 = vmax.f32 %v2245, 0.0
    %v2636 = vmax.f32 %v2250, 0.0
    %v2637 = vmax.f32 %v2255, 0.0
    %v2638 = vmax.f32 %v2260, 0.0
    %v2639 = vmax.f32 %v2265, 0.0
    %v2640 = vmax.f32 %v2270, 0.0
    %v2641 = vmax.f32 %v2275, 0.0
    %v2642 = vmax.f32 %v2280, 0.0
    %v2643 = vmax.f32 %v2285, 0.0
    %v2644 = vmax.f32 %v2290, 0.0
    %v2645 = vmax.f32 %v2295, 0.0
    %v2646 = vmax.f32 %v2300, 0.0
    %v2647 = vmax.f32 %v2305, 0.0
    %v2648 = vmax.f32 %v2310, 0.0
    %v2649 = vmax.f32 %v2315, 0.0
    %v2650 = vmax.f32 %v2320, 0.0
    %v2651 = vmax.f32 %v2325, 0.0
    %v2652 = vmax.f32 %v2330, 0.0
    %v2653 = vmax.f32 %v2335, 0.0
    %v2654 = vmax.f32 %v2340, 0.0
    %v2655 = vmax.f32 %v2345, 0.0
    %v2656 = vmax.f32 %v2350, 0.0
    %v2657 = vmax.f32 %v2355, 0.0
    %v2658 = vmax.f32 %v2360, 0.0
    %v2659 = vmax.f32 %v2365, 0.0
    %v2660 = vmax.f32 %v2370, 0.0
    %v2661 = vmax.f32 %v2375, 0.0
    %v2662 = vmax.f32 %v2380, 0.0
    %v2663 = vmax.f32 %v2385, 0.0
    %v2664 = vmax.f32 %v2390, 0.0
    %v2665 = vmax.f32 %v2395, 0.0
    %v2666 = vmax.f32 %v2400, 0.0
    %v2667 = vmax.f32 %v2405, 0.0
    %v2668 = vmax.f32 %v2410, 0.0
    %2669 = vst.msk [vmem:[#allocation2] sm:$0xff] %vm299, %v2413
    %2670 = vst.msk [vmem:[#allocation2 + $0x8] sm:$0xff] %vm299, %v2414
    %2671 = vst.msk [vmem:[#allocation2 + $0x10] sm:$0xff] %vm299, %v2415
    %2672 = vst.msk [vmem:[#allocation2 + $0x18] sm:$0xff] %vm299, %v2416
    %2673 = vst.msk [vmem:[#allocation2 + $0x20] sm:$0xff] %vm299, %v2417
    %2674 = vst.msk [vmem:[#allocation2 + $0x28] sm:$0xff] %vm299, %v2418
    %2675 = vst.msk [vmem:[#allocation2 + $0x30] sm:$0xff] %vm299, %v2419
    %2676 = vst.msk [vmem:[#allocation2 + $0x38] sm:$0xff] %vm299, %v2420
    %2677 = vst.msk [vmem:[#allocation2 + $0x40] sm:$0xff] %vm299, %v2421
    %2678 = vst.msk [vmem:[#allocation2 + $0x48] sm:$0xff] %vm299, %v2422
    %2679 = vst.msk [vmem:[#allocation2 + $0x50] sm:$0xff] %vm299, %v2423
    %2680 = vst.msk [vmem:[#allocation2 + $0x58] sm:$0xff] %vm299, %v2424
    %2681 = vst.msk [vmem:[#allocation2 + $0x60] sm:$0xff] %vm299, %v2425
    %2682 = vst.msk [vmem:[#allocation2 + $0x68] sm:$0xff] %vm299, %v2426
    %2683 = vst.msk [vmem:[#allocation2 + $0x70] sm:$0xff] %vm299, %v2427
    %2684 = vst.msk [vmem:[#allocation2 + $0x78] sm:$0xff] %vm299, %v2428
    %2685 = vst.msk [vmem:[#allocation2 + $0x80] sm:$0xff] %vm299, %v2429
    %2686 = vst.msk [vmem:[#allocation2 + $0x88] sm:$0xff] %vm299, %v2430
    %2687 = vst.msk [vmem:[#allocation2 + $0x90] sm:$0xff] %vm299, %v2431
    %2688 = vst.msk [vmem:[#allocation2 + $0x98] sm:$0xff] %vm299, %v2432
    %2689 = vst.msk [vmem:[#allocation2 + $0xa0] sm:$0xff] %vm299, %v2433
    %2690 = vst.msk [vmem:[#allocation2 + $0xa8] sm:$0xff] %vm299, %v2434
    %2691 = vst.msk [vmem:[#allocation2 + $0xb0] sm:$0xff] %vm299, %v2435
    %2692 = vst.msk [vmem:[#allocation2 + $0xb8] sm:$0xff] %vm299, %v2436
    %2693 = vst.msk [vmem:[#allocation2 + $0xc0] sm:$0xff] %vm299, %v2437
    %2694 = vst.msk [vmem:[#allocation2 + $0xc8] sm:$0xff] %vm299, %v2438
    %2695 = vst.msk [vmem:[#allocation2 + $0xd0] sm:$0xff] %vm299, %v2439
    %2696 = vst.msk [vmem:[#allocation2 + $0xd8] sm:$0xff] %vm299, %v2440
    %2697 = vst.msk [vmem:[#allocation2 + $0xe0] sm:$0xff] %vm299, %v2441
    %2698 = vst.msk [vmem:[#allocation2 + $0xe8] sm:$0xff] %vm299, %v2442
    %2699 = vst.msk [vmem:[#allocation2 + $0xf0] sm:$0xff] %vm299, %v2443
    %2700 = vst.msk [vmem:[#allocation2 + $0xf8] sm:$0xff] %vm299, %v2444
    %2701 = vst.msk [vmem:[#allocation2 + $0x100] sm:$0xff] %vm299, %v2445
    %2702 = vst.msk [vmem:[#allocation2 + $0x108] sm:$0xff] %vm299, %v2446
    %2703 = vst.msk [vmem:[#allocation2 + $0x110] sm:$0xff] %vm299, %v2447
    %2704 = vst.msk [vmem:[#allocation2 + $0x118] sm:$0xff] %vm299, %v2448
    %2705 = vst.msk [vmem:[#allocation2 + $0x120] sm:$0xff] %vm299, %v2449
    %2706 = vst.msk [vmem:[#allocation2 + $0x128] sm:$0xff] %vm299, %v2450
    %2707 = vst.msk [vmem:[#allocation2 + $0x130] sm:$0xff] %vm299, %v2451
    %2708 = vst.msk [vmem:[#allocation2 + $0x138] sm:$0xff] %vm299, %v2452
    %2709 = vst.msk [vmem:[#allocation2 + $0x140] sm:$0xff] %vm299, %v2453
    %2710 = vst.msk [vmem:[#allocation2 + $0x148] sm:$0xff] %vm299, %v2454
    %2711 = vst.msk [vmem:[#allocation2 + $0x150] sm:$0xff] %vm299, %v2455
    %2712 = vst.msk [vmem:[#allocation2 + $0x158] sm:$0xff] %vm299, %v2456
    %2713 = vst.msk [vmem:[#allocation2 + $0x160] sm:$0xff] %vm299, %v2457
    %2714 = vst.msk [vmem:[#allocation2 + $0x168] sm:$0xff] %vm299, %v2458
    %2715 = vst.msk [vmem:[#allocation2 + $0x170] sm:$0xff] %vm299, %v2459
    %2716 = vst.msk [vmem:[#allocation2 + $0x178] sm:$0xff] %vm299, %v2460
    %2717 = vst.msk [vmem:[#allocation2 + $0x180] sm:$0xff] %vm299, %v2461
    %2718 = vst.msk [vmem:[#allocation2 + $0x188] sm:$0xff] %vm299, %v2462
    %2719 = vst.msk [vmem:[#allocation2 + $0x190] sm:$0xff] %vm299, %v2463
    %2720 = vst.msk [vmem:[#allocation2 + $0x198] sm:$0xff] %vm299, %v2464
    %2721 = vst.msk [vmem:[#allocation2 + $0x1a0] sm:$0xff] %vm299, %v2465
    %2722 = vst.msk [vmem:[#allocation2 + $0x1a8] sm:$0xff] %vm299, %v2466
    %2723 = vst.msk [vmem:[#allocation2 + $0x1b0] sm:$0xff] %vm299, %v2467
    %2724 = vst.msk [vmem:[#allocation2 + $0x1b8] sm:$0xff] %vm299, %v2468
    %2725 = vst.msk [vmem:[#allocation2 + $0x1c0] sm:$0xff] %vm299, %v2469
    %2726 = vst.msk [vmem:[#allocation2 + $0x1c8] sm:$0xff] %vm299, %v2470
    %2727 = vst.msk [vmem:[#allocation2 + $0x1d0] sm:$0xff] %vm299, %v2471
    %2728 = vst.msk [vmem:[#allocation2 + $0x1d8] sm:$0xff] %vm299, %v2472
    %2729 = vst.msk [vmem:[#allocation2 + $0x1e0] sm:$0xff] %vm299, %v2473
    %2730 = vst.msk [vmem:[#allocation2 + $0x1e8] sm:$0xff] %vm299, %v2474
    %2731 = vst.msk [vmem:[#allocation2 + $0x1f0] sm:$0xff] %vm299, %v2475
    %2732 = vst.msk [vmem:[#allocation2 + $0x1f8] sm:$0xff] %vm299, %v2476
    %2733 = vst.msk [vmem:[#allocation2 + $0x200] sm:$0xff] %vm299, %v2477
    %2734 = vst.msk [vmem:[#allocation2 + $0x208] sm:$0xff] %vm299, %v2478
    %2735 = vst.msk [vmem:[#allocation2 + $0x210] sm:$0xff] %vm299, %v2479
    %2736 = vst.msk [vmem:[#allocation2 + $0x218] sm:$0xff] %vm299, %v2480
    %2737 = vst.msk [vmem:[#allocation2 + $0x220] sm:$0xff] %vm299, %v2481
    %2738 = vst.msk [vmem:[#allocation2 + $0x228] sm:$0xff] %vm299, %v2482
    %2739 = vst.msk [vmem:[#allocation2 + $0x230] sm:$0xff] %vm299, %v2483
    %2740 = vst.msk [vmem:[#allocation2 + $0x238] sm:$0xff] %vm299, %v2484
    %2741 = vst.msk [vmem:[#allocation2 + $0x240] sm:$0xff] %vm299, %v2485
    %2742 = vst.msk [vmem:[#allocation2 + $0x248] sm:$0xff] %vm299, %v2486
    %2743 = vst.msk [vmem:[#allocation2 + $0x250] sm:$0xff] %vm299, %v2487
    %2744 = vst.msk [vmem:[#allocation2 + $0x258] sm:$0xff] %vm299, %v2488
    %2745 = vst.msk [vmem:[#allocation2 + $0x260] sm:$0xff] %vm299, %v2489
    %2746 = vst.msk [vmem:[#allocation2 + $0x268] sm:$0xff] %vm299, %v2490
    %2747 = vst.msk [vmem:[#allocation2 + $0x270] sm:$0xff] %vm299, %v2491
    %2748 = vst.msk [vmem:[#allocation2 + $0x278] sm:$0xff] %vm299, %v2492
    %2749 = vst.msk [vmem:[#allocation2 + $0x280] sm:$0xff] %vm299, %v2493
    %2750 = vst.msk [vmem:[#allocation2 + $0x288] sm:$0xff] %vm299, %v2494
    %2751 = vst.msk [vmem:[#allocation2 + $0x290] sm:$0xff] %vm299, %v2495
    %2752 = vst.msk [vmem:[#allocation2 + $0x298] sm:$0xff] %vm299, %v2496
    %2753 = vst.msk [vmem:[#allocation2 + $0x2a0] sm:$0xff] %vm299, %v2497
    %2754 = vst.msk [vmem:[#allocation2 + $0x2a8] sm:$0xff] %vm299, %v2498
    %2755 = vst.msk [vmem:[#allocation2 + $0x2b0] sm:$0xff] %vm299, %v2499
    %2756 = vst.msk [vmem:[#allocation2 + $0x2b8] sm:$0xff] %vm299, %v2500
    %2757 = vst.msk [vmem:[#allocation2 + $0x2c0] sm:$0xff] %vm299, %v2501
    %2758 = vst.msk [vmem:[#allocation2 + $0x2c8] sm:$0xff] %vm299, %v2502
    %2759 = vst.msk [vmem:[#allocation2 + $0x2d0] sm:$0xff] %vm299, %v2503
    %2760 = vst.msk [vmem:[#allocation2 + $0x2d8] sm:$0xff] %vm299, %v2504
    %2761 = vst.msk [vmem:[#allocation2 + $0x2e0] sm:$0xff] %vm299, %v2505
    %2762 = vst.msk [vmem:[#allocation2 + $0x2e8] sm:$0xff] %vm299, %v2506
    %2763 = vst.msk [vmem:[#allocation2 + $0x2f0] sm:$0xff] %vm299, %v2507
    %2764 = vst.msk [vmem:[#allocation2 + $0x2f8] sm:$0xff] %vm299, %v2508
    %2765 = vst.msk [vmem:[#allocation2 + $0x300] sm:$0xff] %vm299, %v2509
    %2766 = vst.msk [vmem:[#allocation2 + $0x308] sm:$0xff] %vm299, %v2510
    %2767 = vst.msk [vmem:[#allocation2 + $0x310] sm:$0xff] %vm299, %v2511
    %2768 = vst.msk [vmem:[#allocation2 + $0x318] sm:$0xff] %vm299, %v2512
    %2769 = vst.msk [vmem:[#allocation2 + $0x320] sm:$0xff] %vm299, %v2513
    %2770 = vst.msk [vmem:[#allocation2 + $0x328] sm:$0xff] %vm299, %v2514
    %2771 = vst.msk [vmem:[#allocation2 + $0x330] sm:$0xff] %vm299, %v2515
    %2772 = vst.msk [vmem:[#allocation2 + $0x338] sm:$0xff] %vm299, %v2516
    %2773 = vst.msk [vmem:[#allocation2 + $0x340] sm:$0xff] %vm299, %v2517
    %2774 = vst.msk [vmem:[#allocation2 + $0x348] sm:$0xff] %vm299, %v2518
    %2775 = vst.msk [vmem:[#allocation2 + $0x350] sm:$0xff] %vm299, %v2519
    %2776 = vst.msk [vmem:[#allocation2 + $0x358] sm:$0xff] %vm299, %v2520
    %2777 = vst.msk [vmem:[#allocation2 + $0x360] sm:$0xff] %vm299, %v2521
    %2778 = vst.msk [vmem:[#allocation2 + $0x368] sm:$0xff] %vm299, %v2522
    %2779 = vst.msk [vmem:[#allocation2 + $0x370] sm:$0xff] %vm299, %v2523
    %2780 = vst.msk [vmem:[#allocation2 + $0x378] sm:$0xff] %vm299, %v2524
    %2781 = vst.msk [vmem:[#allocation2 + $0x380] sm:$0xff] %vm299, %v2525
    %2782 = vst.msk [vmem:[#allocation2 + $0x388] sm:$0xff] %vm299, %v2526
    %2783 = vst.msk [vmem:[#allocation2 + $0x390] sm:$0xff] %vm299, %v2527
    %2784 = vst.msk [vmem:[#allocation2 + $0x398] sm:$0xff] %vm299, %v2528
    %2785 = vst.msk [vmem:[#allocation2 + $0x3a0] sm:$0xff] %vm299, %v2529
    %2786 = vst.msk [vmem:[#allocation2 + $0x3a8] sm:$0xff] %vm299, %v2530
    %2787 = vst.msk [vmem:[#allocation2 + $0x3b0] sm:$0xff] %vm299, %v2531
    %2788 = vst.msk [vmem:[#allocation2 + $0x3b8] sm:$0xff] %vm299, %v2532
    %2789 = vst.msk [vmem:[#allocation2 + $0x3c0] sm:$0xff] %vm299, %v2533
    %2790 = vst.msk [vmem:[#allocation2 + $0x3c8] sm:$0xff] %vm299, %v2534
    %2791 = vst.msk [vmem:[#allocation2 + $0x3d0] sm:$0xff] %vm299, %v2535
    %2792 = vst.msk [vmem:[#allocation2 + $0x3d8] sm:$0xff] %vm299, %v2536
    %2793 = vst.msk [vmem:[#allocation2 + $0x3e0] sm:$0xff] %vm299, %v2537
    %2794 = vst.msk [vmem:[#allocation2 + $0x3e8] sm:$0xff] %vm299, %v2538
    %2795 = vst.msk [vmem:[#allocation2 + $0x3f0] sm:$0xff] %vm299, %v2539
    %2796 = vst.msk [vmem:[#allocation2 + $0x3f8] sm:$0xff] %vm299, %v2540
    %2797 = vst.msk [vmem:[#allocation2 + $0x400] sm:$0xff] %vm299, %v2541
    %2798 = vst.msk [vmem:[#allocation2 + $0x408] sm:$0xff] %vm299, %v2542
    %2799 = vst.msk [vmem:[#allocation2 + $0x410] sm:$0xff] %vm299, %v2543
    %2800 = vst.msk [vmem:[#allocation2 + $0x418] sm:$0xff] %vm299, %v2544
    %2801 = vst.msk [vmem:[#allocation2 + $0x420] sm:$0xff] %vm299, %v2545
    %2802 = vst.msk [vmem:[#allocation2 + $0x428] sm:$0xff] %vm299, %v2546
    %2803 = vst.msk [vmem:[#allocation2 + $0x430] sm:$0xff] %vm299, %v2547
    %2804 = vst.msk [vmem:[#allocation2 + $0x438] sm:$0xff] %vm299, %v2548
    %2805 = vst.msk [vmem:[#allocation2 + $0x440] sm:$0xff] %vm299, %v2549
    %2806 = vst.msk [vmem:[#allocation2 + $0x448] sm:$0xff] %vm299, %v2550
    %2807 = vst.msk [vmem:[#allocation2 + $0x450] sm:$0xff] %vm299, %v2551
    %2808 = vst.msk [vmem:[#allocation2 + $0x458] sm:$0xff] %vm299, %v2552
    %2809 = vst.msk [vmem:[#allocation2 + $0x460] sm:$0xff] %vm299, %v2553
    %2810 = vst.msk [vmem:[#allocation2 + $0x468] sm:$0xff] %vm299, %v2554
    %2811 = vst.msk [vmem:[#allocation2 + $0x470] sm:$0xff] %vm299, %v2555
    %2812 = vst.msk [vmem:[#allocation2 + $0x478] sm:$0xff] %vm299, %v2556
    %2813 = vst.msk [vmem:[#allocation2 + $0x480] sm:$0xff] %vm299, %v2557
    %2814 = vst.msk [vmem:[#allocation2 + $0x488] sm:$0xff] %vm299, %v2558
    %2815 = vst.msk [vmem:[#allocation2 + $0x490] sm:$0xff] %vm299, %v2559
    %2816 = vst.msk [vmem:[#allocation2 + $0x498] sm:$0xff] %vm299, %v2560
    %2817 = vst.msk [vmem:[#allocation2 + $0x4a0] sm:$0xff] %vm299, %v2561
    %2818 = vst.msk [vmem:[#allocation2 + $0x4a8] sm:$0xff] %vm299, %v2562
    %2819 = vst.msk [vmem:[#allocation2 + $0x4b0] sm:$0xff] %vm299, %v2563
    %2820 = vst.msk [vmem:[#allocation2 + $0x4b8] sm:$0xff] %vm299, %v2564
    %2821 = vst.msk [vmem:[#allocation2 + $0x4c0] sm:$0xff] %vm299, %v2565
    %2822 = vst.msk [vmem:[#allocation2 + $0x4c8] sm:$0xff] %vm299, %v2566
    %2823 = vst.msk [vmem:[#allocation2 + $0x4d0] sm:$0xff] %vm299, %v2567
    %2824 = vst.msk [vmem:[#allocation2 + $0x4d8] sm:$0xff] %vm299, %v2568
    %2825 = vst.msk [vmem:[#allocation2 + $0x4e0] sm:$0xff] %vm299, %v2569
    %2826 = vst.msk [vmem:[#allocation2 + $0x4e8] sm:$0xff] %vm299, %v2570
    %2827 = vst.msk [vmem:[#allocation2 + $0x4f0] sm:$0xff] %vm299, %v2571
    %2828 = vst.msk [vmem:[#allocation2 + $0x4f8] sm:$0xff] %vm299, %v2572
    %2829 = vst.msk [vmem:[#allocation2 + $0x500] sm:$0xff] %vm299, %v2573
    %2830 = vst.msk [vmem:[#allocation2 + $0x508] sm:$0xff] %vm299, %v2574
    %2831 = vst.msk [vmem:[#allocation2 + $0x510] sm:$0xff] %vm299, %v2575
    %2832 = vst.msk [vmem:[#allocation2 + $0x518] sm:$0xff] %vm299, %v2576
    %2833 = vst.msk [vmem:[#allocation2 + $0x520] sm:$0xff] %vm299, %v2577
    %2834 = vst.msk [vmem:[#allocation2 + $0x528] sm:$0xff] %vm299, %v2578
    %2835 = vst.msk [vmem:[#allocation2 + $0x530] sm:$0xff] %vm299, %v2579
    %2836 = vst.msk [vmem:[#allocation2 + $0x538] sm:$0xff] %vm299, %v2580
    %2837 = vst.msk [vmem:[#allocation2 + $0x540] sm:$0xff] %vm299, %v2581
    %2838 = vst.msk [vmem:[#allocation2 + $0x548] sm:$0xff] %vm299, %v2582
    %2839 = vst.msk [vmem:[#allocation2 + $0x550] sm:$0xff] %vm299, %v2583
    %2840 = vst.msk [vmem:[#allocation2 + $0x558] sm:$0xff] %vm299, %v2584
    %2841 = vst.msk [vmem:[#allocation2 + $0x560] sm:$0xff] %vm299, %v2585
    %2842 = vst.msk [vmem:[#allocation2 + $0x568] sm:$0xff] %vm299, %v2586
    %2843 = vst.msk [vmem:[#allocation2 + $0x570] sm:$0xff] %vm299, %v2587
    %2844 = vst.msk [vmem:[#allocation2 + $0x578] sm:$0xff] %vm299, %v2588
    %2845 = vst.msk [vmem:[#allocation2 + $0x580] sm:$0xff] %vm299, %v2589
    %2846 = vst.msk [vmem:[#allocation2 + $0x588] sm:$0xff] %vm299, %v2590
    %2847 = vst.msk [vmem:[#allocation2 + $0x590] sm:$0xff] %vm299, %v2591
    %2848 = vst.msk [vmem:[#allocation2 + $0x598] sm:$0xff] %vm299, %v2592
    %2849 = vst.msk [vmem:[#allocation2 + $0x5a0] sm:$0xff] %vm299, %v2593
    %2850 = vst.msk [vmem:[#allocation2 + $0x5a8] sm:$0xff] %vm299, %v2594
    %2851 = vst.msk [vmem:[#allocation2 + $0x5b0] sm:$0xff] %vm299, %v2595
    %2852 = vst.msk [vmem:[#allocation2 + $0x5b8] sm:$0xff] %vm299, %v2596
    %2853 = vst.msk [vmem:[#allocation2 + $0x5c0] sm:$0xff] %vm299, %v2597
    %2854 = vst.msk [vmem:[#allocation2 + $0x5c8] sm:$0xff] %vm299, %v2598
    %2855 = vst.msk [vmem:[#allocation2 + $0x5d0] sm:$0xff] %vm299, %v2599
    %2856 = vst.msk [vmem:[#allocation2 + $0x5d8] sm:$0xff] %vm299, %v2600
    %2857 = vst.msk [vmem:[#allocation2 + $0x5e0] sm:$0xff] %vm299, %v2601
    %2858 = vst.msk [vmem:[#allocation2 + $0x5e8] sm:$0xff] %vm299, %v2602
    %2859 = vst.msk [vmem:[#allocation2 + $0x5f0] sm:$0xff] %vm299, %v2603
    %2860 = vst.msk [vmem:[#allocation2 + $0x5f8] sm:$0xff] %vm299, %v2604
    %2861 = vst.msk [vmem:[#allocation2 + $0x600] sm:$0xff] %vm299, %v2605
    %2862 = vst.msk [vmem:[#allocation2 + $0x608] sm:$0xff] %vm299, %v2606
    %2863 = vst.msk [vmem:[#allocation2 + $0x610] sm:$0xff] %vm299, %v2607
    %2864 = vst.msk [vmem:[#allocation2 + $0x618] sm:$0xff] %vm299, %v2608
    %2865 = vst.msk [vmem:[#allocation2 + $0x620] sm:$0xff] %vm299, %v2609
    %2866 = vst.msk [vmem:[#allocation2 + $0x628] sm:$0xff] %vm299, %v2610
    %2867 = vst.msk [vmem:[#allocation2 + $0x630] sm:$0xff] %vm299, %v2611
    %2868 = vst.msk [vmem:[#allocation2 + $0x638] sm:$0xff] %vm299, %v2612
    %2869 = vst.msk [vmem:[#allocation2 + $0x640] sm:$0xff] %vm299, %v2613
    %2870 = vst.msk [vmem:[#allocation2 + $0x648] sm:$0xff] %vm299, %v2614
    %2871 = vst.msk [vmem:[#allocation2 + $0x650] sm:$0xff] %vm299, %v2615
    %2872 = vst.msk [vmem:[#allocation2 + $0x658] sm:$0xff] %vm299, %v2616
    %2873 = vst.msk [vmem:[#allocation2 + $0x660] sm:$0xff] %vm299, %v2617
    %2874 = vst.msk [vmem:[#allocation2 + $0x668] sm:$0xff] %vm299, %v2618
    %2875 = vst.msk [vmem:[#allocation2 + $0x670] sm:$0xff] %vm299, %v2619
    %2876 = vst.msk [vmem:[#allocation2 + $0x678] sm:$0xff] %vm299, %v2620
    %2877 = vst.msk [vmem:[#allocation2 + $0x680] sm:$0xff] %vm299, %v2621
    %2878 = vst.msk [vmem:[#allocation2 + $0x688] sm:$0xff] %vm299, %v2622
    %2879 = vst.msk [vmem:[#allocation2 + $0x690] sm:$0xff] %vm299, %v2623
    %2880 = vst.msk [vmem:[#allocation2 + $0x698] sm:$0xff] %vm299, %v2624
    %2881 = vst.msk [vmem:[#allocation2 + $0x6a0] sm:$0xff] %vm299, %v2625
    %2882 = vst.msk [vmem:[#allocation2 + $0x6a8] sm:$0xff] %vm299, %v2626
    %2883 = vst.msk [vmem:[#allocation2 + $0x6b0] sm:$0xff] %vm299, %v2627
    %2884 = vst.msk [vmem:[#allocation2 + $0x6b8] sm:$0xff] %vm299, %v2628
    %2885 = vst.msk [vmem:[#allocation2 + $0x6c0] sm:$0xff] %vm299, %v2629
    %2886 = vst.msk [vmem:[#allocation2 + $0x6c8] sm:$0xff] %vm299, %v2630
    %2887 = vst.msk [vmem:[#allocation2 + $0x6d0] sm:$0xff] %vm299, %v2631
    %2888 = vst.msk [vmem:[#allocation2 + $0x6d8] sm:$0xff] %vm299, %v2632
    %2889 = vst.msk [vmem:[#allocation2 + $0x6e0] sm:$0xff] %vm299, %v2633
    %2890 = vst.msk [vmem:[#allocation2 + $0x6e8] sm:$0xff] %vm299, %v2634
    %2891 = vst.msk [vmem:[#allocation2 + $0x6f0] sm:$0xff] %vm299, %v2635
    %2892 = vst.msk [vmem:[#allocation2 + $0x6f8] sm:$0xff] %vm299, %v2636
    %2893 = vst.msk [vmem:[#allocation2 + $0x700] sm:$0xff] %vm299, %v2637
    %2894 = vst.msk [vmem:[#allocation2 + $0x708] sm:$0xff] %vm299, %v2638
    %2895 = vst.msk [vmem:[#allocation2 + $0x710] sm:$0xff] %vm299, %v2639
    %2896 = vst.msk [vmem:[#allocation2 + $0x718] sm:$0xff] %vm299, %v2640
    %2897 = vst.msk [vmem:[#allocation2 + $0x720] sm:$0xff] %vm299, %v2641
    %2898 = vst.msk [vmem:[#allocation2 + $0x728] sm:$0xff] %vm299, %v2642
    %2899 = vst.msk [vmem:[#allocation2 + $0x730] sm:$0xff] %vm299, %v2643
    %2900 = vst.msk [vmem:[#allocation2 + $0x738] sm:$0xff] %vm299, %v2644
    %2901 = vst.msk [vmem:[#allocation2 + $0x740] sm:$0xff] %vm299, %v2645
    %2902 = vst.msk [vmem:[#allocation2 + $0x748] sm:$0xff] %vm299, %v2646
    %2903 = vst.msk [vmem:[#allocation2 + $0x750] sm:$0xff] %vm299, %v2647
    %2904 = vst.msk [vmem:[#allocation2 + $0x758] sm:$0xff] %vm299, %v2648
    %2905 = vst.msk [vmem:[#allocation2 + $0x760] sm:$0xff] %vm299, %v2649
    %2906 = vst.msk [vmem:[#allocation2 + $0x768] sm:$0xff] %vm299, %v2650
    %2907 = vst.msk [vmem:[#allocation2 + $0x770] sm:$0xff] %vm299, %v2651
    %2908 = vst.msk [vmem:[#allocation2 + $0x778] sm:$0xff] %vm299, %v2652
    %2909 = vst.msk [vmem:[#allocation2 + $0x780] sm:$0xff] %vm299, %v2653
    %2910 = vst.msk [vmem:[#allocation2 + $0x788] sm:$0xff] %vm299, %v2654
    %2911 = vst.msk [vmem:[#allocation2 + $0x790] sm:$0xff] %vm299, %v2655
    %2912 = vst.msk [vmem:[#allocation2 + $0x798] sm:$0xff] %vm299, %v2656
    %2913 = vst.msk [vmem:[#allocation2 + $0x7a0] sm:$0xff] %vm299, %v2657
    %2914 = vst.msk [vmem:[#allocation2 + $0x7a8] sm:$0xff] %vm299, %v2658
    %2915 = vst.msk [vmem:[#allocation2 + $0x7b0] sm:$0xff] %vm299, %v2659
    %2916 = vst.msk [vmem:[#allocation2 + $0x7b8] sm:$0xff] %vm299, %v2660
    %2917 = vst.msk [vmem:[#allocation2 + $0x7c0] sm:$0xff] %vm299, %v2661
    %2918 = vst.msk [vmem:[#allocation2 + $0x7c8] sm:$0xff] %vm299, %v2662
    %2919 = vst.msk [vmem:[#allocation2 + $0x7d0] sm:$0xff] %vm299, %v2663
    %2920 = vst.msk [vmem:[#allocation2 + $0x7d8] sm:$0xff] %vm299, %v2664
    %2921 = vst.msk [vmem:[#allocation2 + $0x7e0] sm:$0xff] %vm299, %v2665
    %2922 = vst.msk [vmem:[#allocation2 + $0x7e8] sm:$0xff] %vm299, %v2666
    %2923 = vst.msk [vmem:[#allocation2 + $0x7f0] sm:$0xff] %vm299, %v2667
    %2924 = vst.msk [vmem:[#allocation2 + $0x7f8] sm:$0xff] %vm299, %v2668
    %2925 = vst.msk [vmem:[#allocation3] sm:$0xff] %vm299, 0.0
    %2926 = vst.msk [vmem:[#allocation3 + $0x8] sm:$0xff] %vm299, 0.0
    %vm2927 = vcmask 254976
    %2928 = vst.msk [vmem:[#allocation3 + $0x10] sm:$0x3] %vm2927, 0.0
    %2929 = vst.msk [vmem:[#allocation3 + $0x18] sm:$0xff] %vm299, 0.0
    %2930 = vst.msk [vmem:[#allocation3 + $0x20] sm:$0xff] %vm299, 0.0
    %2931 = vst.msk [vmem:[#allocation3 + $0x28] sm:$0x3] %vm2927, 0.0
    %2932 = vst.msk [vmem:[#allocation3 + $0x30] sm:$0xff] %vm299, 0.0
    %2933 = vst.msk [vmem:[#allocation3 + $0x38] sm:$0xff] %vm299, 0.0
    %2934 = vst.msk [vmem:[#allocation3 + $0x40] sm:$0x3] %vm2927, 0.0
    %2935 = vst.msk [vmem:[#allocation3 + $0x48] sm:$0xff] %vm299, 0.0
    %2936 = vst.msk [vmem:[#allocation3 + $0x50] sm:$0xff] %vm299, 0.0
    %2937 = vst.msk [vmem:[#allocation3 + $0x58] sm:$0x3] %vm2927, 0.0
    %2938 = vst.msk [vmem:[#allocation3 + $0x60] sm:$0xff] %vm299, 0.0
    %2939 = vst.msk [vmem:[#allocation3 + $0x68] sm:$0xff] %vm299, 0.0
    %2940 = vst.msk [vmem:[#allocation3 + $0x70] sm:$0x3] %vm2927, 0.0
    %2941 = vst.msk [vmem:[#allocation3 + $0x78] sm:$0xff] %vm299, 0.0
    %2942 = vst.msk [vmem:[#allocation3 + $0x80] sm:$0xff] %vm299, 0.0
    %2943 = vst.msk [vmem:[#allocation3 + $0x88] sm:$0x3] %vm2927, 0.0
    %2944 = vst.msk [vmem:[#allocation3 + $0x90] sm:$0xff] %vm299, 0.0
    %2945 = vst.msk [vmem:[#allocation3 + $0x98] sm:$0xff] %vm299, 0.0
    %2946 = vst.msk [vmem:[#allocation3 + $0xa0] sm:$0x3] %vm2927, 0.0
    %2947 = vst.msk [vmem:[#allocation3 + $0xa8] sm:$0xff] %vm299, 0.0
    %2948 = vst.msk [vmem:[#allocation3 + $0xb0] sm:$0xff] %vm299, 0.0
    %2949 = vst.msk [vmem:[#allocation3 + $0xb8] sm:$0x3] %vm2927, 0.0
    %2950 = vst.msk [vmem:[#allocation3 + $0xc0] sm:$0xff] %vm299, 0.0
    %2951 = vst.msk [vmem:[#allocation3 + $0xc8] sm:$0xff] %vm299, 0.0
    %2952 = vst.msk [vmem:[#allocation3 + $0xd0] sm:$0x3] %vm2927, 0.0
    %2953 = vst.msk [vmem:[#allocation3 + $0xd8] sm:$0xff] %vm299, 0.0
    %2954 = vst.msk [vmem:[#allocation3 + $0xe0] sm:$0xff] %vm299, 0.0
    %2955 = vst.msk [vmem:[#allocation3 + $0xe8] sm:$0x3] %vm2927, 0.0
    %2956 = vst.msk [vmem:[#allocation3 + $0xf0] sm:$0xff] %vm299, 0.0
    %2957 = vst.msk [vmem:[#allocation3 + $0xf8] sm:$0xff] %vm299, 0.0
    %2958 = vst.msk [vmem:[#allocation3 + $0x100] sm:$0x3] %vm2927, 0.0
    %2959 = vst.msk [vmem:[#allocation3 + $0x108] sm:$0xff] %vm299, 0.0
    %2960 = vst.msk [vmem:[#allocation3 + $0x110] sm:$0xff] %vm299, 0.0
    %2961 = vst.msk [vmem:[#allocation3 + $0x118] sm:$0x3] %vm2927, 0.0
    %2962 = vst.msk [vmem:[#allocation3 + $0x120] sm:$0xff] %vm299, 0.0
    %2963 = vst.msk [vmem:[#allocation3 + $0x128] sm:$0xff] %vm299, 0.0
    %2964 = vst.msk [vmem:[#allocation3 + $0x130] sm:$0x3] %vm2927, 0.0
    %2965 = vst.msk [vmem:[#allocation3 + $0x138] sm:$0xff] %vm299, 0.0
    %2966 = vst.msk [vmem:[#allocation3 + $0x140] sm:$0xff] %vm299, 0.0
    %2967 = vst.msk [vmem:[#allocation3 + $0x148] sm:$0x3] %vm2927, 0.0
    %2968 = vst.msk [vmem:[#allocation3 + $0x150] sm:$0xff] %vm299, 0.0
    %2969 = vst.msk [vmem:[#allocation3 + $0x158] sm:$0xff] %vm299, 0.0
    %2970 = vst.msk [vmem:[#allocation3 + $0x160] sm:$0x3] %vm2927, 0.0
    %2971 = vst.msk [vmem:[#allocation3 + $0x168] sm:$0xff] %vm299, 0.0
    %2972 = vst.msk [vmem:[#allocation3 + $0x170] sm:$0xff] %vm299, 0.0
    %2973 = vst.msk [vmem:[#allocation3 + $0x178] sm:$0x3] %vm2927, 0.0
    %2974 = vst.msk [vmem:[#allocation3 + $0x180] sm:$0xff] %vm299, 0.0
    %2975 = vst.msk [vmem:[#allocation3 + $0x188] sm:$0xff] %vm299, 0.0
    %2976 = vst.msk [vmem:[#allocation3 + $0x190] sm:$0x3] %vm2927, 0.0
    %2977 = vst.msk [vmem:[#allocation3 + $0x198] sm:$0xff] %vm299, 0.0
    %2978 = vst.msk [vmem:[#allocation3 + $0x1a0] sm:$0xff] %vm299, 0.0
    %2979 = vst.msk [vmem:[#allocation3 + $0x1a8] sm:$0x3] %vm2927, 0.0
    %2980 = vst.msk [vmem:[#allocation3 + $0x1b0] sm:$0xff] %vm299, 0.0
    %2981 = vst.msk [vmem:[#allocation3 + $0x1b8] sm:$0xff] %vm299, 0.0
    %2982 = vst.msk [vmem:[#allocation3 + $0x1c0] sm:$0x3] %vm2927, 0.0
    %2983 = vst.msk [vmem:[#allocation3 + $0x1c8] sm:$0xff] %vm299, 0.0
    %2984 = vst.msk [vmem:[#allocation3 + $0x1d0] sm:$0xff] %vm299, 0.0
    %2985 = vst.msk [vmem:[#allocation3 + $0x1d8] sm:$0x3] %vm2927, 0.0
    %2986 = vst.msk [vmem:[#allocation3 + $0x1e0] sm:$0xff] %vm299, 0.0
    %2987 = vst.msk [vmem:[#allocation3 + $0x1e8] sm:$0xff] %vm299, 0.0
    %2988 = vst.msk [vmem:[#allocation3 + $0x1f0] sm:$0x3] %vm2927, 0.0
    %2989 = vst.msk [vmem:[#allocation3 + $0x1f8] sm:$0xff] %vm299, 0.0
    %2990 = vst.msk [vmem:[#allocation3 + $0x200] sm:$0xff] %vm299, 0.0
    %2991 = vst.msk [vmem:[#allocation3 + $0x208] sm:$0x3] %vm2927, 0.0
    %2992 = vst.msk [vmem:[#allocation3 + $0x210] sm:$0xff] %vm299, 0.0
    %2993 = vst.msk [vmem:[#allocation3 + $0x218] sm:$0xff] %vm299, 0.0
    %2994 = vst.msk [vmem:[#allocation3 + $0x220] sm:$0x3] %vm2927, 0.0
    %2995 = vst.msk [vmem:[#allocation3 + $0x228] sm:$0xff] %vm299, 0.0
    %2996 = vst.msk [vmem:[#allocation3 + $0x230] sm:$0xff] %vm299, 0.0
    %2997 = vst.msk [vmem:[#allocation3 + $0x238] sm:$0x3] %vm2927, 0.0
    %2998 = vst.msk [vmem:[#allocation3 + $0x240] sm:$0xff] %vm299, 0.0
    %2999 = vst.msk [vmem:[#allocation3 + $0x248] sm:$0xff] %vm299, 0.0
    %3000 = vst.msk [vmem:[#allocation3 + $0x250] sm:$0x3] %vm2927, 0.0
    %3001 = vst.msk [vmem:[#allocation3 + $0x258] sm:$0xff] %vm299, 0.0
    %3002 = vst.msk [vmem:[#allocation3 + $0x260] sm:$0xff] %vm299, 0.0
    %3003 = vst.msk [vmem:[#allocation3 + $0x268] sm:$0x3] %vm2927, 0.0
    %3004 = vst.msk [vmem:[#allocation3 + $0x270] sm:$0xff] %vm299, 0.0
    %3005 = vst.msk [vmem:[#allocation3 + $0x278] sm:$0xff] %vm299, 0.0
    %3006 = vst.msk [vmem:[#allocation3 + $0x280] sm:$0x3] %vm2927, 0.0
    %3007 = vst.msk [vmem:[#allocation3 + $0x288] sm:$0xff] %vm299, 0.0
    %3008 = vst.msk [vmem:[#allocation3 + $0x290] sm:$0xff] %vm299, 0.0
    %3009 = vst.msk [vmem:[#allocation3 + $0x298] sm:$0x3] %vm2927, 0.0
    %3010 = vst.msk [vmem:[#allocation3 + $0x2a0] sm:$0xff] %vm299, 0.0
    %3011 = vst.msk [vmem:[#allocation3 + $0x2a8] sm:$0xff] %vm299, 0.0
    %3012 = vst.msk [vmem:[#allocation3 + $0x2b0] sm:$0x3] %vm2927, 0.0
    %3013 = vst.msk [vmem:[#allocation3 + $0x2b8] sm:$0xff] %vm299, 0.0
    %3014 = vst.msk [vmem:[#allocation3 + $0x2c0] sm:$0xff] %vm299, 0.0
    %3015 = vst.msk [vmem:[#allocation3 + $0x2c8] sm:$0x3] %vm2927, 0.0
    %3016 = vst.msk [vmem:[#allocation3 + $0x2d0] sm:$0xff] %vm299, 0.0
    %3017 = vst.msk [vmem:[#allocation3 + $0x2d8] sm:$0xff] %vm299, 0.0
    %3018 = vst.msk [vmem:[#allocation3 + $0x2e0] sm:$0x3] %vm2927, 0.0
    %3019 = vst.msk [vmem:[#allocation3 + $0x2e8] sm:$0xff] %vm299, 0.0
    %3020 = vst.msk [vmem:[#allocation3 + $0x2f0] sm:$0xff] %vm299, 0.0
    %3021 = vst.msk [vmem:[#allocation3 + $0x2f8] sm:$0x3] %vm2927, 0.0
    %3022 = vst.msk [vmem:[#allocation3 + $0x300] sm:$0xff] %vm299, 0.0
    %3023 = vst.msk [vmem:[#allocation3 + $0x308] sm:$0xff] %vm299, 0.0
    %3024 = vst.msk [vmem:[#allocation3 + $0x310] sm:$0x3] %vm2927, 0.0
    %3025 = vst.msk [vmem:[#allocation3 + $0x318] sm:$0xff] %vm299, 0.0
    %3026 = vst.msk [vmem:[#allocation3 + $0x320] sm:$0xff] %vm299, 0.0
    %3027 = vst.msk [vmem:[#allocation3 + $0x328] sm:$0x3] %vm2927, 0.0
    %3028 = vst.msk [vmem:[#allocation3 + $0x330] sm:$0xff] %vm299, 0.0
    %3029 = vst.msk [vmem:[#allocation3 + $0x338] sm:$0xff] %vm299, 0.0
    %3030 = vst.msk [vmem:[#allocation3 + $0x340] sm:$0x3] %vm2927, 0.0
    %3031 = vst.msk [vmem:[#allocation3 + $0x348] sm:$0xff] %vm299, 0.0
    %3032 = vst.msk [vmem:[#allocation3 + $0x350] sm:$0xff] %vm299, 0.0
    %3033 = vst.msk [vmem:[#allocation3 + $0x358] sm:$0x3] %vm2927, 0.0
    %v3034 = vld [vmem:[#allocation2] ss:$2 sm:$0xff]
    %s3035 = scalar_lea.vmem [#allocation2], 16
    %v3036 = vld [vmem:[%s3035] ss:$2 sm:$0xff]
    %s3037 = scalar_lea.vmem [#allocation2], 32
    %v3038 = vld [vmem:[%s3037] ss:$2 sm:$0xff]
    %s3039 = scalar_lea.vmem [#allocation2], 48
    %v3040 = vld [vmem:[%s3039] ss:$2 sm:$0xff]
    %s3041 = scalar_lea.vmem [#allocation2], 64
    %v3042 = vld [vmem:[%s3041] ss:$2 sm:$0xff]
    %s3043 = scalar_lea.vmem [#allocation2], 80
    %v3044 = vld [vmem:[%s3043] ss:$2 sm:$0xff]
    %s3045 = scalar_lea.vmem [#allocation2], 96
    %v3046 = vld [vmem:[%s3045] ss:$2 sm:$0xff]
    %s3047 = scalar_lea.vmem [#allocation2], 112
    %v3048 = vld [vmem:[%s3047] ss:$2 sm:$0xff]
    %s3049 = scalar_lea.vmem [#allocation2], 128
    %v3050 = vld [vmem:[%s3049] ss:$2 sm:$0xff]
    %s3051 = scalar_lea.vmem [#allocation2], 144
    %v3052 = vld [vmem:[%s3051] ss:$2 sm:$0xff]
    %s3053 = scalar_lea.vmem [#allocation2], 160
    %v3054 = vld [vmem:[%s3053] ss:$2 sm:$0xff]
    %s3055 = scalar_lea.vmem [#allocation2], 176
    %v3056 = vld [vmem:[%s3055] ss:$2 sm:$0xff]
    %s3057 = scalar_lea.vmem [#allocation2], 192
    %v3058 = vld [vmem:[%s3057] ss:$2 sm:$0xff]
    %s3059 = scalar_lea.vmem [#allocation2], 208
    %v3060 = vld [vmem:[%s3059] ss:$2 sm:$0xff]
    %s3061 = scalar_lea.vmem [#allocation2], 224
    %v3062 = vld [vmem:[%s3061] ss:$2 sm:$0xff]
    %s3063 = scalar_lea.vmem [#allocation2], 240
    %v3064 = vld [vmem:[%s3063] ss:$2 sm:$0xff]
    %s3065 = scalar_lea.vmem [#allocation2], 256
    %v3066 = vld [vmem:[%s3065] ss:$2 sm:$0xff]
    %s3067 = scalar_lea.vmem [#allocation2], 272
    %v3068 = vld [vmem:[%s3067] ss:$2 sm:$0xff]
    %s3069 = scalar_lea.vmem [#allocation2], 288
    %v3070 = vld [vmem:[%s3069] ss:$2 sm:$0xff]
    %s3071 = scalar_lea.vmem [#allocation2], 304
    %v3072 = vld [vmem:[%s3071] ss:$2 sm:$0xff]
    %s3073 = scalar_lea.vmem [#allocation2], 320
    %v3074 = vld [vmem:[%s3073] ss:$2 sm:$0xff]
    %s3075 = scalar_lea.vmem [#allocation2], 336
    %v3076 = vld [vmem:[%s3075] ss:$2 sm:$0xff]
    %s3077 = scalar_lea.vmem [#allocation2], 352
    %v3078 = vld [vmem:[%s3077] ss:$2 sm:$0xff]
    %s3079 = scalar_lea.vmem [#allocation2], 368
    %v3080 = vld [vmem:[%s3079] ss:$2 sm:$0xff]
    %s3081 = scalar_lea.vmem [#allocation2], 384
    %v3082 = vld [vmem:[%s3081] ss:$2 sm:$0xff]
    %s3083 = scalar_lea.vmem [#allocation2], 400
    %v3084 = vld [vmem:[%s3083] ss:$2 sm:$0xff]
    %s3085 = scalar_lea.vmem [#allocation2], 416
    %v3086 = vld [vmem:[%s3085] ss:$2 sm:$0xff]
    %s3087 = scalar_lea.vmem [#allocation2], 432
    %v3088 = vld [vmem:[%s3087] ss:$2 sm:$0xff]
    %s3089 = scalar_lea.vmem [#allocation2], 448
    %v3090 = vld [vmem:[%s3089] ss:$2 sm:$0xff]
    %s3091 = scalar_lea.vmem [#allocation2], 464
    %v3092 = vld [vmem:[%s3091] ss:$2 sm:$0xff]
    %s3093 = scalar_lea.vmem [#allocation2], 480
    %v3094 = vld [vmem:[%s3093] ss:$2 sm:$0xff]
    %s3095 = scalar_lea.vmem [#allocation2], 496
    %v3096 = vld [vmem:[%s3095] ss:$2 sm:$0xff]
    %s3097 = scalar_lea.vmem [#allocation2], 512
    %v3098 = vld [vmem:[%s3097] ss:$2 sm:$0xff]
    %s3099 = scalar_lea.vmem [#allocation2], 528
    %v3100 = vld [vmem:[%s3099] ss:$2 sm:$0xff]
    %s3101 = scalar_lea.vmem [#allocation2], 544
    %v3102 = vld [vmem:[%s3101] ss:$2 sm:$0xff]
    %s3103 = scalar_lea.vmem [#allocation2], 560
    %v3104 = vld [vmem:[%s3103] ss:$2 sm:$0xff]
    %s3105 = scalar_lea.vmem [#allocation2], 576
    %v3106 = vld [vmem:[%s3105] ss:$2 sm:$0xff]
    %s3107 = scalar_lea.vmem [#allocation2], 592
    %v3108 = vld [vmem:[%s3107] ss:$2 sm:$0xff]
    %s3109 = scalar_lea.vmem [#allocation2], 608
    %v3110 = vld [vmem:[%s3109] ss:$2 sm:$0xff]
    %s3111 = scalar_lea.vmem [#allocation2], 624
    %v3112 = vld [vmem:[%s3111] ss:$2 sm:$0xff]
    %s3113 = scalar_lea.vmem [#allocation2], 640
    %v3114 = vld [vmem:[%s3113] ss:$2 sm:$0xff]
    %s3115 = scalar_lea.vmem [#allocation2], 656
    %v3116 = vld [vmem:[%s3115] ss:$2 sm:$0xff]
    %s3117 = scalar_lea.vmem [#allocation2], 672
    %v3118 = vld [vmem:[%s3117] ss:$2 sm:$0xff]
    %s3119 = scalar_lea.vmem [#allocation2], 688
    %v3120 = vld [vmem:[%s3119] ss:$2 sm:$0xff]
    %s3121 = scalar_lea.vmem [#allocation2], 704
    %v3122 = vld [vmem:[%s3121] ss:$2 sm:$0xff]
    %s3123 = scalar_lea.vmem [#allocation2], 720
    %v3124 = vld [vmem:[%s3123] ss:$2 sm:$0xff]
    %s3125 = scalar_lea.vmem [#allocation2], 736
    %v3126 = vld [vmem:[%s3125] ss:$2 sm:$0xff]
    %s3127 = scalar_lea.vmem [#allocation2], 752
    %v3128 = vld [vmem:[%s3127] ss:$2 sm:$0xff]
    %s3129 = scalar_lea.vmem [#allocation2], 768
    %v3130 = vld [vmem:[%s3129] ss:$2 sm:$0xff]
    %s3131 = scalar_lea.vmem [#allocation2], 784
    %v3132 = vld [vmem:[%s3131] ss:$2 sm:$0xff]
    %s3133 = scalar_lea.vmem [#allocation2], 800
    %v3134 = vld [vmem:[%s3133] ss:$2 sm:$0xff]
    %s3135 = scalar_lea.vmem [#allocation2], 816
    %v3136 = vld [vmem:[%s3135] ss:$2 sm:$0xff]
    %s3137 = scalar_lea.vmem [#allocation2], 832
    %v3138 = vld [vmem:[%s3137] ss:$2 sm:$0xff]
    %s3139 = scalar_lea.vmem [#allocation2], 848
    %v3140 = vld [vmem:[%s3139] ss:$2 sm:$0xff]
    %s3141 = scalar_lea.vmem [#allocation2], 864
    %v3142 = vld [vmem:[%s3141] ss:$2 sm:$0xff]
    %s3143 = scalar_lea.vmem [#allocation2], 880
    %v3144 = vld [vmem:[%s3143] ss:$2 sm:$0xff]
    %s3145 = scalar_lea.vmem [#allocation2], 896
    %v3146 = vld [vmem:[%s3145] ss:$2 sm:$0xff]
    %s3147 = scalar_lea.vmem [#allocation2], 912
    %v3148 = vld [vmem:[%s3147] ss:$2 sm:$0xff]
    %s3149 = scalar_lea.vmem [#allocation2], 928
    %v3150 = vld [vmem:[%s3149] ss:$2 sm:$0xff]
    %s3151 = scalar_lea.vmem [#allocation2], 944
    %v3152 = vld [vmem:[%s3151] ss:$2 sm:$0xff]
    %s3153 = scalar_lea.vmem [#allocation2], 960
    %v3154 = vld [vmem:[%s3153] ss:$2 sm:$0xff]
    %s3155 = scalar_lea.vmem [#allocation2], 976
    %v3156 = vld [vmem:[%s3155] ss:$2 sm:$0xff]
    %s3157 = scalar_lea.vmem [#allocation2], 992
    %v3158 = vld [vmem:[%s3157] ss:$2 sm:$0xff]
    %s3159 = scalar_lea.vmem [#allocation2], 1008
    %v3160 = vld [vmem:[%s3159] ss:$2 sm:$0xff]
    %s3161 = scalar_lea.vmem [#allocation2], 1024
    %v3162 = vld [vmem:[%s3161] ss:$2 sm:$0xff]
    %s3163 = scalar_lea.vmem [#allocation2], 1040
    %v3164 = vld [vmem:[%s3163] ss:$2 sm:$0xff]
    %s3165 = scalar_lea.vmem [#allocation2], 1056
    %v3166 = vld [vmem:[%s3165] ss:$2 sm:$0xff]
    %s3167 = scalar_lea.vmem [#allocation2], 1072
    %v3168 = vld [vmem:[%s3167] ss:$2 sm:$0xff]
    %s3169 = scalar_lea.vmem [#allocation2], 1088
    %v3170 = vld [vmem:[%s3169] ss:$2 sm:$0xff]
    %s3171 = scalar_lea.vmem [#allocation2], 1104
    %v3172 = vld [vmem:[%s3171] ss:$2 sm:$0xff]
    %s3173 = scalar_lea.vmem [#allocation2], 1120
    %v3174 = vld [vmem:[%s3173] ss:$2 sm:$0xff]
    %s3175 = scalar_lea.vmem [#allocation2], 1136
    %v3176 = vld [vmem:[%s3175] ss:$2 sm:$0xff]
    %s3177 = scalar_lea.vmem [#allocation2], 1152
    %v3178 = vld [vmem:[%s3177] ss:$2 sm:$0xff]
    %s3179 = scalar_lea.vmem [#allocation2], 1168
    %v3180 = vld [vmem:[%s3179] ss:$2 sm:$0xff]
    %s3181 = scalar_lea.vmem [#allocation2], 1184
    %v3182 = vld [vmem:[%s3181] ss:$2 sm:$0xff]
    %s3183 = scalar_lea.vmem [#allocation2], 1200
    %v3184 = vld [vmem:[%s3183] ss:$2 sm:$0xff]
    %s3185 = scalar_lea.vmem [#allocation2], 1216
    %v3186 = vld [vmem:[%s3185] ss:$2 sm:$0xff]
    %s3187 = scalar_lea.vmem [#allocation2], 1232
    %v3188 = vld [vmem:[%s3187] ss:$2 sm:$0xff]
    %s3189 = scalar_lea.vmem [#allocation2], 1248
    %v3190 = vld [vmem:[%s3189] ss:$2 sm:$0xff]
    %s3191 = scalar_lea.vmem [#allocation2], 1264
    %v3192 = vld [vmem:[%s3191] ss:$2 sm:$0xff]
    %s3193 = scalar_lea.vmem [#allocation2], 1280
    %v3194 = vld [vmem:[%s3193] ss:$2 sm:$0xff]
    %s3195 = scalar_lea.vmem [#allocation2], 1296
    %v3196 = vld [vmem:[%s3195] ss:$2 sm:$0xff]
    %s3197 = scalar_lea.vmem [#allocation2], 1312
    %v3198 = vld [vmem:[%s3197] ss:$2 sm:$0xff]
    %s3199 = scalar_lea.vmem [#allocation2], 1328
    %v3200 = vld [vmem:[%s3199] ss:$2 sm:$0xff]
    %s3201 = scalar_lea.vmem [#allocation2], 1344
    %v3202 = vld [vmem:[%s3201] ss:$2 sm:$0xff]
    %s3203 = scalar_lea.vmem [#allocation2], 1360
    %v3204 = vld [vmem:[%s3203] ss:$2 sm:$0xff]
    %s3205 = scalar_lea.vmem [#allocation2], 1376
    %v3206 = vld [vmem:[%s3205] ss:$2 sm:$0xff]
    %s3207 = scalar_lea.vmem [#allocation2], 1392
    %v3208 = vld [vmem:[%s3207] ss:$2 sm:$0xff]
    %s3209 = scalar_lea.vmem [#allocation2], 1408
    %v3210 = vld [vmem:[%s3209] ss:$2 sm:$0xff]
    %s3211 = scalar_lea.vmem [#allocation2], 1424
    %v3212 = vld [vmem:[%s3211] ss:$2 sm:$0xff]
    %s3213 = scalar_lea.vmem [#allocation2], 1440
    %v3214 = vld [vmem:[%s3213] ss:$2 sm:$0xff]
    %s3215 = scalar_lea.vmem [#allocation2], 1456
    %v3216 = vld [vmem:[%s3215] ss:$2 sm:$0xff]
    %s3217 = scalar_lea.vmem [#allocation2], 1472
    %v3218 = vld [vmem:[%s3217] ss:$2 sm:$0xff]
    %s3219 = scalar_lea.vmem [#allocation2], 1488
    %v3220 = vld [vmem:[%s3219] ss:$2 sm:$0xff]
    %s3221 = scalar_lea.vmem [#allocation2], 1504
    %v3222 = vld [vmem:[%s3221] ss:$2 sm:$0xff]
    %s3223 = scalar_lea.vmem [#allocation2], 1520
    %v3224 = vld [vmem:[%s3223] ss:$2 sm:$0xff]
    %s3225 = scalar_lea.vmem [#allocation2], 1536
    %v3226 = vld [vmem:[%s3225] ss:$2 sm:$0xff]
    %s3227 = scalar_lea.vmem [#allocation2], 1552
    %v3228 = vld [vmem:[%s3227] ss:$2 sm:$0xff]
    %s3229 = scalar_lea.vmem [#allocation2], 1568
    %v3230 = vld [vmem:[%s3229] ss:$2 sm:$0xff]
    %s3231 = scalar_lea.vmem [#allocation2], 1584
    %v3232 = vld [vmem:[%s3231] ss:$2 sm:$0xff]
    %s3233 = scalar_lea.vmem [#allocation2], 1600
    %v3234 = vld [vmem:[%s3233] ss:$2 sm:$0xff]
    %s3235 = scalar_lea.vmem [#allocation2], 1616
    %v3236 = vld [vmem:[%s3235] ss:$2 sm:$0xff]
    %s3237 = scalar_lea.vmem [#allocation2], 1632
    %v3238 = vld [vmem:[%s3237] ss:$2 sm:$0xff]
    %s3239 = scalar_lea.vmem [#allocation2], 1648
    %v3240 = vld [vmem:[%s3239] ss:$2 sm:$0xff]
    %s3241 = scalar_lea.vmem [#allocation2], 1664
    %v3242 = vld [vmem:[%s3241] ss:$2 sm:$0xff]
    %s3243 = scalar_lea.vmem [#allocation2], 1680
    %v3244 = vld [vmem:[%s3243] ss:$2 sm:$0xff]
    %s3245 = scalar_lea.vmem [#allocation2], 1696
    %v3246 = vld [vmem:[%s3245] ss:$2 sm:$0xff]
    %s3247 = scalar_lea.vmem [#allocation2], 1712
    %v3248 = vld [vmem:[%s3247] ss:$2 sm:$0xff]
    %s3249 = scalar_lea.vmem [#allocation2], 1728
    %v3250 = vld [vmem:[%s3249] ss:$2 sm:$0xff]
    %s3251 = scalar_lea.vmem [#allocation2], 1744
    %v3252 = vld [vmem:[%s3251] ss:$2 sm:$0xff]
    %s3253 = scalar_lea.vmem [#allocation2], 1760
    %v3254 = vld [vmem:[%s3253] ss:$2 sm:$0xff]
    %s3255 = scalar_lea.vmem [#allocation2], 1776
    %v3256 = vld [vmem:[%s3255] ss:$2 sm:$0xff]
    %s3257 = scalar_lea.vmem [#allocation2], 1792
    %v3258 = vld [vmem:[%s3257] ss:$2 sm:$0xff]
    %s3259 = scalar_lea.vmem [#allocation2], 1808
    %v3260 = vld [vmem:[%s3259] ss:$2 sm:$0xff]
    %s3261 = scalar_lea.vmem [#allocation2], 1824
    %v3262 = vld [vmem:[%s3261] ss:$2 sm:$0xff]
    %s3263 = scalar_lea.vmem [#allocation2], 1840
    %v3264 = vld [vmem:[%s3263] ss:$2 sm:$0xff]
    %s3265 = scalar_lea.vmem [#allocation2], 1856
    %v3266 = vld [vmem:[%s3265] ss:$2 sm:$0xff]
    %s3267 = scalar_lea.vmem [#allocation2], 1872
    %v3268 = vld [vmem:[%s3267] ss:$2 sm:$0xff]
    %s3269 = scalar_lea.vmem [#allocation2], 1888
    %v3270 = vld [vmem:[%s3269] ss:$2 sm:$0xff]
    %s3271 = scalar_lea.vmem [#allocation2], 1904
    %v3272 = vld [vmem:[%s3271] ss:$2 sm:$0xff]
    %s3273 = scalar_lea.vmem [#allocation2], 1920
    %v3274 = vld [vmem:[%s3273] ss:$2 sm:$0xff]
    %s3275 = scalar_lea.vmem [#allocation2], 1936
    %v3276 = vld [vmem:[%s3275] ss:$2 sm:$0xff]
    %s3277 = scalar_lea.vmem [#allocation2], 1952
    %v3278 = vld [vmem:[%s3277] ss:$2 sm:$0xff]
    %s3279 = scalar_lea.vmem [#allocation2], 1968
    %v3280 = vld [vmem:[%s3279] ss:$2 sm:$0xff]
    %s3281 = scalar_lea.vmem [#allocation2], 1984
    %v3282 = vld [vmem:[%s3281] ss:$2 sm:$0xff]
    %s3283 = scalar_lea.vmem [#allocation2], 2000
    %v3284 = vld [vmem:[%s3283] ss:$2 sm:$0xff]
    %s3285 = scalar_lea.vmem [#allocation2], 2016
    %v3286 = vld [vmem:[%s3285] ss:$2 sm:$0xff]
    %s3287 = scalar_lea.vmem [#allocation2], 2032
    %v3288 = vld [vmem:[%s3287] ss:$2 sm:$0xff]
    %s3289 = scalar_lea.vmem [#allocation2], 1
    %v3290 = vld [vmem:[%s3289] ss:$2 sm:$0xff]
    %s3291 = scalar_lea.vmem [#allocation2], 17
    %v3292 = vld [vmem:[%s3291] ss:$2 sm:$0xff]
    %s3293 = scalar_lea.vmem [#allocation2], 33
    %v3294 = vld [vmem:[%s3293] ss:$2 sm:$0xff]
    %s3295 = scalar_lea.vmem [#allocation2], 49
    %v3296 = vld [vmem:[%s3295] ss:$2 sm:$0xff]
    %s3297 = scalar_lea.vmem [#allocation2], 65
    %v3298 = vld [vmem:[%s3297] ss:$2 sm:$0xff]
    %s3299 = scalar_lea.vmem [#allocation2], 81
    %v3300 = vld [vmem:[%s3299] ss:$2 sm:$0xff]
    %s3301 = scalar_lea.vmem [#allocation2], 97
    %v3302 = vld [vmem:[%s3301] ss:$2 sm:$0xff]
    %s3303 = scalar_lea.vmem [#allocation2], 113
    %v3304 = vld [vmem:[%s3303] ss:$2 sm:$0xff]
    %s3305 = scalar_lea.vmem [#allocation2], 129
    %v3306 = vld [vmem:[%s3305] ss:$2 sm:$0xff]
    %s3307 = scalar_lea.vmem [#allocation2], 145
    %v3308 = vld [vmem:[%s3307] ss:$2 sm:$0xff]
    %s3309 = scalar_lea.vmem [#allocation2], 161
    %v3310 = vld [vmem:[%s3309] ss:$2 sm:$0xff]
    %s3311 = scalar_lea.vmem [#allocation2], 177
    %v3312 = vld [vmem:[%s3311] ss:$2 sm:$0xff]
    %s3313 = scalar_lea.vmem [#allocation2], 193
    %v3314 = vld [vmem:[%s3313] ss:$2 sm:$0xff]
    %s3315 = scalar_lea.vmem [#allocation2], 209
    %v3316 = vld [vmem:[%s3315] ss:$2 sm:$0xff]
    %s3317 = scalar_lea.vmem [#allocation2], 225
    %v3318 = vld [vmem:[%s3317] ss:$2 sm:$0xff]
    %s3319 = scalar_lea.vmem [#allocation2], 241
    %v3320 = vld [vmem:[%s3319] ss:$2 sm:$0xff]
    %s3321 = scalar_lea.vmem [#allocation2], 257
    %v3322 = vld [vmem:[%s3321] ss:$2 sm:$0xff]
    %s3323 = scalar_lea.vmem [#allocation2], 273
    %v3324 = vld [vmem:[%s3323] ss:$2 sm:$0xff]
    %s3325 = scalar_lea.vmem [#allocation2], 289
    %v3326 = vld [vmem:[%s3325] ss:$2 sm:$0xff]
    %s3327 = scalar_lea.vmem [#allocation2], 305
    %v3328 = vld [vmem:[%s3327] ss:$2 sm:$0xff]
    %s3329 = scalar_lea.vmem [#allocation2], 321
    %v3330 = vld [vmem:[%s3329] ss:$2 sm:$0xff]
    %s3331 = scalar_lea.vmem [#allocation2], 337
    %v3332 = vld [vmem:[%s3331] ss:$2 sm:$0xff]
    %s3333 = scalar_lea.vmem [#allocation2], 353
    %v3334 = vld [vmem:[%s3333] ss:$2 sm:$0xff]
    %s3335 = scalar_lea.vmem [#allocation2], 369
    %v3336 = vld [vmem:[%s3335] ss:$2 sm:$0xff]
    %s3337 = scalar_lea.vmem [#allocation2], 385
    %v3338 = vld [vmem:[%s3337] ss:$2 sm:$0xff]
    %s3339 = scalar_lea.vmem [#allocation2], 401
    %v3340 = vld [vmem:[%s3339] ss:$2 sm:$0xff]
    %s3341 = scalar_lea.vmem [#allocation2], 417
    %v3342 = vld [vmem:[%s3341] ss:$2 sm:$0xff]
    %s3343 = scalar_lea.vmem [#allocation2], 433
    %v3344 = vld [vmem:[%s3343] ss:$2 sm:$0xff]
    %s3345 = scalar_lea.vmem [#allocation2], 449
    %v3346 = vld [vmem:[%s3345] ss:$2 sm:$0xff]
    %s3347 = scalar_lea.vmem [#allocation2], 465
    %v3348 = vld [vmem:[%s3347] ss:$2 sm:$0xff]
    %s3349 = scalar_lea.vmem [#allocation2], 481
    %v3350 = vld [vmem:[%s3349] ss:$2 sm:$0xff]
    %s3351 = scalar_lea.vmem [#allocation2], 497
    %v3352 = vld [vmem:[%s3351] ss:$2 sm:$0xff]
    %s3353 = scalar_lea.vmem [#allocation2], 513
    %v3354 = vld [vmem:[%s3353] ss:$2 sm:$0xff]
    %s3355 = scalar_lea.vmem [#allocation2], 529
    %v3356 = vld [vmem:[%s3355] ss:$2 sm:$0xff]
    %s3357 = scalar_lea.vmem [#allocation2], 545
    %v3358 = vld [vmem:[%s3357] ss:$2 sm:$0xff]
    %s3359 = scalar_lea.vmem [#allocation2], 561
    %v3360 = vld [vmem:[%s3359] ss:$2 sm:$0xff]
    %s3361 = scalar_lea.vmem [#allocation2], 577
    %v3362 = vld [vmem:[%s3361] ss:$2 sm:$0xff]
    %s3363 = scalar_lea.vmem [#allocation2], 593
    %v3364 = vld [vmem:[%s3363] ss:$2 sm:$0xff]
    %s3365 = scalar_lea.vmem [#allocation2], 609
    %v3366 = vld [vmem:[%s3365] ss:$2 sm:$0xff]
    %s3367 = scalar_lea.vmem [#allocation2], 625
    %v3368 = vld [vmem:[%s3367] ss:$2 sm:$0xff]
    %s3369 = scalar_lea.vmem [#allocation2], 641
    %v3370 = vld [vmem:[%s3369] ss:$2 sm:$0xff]
    %s3371 = scalar_lea.vmem [#allocation2], 657
    %v3372 = vld [vmem:[%s3371] ss:$2 sm:$0xff]
    %s3373 = scalar_lea.vmem [#allocation2], 673
    %v3374 = vld [vmem:[%s3373] ss:$2 sm:$0xff]
    %s3375 = scalar_lea.vmem [#allocation2], 689
    %v3376 = vld [vmem:[%s3375] ss:$2 sm:$0xff]
    %s3377 = scalar_lea.vmem [#allocation2], 705
    %v3378 = vld [vmem:[%s3377] ss:$2 sm:$0xff]
    %s3379 = scalar_lea.vmem [#allocation2], 721
    %v3380 = vld [vmem:[%s3379] ss:$2 sm:$0xff]
    %s3381 = scalar_lea.vmem [#allocation2], 737
    %v3382 = vld [vmem:[%s3381] ss:$2 sm:$0xff]
    %s3383 = scalar_lea.vmem [#allocation2], 753
    %v3384 = vld [vmem:[%s3383] ss:$2 sm:$0xff]
    %s3385 = scalar_lea.vmem [#allocation2], 769
    %v3386 = vld [vmem:[%s3385] ss:$2 sm:$0xff]
    %s3387 = scalar_lea.vmem [#allocation2], 785
    %v3388 = vld [vmem:[%s3387] ss:$2 sm:$0xff]
    %s3389 = scalar_lea.vmem [#allocation2], 801
    %v3390 = vld [vmem:[%s3389] ss:$2 sm:$0xff]
    %s3391 = scalar_lea.vmem [#allocation2], 817
    %v3392 = vld [vmem:[%s3391] ss:$2 sm:$0xff]
    %s3393 = scalar_lea.vmem [#allocation2], 833
    %v3394 = vld [vmem:[%s3393] ss:$2 sm:$0xff]
    %s3395 = scalar_lea.vmem [#allocation2], 849
    %v3396 = vld [vmem:[%s3395] ss:$2 sm:$0xff]
    %s3397 = scalar_lea.vmem [#allocation2], 865
    %v3398 = vld [vmem:[%s3397] ss:$2 sm:$0xff]
    %s3399 = scalar_lea.vmem [#allocation2], 881
    %v3400 = vld [vmem:[%s3399] ss:$2 sm:$0xff]
    %s3401 = scalar_lea.vmem [#allocation2], 897
    %v3402 = vld [vmem:[%s3401] ss:$2 sm:$0xff]
    %s3403 = scalar_lea.vmem [#allocation2], 913
    %v3404 = vld [vmem:[%s3403] ss:$2 sm:$0xff]
    %s3405 = scalar_lea.vmem [#allocation2], 929
    %v3406 = vld [vmem:[%s3405] ss:$2 sm:$0xff]
    %s3407 = scalar_lea.vmem [#allocation2], 945
    %v3408 = vld [vmem:[%s3407] ss:$2 sm:$0xff]
    %s3409 = scalar_lea.vmem [#allocation2], 961
    %v3410 = vld [vmem:[%s3409] ss:$2 sm:$0xff]
    %s3411 = scalar_lea.vmem [#allocation2], 977
    %v3412 = vld [vmem:[%s3411] ss:$2 sm:$0xff]
    %s3413 = scalar_lea.vmem [#allocation2], 993
    %v3414 = vld [vmem:[%s3413] ss:$2 sm:$0xff]
    %s3415 = scalar_lea.vmem [#allocation2], 1009
    %v3416 = vld [vmem:[%s3415] ss:$2 sm:$0xff]
    %s3417 = scalar_lea.vmem [#allocation2], 1025
    %v3418 = vld [vmem:[%s3417] ss:$2 sm:$0xff]
    %s3419 = scalar_lea.vmem [#allocation2], 1041
    %v3420 = vld [vmem:[%s3419] ss:$2 sm:$0xff]
    %s3421 = scalar_lea.vmem [#allocation2], 1057
    %v3422 = vld [vmem:[%s3421] ss:$2 sm:$0xff]
    %s3423 = scalar_lea.vmem [#allocation2], 1073
    %v3424 = vld [vmem:[%s3423] ss:$2 sm:$0xff]
    %s3425 = scalar_lea.vmem [#allocation2], 1089
    %v3426 = vld [vmem:[%s3425] ss:$2 sm:$0xff]
    %s3427 = scalar_lea.vmem [#allocation2], 1105
    %v3428 = vld [vmem:[%s3427] ss:$2 sm:$0xff]
    %s3429 = scalar_lea.vmem [#allocation2], 1121
    %v3430 = vld [vmem:[%s3429] ss:$2 sm:$0xff]
    %s3431 = scalar_lea.vmem [#allocation2], 1137
    %v3432 = vld [vmem:[%s3431] ss:$2 sm:$0xff]
    %s3433 = scalar_lea.vmem [#allocation2], 1153
    %v3434 = vld [vmem:[%s3433] ss:$2 sm:$0xff]
    %s3435 = scalar_lea.vmem [#allocation2], 1169
    %v3436 = vld [vmem:[%s3435] ss:$2 sm:$0xff]
    %s3437 = scalar_lea.vmem [#allocation2], 1185
    %v3438 = vld [vmem:[%s3437] ss:$2 sm:$0xff]
    %s3439 = scalar_lea.vmem [#allocation2], 1201
    %v3440 = vld [vmem:[%s3439] ss:$2 sm:$0xff]
    %s3441 = scalar_lea.vmem [#allocation2], 1217
    %v3442 = vld [vmem:[%s3441] ss:$2 sm:$0xff]
    %s3443 = scalar_lea.vmem [#allocation2], 1233
    %v3444 = vld [vmem:[%s3443] ss:$2 sm:$0xff]
    %s3445 = scalar_lea.vmem [#allocation2], 1249
    %v3446 = vld [vmem:[%s3445] ss:$2 sm:$0xff]
    %s3447 = scalar_lea.vmem [#allocation2], 1265
    %v3448 = vld [vmem:[%s3447] ss:$2 sm:$0xff]
    %s3449 = scalar_lea.vmem [#allocation2], 1281
    %v3450 = vld [vmem:[%s3449] ss:$2 sm:$0xff]
    %s3451 = scalar_lea.vmem [#allocation2], 1297
    %v3452 = vld [vmem:[%s3451] ss:$2 sm:$0xff]
    %s3453 = scalar_lea.vmem [#allocation2], 1313
    %v3454 = vld [vmem:[%s3453] ss:$2 sm:$0xff]
    %s3455 = scalar_lea.vmem [#allocation2], 1329
    %v3456 = vld [vmem:[%s3455] ss:$2 sm:$0xff]
    %s3457 = scalar_lea.vmem [#allocation2], 1345
    %v3458 = vld [vmem:[%s3457] ss:$2 sm:$0xff]
    %s3459 = scalar_lea.vmem [#allocation2], 1361
    %v3460 = vld [vmem:[%s3459] ss:$2 sm:$0xff]
    %s3461 = scalar_lea.vmem [#allocation2], 1377
    %v3462 = vld [vmem:[%s3461] ss:$2 sm:$0xff]
    %s3463 = scalar_lea.vmem [#allocation2], 1393
    %v3464 = vld [vmem:[%s3463] ss:$2 sm:$0xff]
    %s3465 = scalar_lea.vmem [#allocation2], 1409
    %v3466 = vld [vmem:[%s3465] ss:$2 sm:$0xff]
    %s3467 = scalar_lea.vmem [#allocation2], 1425
    %v3468 = vld [vmem:[%s3467] ss:$2 sm:$0xff]
    %s3469 = scalar_lea.vmem [#allocation2], 1441
    %v3470 = vld [vmem:[%s3469] ss:$2 sm:$0xff]
    %s3471 = scalar_lea.vmem [#allocation2], 1457
    %v3472 = vld [vmem:[%s3471] ss:$2 sm:$0xff]
    %s3473 = scalar_lea.vmem [#allocation2], 1473
    %v3474 = vld [vmem:[%s3473] ss:$2 sm:$0xff]
    %s3475 = scalar_lea.vmem [#allocation2], 1489
    %v3476 = vld [vmem:[%s3475] ss:$2 sm:$0xff]
    %s3477 = scalar_lea.vmem [#allocation2], 1505
    %v3478 = vld [vmem:[%s3477] ss:$2 sm:$0xff]
    %s3479 = scalar_lea.vmem [#allocation2], 1521
    %v3480 = vld [vmem:[%s3479] ss:$2 sm:$0xff]
    %s3481 = scalar_lea.vmem [#allocation2], 1537
    %v3482 = vld [vmem:[%s3481] ss:$2 sm:$0xff]
    %s3483 = scalar_lea.vmem [#allocation2], 1553
    %v3484 = vld [vmem:[%s3483] ss:$2 sm:$0xff]
    %s3485 = scalar_lea.vmem [#allocation2], 1569
    %v3486 = vld [vmem:[%s3485] ss:$2 sm:$0xff]
    %s3487 = scalar_lea.vmem [#allocation2], 1585
    %v3488 = vld [vmem:[%s3487] ss:$2 sm:$0xff]
    %s3489 = scalar_lea.vmem [#allocation2], 1601
    %v3490 = vld [vmem:[%s3489] ss:$2 sm:$0xff]
    %s3491 = scalar_lea.vmem [#allocation2], 1617
    %v3492 = vld [vmem:[%s3491] ss:$2 sm:$0xff]
    %s3493 = scalar_lea.vmem [#allocation2], 1633
    %v3494 = vld [vmem:[%s3493] ss:$2 sm:$0xff]
    %s3495 = scalar_lea.vmem [#allocation2], 1649
    %v3496 = vld [vmem:[%s3495] ss:$2 sm:$0xff]
    %s3497 = scalar_lea.vmem [#allocation2], 1665
    %v3498 = vld [vmem:[%s3497] ss:$2 sm:$0xff]
    %s3499 = scalar_lea.vmem [#allocation2], 1681
    %v3500 = vld [vmem:[%s3499] ss:$2 sm:$0xff]
    %s3501 = scalar_lea.vmem [#allocation2], 1697
    %v3502 = vld [vmem:[%s3501] ss:$2 sm:$0xff]
    %s3503 = scalar_lea.vmem [#allocation2], 1713
    %v3504 = vld [vmem:[%s3503] ss:$2 sm:$0xff]
    %s3505 = scalar_lea.vmem [#allocation2], 1729
    %v3506 = vld [vmem:[%s3505] ss:$2 sm:$0xff]
    %s3507 = scalar_lea.vmem [#allocation2], 1745
    %v3508 = vld [vmem:[%s3507] ss:$2 sm:$0xff]
    %s3509 = scalar_lea.vmem [#allocation2], 1761
    %v3510 = vld [vmem:[%s3509] ss:$2 sm:$0xff]
    %s3511 = scalar_lea.vmem [#allocation2], 1777
    %v3512 = vld [vmem:[%s3511] ss:$2 sm:$0xff]
    %s3513 = scalar_lea.vmem [#allocation2], 1793
    %v3514 = vld [vmem:[%s3513] ss:$2 sm:$0xff]
    %s3515 = scalar_lea.vmem [#allocation2], 1809
    %v3516 = vld [vmem:[%s3515] ss:$2 sm:$0xff]
    %s3517 = scalar_lea.vmem [#allocation2], 1825
    %v3518 = vld [vmem:[%s3517] ss:$2 sm:$0xff]
    %s3519 = scalar_lea.vmem [#allocation2], 1841
    %v3520 = vld [vmem:[%s3519] ss:$2 sm:$0xff]
    %s3521 = scalar_lea.vmem [#allocation2], 1857
    %v3522 = vld [vmem:[%s3521] ss:$2 sm:$0xff]
    %s3523 = scalar_lea.vmem [#allocation2], 1873
    %v3524 = vld [vmem:[%s3523] ss:$2 sm:$0xff]
    %s3525 = scalar_lea.vmem [#allocation2], 1889
    %v3526 = vld [vmem:[%s3525] ss:$2 sm:$0xff]
    %s3527 = scalar_lea.vmem [#allocation2], 1905
    %v3528 = vld [vmem:[%s3527] ss:$2 sm:$0xff]
    %s3529 = scalar_lea.vmem [#allocation2], 1921
    %v3530 = vld [vmem:[%s3529] ss:$2 sm:$0xff]
    %s3531 = scalar_lea.vmem [#allocation2], 1937
    %v3532 = vld [vmem:[%s3531] ss:$2 sm:$0xff]
    %s3533 = scalar_lea.vmem [#allocation2], 1953
    %v3534 = vld [vmem:[%s3533] ss:$2 sm:$0xff]
    %s3535 = scalar_lea.vmem [#allocation2], 1969
    %v3536 = vld [vmem:[%s3535] ss:$2 sm:$0xff]
    %s3537 = scalar_lea.vmem [#allocation2], 1985
    %v3538 = vld [vmem:[%s3537] ss:$2 sm:$0xff]
    %s3539 = scalar_lea.vmem [#allocation2], 2001
    %v3540 = vld [vmem:[%s3539] ss:$2 sm:$0xff]
    %s3541 = scalar_lea.vmem [#allocation2], 2017
    %v3542 = vld [vmem:[%s3541] ss:$2 sm:$0xff]
    %s3543 = scalar_lea.vmem [#allocation2], 2033
    %v3544 = vld [vmem:[%s3543] ss:$2 sm:$0xff]
    %v3545 = vmax.f32 %v3034, %v3290
    %v3546 = vmax.f32 %v3036, %v3292
    %v3547 = vmax.f32 %v3038, %v3294
    %v3548 = vmax.f32 %v3040, %v3296
    %v3549 = vmax.f32 %v3042, %v3298
    %v3550 = vmax.f32 %v3044, %v3300
    %v3551 = vmax.f32 %v3046, %v3302
    %v3552 = vmax.f32 %v3048, %v3304
    %v3553 = vmax.f32 %v3050, %v3306
    %v3554 = vmax.f32 %v3052, %v3308
    %v3555 = vmax.f32 %v3054, %v3310
    %v3556 = vmax.f32 %v3056, %v3312
    %v3557 = vmax.f32 %v3058, %v3314
    %v3558 = vmax.f32 %v3060, %v3316
    %v3559 = vmax.f32 %v3062, %v3318
    %v3560 = vmax.f32 %v3064, %v3320
    %v3561 = vmax.f32 %v3066, %v3322
    %v3562 = vmax.f32 %v3068, %v3324
    %v3563 = vmax.f32 %v3070, %v3326
    %v3564 = vmax.f32 %v3072, %v3328
    %v3565 = vmax.f32 %v3074, %v3330
    %v3566 = vmax.f32 %v3076, %v3332
    %v3567 = vmax.f32 %v3078, %v3334
    %v3568 = vmax.f32 %v3080, %v3336
    %v3569 = vmax.f32 %v3082, %v3338
    %v3570 = vmax.f32 %v3084, %v3340
    %v3571 = vmax.f32 %v3086, %v3342
    %v3572 = vmax.f32 %v3088, %v3344
    %v3573 = vmax.f32 %v3090, %v3346
    %v3574 = vmax.f32 %v3092, %v3348
    %v3575 = vmax.f32 %v3094, %v3350
    %v3576 = vmax.f32 %v3096, %v3352
    %v3577 = vmax.f32 %v3098, %v3354
    %v3578 = vmax.f32 %v3100, %v3356
    %v3579 = vmax.f32 %v3102, %v3358
    %v3580 = vmax.f32 %v3104, %v3360
    %v3581 = vmax.f32 %v3106, %v3362
    %v3582 = vmax.f32 %v3108, %v3364
    %v3583 = vmax.f32 %v3110, %v3366
    %v3584 = vmax.f32 %v3112, %v3368
    %v3585 = vmax.f32 %v3114, %v3370
    %v3586 = vmax.f32 %v3116, %v3372
    %v3587 = vmax.f32 %v3118, %v3374
    %v3588 = vmax.f32 %v3120, %v3376
    %v3589 = vmax.f32 %v3122, %v3378
    %v3590 = vmax.f32 %v3124, %v3380
    %v3591 = vmax.f32 %v3126, %v3382
    %v3592 = vmax.f32 %v3128, %v3384
    %v3593 = vmax.f32 %v3130, %v3386
    %v3594 = vmax.f32 %v3132, %v3388
    %v3595 = vmax.f32 %v3134, %v3390
    %v3596 = vmax.f32 %v3136, %v3392
    %v3597 = vmax.f32 %v3138, %v3394
    %v3598 = vmax.f32 %v3140, %v3396
    %v3599 = vmax.f32 %v3142, %v3398
    %v3600 = vmax.f32 %v3144, %v3400
    %v3601 = vmax.f32 %v3146, %v3402
    %v3602 = vmax.f32 %v3148, %v3404
    %v3603 = vmax.f32 %v3150, %v3406
    %v3604 = vmax.f32 %v3152, %v3408
    %v3605 = vmax.f32 %v3154, %v3410
    %v3606 = vmax.f32 %v3156, %v3412
    %v3607 = vmax.f32 %v3158, %v3414
    %v3608 = vmax.f32 %v3160, %v3416
    %v3609 = vmax.f32 %v3162, %v3418
    %v3610 = vmax.f32 %v3164, %v3420
    %v3611 = vmax.f32 %v3166, %v3422
    %v3612 = vmax.f32 %v3168, %v3424
    %v3613 = vmax.f32 %v3170, %v3426
    %v3614 = vmax.f32 %v3172, %v3428
    %v3615 = vmax.f32 %v3174, %v3430
    %v3616 = vmax.f32 %v3176, %v3432
    %v3617 = vmax.f32 %v3178, %v3434
    %v3618 = vmax.f32 %v3180, %v3436
    %v3619 = vmax.f32 %v3182, %v3438
    %v3620 = vmax.f32 %v3184, %v3440
    %v3621 = vmax.f32 %v3186, %v3442
    %v3622 = vmax.f32 %v3188, %v3444
    %v3623 = vmax.f32 %v3190, %v3446
    %v3624 = vmax.f32 %v3192, %v3448
    %v3625 = vmax.f32 %v3194, %v3450
    %v3626 = vmax.f32 %v3196, %v3452
    %v3627 = vmax.f32 %v3198, %v3454
    %v3628 = vmax.f32 %v3200, %v3456
    %v3629 = vmax.f32 %v3202, %v3458
    %v3630 = vmax.f32 %v3204, %v3460
    %v3631 = vmax.f32 %v3206, %v3462
    %v3632 = vmax.f32 %v3208, %v3464
    %v3633 = vmax.f32 %v3210, %v3466
    %v3634 = vmax.f32 %v3212, %v3468
    %v3635 = vmax.f32 %v3214, %v3470
    %v3636 = vmax.f32 %v3216, %v3472
    %v3637 = vmax.f32 %v3218, %v3474
    %v3638 = vmax.f32 %v3220, %v3476
    %v3639 = vmax.f32 %v3222, %v3478
    %v3640 = vmax.f32 %v3224, %v3480
    %v3641 = vmax.f32 %v3226, %v3482
    %v3642 = vmax.f32 %v3228, %v3484
    %v3643 = vmax.f32 %v3230, %v3486
    %v3644 = vmax.f32 %v3232, %v3488
    %v3645 = vmax.f32 %v3234, %v3490
    %v3646 = vmax.f32 %v3236, %v3492
    %v3647 = vmax.f32 %v3238, %v3494
    %v3648 = vmax.f32 %v3240, %v3496
    %v3649 = vmax.f32 %v3242, %v3498
    %v3650 = vmax.f32 %v3244, %v3500
    %v3651 = vmax.f32 %v3246, %v3502
    %v3652 = vmax.f32 %v3248, %v3504
    %v3653 = vmax.f32 %v3250, %v3506
    %v3654 = vmax.f32 %v3252, %v3508
    %v3655 = vmax.f32 %v3254, %v3510
    %v3656 = vmax.f32 %v3256, %v3512
    %v3657 = vmax.f32 %v3258, %v3514
    %v3658 = vmax.f32 %v3260, %v3516
    %v3659 = vmax.f32 %v3262, %v3518
    %v3660 = vmax.f32 %v3264, %v3520
    %v3661 = vmax.f32 %v3266, %v3522
    %v3662 = vmax.f32 %v3268, %v3524
    %v3663 = vmax.f32 %v3270, %v3526
    %v3664 = vmax.f32 %v3272, %v3528
    %v3665 = vmax.f32 %v3274, %v3530
    %v3666 = vmax.f32 %v3276, %v3532
    %v3667 = vmax.f32 %v3278, %v3534
    %v3668 = vmax.f32 %v3280, %v3536
    %v3669 = vmax.f32 %v3282, %v3538
    %v3670 = vmax.f32 %v3284, %v3540
    %v3671 = vmax.f32 %v3286, %v3542
    %v3672 = vmax.f32 %v3288, %v3544
    %v3673 = vsel %vm299, %v3545, -inf
    %v3674 = vsel %vm299, %v3547, -inf
    %v3675 = vmax.f32 %v3673, %v3674
    %v3676 = vsel %vm299, %v3546, -inf
    %v3677 = vsel %vm299, %v3548, -inf
    %v3678 = vmax.f32 %v3676, %v3677
    %v3679 = vsel %vm299, %v3549, -inf
    %v3680 = vsel %vm299, %v3551, -inf
    %v3681 = vmax.f32 %v3679, %v3680
    %v3682 = vsel %vm299, %v3550, -inf
    %v3683 = vsel %vm299, %v3552, -inf
    %v3684 = vmax.f32 %v3682, %v3683
    %v3685 = vsel %vm299, %v3553, -inf
    %v3686 = vsel %vm299, %v3555, -inf
    %v3687 = vmax.f32 %v3685, %v3686
    %v3688 = vsel %vm299, %v3554, -inf
    %v3689 = vsel %vm299, %v3556, -inf
    %v3690 = vmax.f32 %v3688, %v3689
    %v3691 = vsel %vm299, %v3557, -inf
    %v3692 = vsel %vm299, %v3559, -inf
    %v3693 = vmax.f32 %v3691, %v3692
    %v3694 = vsel %vm299, %v3558, -inf
    %v3695 = vsel %vm299, %v3560, -inf
    %v3696 = vmax.f32 %v3694, %v3695
    %v3697 = vsel %vm299, %v3561, -inf
    %v3698 = vsel %vm299, %v3563, -inf
    %v3699 = vmax.f32 %v3697, %v3698
    %v3700 = vsel %vm299, %v3562, -inf
    %v3701 = vsel %vm299, %v3564, -inf
    %v3702 = vmax.f32 %v3700, %v3701
    %v3703 = vsel %vm299, %v3565, -inf
    %v3704 = vsel %vm299, %v3567, -inf
    %v3705 = vmax.f32 %v3703, %v3704
    %v3706 = vsel %vm299, %v3566, -inf
    %v3707 = vsel %vm299, %v3568, -inf
    %v3708 = vmax.f32 %v3706, %v3707
    %v3709 = vsel %vm299, %v3569, -inf
    %v3710 = vsel %vm299, %v3571, -inf
    %v3711 = vmax.f32 %v3709, %v3710
    %v3712 = vsel %vm299, %v3570, -inf
    %v3713 = vsel %vm299, %v3572, -inf
    %v3714 = vmax.f32 %v3712, %v3713
    %v3715 = vsel %vm299, %v3573, -inf
    %v3716 = vsel %vm299, %v3575, -inf
    %v3717 = vmax.f32 %v3715, %v3716
    %v3718 = vsel %vm299, %v3574, -inf
    %v3719 = vsel %vm299, %v3576, -inf
    %v3720 = vmax.f32 %v3718, %v3719
    %v3721 = vsel %vm299, %v3577, -inf
    %v3722 = vsel %vm299, %v3579, -inf
    %v3723 = vmax.f32 %v3721, %v3722
    %v3724 = vsel %vm299, %v3578, -inf
    %v3725 = vsel %vm299, %v3580, -inf
    %v3726 = vmax.f32 %v3724, %v3725
    %v3727 = vsel %vm299, %v3581, -inf
    %v3728 = vsel %vm299, %v3583, -inf
    %v3729 = vmax.f32 %v3727, %v3728
    %v3730 = vsel %vm299, %v3582, -inf
    %v3731 = vsel %vm299, %v3584, -inf
    %v3732 = vmax.f32 %v3730, %v3731
    %v3733 = vsel %vm299, %v3585, -inf
    %v3734 = vsel %vm299, %v3587, -inf
    %v3735 = vmax.f32 %v3733, %v3734
    %v3736 = vsel %vm299, %v3586, -inf
    %v3737 = vsel %vm299, %v3588, -inf
    %v3738 = vmax.f32 %v3736, %v3737
    %v3739 = vsel %vm299, %v3589, -inf
    %v3740 = vsel %vm299, %v3591, -inf
    %v3741 = vmax.f32 %v3739, %v3740
    %v3742 = vsel %vm299, %v3590, -inf
    %v3743 = vsel %vm299, %v3592, -inf
    %v3744 = vmax.f32 %v3742, %v3743
    %v3745 = vsel %vm299, %v3593, -inf
    %v3746 = vsel %vm299, %v3595, -inf
    %v3747 = vmax.f32 %v3745, %v3746
    %v3748 = vsel %vm299, %v3594, -inf
    %v3749 = vsel %vm299, %v3596, -inf
    %v3750 = vmax.f32 %v3748, %v3749
    %v3751 = vsel %vm299, %v3597, -inf
    %v3752 = vsel %vm299, %v3599, -inf
    %v3753 = vmax.f32 %v3751, %v3752
    %v3754 = vsel %vm299, %v3598, -inf
    %v3755 = vsel %vm299, %v3600, -inf
    %v3756 = vmax.f32 %v3754, %v3755
    %v3757 = vsel %vm299, %v3601, -inf
    %v3758 = vsel %vm299, %v3603, -inf
    %v3759 = vmax.f32 %v3757, %v3758
    %v3760 = vsel %vm299, %v3602, -inf
    %v3761 = vsel %vm299, %v3604, -inf
    %v3762 = vmax.f32 %v3760, %v3761
    %v3763 = vsel %vm299, %v3605, -inf
    %v3764 = vsel %vm299, %v3607, -inf
    %v3765 = vmax.f32 %v3763, %v3764
    %v3766 = vsel %vm299, %v3606, -inf
    %v3767 = vsel %vm299, %v3608, -inf
    %v3768 = vmax.f32 %v3766, %v3767
    %v3769 = vsel %vm299, %v3609, -inf
    %v3770 = vsel %vm299, %v3611, -inf
    %v3771 = vmax.f32 %v3769, %v3770
    %v3772 = vsel %vm299, %v3610, -inf
    %v3773 = vsel %vm299, %v3612, -inf
    %v3774 = vmax.f32 %v3772, %v3773
    %v3775 = vsel %vm299, %v3613, -inf
    %v3776 = vsel %vm299, %v3615, -inf
    %v3777 = vmax.f32 %v3775, %v3776
    %v3778 = vsel %vm299, %v3614, -inf
    %v3779 = vsel %vm299, %v3616, -inf
    %v3780 = vmax.f32 %v3778, %v3779
    %v3781 = vsel %vm299, %v3617, -inf
    %v3782 = vsel %vm299, %v3619, -inf
    %v3783 = vmax.f32 %v3781, %v3782
    %v3784 = vsel %vm299, %v3618, -inf
    %v3785 = vsel %vm299, %v3620, -inf
    %v3786 = vmax.f32 %v3784, %v3785
    %v3787 = vsel %vm299, %v3621, -inf
    %v3788 = vsel %vm299, %v3623, -inf
    %v3789 = vmax.f32 %v3787, %v3788
    %v3790 = vsel %vm299, %v3622, -inf
    %v3791 = vsel %vm299, %v3624, -inf
    %v3792 = vmax.f32 %v3790, %v3791
    %v3793 = vsel %vm299, %v3625, -inf
    %v3794 = vsel %vm299, %v3627, -inf
    %v3795 = vmax.f32 %v3793, %v3794
    %v3796 = vsel %vm299, %v3626, -inf
    %v3797 = vsel %vm299, %v3628, -inf
    %v3798 = vmax.f32 %v3796, %v3797
    %v3799 = vsel %vm299, %v3629, -inf
    %v3800 = vsel %vm299, %v3631, -inf
    %v3801 = vmax.f32 %v3799, %v3800
    %v3802 = vsel %vm299, %v3630, -inf
    %v3803 = vsel %vm299, %v3632, -inf
    %v3804 = vmax.f32 %v3802, %v3803
    %v3805 = vsel %vm299, %v3633, -inf
    %v3806 = vsel %vm299, %v3635, -inf
    %v3807 = vmax.f32 %v3805, %v3806
    %v3808 = vsel %vm299, %v3634, -inf
    %v3809 = vsel %vm299, %v3636, -inf
    %v3810 = vmax.f32 %v3808, %v3809
    %v3811 = vsel %vm299, %v3637, -inf
    %v3812 = vsel %vm299, %v3639, -inf
    %v3813 = vmax.f32 %v3811, %v3812
    %v3814 = vsel %vm299, %v3638, -inf
    %v3815 = vsel %vm299, %v3640, -inf
    %v3816 = vmax.f32 %v3814, %v3815
    %v3817 = vsel %vm299, %v3641, -inf
    %v3818 = vsel %vm299, %v3643, -inf
    %v3819 = vmax.f32 %v3817, %v3818
    %v3820 = vsel %vm299, %v3642, -inf
    %v3821 = vsel %vm299, %v3644, -inf
    %v3822 = vmax.f32 %v3820, %v3821
    %v3823 = vsel %vm299, %v3645, -inf
    %v3824 = vsel %vm299, %v3647, -inf
    %v3825 = vmax.f32 %v3823, %v3824
    %v3826 = vsel %vm299, %v3646, -inf
    %v3827 = vsel %vm299, %v3648, -inf
    %v3828 = vmax.f32 %v3826, %v3827
    %v3829 = vsel %vm299, %v3649, -inf
    %v3830 = vsel %vm299, %v3651, -inf
    %v3831 = vmax.f32 %v3829, %v3830
    %v3832 = vsel %vm299, %v3650, -inf
    %v3833 = vsel %vm299, %v3652, -inf
    %v3834 = vmax.f32 %v3832, %v3833
    %v3835 = vsel %vm299, %v3653, -inf
    %v3836 = vsel %vm299, %v3655, -inf
    %v3837 = vmax.f32 %v3835, %v3836
    %v3838 = vsel %vm299, %v3654, -inf
    %v3839 = vsel %vm299, %v3656, -inf
    %v3840 = vmax.f32 %v3838, %v3839
    %v3841 = vsel %vm299, %v3657, -inf
    %v3842 = vsel %vm299, %v3659, -inf
    %v3843 = vmax.f32 %v3841, %v3842
    %v3844 = vsel %vm299, %v3658, -inf
    %v3845 = vsel %vm299, %v3660, -inf
    %v3846 = vmax.f32 %v3844, %v3845
    %v3847 = vsel %vm299, %v3661, -inf
    %v3848 = vsel %vm299, %v3663, -inf
    %v3849 = vmax.f32 %v3847, %v3848
    %v3850 = vsel %vm299, %v3662, -inf
    %v3851 = vsel %vm299, %v3664, -inf
    %v3852 = vmax.f32 %v3850, %v3851
    %v3853 = vsel %vm299, %v3665, -inf
    %v3854 = vsel %vm299, %v3667, -inf
    %v3855 = vmax.f32 %v3853, %v3854
    %v3856 = vsel %vm299, %v3666, -inf
    %v3857 = vsel %vm299, %v3668, -inf
    %v3858 = vmax.f32 %v3856, %v3857
    %v3859 = vsel %vm299, %v3669, -inf
    %v3860 = vsel %vm299, %v3671, -inf
    %v3861 = vmax.f32 %v3859, %v3860
    %v3862 = vsel %vm299, %v3670, -inf
    %v3863 = vsel %vm299, %v3672, -inf
    %v3864 = vmax.f32 %v3862, %v3863
    %s3865 = scalar_lea.vmem [#allocation3], 24
    %3866 = vst.msk [vmem:[%s3865 + $0x1] sm:$0xff] %vm299, %v3675
    %3867 = vst.msk [vmem:[%s3865 + $0x9] sm:$0xff] %vm299, %v3678
    %3868 = vst.msk [vmem:[%s3865 + $0x19] sm:$0xff] %vm299, %v3681
    %3869 = vst.msk [vmem:[%s3865 + $0x21] sm:$0xff] %vm299, %v3684
    %3870 = vst.msk [vmem:[%s3865 + $0x31] sm:$0xff] %vm299, %v3687
    %3871 = vst.msk [vmem:[%s3865 + $0x39] sm:$0xff] %vm299, %v3690
    %3872 = vst.msk [vmem:[%s3865 + $0x49] sm:$0xff] %vm299, %v3693
    %3873 = vst.msk [vmem:[%s3865 + $0x51] sm:$0xff] %vm299, %v3696
    %3874 = vst.msk [vmem:[%s3865 + $0x61] sm:$0xff] %vm299, %v3699
    %3875 = vst.msk [vmem:[%s3865 + $0x69] sm:$0xff] %vm299, %v3702
    %3876 = vst.msk [vmem:[%s3865 + $0x79] sm:$0xff] %vm299, %v3705
    %3877 = vst.msk [vmem:[%s3865 + $0x81] sm:$0xff] %vm299, %v3708
    %3878 = vst.msk [vmem:[%s3865 + $0x91] sm:$0xff] %vm299, %v3711
    %3879 = vst.msk [vmem:[%s3865 + $0x99] sm:$0xff] %vm299, %v3714
    %3880 = vst.msk [vmem:[%s3865 + $0xa9] sm:$0xff] %vm299, %v3717
    %3881 = vst.msk [vmem:[%s3865 + $0xb1] sm:$0xff] %vm299, %v3720
    %3882 = vst.msk [vmem:[%s3865 + $0xc1] sm:$0xff] %vm299, %v3723
    %3883 = vst.msk [vmem:[%s3865 + $0xc9] sm:$0xff] %vm299, %v3726
    %3884 = vst.msk [vmem:[%s3865 + $0xd9] sm:$0xff] %vm299, %v3729
    %3885 = vst.msk [vmem:[%s3865 + $0xe1] sm:$0xff] %vm299, %v3732
    %3886 = vst.msk [vmem:[%s3865 + $0xf1] sm:$0xff] %vm299, %v3735
    %3887 = vst.msk [vmem:[%s3865 + $0xf9] sm:$0xff] %vm299, %v3738
    %3888 = vst.msk [vmem:[%s3865 + $0x109] sm:$0xff] %vm299, %v3741
    %3889 = vst.msk [vmem:[%s3865 + $0x111] sm:$0xff] %vm299, %v3744
    %3890 = vst.msk [vmem:[%s3865 + $0x121] sm:$0xff] %vm299, %v3747
    %3891 = vst.msk [vmem:[%s3865 + $0x129] sm:$0xff] %vm299, %v3750
    %3892 = vst.msk [vmem:[%s3865 + $0x139] sm:$0xff] %vm299, %v3753
    %3893 = vst.msk [vmem:[%s3865 + $0x141] sm:$0xff] %vm299, %v3756
    %3894 = vst.msk [vmem:[%s3865 + $0x151] sm:$0xff] %vm299, %v3759
    %3895 = vst.msk [vmem:[%s3865 + $0x159] sm:$0xff] %vm299, %v3762
    %3896 = vst.msk [vmem:[%s3865 + $0x169] sm:$0xff] %vm299, %v3765
    %3897 = vst.msk [vmem:[%s3865 + $0x171] sm:$0xff] %vm299, %v3768
    %3898 = vst.msk [vmem:[%s3865 + $0x1b1] sm:$0xff] %vm299, %v3771
    %3899 = vst.msk [vmem:[%s3865 + $0x1b9] sm:$0xff] %vm299, %v3774
    %3900 = vst.msk [vmem:[%s3865 + $0x1c9] sm:$0xff] %vm299, %v3777
    %3901 = vst.msk [vmem:[%s3865 + $0x1d1] sm:$0xff] %vm299, %v3780
    %3902 = vst.msk [vmem:[%s3865 + $0x1e1] sm:$0xff] %vm299, %v3783
    %3903 = vst.msk [vmem:[%s3865 + $0x1e9] sm:$0xff] %vm299, %v3786
    %3904 = vst.msk [vmem:[%s3865 + $0x1f9] sm:$0xff] %vm299, %v3789
    %3905 = vst.msk [vmem:[%s3865 + $0x201] sm:$0xff] %vm299, %v3792
    %3906 = vst.msk [vmem:[%s3865 + $0x211] sm:$0xff] %vm299, %v3795
    %3907 = vst.msk [vmem:[%s3865 + $0x219] sm:$0xff] %vm299, %v3798
    %3908 = vst.msk [vmem:[%s3865 + $0x229] sm:$0xff] %vm299, %v3801
    %3909 = vst.msk [vmem:[%s3865 + $0x231] sm:$0xff] %vm299, %v3804
    %3910 = vst.msk [vmem:[%s3865 + $0x241] sm:$0xff] %vm299, %v3807
    %3911 = vst.msk [vmem:[%s3865 + $0x249] sm:$0xff] %vm299, %v3810
    %3912 = vst.msk [vmem:[%s3865 + $0x259] sm:$0xff] %vm299, %v3813
    %3913 = vst.msk [vmem:[%s3865 + $0x261] sm:$0xff] %vm299, %v3816
    %3914 = vst.msk [vmem:[%s3865 + $0x271] sm:$0xff] %vm299, %v3819
    %3915 = vst.msk [vmem:[%s3865 + $0x279] sm:$0xff] %vm299, %v3822
    %3916 = vst.msk [vmem:[%s3865 + $0x289] sm:$0xff] %vm299, %v3825
    %3917 = vst.msk [vmem:[%s3865 + $0x291] sm:$0xff] %vm299, %v3828
    %3918 = vst.msk [vmem:[%s3865 + $0x2a1] sm:$0xff] %vm299, %v3831
    %3919 = vst.msk [vmem:[%s3865 + $0x2a9] sm:$0xff] %vm299, %v3834
    %3920 = vst.msk [vmem:[%s3865 + $0x2b9] sm:$0xff] %vm299, %v3837
    %3921 = vst.msk [vmem:[%s3865 + $0x2c1] sm:$0xff] %vm299, %v3840
    %3922 = vst.msk [vmem:[%s3865 + $0x2d1] sm:$0xff] %vm299, %v3843
    %3923 = vst.msk [vmem:[%s3865 + $0x2d9] sm:$0xff] %vm299, %v3846
    %3924 = vst.msk [vmem:[%s3865 + $0x2e9] sm:$0xff] %vm299, %v3849
    %3925 = vst.msk [vmem:[%s3865 + $0x2f1] sm:$0xff] %vm299, %v3852
    %3926 = vst.msk [vmem:[%s3865 + $0x301] sm:$0xff] %vm299, %v3855
    %3927 = vst.msk [vmem:[%s3865 + $0x309] sm:$0xff] %vm299, %v3858
    %3928 = vst.msk [vmem:[%s3865 + $0x319] sm:$0xff] %vm299, %v3861
    %3929 = vst.msk [vmem:[%s3865 + $0x321] sm:$0xff] %vm299, %v3864
    %v3930 = vld [vmem:[#allocation3] sm:$0xff]
    %v3931 = vld [vmem:[#allocation3 + $0x8] sm:$0xff]
    %v3932 = vld [vmem:[#allocation3 + $0x18] sm:$0xff]
    %v3933 = vld [vmem:[#allocation3 + $0x20] sm:$0xff]
    %v3934 = vld [vmem:[#allocation3 + $0x30] sm:$0xff]
    %v3935 = vld [vmem:[#allocation3 + $0x38] sm:$0xff]
    %v3936 = vld [vmem:[#allocation3 + $0x48] sm:$0xff]
    %v3937 = vld [vmem:[#allocation3 + $0x50] sm:$0xff]
    %v3938 = vld [vmem:[#allocation3 + $0x60] sm:$0xff]
    %v3939 = vld [vmem:[#allocation3 + $0x68] sm:$0xff]
    %v3940 = vld [vmem:[#allocation3 + $0x78] sm:$0xff]
    %v3941 = vld [vmem:[#allocation3 + $0x80] sm:$0xff]
    %v3942 = vld [vmem:[#allocation3 + $0x90] sm:$0xff]
    %v3943 = vld [vmem:[#allocation3 + $0x98] sm:$0xff]
    %v3944 = vld [vmem:[#allocation3 + $0xa8] sm:$0xff]
    %v3945 = vld [vmem:[#allocation3 + $0xb0] sm:$0xff]
    %v3946 = vld [vmem:[#allocation3 + $0xc0] sm:$0xff]
    %v3947 = vld [vmem:[#allocation3 + $0xc8] sm:$0xff]
    %v3948 = vld [vmem:[#allocation3 + $0xd8] sm:$0xff]
    %v3949 = vld [vmem:[#allocation3 + $0xe0] sm:$0xff]
    %v3950 = vld [vmem:[#allocation3 + $0xf0] sm:$0xff]
    %v3951 = vld [vmem:[#allocation3 + $0xf8] sm:$0xff]
    %v3952 = vld [vmem:[#allocation3 + $0x108] sm:$0xff]
    %v3953 = vld [vmem:[#allocation3 + $0x110] sm:$0xff]
    %v3954 = vld [vmem:[#allocation3 + $0x120] sm:$0xff]
    %v3955 = vld [vmem:[#allocation3 + $0x128] sm:$0xff]
    %v3956 = vld [vmem:[#allocation3 + $0x138] sm:$0xff]
    %v3957 = vld [vmem:[#allocation3 + $0x140] sm:$0xff]
    %v3958 = vld [vmem:[#allocation3 + $0x150] sm:$0xff]
    %v3959 = vld [vmem:[#allocation3 + $0x158] sm:$0xff]
    %v3960 = vld [vmem:[#allocation3 + $0x168] sm:$0xff]
    %v3961 = vld [vmem:[#allocation3 + $0x170] sm:$0xff]
    %v3962 = vld [vmem:[#allocation3 + $0x1b0] sm:$0xff]
    %v3963 = vld [vmem:[#allocation3 + $0x1b8] sm:$0xff]
    %v3964 = vld [vmem:[#allocation3 + $0x1c8] sm:$0xff]
    %v3965 = vld [vmem:[#allocation3 + $0x1d0] sm:$0xff]
    %v3966 = vld [vmem:[#allocation3 + $0x1e0] sm:$0xff]
    %v3967 = vld [vmem:[#allocation3 + $0x1e8] sm:$0xff]
    %v3968 = vld [vmem:[#allocation3 + $0x1f8] sm:$0xff]
    %v3969 = vld [vmem:[#allocation3 + $0x200] sm:$0xff]
    %v3970 = vld [vmem:[#allocation3 + $0x210] sm:$0xff]
    %v3971 = vld [vmem:[#allocation3 + $0x218] sm:$0xff]
    %v3972 = vld [vmem:[#allocation3 + $0x228] sm:$0xff]
    %v3973 = vld [vmem:[#allocation3 + $0x230] sm:$0xff]
    %v3974 = vld [vmem:[#allocation3 + $0x240] sm:$0xff]
    %v3975 = vld [vmem:[#allocation3 + $0x248] sm:$0xff]
    %v3976 = vld [vmem:[#allocation3 + $0x258] sm:$0xff]
    %v3977 = vld [vmem:[#allocation3 + $0x260] sm:$0xff]
    %v3978 = vld [vmem:[#allocation3 + $0x270] sm:$0xff]
    %v3979 = vld [vmem:[#allocation3 + $0x278] sm:$0xff]
    %v3980 = vld [vmem:[#allocation3 + $0x288] sm:$0xff]
    %v3981 = vld [vmem:[#allocation3 + $0x290] sm:$0xff]
    %v3982 = vld [vmem:[#allocation3 + $0x2a0] sm:$0xff]
    %v3983 = vld [vmem:[#allocation3 + $0x2a8] sm:$0xff]
    %v3984 = vld [vmem:[#allocation3 + $0x2b8] sm:$0xff]
    %v3985 = vld [vmem:[#allocation3 + $0x2c0] sm:$0xff]
    %v3986 = vld [vmem:[#allocation3 + $0x2d0] sm:$0xff]
    %v3987 = vld [vmem:[#allocation3 + $0x2d8] sm:$0xff]
    %v3988 = vld [vmem:[#allocation3 + $0x2e8] sm:$0xff]
    %v3989 = vld [vmem:[#allocation3 + $0x2f0] sm:$0xff]
    %v3990 = vld [vmem:[#allocation3 + $0x300] sm:$0xff]
    %v3991 = vld [vmem:[#allocation3 + $0x308] sm:$0xff]
    %v3992 = vld [vmem:[#allocation3 + $0x318] sm:$0xff]
    %v3993 = vld [vmem:[#allocation3 + $0x320] sm:$0xff]
    %3994 = vst.msk [vmem:[#allocation4] sm:$0xff] %vm299, %v3930
    %3995 = vst.msk [vmem:[#allocation4 + $0x18] sm:$0xff] %vm299, %v3931
    %3996 = vst.msk [vmem:[#allocation4 + $0x30] sm:$0xff] %vm299, %v3932
    %3997 = vst.msk [vmem:[#allocation4 + $0x48] sm:$0xff] %vm299, %v3933
    %3998 = vst.msk [vmem:[#allocation4 + $0x60] sm:$0xff] %vm299, %v3934
    %3999 = vst.msk [vmem:[#allocation4 + $0x78] sm:$0xff] %vm299, %v3935
    %4000 = vst.msk [vmem:[#allocation4 + $0x90] sm:$0xff] %vm299, %v3936
    %4001 = vst.msk [vmem:[#allocation4 + $0xa8] sm:$0xff] %vm299, %v3937
    %4002 = vst.msk [vmem:[#allocation4 + $0xc0] sm:$0xff] %vm299, %v3938
    %4003 = vst.msk [vmem:[#allocation4 + $0xd8] sm:$0xff] %vm299, %v3939
    %4004 = vst.msk [vmem:[#allocation4 + $0xf0] sm:$0xff] %vm299, %v3940
    %4005 = vst.msk [vmem:[#allocation4 + $0x108] sm:$0xff] %vm299, %v3941
    %4006 = vst.msk [vmem:[#allocation4 + $0x120] sm:$0xff] %vm299, %v3942
    %4007 = vst.msk [vmem:[#allocation4 + $0x138] sm:$0xff] %vm299, %v3943
    %4008 = vst.msk [vmem:[#allocation4 + $0x150] sm:$0xff] %vm299, %v3944
    %4009 = vst.msk [vmem:[#allocation4 + $0x168] sm:$0xff] %vm299, %v3945
    %4010 = vst.msk [vmem:[#allocation4 + $0x180] sm:$0xff] %vm299, %v3946
    %4011 = vst.msk [vmem:[#allocation4 + $0x198] sm:$0xff] %vm299, %v3947
    %4012 = vst.msk [vmem:[#allocation4 + $0x1b0] sm:$0xff] %vm299, %v3948
    %4013 = vst.msk [vmem:[#allocation4 + $0x1c8] sm:$0xff] %vm299, %v3949
    %4014 = vst.msk [vmem:[#allocation4 + $0x1e0] sm:$0xff] %vm299, %v3950
    %4015 = vst.msk [vmem:[#allocation4 + $0x1f8] sm:$0xff] %vm299, %v3951
    %4016 = vst.msk [vmem:[#allocation4 + $0x210] sm:$0xff] %vm299, %v3952
    %4017 = vst.msk [vmem:[#allocation4 + $0x228] sm:$0xff] %vm299, %v3953
    %4018 = vst.msk [vmem:[#allocation4 + $0x240] sm:$0xff] %vm299, %v3954
    %4019 = vst.msk [vmem:[#allocation4 + $0x258] sm:$0xff] %vm299, %v3955
    %4020 = vst.msk [vmem:[#allocation4 + $0x270] sm:$0xff] %vm299, %v3956
    %4021 = vst.msk [vmem:[#allocation4 + $0x288] sm:$0xff] %vm299, %v3957
    %4022 = vst.msk [vmem:[#allocation4 + $0x2a0] sm:$0xff] %vm299, %v3958
    %4023 = vst.msk [vmem:[#allocation4 + $0x2b8] sm:$0xff] %vm299, %v3959
    %4024 = vst.msk [vmem:[#allocation4 + $0x2d0] sm:$0xff] %vm299, %v3960
    %4025 = vst.msk [vmem:[#allocation4 + $0x2e8] sm:$0xff] %vm299, %v3961
    %4026 = vst.msk [vmem:[#allocation4 + $0x300] sm:$0xff] %vm299, %v3962
    %4027 = vst.msk [vmem:[#allocation4 + $0x318] sm:$0xff] %vm299, %v3963
    %4028 = vst.msk [vmem:[#allocation4 + $0x330] sm:$0xff] %vm299, %v3964
    %4029 = vst.msk [vmem:[#allocation4 + $0x348] sm:$0xff] %vm299, %v3965
    %4030 = vst.msk [vmem:[#allocation4 + $0x360] sm:$0xff] %vm299, %v3966
    %4031 = vst.msk [vmem:[#allocation4 + $0x378] sm:$0xff] %vm299, %v3967
    %4032 = vst.msk [vmem:[#allocation4 + $0x390] sm:$0xff] %vm299, %v3968
    %4033 = vst.msk [vmem:[#allocation4 + $0x3a8] sm:$0xff] %vm299, %v3969
    %4034 = vst.msk [vmem:[#allocation4 + $0x3c0] sm:$0xff] %vm299, %v3970
    %4035 = vst.msk [vmem:[#allocation4 + $0x3d8] sm:$0xff] %vm299, %v3971
    %4036 = vst.msk [vmem:[#allocation4 + $0x3f0] sm:$0xff] %vm299, %v3972
    %4037 = vst.msk [vmem:[#allocation4 + $0x408] sm:$0xff] %vm299, %v3973
    %4038 = vst.msk [vmem:[#allocation4 + $0x420] sm:$0xff] %vm299, %v3974
    %4039 = vst.msk [vmem:[#allocation4 + $0x438] sm:$0xff] %vm299, %v3975
    %4040 = vst.msk [vmem:[#allocation4 + $0x450] sm:$0xff] %vm299, %v3976
    %4041 = vst.msk [vmem:[#allocation4 + $0x468] sm:$0xff] %vm299, %v3977
    %4042 = vst.msk [vmem:[#allocation4 + $0x480] sm:$0xff] %vm299, %v3978
    %4043 = vst.msk [vmem:[#allocation4 + $0x498] sm:$0xff] %vm299, %v3979
    %4044 = vst.msk [vmem:[#allocation4 + $0x4b0] sm:$0xff] %vm299, %v3980
    %4045 = vst.msk [vmem:[#allocation4 + $0x4c8] sm:$0xff] %vm299, %v3981
    %4046 = vst.msk [vmem:[#allocation4 + $0x4e0] sm:$0xff] %vm299, %v3982
    %4047 = vst.msk [vmem:[#allocation4 + $0x4f8] sm:$0xff] %vm299, %v3983
    %4048 = vst.msk [vmem:[#allocation4 + $0x510] sm:$0xff] %vm299, %v3984
    %4049 = vst.msk [vmem:[#allocation4 + $0x528] sm:$0xff] %vm299, %v3985
    %4050 = vst.msk [vmem:[#allocation4 + $0x540] sm:$0xff] %vm299, %v3986
    %4051 = vst.msk [vmem:[#allocation4 + $0x558] sm:$0xff] %vm299, %v3987
    %4052 = vst.msk [vmem:[#allocation4 + $0x570] sm:$0xff] %vm299, %v3988
    %4053 = vst.msk [vmem:[#allocation4 + $0x588] sm:$0xff] %vm299, %v3989
    %4054 = vst.msk [vmem:[#allocation4 + $0x5a0] sm:$0xff] %vm299, %v3990
    %4055 = vst.msk [vmem:[#allocation4 + $0x5b8] sm:$0xff] %vm299, %v3991
    %4056 = vst.msk [vmem:[#allocation4 + $0x5d0] sm:$0xff] %vm299, %v3992
    %4057 = vst.msk [vmem:[#allocation4 + $0x5e8] sm:$0xff] %vm299, %v3993
    %v4058 = vld [vmem:[#allocation3 + $0x1] sm:$0xff]
    %v4059 = vld [vmem:[#allocation3 + $0x9] sm:$0xff]
    %v4060 = vld [vmem:[#allocation3 + $0x19] sm:$0xff]
    %v4061 = vld [vmem:[#allocation3 + $0x21] sm:$0xff]
    %v4062 = vld [vmem:[#allocation3 + $0x31] sm:$0xff]
    %v4063 = vld [vmem:[#allocation3 + $0x39] sm:$0xff]
    %v4064 = vld [vmem:[#allocation3 + $0x49] sm:$0xff]
    %v4065 = vld [vmem:[#allocation3 + $0x51] sm:$0xff]
    %v4066 = vld [vmem:[#allocation3 + $0x61] sm:$0xff]
    %v4067 = vld [vmem:[#allocation3 + $0x69] sm:$0xff]
    %v4068 = vld [vmem:[#allocation3 + $0x79] sm:$0xff]
    %v4069 = vld [vmem:[#allocation3 + $0x81] sm:$0xff]
    %v4070 = vld [vmem:[#allocation3 + $0x91] sm:$0xff]
    %v4071 = vld [vmem:[#allocation3 + $0x99] sm:$0xff]
    %v4072 = vld [vmem:[#allocation3 + $0xa9] sm:$0xff]
    %v4073 = vld [vmem:[#allocation3 + $0xb1] sm:$0xff]
    %v4074 = vld [vmem:[#allocation3 + $0xc1] sm:$0xff]
    %v4075 = vld [vmem:[#allocation3 + $0xc9] sm:$0xff]
    %v4076 = vld [vmem:[#allocation3 + $0xd9] sm:$0xff]
    %v4077 = vld [vmem:[#allocation3 + $0xe1] sm:$0xff]
    %v4078 = vld [vmem:[#allocation3 + $0xf1] sm:$0xff]
    %v4079 = vld [vmem:[#allocation3 + $0xf9] sm:$0xff]
    %v4080 = vld [vmem:[#allocation3 + $0x109] sm:$0xff]
    %v4081 = vld [vmem:[#allocation3 + $0x111] sm:$0xff]
    %v4082 = vld [vmem:[#allocation3 + $0x121] sm:$0xff]
    %v4083 = vld [vmem:[#allocation3 + $0x129] sm:$0xff]
    %v4084 = vld [vmem:[#allocation3 + $0x139] sm:$0xff]
    %v4085 = vld [vmem:[#allocation3 + $0x141] sm:$0xff]
    %v4086 = vld [vmem:[#allocation3 + $0x151] sm:$0xff]
    %v4087 = vld [vmem:[#allocation3 + $0x159] sm:$0xff]
    %v4088 = vld [vmem:[#allocation3 + $0x169] sm:$0xff]
    %v4089 = vld [vmem:[#allocation3 + $0x171] sm:$0xff]
    %v4090 = vld [vmem:[#allocation3 + $0x1b1] sm:$0xff]
    %v4091 = vld [vmem:[#allocation3 + $0x1b9] sm:$0xff]
    %v4092 = vld [vmem:[#allocation3 + $0x1c9] sm:$0xff]
    %v4093 = vld [vmem:[#allocation3 + $0x1d1] sm:$0xff]
    %v4094 = vld [vmem:[#allocation3 + $0x1e1] sm:$0xff]
    %v4095 = vld [vmem:[#allocation3 + $0x1e9] sm:$0xff]
    %v4096 = vld [vmem:[#allocation3 + $0x1f9] sm:$0xff]
    %v4097 = vld [vmem:[#allocation3 + $0x201] sm:$0xff]
    %v4098 = vld [vmem:[#allocation3 + $0x211] sm:$0xff]
    %v4099 = vld [vmem:[#allocation3 + $0x219] sm:$0xff]
    %v4100 = vld [vmem:[#allocation3 + $0x229] sm:$0xff]
    %v4101 = vld [vmem:[#allocation3 + $0x231] sm:$0xff]
    %v4102 = vld [vmem:[#allocation3 + $0x241] sm:$0xff]
    %v4103 = vld [vmem:[#allocation3 + $0x249] sm:$0xff]
    %v4104 = vld [vmem:[#allocation3 + $0x259] sm:$0xff]
    %v4105 = vld [vmem:[#allocation3 + $0x261] sm:$0xff]
    %v4106 = vld [vmem:[#allocation3 + $0x271] sm:$0xff]
    %v4107 = vld [vmem:[#allocation3 + $0x279] sm:$0xff]
    %v4108 = vld [vmem:[#allocation3 + $0x289] sm:$0xff]
    %v4109 = vld [vmem:[#allocation3 + $0x291] sm:$0xff]
    %v4110 = vld [vmem:[#allocation3 + $0x2a1] sm:$0xff]
    %v4111 = vld [vmem:[#allocation3 + $0x2a9] sm:$0xff]
    %v4112 = vld [vmem:[#allocation3 + $0x2b9] sm:$0xff]
    %v4113 = vld [vmem:[#allocation3 + $0x2c1] sm:$0xff]
    %v4114 = vld [vmem:[#allocation3 + $0x2d1] sm:$0xff]
    %v4115 = vld [vmem:[#allocation3 + $0x2d9] sm:$0xff]
    %v4116 = vld [vmem:[#allocation3 + $0x2e9] sm:$0xff]
    %v4117 = vld [vmem:[#allocation3 + $0x2f1] sm:$0xff]
    %v4118 = vld [vmem:[#allocation3 + $0x301] sm:$0xff]
    %v4119 = vld [vmem:[#allocation3 + $0x309] sm:$0xff]
    %v4120 = vld [vmem:[#allocation3 + $0x319] sm:$0xff]
    %v4121 = vld [vmem:[#allocation3 + $0x321] sm:$0xff]
    %4186 = vrot.lane.b32.xlu0 %v4058, 32
    %v4187 = vpop.permute.xlu0 %4186
    %4188 = vrot.lane.b32.xlu0 %v4059, 32
    %v4189 = vpop.permute.xlu0 %4188
    %4190 = vrot.lane.b32.xlu0 %v4060, 32
    %v4191 = vpop.permute.xlu0 %4190
    %4192 = vrot.lane.b32.xlu0 %v4061, 32
    %v4193 = vpop.permute.xlu0 %4192
    %4194 = vrot.lane.b32.xlu0 %v4062, 32
    %v4195 = vpop.permute.xlu0 %4194
    %4196 = vrot.lane.b32.xlu0 %v4063, 32
    %v4197 = vpop.permute.xlu0 %4196
    %4198 = vrot.lane.b32.xlu0 %v4064, 32
    %v4199 = vpop.permute.xlu0 %4198
    %4200 = vrot.lane.b32.xlu0 %v4065, 32
    %v4201 = vpop.permute.xlu0 %4200
    %4202 = vrot.lane.b32.xlu0 %v4066, 32
    %v4203 = vpop.permute.xlu0 %4202
    %4204 = vrot.lane.b32.xlu0 %v4067, 32
    %v4205 = vpop.permute.xlu0 %4204
    %4206 = vrot.lane.b32.xlu0 %v4068, 32
    %v4207 = vpop.permute.xlu0 %4206
    %4208 = vrot.lane.b32.xlu0 %v4069, 32
    %v4209 = vpop.permute.xlu0 %4208
    %4210 = vrot.lane.b32.xlu0 %v4070, 32
    %v4211 = vpop.permute.xlu0 %4210
    %4212 = vrot.lane.b32.xlu0 %v4071, 32
    %v4213 = vpop.permute.xlu0 %4212
    %4214 = vrot.lane.b32.xlu0 %v4072, 32
    %v4215 = vpop.permute.xlu0 %4214
    %4216 = vrot.lane.b32.xlu0 %v4073, 32
    %v4217 = vpop.permute.xlu0 %4216
    %4218 = vrot.lane.b32.xlu0 %v4074, 32
    %v4219 = vpop.permute.xlu0 %4218
    %4220 = vrot.lane.b32.xlu0 %v4075, 32
    %v4221 = vpop.permute.xlu0 %4220
    %4222 = vrot.lane.b32.xlu0 %v4076, 32
    %v4223 = vpop.permute.xlu0 %4222
    %4224 = vrot.lane.b32.xlu0 %v4077, 32
    %v4225 = vpop.permute.xlu0 %4224
    %4226 = vrot.lane.b32.xlu0 %v4078, 32
    %v4227 = vpop.permute.xlu0 %4226
    %4228 = vrot.lane.b32.xlu0 %v4079, 32
    %v4229 = vpop.permute.xlu0 %4228
    %4230 = vrot.lane.b32.xlu0 %v4080, 32
    %v4231 = vpop.permute.xlu0 %4230
    %4232 = vrot.lane.b32.xlu0 %v4081, 32
    %v4233 = vpop.permute.xlu0 %4232
    %4234 = vrot.lane.b32.xlu0 %v4082, 32
    %v4235 = vpop.permute.xlu0 %4234
    %4236 = vrot.lane.b32.xlu0 %v4083, 32
    %v4237 = vpop.permute.xlu0 %4236
    %4238 = vrot.lane.b32.xlu0 %v4084, 32
    %v4239 = vpop.permute.xlu0 %4238
    %4240 = vrot.lane.b32.xlu0 %v4085, 32
    %v4241 = vpop.permute.xlu0 %4240
    %4242 = vrot.lane.b32.xlu0 %v4086, 32
    %v4243 = vpop.permute.xlu0 %4242
    %4244 = vrot.lane.b32.xlu0 %v4087, 32
    %v4245 = vpop.permute.xlu0 %4244
    %4246 = vrot.lane.b32.xlu0 %v4088, 32
    %v4247 = vpop.permute.xlu0 %4246
    %4248 = vrot.lane.b32.xlu0 %v4089, 32
    %v4249 = vpop.permute.xlu0 %4248
    %4250 = vrot.lane.b32.xlu0 %v4090, 32
    %v4251 = vpop.permute.xlu0 %4250
    %4252 = vrot.lane.b32.xlu0 %v4091, 32
    %v4253 = vpop.permute.xlu0 %4252
    %4254 = vrot.lane.b32.xlu0 %v4092, 32
    %v4255 = vpop.permute.xlu0 %4254
    %4256 = vrot.lane.b32.xlu0 %v4093, 32
    %v4257 = vpop.permute.xlu0 %4256
    %4258 = vrot.lane.b32.xlu0 %v4094, 32
    %v4259 = vpop.permute.xlu0 %4258
    %4260 = vrot.lane.b32.xlu0 %v4095, 32
    %v4261 = vpop.permute.xlu0 %4260
    %4262 = vrot.lane.b32.xlu0 %v4096, 32
    %v4263 = vpop.permute.xlu0 %4262
    %4264 = vrot.lane.b32.xlu0 %v4097, 32
    %v4265 = vpop.permute.xlu0 %4264
    %4266 = vrot.lane.b32.xlu0 %v4098, 32
    %v4267 = vpop.permute.xlu0 %4266
    %4268 = vrot.lane.b32.xlu0 %v4099, 32
    %v4269 = vpop.permute.xlu0 %4268
    %4270 = vrot.lane.b32.xlu0 %v4100, 32
    %v4271 = vpop.permute.xlu0 %4270
    %4272 = vrot.lane.b32.xlu0 %v4101, 32
    %v4273 = vpop.permute.xlu0 %4272
    %4274 = vrot.lane.b32.xlu0 %v4102, 32
    %v4275 = vpop.permute.xlu0 %4274
    %4276 = vrot.lane.b32.xlu0 %v4103, 32
    %v4277 = vpop.permute.xlu0 %4276
    %4278 = vrot.lane.b32.xlu0 %v4104, 32
    %v4279 = vpop.permute.xlu0 %4278
    %4280 = vrot.lane.b32.xlu0 %v4105, 32
    %v4281 = vpop.permute.xlu0 %4280
    %4282 = vrot.lane.b32.xlu0 %v4106, 32
    %v4283 = vpop.permute.xlu0 %4282
    %4284 = vrot.lane.b32.xlu0 %v4107, 32
    %v4285 = vpop.permute.xlu0 %4284
    %4286 = vrot.lane.b32.xlu0 %v4108, 32
    %v4287 = vpop.permute.xlu0 %4286
    %4288 = vrot.lane.b32.xlu0 %v4109, 32
    %v4289 = vpop.permute.xlu0 %4288
    %4290 = vrot.lane.b32.xlu0 %v4110, 32
    %v4291 = vpop.permute.xlu0 %4290
    %4292 = vrot.lane.b32.xlu0 %v4111, 32
    %v4293 = vpop.permute.xlu0 %4292
    %4294 = vrot.lane.b32.xlu0 %v4112, 32
    %v4295 = vpop.permute.xlu0 %4294
    %4296 = vrot.lane.b32.xlu0 %v4113, 32
    %v4297 = vpop.permute.xlu0 %4296
    %4298 = vrot.lane.b32.xlu0 %v4114, 32
    %v4299 = vpop.permute.xlu0 %4298
    %4300 = vrot.lane.b32.xlu0 %v4115, 32
    %v4301 = vpop.permute.xlu0 %4300
    %4302 = vrot.lane.b32.xlu0 %v4116, 32
    %v4303 = vpop.permute.xlu0 %4302
    %4304 = vrot.lane.b32.xlu0 %v4117, 32
    %v4305 = vpop.permute.xlu0 %4304
    %4306 = vrot.lane.b32.xlu0 %v4118, 32
    %v4307 = vpop.permute.xlu0 %4306
    %4308 = vrot.lane.b32.xlu0 %v4119, 32
    %v4309 = vpop.permute.xlu0 %4308
    %4310 = vrot.lane.b32.xlu0 %v4120, 32
    %v4311 = vpop.permute.xlu0 %4310
    %4312 = vrot.lane.b32.xlu0 %v4121, 32
    %v4313 = vpop.permute.xlu0 %4312
    %vm4378 = vcmask 523520
    %4379 = vst.msk [vmem:[#allocation4] sm:$0xff] %vm4378, %v4187
    %4380 = vst.msk [vmem:[#allocation4 + $0x18] sm:$0xff] %vm4378, %v4189
    %4381 = vst.msk [vmem:[#allocation4 + $0x30] sm:$0xff] %vm4378, %v4191
    %4382 = vst.msk [vmem:[#allocation4 + $0x48] sm:$0xff] %vm4378, %v4193
    %4383 = vst.msk [vmem:[#allocation4 + $0x60] sm:$0xff] %vm4378, %v4195
    %4384 = vst.msk [vmem:[#allocation4 + $0x78] sm:$0xff] %vm4378, %v4197
    %4385 = vst.msk [vmem:[#allocation4 + $0x90] sm:$0xff] %vm4378, %v4199
    %4386 = vst.msk [vmem:[#allocation4 + $0xa8] sm:$0xff] %vm4378, %v4201
    %4387 = vst.msk [vmem:[#allocation4 + $0xc0] sm:$0xff] %vm4378, %v4203
    %4388 = vst.msk [vmem:[#allocation4 + $0xd8] sm:$0xff] %vm4378, %v4205
    %4389 = vst.msk [vmem:[#allocation4 + $0xf0] sm:$0xff] %vm4378, %v4207
    %4390 = vst.msk [vmem:[#allocation4 + $0x108] sm:$0xff] %vm4378, %v4209
    %4391 = vst.msk [vmem:[#allocation4 + $0x120] sm:$0xff] %vm4378, %v4211
    %4392 = vst.msk [vmem:[#allocation4 + $0x138] sm:$0xff] %vm4378, %v4213
    %4393 = vst.msk [vmem:[#allocation4 + $0x150] sm:$0xff] %vm4378, %v4215
    %4394 = vst.msk [vmem:[#allocation4 + $0x168] sm:$0xff] %vm4378, %v4217
    %4395 = vst.msk [vmem:[#allocation4 + $0x180] sm:$0xff] %vm4378, %v4219
    %4396 = vst.msk [vmem:[#allocation4 + $0x198] sm:$0xff] %vm4378, %v4221
    %4397 = vst.msk [vmem:[#allocation4 + $0x1b0] sm:$0xff] %vm4378, %v4223
    %4398 = vst.msk [vmem:[#allocation4 + $0x1c8] sm:$0xff] %vm4378, %v4225
    %4399 = vst.msk [vmem:[#allocation4 + $0x1e0] sm:$0xff] %vm4378, %v4227
    %4400 = vst.msk [vmem:[#allocation4 + $0x1f8] sm:$0xff] %vm4378, %v4229
    %4401 = vst.msk [vmem:[#allocation4 + $0x210] sm:$0xff] %vm4378, %v4231
    %4402 = vst.msk [vmem:[#allocation4 + $0x228] sm:$0xff] %vm4378, %v4233
    %4403 = vst.msk [vmem:[#allocation4 + $0x240] sm:$0xff] %vm4378, %v4235
    %4404 = vst.msk [vmem:[#allocation4 + $0x258] sm:$0xff] %vm4378, %v4237
    %4405 = vst.msk [vmem:[#allocation4 + $0x270] sm:$0xff] %vm4378, %v4239
    %4406 = vst.msk [vmem:[#allocation4 + $0x288] sm:$0xff] %vm4378, %v4241
    %4407 = vst.msk [vmem:[#allocation4 + $0x2a0] sm:$0xff] %vm4378, %v4243
    %4408 = vst.msk [vmem:[#allocation4 + $0x2b8] sm:$0xff] %vm4378, %v4245
    %4409 = vst.msk [vmem:[#allocation4 + $0x2d0] sm:$0xff] %vm4378, %v4247
    %4410 = vst.msk [vmem:[#allocation4 + $0x2e8] sm:$0xff] %vm4378, %v4249
    %4411 = vst.msk [vmem:[#allocation4 + $0x300] sm:$0xff] %vm4378, %v4251
    %4412 = vst.msk [vmem:[#allocation4 + $0x318] sm:$0xff] %vm4378, %v4253
    %4413 = vst.msk [vmem:[#allocation4 + $0x330] sm:$0xff] %vm4378, %v4255
    %4414 = vst.msk [vmem:[#allocation4 + $0x348] sm:$0xff] %vm4378, %v4257
    %4415 = vst.msk [vmem:[#allocation4 + $0x360] sm:$0xff] %vm4378, %v4259
    %4416 = vst.msk [vmem:[#allocation4 + $0x378] sm:$0xff] %vm4378, %v4261
    %4417 = vst.msk [vmem:[#allocation4 + $0x390] sm:$0xff] %vm4378, %v4263
    %4418 = vst.msk [vmem:[#allocation4 + $0x3a8] sm:$0xff] %vm4378, %v4265
    %4419 = vst.msk [vmem:[#allocation4 + $0x3c0] sm:$0xff] %vm4378, %v4267
    %4420 = vst.msk [vmem:[#allocation4 + $0x3d8] sm:$0xff] %vm4378, %v4269
    %4421 = vst.msk [vmem:[#allocation4 + $0x3f0] sm:$0xff] %vm4378, %v4271
    %4422 = vst.msk [vmem:[#allocation4 + $0x408] sm:$0xff] %vm4378, %v4273
    %4423 = vst.msk [vmem:[#allocation4 + $0x420] sm:$0xff] %vm4378, %v4275
    %4424 = vst.msk [vmem:[#allocation4 + $0x438] sm:$0xff] %vm4378, %v4277
    %4425 = vst.msk [vmem:[#allocation4 + $0x450] sm:$0xff] %vm4378, %v4279
    %4426 = vst.msk [vmem:[#allocation4 + $0x468] sm:$0xff] %vm4378, %v4281
    %4427 = vst.msk [vmem:[#allocation4 + $0x480] sm:$0xff] %vm4378, %v4283
    %4428 = vst.msk [vmem:[#allocation4 + $0x498] sm:$0xff] %vm4378, %v4285
    %4429 = vst.msk [vmem:[#allocation4 + $0x4b0] sm:$0xff] %vm4378, %v4287
    %4430 = vst.msk [vmem:[#allocation4 + $0x4c8] sm:$0xff] %vm4378, %v4289
    %4431 = vst.msk [vmem:[#allocation4 + $0x4e0] sm:$0xff] %vm4378, %v4291
    %4432 = vst.msk [vmem:[#allocation4 + $0x4f8] sm:$0xff] %vm4378, %v4293
    %4433 = vst.msk [vmem:[#allocation4 + $0x510] sm:$0xff] %vm4378, %v4295
    %4434 = vst.msk [vmem:[#allocation4 + $0x528] sm:$0xff] %vm4378, %v4297
    %4435 = vst.msk [vmem:[#allocation4 + $0x540] sm:$0xff] %vm4378, %v4299
    %4436 = vst.msk [vmem:[#allocation4 + $0x558] sm:$0xff] %vm4378, %v4301
    %4437 = vst.msk [vmem:[#allocation4 + $0x570] sm:$0xff] %vm4378, %v4303
    %4438 = vst.msk [vmem:[#allocation4 + $0x588] sm:$0xff] %vm4378, %v4305
    %4439 = vst.msk [vmem:[#allocation4 + $0x5a0] sm:$0xff] %vm4378, %v4307
    %4440 = vst.msk [vmem:[#allocation4 + $0x5b8] sm:$0xff] %vm4378, %v4309
    %4441 = vst.msk [vmem:[#allocation4 + $0x5d0] sm:$0xff] %vm4378, %v4311
    %4442 = vst.msk [vmem:[#allocation4 + $0x5e8] sm:$0xff] %vm4378, %v4313
    %v4443 = vld [vmem:[#allocation3 + $0x2] sm:$0xff]
    %v4444 = vld [vmem:[#allocation3 + $0xa] sm:$0xff]
    %v4445 = vld [vmem:[#allocation3 + $0x1a] sm:$0xff]
    %v4446 = vld [vmem:[#allocation3 + $0x22] sm:$0xff]
    %v4447 = vld [vmem:[#allocation3 + $0x32] sm:$0xff]
    %v4448 = vld [vmem:[#allocation3 + $0x3a] sm:$0xff]
    %v4449 = vld [vmem:[#allocation3 + $0x4a] sm:$0xff]
    %v4450 = vld [vmem:[#allocation3 + $0x52] sm:$0xff]
    %v4451 = vld [vmem:[#allocation3 + $0x62] sm:$0xff]
    %v4452 = vld [vmem:[#allocation3 + $0x6a] sm:$0xff]
    %v4453 = vld [vmem:[#allocation3 + $0x7a] sm:$0xff]
    %v4454 = vld [vmem:[#allocation3 + $0x82] sm:$0xff]
    %v4455 = vld [vmem:[#allocation3 + $0x92] sm:$0xff]
    %v4456 = vld [vmem:[#allocation3 + $0x9a] sm:$0xff]
    %v4457 = vld [vmem:[#allocation3 + $0xaa] sm:$0xff]
    %v4458 = vld [vmem:[#allocation3 + $0xb2] sm:$0xff]
    %v4459 = vld [vmem:[#allocation3 + $0xc2] sm:$0xff]
    %v4460 = vld [vmem:[#allocation3 + $0xca] sm:$0xff]
    %v4461 = vld [vmem:[#allocation3 + $0xda] sm:$0xff]
    %v4462 = vld [vmem:[#allocation3 + $0xe2] sm:$0xff]
    %v4463 = vld [vmem:[#allocation3 + $0xf2] sm:$0xff]
    %v4464 = vld [vmem:[#allocation3 + $0xfa] sm:$0xff]
    %v4465 = vld [vmem:[#allocation3 + $0x10a] sm:$0xff]
    %v4466 = vld [vmem:[#allocation3 + $0x112] sm:$0xff]
    %v4467 = vld [vmem:[#allocation3 + $0x122] sm:$0xff]
    %v4468 = vld [vmem:[#allocation3 + $0x12a] sm:$0xff]
    %v4469 = vld [vmem:[#allocation3 + $0x13a] sm:$0xff]
    %v4470 = vld [vmem:[#allocation3 + $0x142] sm:$0xff]
    %v4471 = vld [vmem:[#allocation3 + $0x152] sm:$0xff]
    %v4472 = vld [vmem:[#allocation3 + $0x15a] sm:$0xff]
    %v4473 = vld [vmem:[#allocation3 + $0x16a] sm:$0xff]
    %v4474 = vld [vmem:[#allocation3 + $0x172] sm:$0xff]
    %v4475 = vld [vmem:[#allocation3 + $0x1b2] sm:$0xff]
    %v4476 = vld [vmem:[#allocation3 + $0x1ba] sm:$0xff]
    %v4477 = vld [vmem:[#allocation3 + $0x1ca] sm:$0xff]
    %v4478 = vld [vmem:[#allocation3 + $0x1d2] sm:$0xff]
    %v4479 = vld [vmem:[#allocation3 + $0x1e2] sm:$0xff]
    %v4480 = vld [vmem:[#allocation3 + $0x1ea] sm:$0xff]
    %v4481 = vld [vmem:[#allocation3 + $0x1fa] sm:$0xff]
    %v4482 = vld [vmem:[#allocation3 + $0x202] sm:$0xff]
    %v4483 = vld [vmem:[#allocation3 + $0x212] sm:$0xff]
    %v4484 = vld [vmem:[#allocation3 + $0x21a] sm:$0xff]
    %v4485 = vld [vmem:[#allocation3 + $0x22a] sm:$0xff]
    %v4486 = vld [vmem:[#allocation3 + $0x232] sm:$0xff]
    %v4487 = vld [vmem:[#allocation3 + $0x242] sm:$0xff]
    %v4488 = vld [vmem:[#allocation3 + $0x24a] sm:$0xff]
    %v4489 = vld [vmem:[#allocation3 + $0x25a] sm:$0xff]
    %v4490 = vld [vmem:[#allocation3 + $0x262] sm:$0xff]
    %v4491 = vld [vmem:[#allocation3 + $0x272] sm:$0xff]
    %v4492 = vld [vmem:[#allocation3 + $0x27a] sm:$0xff]
    %v4493 = vld [vmem:[#allocation3 + $0x28a] sm:$0xff]
    %v4494 = vld [vmem:[#allocation3 + $0x292] sm:$0xff]
    %v4495 = vld [vmem:[#allocation3 + $0x2a2] sm:$0xff]
    %v4496 = vld [vmem:[#allocation3 + $0x2aa] sm:$0xff]
    %v4497 = vld [vmem:[#allocation3 + $0x2ba] sm:$0xff]
    %v4498 = vld [vmem:[#allocation3 + $0x2c2] sm:$0xff]
    %v4499 = vld [vmem:[#allocation3 + $0x2d2] sm:$0xff]
    %v4500 = vld [vmem:[#allocation3 + $0x2da] sm:$0xff]
    %v4501 = vld [vmem:[#allocation3 + $0x2ea] sm:$0xff]
    %v4502 = vld [vmem:[#allocation3 + $0x2f2] sm:$0xff]
    %v4503 = vld [vmem:[#allocation3 + $0x302] sm:$0xff]
    %v4504 = vld [vmem:[#allocation3 + $0x30a] sm:$0xff]
    %v4505 = vld [vmem:[#allocation3 + $0x31a] sm:$0xff]
    %v4506 = vld [vmem:[#allocation3 + $0x322] sm:$0xff]
    %4571 = vrot.lane.b32.xlu0 %v4443, 64
    %v4572 = vpop.permute.xlu0 %4571
    %4573 = vrot.lane.b32.xlu0 %v4444, 64
    %v4574 = vpop.permute.xlu0 %4573
    %4575 = vrot.lane.b32.xlu0 %v4445, 64
    %v4576 = vpop.permute.xlu0 %4575
    %4577 = vrot.lane.b32.xlu0 %v4446, 64
    %v4578 = vpop.permute.xlu0 %4577
    %4579 = vrot.lane.b32.xlu0 %v4447, 64
    %v4580 = vpop.permute.xlu0 %4579
    %4581 = vrot.lane.b32.xlu0 %v4448, 64
    %v4582 = vpop.permute.xlu0 %4581
    %4583 = vrot.lane.b32.xlu0 %v4449, 64
    %v4584 = vpop.permute.xlu0 %4583
    %4585 = vrot.lane.b32.xlu0 %v4450, 64
    %v4586 = vpop.permute.xlu0 %4585
    %4587 = vrot.lane.b32.xlu0 %v4451, 64
    %v4588 = vpop.permute.xlu0 %4587
    %4589 = vrot.lane.b32.xlu0 %v4452, 64
    %v4590 = vpop.permute.xlu0 %4589
    %4591 = vrot.lane.b32.xlu0 %v4453, 64
    %v4592 = vpop.permute.xlu0 %4591
    %4593 = vrot.lane.b32.xlu0 %v4454, 64
    %v4594 = vpop.permute.xlu0 %4593
    %4595 = vrot.lane.b32.xlu0 %v4455, 64
    %v4596 = vpop.permute.xlu0 %4595
    %4597 = vrot.lane.b32.xlu0 %v4456, 64
    %v4598 = vpop.permute.xlu0 %4597
    %4599 = vrot.lane.b32.xlu0 %v4457, 64
    %v4600 = vpop.permute.xlu0 %4599
    %4601 = vrot.lane.b32.xlu0 %v4458, 64
    %v4602 = vpop.permute.xlu0 %4601
    %4603 = vrot.lane.b32.xlu0 %v4459, 64
    %v4604 = vpop.permute.xlu0 %4603
    %4605 = vrot.lane.b32.xlu0 %v4460, 64
    %v4606 = vpop.permute.xlu0 %4605
    %4607 = vrot.lane.b32.xlu0 %v4461, 64
    %v4608 = vpop.permute.xlu0 %4607
    %4609 = vrot.lane.b32.xlu0 %v4462, 64
    %v4610 = vpop.permute.xlu0 %4609
    %4611 = vrot.lane.b32.xlu0 %v4463, 64
    %v4612 = vpop.permute.xlu0 %4611
    %4613 = vrot.lane.b32.xlu0 %v4464, 64
    %v4614 = vpop.permute.xlu0 %4613
    %4615 = vrot.lane.b32.xlu0 %v4465, 64
    %v4616 = vpop.permute.xlu0 %4615
    %4617 = vrot.lane.b32.xlu0 %v4466, 64
    %v4618 = vpop.permute.xlu0 %4617
    %4619 = vrot.lane.b32.xlu0 %v4467, 64
    %v4620 = vpop.permute.xlu0 %4619
    %4621 = vrot.lane.b32.xlu0 %v4468, 64
    %v4622 = vpop.permute.xlu0 %4621
    %4623 = vrot.lane.b32.xlu0 %v4469, 64
    %v4624 = vpop.permute.xlu0 %4623
    %4625 = vrot.lane.b32.xlu0 %v4470, 64
    %v4626 = vpop.permute.xlu0 %4625
    %4627 = vrot.lane.b32.xlu0 %v4471, 64
    %v4628 = vpop.permute.xlu0 %4627
    %4629 = vrot.lane.b32.xlu0 %v4472, 64
    %v4630 = vpop.permute.xlu0 %4629
    %4631 = vrot.lane.b32.xlu0 %v4473, 64
    %v4632 = vpop.permute.xlu0 %4631
    %4633 = vrot.lane.b32.xlu0 %v4474, 64
    %v4634 = vpop.permute.xlu0 %4633
    %4635 = vrot.lane.b32.xlu0 %v4475, 64
    %v4636 = vpop.permute.xlu0 %4635
    %4637 = vrot.lane.b32.xlu0 %v4476, 64
    %v4638 = vpop.permute.xlu0 %4637
    %4639 = vrot.lane.b32.xlu0 %v4477, 64
    %v4640 = vpop.permute.xlu0 %4639
    %4641 = vrot.lane.b32.xlu0 %v4478, 64
    %v4642 = vpop.permute.xlu0 %4641
    %4643 = vrot.lane.b32.xlu0 %v4479, 64
    %v4644 = vpop.permute.xlu0 %4643
    %4645 = vrot.lane.b32.xlu0 %v4480, 64
    %v4646 = vpop.permute.xlu0 %4645
    %4647 = vrot.lane.b32.xlu0 %v4481, 64
    %v4648 = vpop.permute.xlu0 %4647
    %4649 = vrot.lane.b32.xlu0 %v4482, 64
    %v4650 = vpop.permute.xlu0 %4649
    %4651 = vrot.lane.b32.xlu0 %v4483, 64
    %v4652 = vpop.permute.xlu0 %4651
    %4653 = vrot.lane.b32.xlu0 %v4484, 64
    %v4654 = vpop.permute.xlu0 %4653
    %4655 = vrot.lane.b32.xlu0 %v4485, 64
    %v4656 = vpop.permute.xlu0 %4655
    %4657 = vrot.lane.b32.xlu0 %v4486, 64
    %v4658 = vpop.permute.xlu0 %4657
    %4659 = vrot.lane.b32.xlu0 %v4487, 64
    %v4660 = vpop.permute.xlu0 %4659
    %4661 = vrot.lane.b32.xlu0 %v4488, 64
    %v4662 = vpop.permute.xlu0 %4661
    %4663 = vrot.lane.b32.xlu0 %v4489, 64
    %v4664 = vpop.permute.xlu0 %4663
    %4665 = vrot.lane.b32.xlu0 %v4490, 64
    %v4666 = vpop.permute.xlu0 %4665
    %4667 = vrot.lane.b32.xlu0 %v4491, 64
    %v4668 = vpop.permute.xlu0 %4667
    %4669 = vrot.lane.b32.xlu0 %v4492, 64
    %v4670 = vpop.permute.xlu0 %4669
    %4671 = vrot.lane.b32.xlu0 %v4493, 64
    %v4672 = vpop.permute.xlu0 %4671
    %4673 = vrot.lane.b32.xlu0 %v4494, 64
    %v4674 = vpop.permute.xlu0 %4673
    %4675 = vrot.lane.b32.xlu0 %v4495, 64
    %v4676 = vpop.permute.xlu0 %4675
    %4677 = vrot.lane.b32.xlu0 %v4496, 64
    %v4678 = vpop.permute.xlu0 %4677
    %4679 = vrot.lane.b32.xlu0 %v4497, 64
    %v4680 = vpop.permute.xlu0 %4679
    %4681 = vrot.lane.b32.xlu0 %v4498, 64
    %v4682 = vpop.permute.xlu0 %4681
    %4683 = vrot.lane.b32.xlu0 %v4499, 64
    %v4684 = vpop.permute.xlu0 %4683
    %4685 = vrot.lane.b32.xlu0 %v4500, 64
    %v4686 = vpop.permute.xlu0 %4685
    %4687 = vrot.lane.b32.xlu0 %v4501, 64
    %v4688 = vpop.permute.xlu0 %4687
    %4689 = vrot.lane.b32.xlu0 %v4502, 64
    %v4690 = vpop.permute.xlu0 %4689
    %4691 = vrot.lane.b32.xlu0 %v4503, 64
    %v4692 = vpop.permute.xlu0 %4691
    %4693 = vrot.lane.b32.xlu0 %v4504, 64
    %v4694 = vpop.permute.xlu0 %4693
    %4695 = vrot.lane.b32.xlu0 %v4505, 64
    %v4696 = vpop.permute.xlu0 %4695
    %4697 = vrot.lane.b32.xlu0 %v4506, 64
    %v4698 = vpop.permute.xlu0 %4697
    %vm4763 = vcmask 785920
    %4764 = vst.msk [vmem:[#allocation4] sm:$0xff] %vm4763, %v4572
    %4765 = vst.msk [vmem:[#allocation4 + $0x18] sm:$0xff] %vm4763, %v4574
    %4766 = vst.msk [vmem:[#allocation4 + $0x30] sm:$0xff] %vm4763, %v4576
    %4767 = vst.msk [vmem:[#allocation4 + $0x48] sm:$0xff] %vm4763, %v4578
    %4768 = vst.msk [vmem:[#allocation4 + $0x60] sm:$0xff] %vm4763, %v4580
    %4769 = vst.msk [vmem:[#allocation4 + $0x78] sm:$0xff] %vm4763, %v4582
    %4770 = vst.msk [vmem:[#allocation4 + $0x90] sm:$0xff] %vm4763, %v4584
    %4771 = vst.msk [vmem:[#allocation4 + $0xa8] sm:$0xff] %vm4763, %v4586
    %4772 = vst.msk [vmem:[#allocation4 + $0xc0] sm:$0xff] %vm4763, %v4588
    %4773 = vst.msk [vmem:[#allocation4 + $0xd8] sm:$0xff] %vm4763, %v4590
    %4774 = vst.msk [vmem:[#allocation4 + $0xf0] sm:$0xff] %vm4763, %v4592
    %4775 = vst.msk [vmem:[#allocation4 + $0x108] sm:$0xff] %vm4763, %v4594
    %4776 = vst.msk [vmem:[#allocation4 + $0x120] sm:$0xff] %vm4763, %v4596
    %4777 = vst.msk [vmem:[#allocation4 + $0x138] sm:$0xff] %vm4763, %v4598
    %4778 = vst.msk [vmem:[#allocation4 + $0x150] sm:$0xff] %vm4763, %v4600
    %4779 = vst.msk [vmem:[#allocation4 + $0x168] sm:$0xff] %vm4763, %v4602
    %4780 = vst.msk [vmem:[#allocation4 + $0x180] sm:$0xff] %vm4763, %v4604
    %4781 = vst.msk [vmem:[#allocation4 + $0x198] sm:$0xff] %vm4763, %v4606
    %4782 = vst.msk [vmem:[#allocation4 + $0x1b0] sm:$0xff] %vm4763, %v4608
    %4783 = vst.msk [vmem:[#allocation4 + $0x1c8] sm:$0xff] %vm4763, %v4610
    %4784 = vst.msk [vmem:[#allocation4 + $0x1e0] sm:$0xff] %vm4763, %v4612
    %4785 = vst.msk [vmem:[#allocation4 + $0x1f8] sm:$0xff] %vm4763, %v4614
    %4786 = vst.msk [vmem:[#allocation4 + $0x210] sm:$0xff] %vm4763, %v4616
    %4787 = vst.msk [vmem:[#allocation4 + $0x228] sm:$0xff] %vm4763, %v4618
    %4788 = vst.msk [vmem:[#allocation4 + $0x240] sm:$0xff] %vm4763, %v4620
    %4789 = vst.msk [vmem:[#allocation4 + $0x258] sm:$0xff] %vm4763, %v4622
    %4790 = vst.msk [vmem:[#allocation4 + $0x270] sm:$0xff] %vm4763, %v4624
    %4791 = vst.msk [vmem:[#allocation4 + $0x288] sm:$0xff] %vm4763, %v4626
    %4792 = vst.msk [vmem:[#allocation4 + $0x2a0] sm:$0xff] %vm4763, %v4628
    %4793 = vst.msk [vmem:[#allocation4 + $0x2b8] sm:$0xff] %vm4763, %v4630
    %4794 = vst.msk [vmem:[#allocation4 + $0x2d0] sm:$0xff] %vm4763, %v4632
    %4795 = vst.msk [vmem:[#allocation4 + $0x2e8] sm:$0xff] %vm4763, %v4634
    %4796 = vst.msk [vmem:[#allocation4 + $0x300] sm:$0xff] %vm4763, %v4636
    %4797 = vst.msk [vmem:[#allocation4 + $0x318] sm:$0xff] %vm4763, %v4638
    %4798 = vst.msk [vmem:[#allocation4 + $0x330] sm:$0xff] %vm4763, %v4640
    %4799 = vst.msk [vmem:[#allocation4 + $0x348] sm:$0xff] %vm4763, %v4642
    %4800 = vst.msk [vmem:[#allocation4 + $0x360] sm:$0xff] %vm4763, %v4644
    %4801 = vst.msk [vmem:[#allocation4 + $0x378] sm:$0xff] %vm4763, %v4646
    %4802 = vst.msk [vmem:[#allocation4 + $0x390] sm:$0xff] %vm4763, %v4648
    %4803 = vst.msk [vmem:[#allocation4 + $0x3a8] sm:$0xff] %vm4763, %v4650
    %4804 = vst.msk [vmem:[#allocation4 + $0x3c0] sm:$0xff] %vm4763, %v4652
    %4805 = vst.msk [vmem:[#allocation4 + $0x3d8] sm:$0xff] %vm4763, %v4654
    %4806 = vst.msk [vmem:[#allocation4 + $0x3f0] sm:$0xff] %vm4763, %v4656
    %4807 = vst.msk [vmem:[#allocation4 + $0x408] sm:$0xff] %vm4763, %v4658
    %4808 = vst.msk [vmem:[#allocation4 + $0x420] sm:$0xff] %vm4763, %v4660
    %4809 = vst.msk [vmem:[#allocation4 + $0x438] sm:$0xff] %vm4763, %v4662
    %4810 = vst.msk [vmem:[#allocation4 + $0x450] sm:$0xff] %vm4763, %v4664
    %4811 = vst.msk [vmem:[#allocation4 + $0x468] sm:$0xff] %vm4763, %v4666
    %4812 = vst.msk [vmem:[#allocation4 + $0x480] sm:$0xff] %vm4763, %v4668
    %4813 = vst.msk [vmem:[#allocation4 + $0x498] sm:$0xff] %vm4763, %v4670
    %4814 = vst.msk [vmem:[#allocation4 + $0x4b0] sm:$0xff] %vm4763, %v4672
    %4815 = vst.msk [vmem:[#allocation4 + $0x4c8] sm:$0xff] %vm4763, %v4674
    %4816 = vst.msk [vmem:[#allocation4 + $0x4e0] sm:$0xff] %vm4763, %v4676
    %4817 = vst.msk [vmem:[#allocation4 + $0x4f8] sm:$0xff] %vm4763, %v4678
    %4818 = vst.msk [vmem:[#allocation4 + $0x510] sm:$0xff] %vm4763, %v4680
    %4819 = vst.msk [vmem:[#allocation4 + $0x528] sm:$0xff] %vm4763, %v4682
    %4820 = vst.msk [vmem:[#allocation4 + $0x540] sm:$0xff] %vm4763, %v4684
    %4821 = vst.msk [vmem:[#allocation4 + $0x558] sm:$0xff] %vm4763, %v4686
    %4822 = vst.msk [vmem:[#allocation4 + $0x570] sm:$0xff] %vm4763, %v4688
    %4823 = vst.msk [vmem:[#allocation4 + $0x588] sm:$0xff] %vm4763, %v4690
    %4824 = vst.msk [vmem:[#allocation4 + $0x5a0] sm:$0xff] %vm4763, %v4692
    %4825 = vst.msk [vmem:[#allocation4 + $0x5b8] sm:$0xff] %vm4763, %v4694
    %4826 = vst.msk [vmem:[#allocation4 + $0x5d0] sm:$0xff] %vm4763, %v4696
    %4827 = vst.msk [vmem:[#allocation4 + $0x5e8] sm:$0xff] %vm4763, %v4698
    %v4828 = vld [vmem:[%s3865] sm:$0xff]
    %v4829 = vld [vmem:[%s3865 + $0x8] sm:$0xff]
    %v4830 = vld [vmem:[%s3865 + $0x18] sm:$0xff]
    %v4831 = vld [vmem:[%s3865 + $0x20] sm:$0xff]
    %v4832 = vld [vmem:[%s3865 + $0x30] sm:$0xff]
    %v4833 = vld [vmem:[%s3865 + $0x38] sm:$0xff]
    %v4834 = vld [vmem:[%s3865 + $0x48] sm:$0xff]
    %v4835 = vld [vmem:[%s3865 + $0x50] sm:$0xff]
    %v4836 = vld [vmem:[%s3865 + $0x60] sm:$0xff]
    %v4837 = vld [vmem:[%s3865 + $0x68] sm:$0xff]
    %v4838 = vld [vmem:[%s3865 + $0x78] sm:$0xff]
    %v4839 = vld [vmem:[%s3865 + $0x80] sm:$0xff]
    %v4840 = vld [vmem:[%s3865 + $0x90] sm:$0xff]
    %v4841 = vld [vmem:[%s3865 + $0x98] sm:$0xff]
    %v4842 = vld [vmem:[%s3865 + $0xa8] sm:$0xff]
    %v4843 = vld [vmem:[%s3865 + $0xb0] sm:$0xff]
    %v4844 = vld [vmem:[%s3865 + $0xc0] sm:$0xff]
    %v4845 = vld [vmem:[%s3865 + $0xc8] sm:$0xff]
    %v4846 = vld [vmem:[%s3865 + $0xd8] sm:$0xff]
    %v4847 = vld [vmem:[%s3865 + $0xe0] sm:$0xff]
    %v4848 = vld [vmem:[%s3865 + $0xf0] sm:$0xff]
    %v4849 = vld [vmem:[%s3865 + $0xf8] sm:$0xff]
    %v4850 = vld [vmem:[%s3865 + $0x108] sm:$0xff]
    %v4851 = vld [vmem:[%s3865 + $0x110] sm:$0xff]
    %v4852 = vld [vmem:[%s3865 + $0x120] sm:$0xff]
    %v4853 = vld [vmem:[%s3865 + $0x128] sm:$0xff]
    %v4854 = vld [vmem:[%s3865 + $0x138] sm:$0xff]
    %v4855 = vld [vmem:[%s3865 + $0x140] sm:$0xff]
    %v4856 = vld [vmem:[%s3865 + $0x150] sm:$0xff]
    %v4857 = vld [vmem:[%s3865 + $0x158] sm:$0xff]
    %v4858 = vld [vmem:[%s3865 + $0x168] sm:$0xff]
    %v4859 = vld [vmem:[%s3865 + $0x170] sm:$0xff]
    %v4860 = vld [vmem:[%s3865 + $0x1b0] sm:$0xff]
    %v4861 = vld [vmem:[%s3865 + $0x1b8] sm:$0xff]
    %v4862 = vld [vmem:[%s3865 + $0x1c8] sm:$0xff]
    %v4863 = vld [vmem:[%s3865 + $0x1d0] sm:$0xff]
    %v4864 = vld [vmem:[%s3865 + $0x1e0] sm:$0xff]
    %v4865 = vld [vmem:[%s3865 + $0x1e8] sm:$0xff]
    %v4866 = vld [vmem:[%s3865 + $0x1f8] sm:$0xff]
    %v4867 = vld [vmem:[%s3865 + $0x200] sm:$0xff]
    %v4868 = vld [vmem:[%s3865 + $0x210] sm:$0xff]
    %v4869 = vld [vmem:[%s3865 + $0x218] sm:$0xff]
    %v4870 = vld [vmem:[%s3865 + $0x228] sm:$0xff]
    %v4871 = vld [vmem:[%s3865 + $0x230] sm:$0xff]
    %v4872 = vld [vmem:[%s3865 + $0x240] sm:$0xff]
    %v4873 = vld [vmem:[%s3865 + $0x248] sm:$0xff]
    %v4874 = vld [vmem:[%s3865 + $0x258] sm:$0xff]
    %v4875 = vld [vmem:[%s3865 + $0x260] sm:$0xff]
    %v4876 = vld [vmem:[%s3865 + $0x270] sm:$0xff]
    %v4877 = vld [vmem:[%s3865 + $0x278] sm:$0xff]
    %v4878 = vld [vmem:[%s3865 + $0x288] sm:$0xff]
    %v4879 = vld [vmem:[%s3865 + $0x290] sm:$0xff]
    %v4880 = vld [vmem:[%s3865 + $0x2a0] sm:$0xff]
    %v4881 = vld [vmem:[%s3865 + $0x2a8] sm:$0xff]
    %v4882 = vld [vmem:[%s3865 + $0x2b8] sm:$0xff]
    %v4883 = vld [vmem:[%s3865 + $0x2c0] sm:$0xff]
    %v4884 = vld [vmem:[%s3865 + $0x2d0] sm:$0xff]
    %v4885 = vld [vmem:[%s3865 + $0x2d8] sm:$0xff]
    %v4886 = vld [vmem:[%s3865 + $0x2e8] sm:$0xff]
    %v4887 = vld [vmem:[%s3865 + $0x2f0] sm:$0xff]
    %v4888 = vld [vmem:[%s3865 + $0x300] sm:$0xff]
    %v4889 = vld [vmem:[%s3865 + $0x308] sm:$0xff]
    %v4890 = vld [vmem:[%s3865 + $0x318] sm:$0xff]
    %v4891 = vld [vmem:[%s3865 + $0x320] sm:$0xff]
    %4956 = vrot.lane.b32.xlu0 %v4828, 96
    %v4957 = vpop.permute.xlu0 %4956
    %4958 = vrot.lane.b32.xlu0 %v4829, 96
    %v4959 = vpop.permute.xlu0 %4958
    %4960 = vrot.lane.b32.xlu0 %v4830, 96
    %v4961 = vpop.permute.xlu0 %4960
    %4962 = vrot.lane.b32.xlu0 %v4831, 96
    %v4963 = vpop.permute.xlu0 %4962
    %4964 = vrot.lane.b32.xlu0 %v4832, 96
    %v4965 = vpop.permute.xlu0 %4964
    %4966 = vrot.lane.b32.xlu0 %v4833, 96
    %v4967 = vpop.permute.xlu0 %4966
    %4968 = vrot.lane.b32.xlu0 %v4834, 96
    %v4969 = vpop.permute.xlu0 %4968
    %4970 = vrot.lane.b32.xlu0 %v4835, 96
    %v4971 = vpop.permute.xlu0 %4970
    %4972 = vrot.lane.b32.xlu0 %v4836, 96
    %v4973 = vpop.permute.xlu0 %4972
    %4974 = vrot.lane.b32.xlu0 %v4837, 96
    %v4975 = vpop.permute.xlu0 %4974
    %4976 = vrot.lane.b32.xlu0 %v4838, 96
    %v4977 = vpop.permute.xlu0 %4976
    %4978 = vrot.lane.b32.xlu0 %v4839, 96
    %v4979 = vpop.permute.xlu0 %4978
    %4980 = vrot.lane.b32.xlu0 %v4840, 96
    %v4981 = vpop.permute.xlu0 %4980
    %4982 = vrot.lane.b32.xlu0 %v4841, 96
    %v4983 = vpop.permute.xlu0 %4982
    %4984 = vrot.lane.b32.xlu0 %v4842, 96
    %v4985 = vpop.permute.xlu0 %4984
    %4986 = vrot.lane.b32.xlu0 %v4843, 96
    %v4987 = vpop.permute.xlu0 %4986
    %4988 = vrot.lane.b32.xlu0 %v4844, 96
    %v4989 = vpop.permute.xlu0 %4988
    %4990 = vrot.lane.b32.xlu0 %v4845, 96
    %v4991 = vpop.permute.xlu0 %4990
    %4992 = vrot.lane.b32.xlu0 %v4846, 96
    %v4993 = vpop.permute.xlu0 %4992
    %4994 = vrot.lane.b32.xlu0 %v4847, 96
    %v4995 = vpop.permute.xlu0 %4994
    %4996 = vrot.lane.b32.xlu0 %v4848, 96
    %v4997 = vpop.permute.xlu0 %4996
    %4998 = vrot.lane.b32.xlu0 %v4849, 96
    %v4999 = vpop.permute.xlu0 %4998
    %5000 = vrot.lane.b32.xlu0 %v4850, 96
    %v5001 = vpop.permute.xlu0 %5000
    %5002 = vrot.lane.b32.xlu0 %v4851, 96
    %v5003 = vpop.permute.xlu0 %5002
    %5004 = vrot.lane.b32.xlu0 %v4852, 96
    %v5005 = vpop.permute.xlu0 %5004
    %5006 = vrot.lane.b32.xlu0 %v4853, 96
    %v5007 = vpop.permute.xlu0 %5006
    %5008 = vrot.lane.b32.xlu0 %v4854, 96
    %v5009 = vpop.permute.xlu0 %5008
    %5010 = vrot.lane.b32.xlu0 %v4855, 96
    %v5011 = vpop.permute.xlu0 %5010
    %5012 = vrot.lane.b32.xlu0 %v4856, 96
    %v5013 = vpop.permute.xlu0 %5012
    %5014 = vrot.lane.b32.xlu0 %v4857, 96
    %v5015 = vpop.permute.xlu0 %5014
    %5016 = vrot.lane.b32.xlu0 %v4858, 96
    %v5017 = vpop.permute.xlu0 %5016
    %5018 = vrot.lane.b32.xlu0 %v4859, 96
    %v5019 = vpop.permute.xlu0 %5018
    %5020 = vrot.lane.b32.xlu0 %v4860, 96
    %v5021 = vpop.permute.xlu0 %5020
    %5022 = vrot.lane.b32.xlu0 %v4861, 96
    %v5023 = vpop.permute.xlu0 %5022
    %5024 = vrot.lane.b32.xlu0 %v4862, 96
    %v5025 = vpop.permute.xlu0 %5024
    %5026 = vrot.lane.b32.xlu0 %v4863, 96
    %v5027 = vpop.permute.xlu0 %5026
    %5028 = vrot.lane.b32.xlu0 %v4864, 96
    %v5029 = vpop.permute.xlu0 %5028
    %5030 = vrot.lane.b32.xlu0 %v4865, 96
    %v5031 = vpop.permute.xlu0 %5030
    %5032 = vrot.lane.b32.xlu0 %v4866, 96
    %v5033 = vpop.permute.xlu0 %5032
    %5034 = vrot.lane.b32.xlu0 %v4867, 96
    %v5035 = vpop.permute.xlu0 %5034
    %5036 = vrot.lane.b32.xlu0 %v4868, 96
    %v5037 = vpop.permute.xlu0 %5036
    %5038 = vrot.lane.b32.xlu0 %v4869, 96
    %v5039 = vpop.permute.xlu0 %5038
    %5040 = vrot.lane.b32.xlu0 %v4870, 96
    %v5041 = vpop.permute.xlu0 %5040
    %5042 = vrot.lane.b32.xlu0 %v4871, 96
    %v5043 = vpop.permute.xlu0 %5042
    %5044 = vrot.lane.b32.xlu0 %v4872, 96
    %v5045 = vpop.permute.xlu0 %5044
    %5046 = vrot.lane.b32.xlu0 %v4873, 96
    %v5047 = vpop.permute.xlu0 %5046
    %5048 = vrot.lane.b32.xlu0 %v4874, 96
    %v5049 = vpop.permute.xlu0 %5048
    %5050 = vrot.lane.b32.xlu0 %v4875, 96
    %v5051 = vpop.permute.xlu0 %5050
    %5052 = vrot.lane.b32.xlu0 %v4876, 96
    %v5053 = vpop.permute.xlu0 %5052
    %5054 = vrot.lane.b32.xlu0 %v4877, 96
    %v5055 = vpop.permute.xlu0 %5054
    %5056 = vrot.lane.b32.xlu0 %v4878, 96
    %v5057 = vpop.permute.xlu0 %5056
    %5058 = vrot.lane.b32.xlu0 %v4879, 96
    %v5059 = vpop.permute.xlu0 %5058
    %5060 = vrot.lane.b32.xlu0 %v4880, 96
    %v5061 = vpop.permute.xlu0 %5060
    %5062 = vrot.lane.b32.xlu0 %v4881, 96
    %v5063 = vpop.permute.xlu0 %5062
    %5064 = vrot.lane.b32.xlu0 %v4882, 96
    %v5065 = vpop.permute.xlu0 %5064
    %5066 = vrot.lane.b32.xlu0 %v4883, 96
    %v5067 = vpop.permute.xlu0 %5066
    %5068 = vrot.lane.b32.xlu0 %v4884, 96
    %v5069 = vpop.permute.xlu0 %5068
    %5070 = vrot.lane.b32.xlu0 %v4885, 96
    %v5071 = vpop.permute.xlu0 %5070
    %5072 = vrot.lane.b32.xlu0 %v4886, 96
    %v5073 = vpop.permute.xlu0 %5072
    %5074 = vrot.lane.b32.xlu0 %v4887, 96
    %v5075 = vpop.permute.xlu0 %5074
    %5076 = vrot.lane.b32.xlu0 %v4888, 96
    %v5077 = vpop.permute.xlu0 %5076
    %5078 = vrot.lane.b32.xlu0 %v4889, 96
    %v5079 = vpop.permute.xlu0 %5078
    %5080 = vrot.lane.b32.xlu0 %v4890, 96
    %v5081 = vpop.permute.xlu0 %5080
    %5082 = vrot.lane.b32.xlu0 %v4891, 96
    %v5083 = vpop.permute.xlu0 %5082
    %vm5148 = vcmask 1048320
    %5149 = vst.msk [vmem:[#allocation4] sm:$0xff] %vm5148, %v4957
    %5150 = vst.msk [vmem:[#allocation4 + $0x18] sm:$0xff] %vm5148, %v4959
    %5151 = vst.msk [vmem:[#allocation4 + $0x30] sm:$0xff] %vm5148, %v4961
    %5152 = vst.msk [vmem:[#allocation4 + $0x48] sm:$0xff] %vm5148, %v4963
    %5153 = vst.msk [vmem:[#allocation4 + $0x60] sm:$0xff] %vm5148, %v4965
    %5154 = vst.msk [vmem:[#allocation4 + $0x78] sm:$0xff] %vm5148, %v4967
    %5155 = vst.msk [vmem:[#allocation4 + $0x90] sm:$0xff] %vm5148, %v4969
    %5156 = vst.msk [vmem:[#allocation4 + $0xa8] sm:$0xff] %vm5148, %v4971
    %5157 = vst.msk [vmem:[#allocation4 + $0xc0] sm:$0xff] %vm5148, %v4973
    %5158 = vst.msk [vmem:[#allocation4 + $0xd8] sm:$0xff] %vm5148, %v4975
    %5159 = vst.msk [vmem:[#allocation4 + $0xf0] sm:$0xff] %vm5148, %v4977
    %5160 = vst.msk [vmem:[#allocation4 + $0x108] sm:$0xff] %vm5148, %v4979
    %5161 = vst.msk [vmem:[#allocation4 + $0x120] sm:$0xff] %vm5148, %v4981
    %5162 = vst.msk [vmem:[#allocation4 + $0x138] sm:$0xff] %vm5148, %v4983
    %5163 = vst.msk [vmem:[#allocation4 + $0x150] sm:$0xff] %vm5148, %v4985
    %5164 = vst.msk [vmem:[#allocation4 + $0x168] sm:$0xff] %vm5148, %v4987
    %5165 = vst.msk [vmem:[#allocation4 + $0x180] sm:$0xff] %vm5148, %v4989
    %5166 = vst.msk [vmem:[#allocation4 + $0x198] sm:$0xff] %vm5148, %v4991
    %5167 = vst.msk [vmem:[#allocation4 + $0x1b0] sm:$0xff] %vm5148, %v4993
    %5168 = vst.msk [vmem:[#allocation4 + $0x1c8] sm:$0xff] %vm5148, %v4995
    %5169 = vst.msk [vmem:[#allocation4 + $0x1e0] sm:$0xff] %vm5148, %v4997
    %5170 = vst.msk [vmem:[#allocation4 + $0x1f8] sm:$0xff] %vm5148, %v4999
    %5171 = vst.msk [vmem:[#allocation4 + $0x210] sm:$0xff] %vm5148, %v5001
    %5172 = vst.msk [vmem:[#allocation4 + $0x228] sm:$0xff] %vm5148, %v5003
    %5173 = vst.msk [vmem:[#allocation4 + $0x240] sm:$0xff] %vm5148, %v5005
    %5174 = vst.msk [vmem:[#allocation4 + $0x258] sm:$0xff] %vm5148, %v5007
    %5175 = vst.msk [vmem:[#allocation4 + $0x270] sm:$0xff] %vm5148, %v5009
    %5176 = vst.msk [vmem:[#allocation4 + $0x288] sm:$0xff] %vm5148, %v5011
    %5177 = vst.msk [vmem:[#allocation4 + $0x2a0] sm:$0xff] %vm5148, %v5013
    %5178 = vst.msk [vmem:[#allocation4 + $0x2b8] sm:$0xff] %vm5148, %v5015
    %5179 = vst.msk [vmem:[#allocation4 + $0x2d0] sm:$0xff] %vm5148, %v5017
    %5180 = vst.msk [vmem:[#allocation4 + $0x2e8] sm:$0xff] %vm5148, %v5019
    %5181 = vst.msk [vmem:[#allocation4 + $0x300] sm:$0xff] %vm5148, %v5021
    %5182 = vst.msk [vmem:[#allocation4 + $0x318] sm:$0xff] %vm5148, %v5023
    %5183 = vst.msk [vmem:[#allocation4 + $0x330] sm:$0xff] %vm5148, %v5025
    %5184 = vst.msk [vmem:[#allocation4 + $0x348] sm:$0xff] %vm5148, %v5027
    %5185 = vst.msk [vmem:[#allocation4 + $0x360] sm:$0xff] %vm5148, %v5029
    %5186 = vst.msk [vmem:[#allocation4 + $0x378] sm:$0xff] %vm5148, %v5031
    %5187 = vst.msk [vmem:[#allocation4 + $0x390] sm:$0xff] %vm5148, %v5033
    %5188 = vst.msk [vmem:[#allocation4 + $0x3a8] sm:$0xff] %vm5148, %v5035
    %5189 = vst.msk [vmem:[#allocation4 + $0x3c0] sm:$0xff] %vm5148, %v5037
    %5190 = vst.msk [vmem:[#allocation4 + $0x3d8] sm:$0xff] %vm5148, %v5039
    %5191 = vst.msk [vmem:[#allocation4 + $0x3f0] sm:$0xff] %vm5148, %v5041
    %5192 = vst.msk [vmem:[#allocation4 + $0x408] sm:$0xff] %vm5148, %v5043
    %5193 = vst.msk [vmem:[#allocation4 + $0x420] sm:$0xff] %vm5148, %v5045
    %5194 = vst.msk [vmem:[#allocation4 + $0x438] sm:$0xff] %vm5148, %v5047
    %5195 = vst.msk [vmem:[#allocation4 + $0x450] sm:$0xff] %vm5148, %v5049
    %5196 = vst.msk [vmem:[#allocation4 + $0x468] sm:$0xff] %vm5148, %v5051
    %5197 = vst.msk [vmem:[#allocation4 + $0x480] sm:$0xff] %vm5148, %v5053
    %5198 = vst.msk [vmem:[#allocation4 + $0x498] sm:$0xff] %vm5148, %v5055
    %5199 = vst.msk [vmem:[#allocation4 + $0x4b0] sm:$0xff] %vm5148, %v5057
    %5200 = vst.msk [vmem:[#allocation4 + $0x4c8] sm:$0xff] %vm5148, %v5059
    %5201 = vst.msk [vmem:[#allocation4 + $0x4e0] sm:$0xff] %vm5148, %v5061
    %5202 = vst.msk [vmem:[#allocation4 + $0x4f8] sm:$0xff] %vm5148, %v5063
    %5203 = vst.msk [vmem:[#allocation4 + $0x510] sm:$0xff] %vm5148, %v5065
    %5204 = vst.msk [vmem:[#allocation4 + $0x528] sm:$0xff] %vm5148, %v5067
    %5205 = vst.msk [vmem:[#allocation4 + $0x540] sm:$0xff] %vm5148, %v5069
    %5206 = vst.msk [vmem:[#allocation4 + $0x558] sm:$0xff] %vm5148, %v5071
    %5207 = vst.msk [vmem:[#allocation4 + $0x570] sm:$0xff] %vm5148, %v5073
    %5208 = vst.msk [vmem:[#allocation4 + $0x588] sm:$0xff] %vm5148, %v5075
    %5209 = vst.msk [vmem:[#allocation4 + $0x5a0] sm:$0xff] %vm5148, %v5077
    %5210 = vst.msk [vmem:[#allocation4 + $0x5b8] sm:$0xff] %vm5148, %v5079
    %5211 = vst.msk [vmem:[#allocation4 + $0x5d0] sm:$0xff] %vm5148, %v5081
    %5212 = vst.msk [vmem:[#allocation4 + $0x5e8] sm:$0xff] %vm5148, %v5083
    %v5213 = vld [vmem:[%s3865 + $0x1] sm:$0xff]
    %v5214 = vld [vmem:[%s3865 + $0x9] sm:$0xff]
    %v5215 = vld [vmem:[%s3865 + $0x19] sm:$0xff]
    %v5216 = vld [vmem:[%s3865 + $0x21] sm:$0xff]
    %v5217 = vld [vmem:[%s3865 + $0x31] sm:$0xff]
    %v5218 = vld [vmem:[%s3865 + $0x39] sm:$0xff]
    %v5219 = vld [vmem:[%s3865 + $0x49] sm:$0xff]
    %v5220 = vld [vmem:[%s3865 + $0x51] sm:$0xff]
    %v5221 = vld [vmem:[%s3865 + $0x61] sm:$0xff]
    %v5222 = vld [vmem:[%s3865 + $0x69] sm:$0xff]
    %v5223 = vld [vmem:[%s3865 + $0x79] sm:$0xff]
    %v5224 = vld [vmem:[%s3865 + $0x81] sm:$0xff]
    %v5225 = vld [vmem:[%s3865 + $0x91] sm:$0xff]
    %v5226 = vld [vmem:[%s3865 + $0x99] sm:$0xff]
    %v5227 = vld [vmem:[%s3865 + $0xa9] sm:$0xff]
    %v5228 = vld [vmem:[%s3865 + $0xb1] sm:$0xff]
    %v5229 = vld [vmem:[%s3865 + $0xc1] sm:$0xff]
    %v5230 = vld [vmem:[%s3865 + $0xc9] sm:$0xff]
    %v5231 = vld [vmem:[%s3865 + $0xd9] sm:$0xff]
    %v5232 = vld [vmem:[%s3865 + $0xe1] sm:$0xff]
    %v5233 = vld [vmem:[%s3865 + $0xf1] sm:$0xff]
    %v5234 = vld [vmem:[%s3865 + $0xf9] sm:$0xff]
    %v5235 = vld [vmem:[%s3865 + $0x109] sm:$0xff]
    %v5236 = vld [vmem:[%s3865 + $0x111] sm:$0xff]
    %v5237 = vld [vmem:[%s3865 + $0x121] sm:$0xff]
    %v5238 = vld [vmem:[%s3865 + $0x129] sm:$0xff]
    %v5239 = vld [vmem:[%s3865 + $0x139] sm:$0xff]
    %v5240 = vld [vmem:[%s3865 + $0x141] sm:$0xff]
    %v5241 = vld [vmem:[%s3865 + $0x151] sm:$0xff]
    %v5242 = vld [vmem:[%s3865 + $0x159] sm:$0xff]
    %v5243 = vld [vmem:[%s3865 + $0x169] sm:$0xff]
    %v5244 = vld [vmem:[%s3865 + $0x171] sm:$0xff]
    %v5245 = vld [vmem:[%s3865 + $0x1b1] sm:$0xff]
    %v5246 = vld [vmem:[%s3865 + $0x1b9] sm:$0xff]
    %v5247 = vld [vmem:[%s3865 + $0x1c9] sm:$0xff]
    %v5248 = vld [vmem:[%s3865 + $0x1d1] sm:$0xff]
    %v5249 = vld [vmem:[%s3865 + $0x1e1] sm:$0xff]
    %v5250 = vld [vmem:[%s3865 + $0x1e9] sm:$0xff]
    %v5251 = vld [vmem:[%s3865 + $0x1f9] sm:$0xff]
    %v5252 = vld [vmem:[%s3865 + $0x201] sm:$0xff]
    %v5253 = vld [vmem:[%s3865 + $0x211] sm:$0xff]
    %v5254 = vld [vmem:[%s3865 + $0x219] sm:$0xff]
    %v5255 = vld [vmem:[%s3865 + $0x229] sm:$0xff]
    %v5256 = vld [vmem:[%s3865 + $0x231] sm:$0xff]
    %v5257 = vld [vmem:[%s3865 + $0x241] sm:$0xff]
    %v5258 = vld [vmem:[%s3865 + $0x249] sm:$0xff]
    %v5259 = vld [vmem:[%s3865 + $0x259] sm:$0xff]
    %v5260 = vld [vmem:[%s3865 + $0x261] sm:$0xff]
    %v5261 = vld [vmem:[%s3865 + $0x271] sm:$0xff]
    %v5262 = vld [vmem:[%s3865 + $0x279] sm:$0xff]
    %v5263 = vld [vmem:[%s3865 + $0x289] sm:$0xff]
    %v5264 = vld [vmem:[%s3865 + $0x291] sm:$0xff]
    %v5265 = vld [vmem:[%s3865 + $0x2a1] sm:$0xff]
    %v5266 = vld [vmem:[%s3865 + $0x2a9] sm:$0xff]
    %v5267 = vld [vmem:[%s3865 + $0x2b9] sm:$0xff]
    %v5268 = vld [vmem:[%s3865 + $0x2c1] sm:$0xff]
    %v5269 = vld [vmem:[%s3865 + $0x2d1] sm:$0xff]
    %v5270 = vld [vmem:[%s3865 + $0x2d9] sm:$0xff]
    %v5271 = vld [vmem:[%s3865 + $0x2e9] sm:$0xff]
    %v5272 = vld [vmem:[%s3865 + $0x2f1] sm:$0xff]
    %v5273 = vld [vmem:[%s3865 + $0x301] sm:$0xff]
    %v5274 = vld [vmem:[%s3865 + $0x309] sm:$0xff]
    %v5275 = vld [vmem:[%s3865 + $0x319] sm:$0xff]
    %v5276 = vld [vmem:[%s3865 + $0x321] sm:$0xff]
    %5277 = vst.msk [vmem:[#allocation4 + $0x8] sm:$0xff] %vm299, %v5213
    %5278 = vst.msk [vmem:[#allocation4 + $0x20] sm:$0xff] %vm299, %v5214
    %5279 = vst.msk [vmem:[#allocation4 + $0x38] sm:$0xff] %vm299, %v5215
    %5280 = vst.msk [vmem:[#allocation4 + $0x50] sm:$0xff] %vm299, %v5216
    %5281 = vst.msk [vmem:[#allocation4 + $0x68] sm:$0xff] %vm299, %v5217
    %5282 = vst.msk [vmem:[#allocation4 + $0x80] sm:$0xff] %vm299, %v5218
    %5283 = vst.msk [vmem:[#allocation4 + $0x98] sm:$0xff] %vm299, %v5219
    %5284 = vst.msk [vmem:[#allocation4 + $0xb0] sm:$0xff] %vm299, %v5220
    %5285 = vst.msk [vmem:[#allocation4 + $0xc8] sm:$0xff] %vm299, %v5221
    %5286 = vst.msk [vmem:[#allocation4 + $0xe0] sm:$0xff] %vm299, %v5222
    %5287 = vst.msk [vmem:[#allocation4 + $0xf8] sm:$0xff] %vm299, %v5223
    %5288 = vst.msk [vmem:[#allocation4 + $0x110] sm:$0xff] %vm299, %v5224
    %5289 = vst.msk [vmem:[#allocation4 + $0x128] sm:$0xff] %vm299, %v5225
    %5290 = vst.msk [vmem:[#allocation4 + $0x140] sm:$0xff] %vm299, %v5226
    %5291 = vst.msk [vmem:[#allocation4 + $0x158] sm:$0xff] %vm299, %v5227
    %5292 = vst.msk [vmem:[#allocation4 + $0x170] sm:$0xff] %vm299, %v5228
    %5293 = vst.msk [vmem:[#allocation4 + $0x188] sm:$0xff] %vm299, %v5229
    %5294 = vst.msk [vmem:[#allocation4 + $0x1a0] sm:$0xff] %vm299, %v5230
    %5295 = vst.msk [vmem:[#allocation4 + $0x1b8] sm:$0xff] %vm299, %v5231
    %5296 = vst.msk [vmem:[#allocation4 + $0x1d0] sm:$0xff] %vm299, %v5232
    %5297 = vst.msk [vmem:[#allocation4 + $0x1e8] sm:$0xff] %vm299, %v5233
    %5298 = vst.msk [vmem:[#allocation4 + $0x200] sm:$0xff] %vm299, %v5234
    %5299 = vst.msk [vmem:[#allocation4 + $0x218] sm:$0xff] %vm299, %v5235
    %5300 = vst.msk [vmem:[#allocation4 + $0x230] sm:$0xff] %vm299, %v5236
    %5301 = vst.msk [vmem:[#allocation4 + $0x248] sm:$0xff] %vm299, %v5237
    %5302 = vst.msk [vmem:[#allocation4 + $0x260] sm:$0xff] %vm299, %v5238
    %5303 = vst.msk [vmem:[#allocation4 + $0x278] sm:$0xff] %vm299, %v5239
    %5304 = vst.msk [vmem:[#allocation4 + $0x290] sm:$0xff] %vm299, %v5240
    %5305 = vst.msk [vmem:[#allocation4 + $0x2a8] sm:$0xff] %vm299, %v5241
    %5306 = vst.msk [vmem:[#allocation4 + $0x2c0] sm:$0xff] %vm299, %v5242
    %5307 = vst.msk [vmem:[#allocation4 + $0x2d8] sm:$0xff] %vm299, %v5243
    %5308 = vst.msk [vmem:[#allocation4 + $0x2f0] sm:$0xff] %vm299, %v5244
    %5309 = vst.msk [vmem:[#allocation4 + $0x308] sm:$0xff] %vm299, %v5245
    %5310 = vst.msk [vmem:[#allocation4 + $0x320] sm:$0xff] %vm299, %v5246
    %5311 = vst.msk [vmem:[#allocation4 + $0x338] sm:$0xff] %vm299, %v5247
    %5312 = vst.msk [vmem:[#allocation4 + $0x350] sm:$0xff] %vm299, %v5248
    %5313 = vst.msk [vmem:[#allocation4 + $0x368] sm:$0xff] %vm299, %v5249
    %5314 = vst.msk [vmem:[#allocation4 + $0x380] sm:$0xff] %vm299, %v5250
    %5315 = vst.msk [vmem:[#allocation4 + $0x398] sm:$0xff] %vm299, %v5251
    %5316 = vst.msk [vmem:[#allocation4 + $0x3b0] sm:$0xff] %vm299, %v5252
    %5317 = vst.msk [vmem:[#allocation4 + $0x3c8] sm:$0xff] %vm299, %v5253
    %5318 = vst.msk [vmem:[#allocation4 + $0x3e0] sm:$0xff] %vm299, %v5254
    %5319 = vst.msk [vmem:[#allocation4 + $0x3f8] sm:$0xff] %vm299, %v5255
    %5320 = vst.msk [vmem:[#allocation4 + $0x410] sm:$0xff] %vm299, %v5256
    %5321 = vst.msk [vmem:[#allocation4 + $0x428] sm:$0xff] %vm299, %v5257
    %5322 = vst.msk [vmem:[#allocation4 + $0x440] sm:$0xff] %vm299, %v5258
    %5323 = vst.msk [vmem:[#allocation4 + $0x458] sm:$0xff] %vm299, %v5259
    %5324 = vst.msk [vmem:[#allocation4 + $0x470] sm:$0xff] %vm299, %v5260
    %5325 = vst.msk [vmem:[#allocation4 + $0x488] sm:$0xff] %vm299, %v5261
    %5326 = vst.msk [vmem:[#allocation4 + $0x4a0] sm:$0xff] %vm299, %v5262
    %5327 = vst.msk [vmem:[#allocation4 + $0x4b8] sm:$0xff] %vm299, %v5263
    %5328 = vst.msk [vmem:[#allocation4 + $0x4d0] sm:$0xff] %vm299, %v5264
    %5329 = vst.msk [vmem:[#allocation4 + $0x4e8] sm:$0xff] %vm299, %v5265
    %5330 = vst.msk [vmem:[#allocation4 + $0x500] sm:$0xff] %vm299, %v5266
    %5331 = vst.msk [vmem:[#allocation4 + $0x518] sm:$0xff] %vm299, %v5267
    %5332 = vst.msk [vmem:[#allocation4 + $0x530] sm:$0xff] %vm299, %v5268
    %5333 = vst.msk [vmem:[#allocation4 + $0x548] sm:$0xff] %vm299, %v5269
    %5334 = vst.msk [vmem:[#allocation4 + $0x560] sm:$0xff] %vm299, %v5270
    %5335 = vst.msk [vmem:[#allocation4 + $0x578] sm:$0xff] %vm299, %v5271
    %5336 = vst.msk [vmem:[#allocation4 + $0x590] sm:$0xff] %vm299, %v5272
    %5337 = vst.msk [vmem:[#allocation4 + $0x5a8] sm:$0xff] %vm299, %v5273
    %5338 = vst.msk [vmem:[#allocation4 + $0x5c0] sm:$0xff] %vm299, %v5274
    %5339 = vst.msk [vmem:[#allocation4 + $0x5d8] sm:$0xff] %vm299, %v5275
    %5340 = vst.msk [vmem:[#allocation4 + $0x5f0] sm:$0xff] %vm299, %v5276
    %v5341 = vld [vmem:[%s3865 + $0x2] sm:$0xff]
    %v5342 = vld [vmem:[%s3865 + $0xa] sm:$0xff]
    %v5343 = vld [vmem:[%s3865 + $0x1a] sm:$0xff]
    %v5344 = vld [vmem:[%s3865 + $0x22] sm:$0xff]
    %v5345 = vld [vmem:[%s3865 + $0x32] sm:$0xff]
    %v5346 = vld [vmem:[%s3865 + $0x3a] sm:$0xff]
    %v5347 = vld [vmem:[%s3865 + $0x4a] sm:$0xff]
    %v5348 = vld [vmem:[%s3865 + $0x52] sm:$0xff]
    %v5349 = vld [vmem:[%s3865 + $0x62] sm:$0xff]
    %v5350 = vld [vmem:[%s3865 + $0x6a] sm:$0xff]
    %v5351 = vld [vmem:[%s3865 + $0x7a] sm:$0xff]
    %v5352 = vld [vmem:[%s3865 + $0x82] sm:$0xff]
    %v5353 = vld [vmem:[%s3865 + $0x92] sm:$0xff]
    %v5354 = vld [vmem:[%s3865 + $0x9a] sm:$0xff]
    %v5355 = vld [vmem:[%s3865 + $0xaa] sm:$0xff]
    %v5356 = vld [vmem:[%s3865 + $0xb2] sm:$0xff]
    %v5357 = vld [vmem:[%s3865 + $0xc2] sm:$0xff]
    %v5358 = vld [vmem:[%s3865 + $0xca] sm:$0xff]
    %v5359 = vld [vmem:[%s3865 + $0xda] sm:$0xff]
    %v5360 = vld [vmem:[%s3865 + $0xe2] sm:$0xff]
    %v5361 = vld [vmem:[%s3865 + $0xf2] sm:$0xff]
    %v5362 = vld [vmem:[%s3865 + $0xfa] sm:$0xff]
    %v5363 = vld [vmem:[%s3865 + $0x10a] sm:$0xff]
    %v5364 = vld [vmem:[%s3865 + $0x112] sm:$0xff]
    %v5365 = vld [vmem:[%s3865 + $0x122] sm:$0xff]
    %v5366 = vld [vmem:[%s3865 + $0x12a] sm:$0xff]
    %v5367 = vld [vmem:[%s3865 + $0x13a] sm:$0xff]
    %v5368 = vld [vmem:[%s3865 + $0x142] sm:$0xff]
    %v5369 = vld [vmem:[%s3865 + $0x152] sm:$0xff]
    %v5370 = vld [vmem:[%s3865 + $0x15a] sm:$0xff]
    %v5371 = vld [vmem:[%s3865 + $0x16a] sm:$0xff]
    %v5372 = vld [vmem:[%s3865 + $0x172] sm:$0xff]
    %v5373 = vld [vmem:[%s3865 + $0x1b2] sm:$0xff]
    %v5374 = vld [vmem:[%s3865 + $0x1ba] sm:$0xff]
    %v5375 = vld [vmem:[%s3865 + $0x1ca] sm:$0xff]
    %v5376 = vld [vmem:[%s3865 + $0x1d2] sm:$0xff]
    %v5377 = vld [vmem:[%s3865 + $0x1e2] sm:$0xff]
    %v5378 = vld [vmem:[%s3865 + $0x1ea] sm:$0xff]
    %v5379 = vld [vmem:[%s3865 + $0x1fa] sm:$0xff]
    %v5380 = vld [vmem:[%s3865 + $0x202] sm:$0xff]
    %v5381 = vld [vmem:[%s3865 + $0x212] sm:$0xff]
    %v5382 = vld [vmem:[%s3865 + $0x21a] sm:$0xff]
    %v5383 = vld [vmem:[%s3865 + $0x22a] sm:$0xff]
    %v5384 = vld [vmem:[%s3865 + $0x232] sm:$0xff]
    %v5385 = vld [vmem:[%s3865 + $0x242] sm:$0xff]
    %v5386 = vld [vmem:[%s3865 + $0x24a] sm:$0xff]
    %v5387 = vld [vmem:[%s3865 + $0x25a] sm:$0xff]
    %v5388 = vld [vmem:[%s3865 + $0x262] sm:$0xff]
    %v5389 = vld [vmem:[%s3865 + $0x272] sm:$0xff]
    %v5390 = vld [vmem:[%s3865 + $0x27a] sm:$0xff]
    %v5391 = vld [vmem:[%s3865 + $0x28a] sm:$0xff]
    %v5392 = vld [vmem:[%s3865 + $0x292] sm:$0xff]
    %v5393 = vld [vmem:[%s3865 + $0x2a2] sm:$0xff]
    %v5394 = vld [vmem:[%s3865 + $0x2aa] sm:$0xff]
    %v5395 = vld [vmem:[%s3865 + $0x2ba] sm:$0xff]
    %v5396 = vld [vmem:[%s3865 + $0x2c2] sm:$0xff]
    %v5397 = vld [vmem:[%s3865 + $0x2d2] sm:$0xff]
    %v5398 = vld [vmem:[%s3865 + $0x2da] sm:$0xff]
    %v5399 = vld [vmem:[%s3865 + $0x2ea] sm:$0xff]
    %v5400 = vld [vmem:[%s3865 + $0x2f2] sm:$0xff]
    %v5401 = vld [vmem:[%s3865 + $0x302] sm:$0xff]
    %v5402 = vld [vmem:[%s3865 + $0x30a] sm:$0xff]
    %v5403 = vld [vmem:[%s3865 + $0x31a] sm:$0xff]
    %v5404 = vld [vmem:[%s3865 + $0x322] sm:$0xff]
    %5469 = vrot.lane.b32.xlu0 %v5341, 32
    %v5470 = vpop.permute.xlu0 %5469
    %5471 = vrot.lane.b32.xlu0 %v5342, 32
    %v5472 = vpop.permute.xlu0 %5471
    %5473 = vrot.lane.b32.xlu0 %v5343, 32
    %v5474 = vpop.permute.xlu0 %5473
    %5475 = vrot.lane.b32.xlu0 %v5344, 32
    %v5476 = vpop.permute.xlu0 %5475
    %5477 = vrot.lane.b32.xlu0 %v5345, 32
    %v5478 = vpop.permute.xlu0 %5477
    %5479 = vrot.lane.b32.xlu0 %v5346, 32
    %v5480 = vpop.permute.xlu0 %5479
    %5481 = vrot.lane.b32.xlu0 %v5347, 32
    %v5482 = vpop.permute.xlu0 %5481
    %5483 = vrot.lane.b32.xlu0 %v5348, 32
    %v5484 = vpop.permute.xlu0 %5483
    %5485 = vrot.lane.b32.xlu0 %v5349, 32
    %v5486 = vpop.permute.xlu0 %5485
    %5487 = vrot.lane.b32.xlu0 %v5350, 32
    %v5488 = vpop.permute.xlu0 %5487
    %5489 = vrot.lane.b32.xlu0 %v5351, 32
    %v5490 = vpop.permute.xlu0 %5489
    %5491 = vrot.lane.b32.xlu0 %v5352, 32
    %v5492 = vpop.permute.xlu0 %5491
    %5493 = vrot.lane.b32.xlu0 %v5353, 32
    %v5494 = vpop.permute.xlu0 %5493
    %5495 = vrot.lane.b32.xlu0 %v5354, 32
    %v5496 = vpop.permute.xlu0 %5495
    %5497 = vrot.lane.b32.xlu0 %v5355, 32
    %v5498 = vpop.permute.xlu0 %5497
    %5499 = vrot.lane.b32.xlu0 %v5356, 32
    %v5500 = vpop.permute.xlu0 %5499
    %5501 = vrot.lane.b32.xlu0 %v5357, 32
    %v5502 = vpop.permute.xlu0 %5501
    %5503 = vrot.lane.b32.xlu0 %v5358, 32
    %v5504 = vpop.permute.xlu0 %5503
    %5505 = vrot.lane.b32.xlu0 %v5359, 32
    %v5506 = vpop.permute.xlu0 %5505
    %5507 = vrot.lane.b32.xlu0 %v5360, 32
    %v5508 = vpop.permute.xlu0 %5507
    %5509 = vrot.lane.b32.xlu0 %v5361, 32
    %v5510 = vpop.permute.xlu0 %5509
    %5511 = vrot.lane.b32.xlu0 %v5362, 32
    %v5512 = vpop.permute.xlu0 %5511
    %5513 = vrot.lane.b32.xlu0 %v5363, 32
    %v5514 = vpop.permute.xlu0 %5513
    %5515 = vrot.lane.b32.xlu0 %v5364, 32
    %v5516 = vpop.permute.xlu0 %5515
    %5517 = vrot.lane.b32.xlu0 %v5365, 32
    %v5518 = vpop.permute.xlu0 %5517
    %5519 = vrot.lane.b32.xlu0 %v5366, 32
    %v5520 = vpop.permute.xlu0 %5519
    %5521 = vrot.lane.b32.xlu0 %v5367, 32
    %v5522 = vpop.permute.xlu0 %5521
    %5523 = vrot.lane.b32.xlu0 %v5368, 32
    %v5524 = vpop.permute.xlu0 %5523
    %5525 = vrot.lane.b32.xlu0 %v5369, 32
    %v5526 = vpop.permute.xlu0 %5525
    %5527 = vrot.lane.b32.xlu0 %v5370, 32
    %v5528 = vpop.permute.xlu0 %5527
    %5529 = vrot.lane.b32.xlu0 %v5371, 32
    %v5530 = vpop.permute.xlu0 %5529
    %5531 = vrot.lane.b32.xlu0 %v5372, 32
    %v5532 = vpop.permute.xlu0 %5531
    %5533 = vrot.lane.b32.xlu0 %v5373, 32
    %v5534 = vpop.permute.xlu0 %5533
    %5535 = vrot.lane.b32.xlu0 %v5374, 32
    %v5536 = vpop.permute.xlu0 %5535
    %5537 = vrot.lane.b32.xlu0 %v5375, 32
    %v5538 = vpop.permute.xlu0 %5537
    %5539 = vrot.lane.b32.xlu0 %v5376, 32
    %v5540 = vpop.permute.xlu0 %5539
    %5541 = vrot.lane.b32.xlu0 %v5377, 32
    %v5542 = vpop.permute.xlu0 %5541
    %5543 = vrot.lane.b32.xlu0 %v5378, 32
    %v5544 = vpop.permute.xlu0 %5543
    %5545 = vrot.lane.b32.xlu0 %v5379, 32
    %v5546 = vpop.permute.xlu0 %5545
    %5547 = vrot.lane.b32.xlu0 %v5380, 32
    %v5548 = vpop.permute.xlu0 %5547
    %5549 = vrot.lane.b32.xlu0 %v5381, 32
    %v5550 = vpop.permute.xlu0 %5549
    %5551 = vrot.lane.b32.xlu0 %v5382, 32
    %v5552 = vpop.permute.xlu0 %5551
    %5553 = vrot.lane.b32.xlu0 %v5383, 32
    %v5554 = vpop.permute.xlu0 %5553
    %5555 = vrot.lane.b32.xlu0 %v5384, 32
    %v5556 = vpop.permute.xlu0 %5555
    %5557 = vrot.lane.b32.xlu0 %v5385, 32
    %v5558 = vpop.permute.xlu0 %5557
    %5559 = vrot.lane.b32.xlu0 %v5386, 32
    %v5560 = vpop.permute.xlu0 %5559
    %5561 = vrot.lane.b32.xlu0 %v5387, 32
    %v5562 = vpop.permute.xlu0 %5561
    %5563 = vrot.lane.b32.xlu0 %v5388, 32
    %v5564 = vpop.permute.xlu0 %5563
    %5565 = vrot.lane.b32.xlu0 %v5389, 32
    %v5566 = vpop.permute.xlu0 %5565
    %5567 = vrot.lane.b32.xlu0 %v5390, 32
    %v5568 = vpop.permute.xlu0 %5567
    %5569 = vrot.lane.b32.xlu0 %v5391, 32
    %v5570 = vpop.permute.xlu0 %5569
    %5571 = vrot.lane.b32.xlu0 %v5392, 32
    %v5572 = vpop.permute.xlu0 %5571
    %5573 = vrot.lane.b32.xlu0 %v5393, 32
    %v5574 = vpop.permute.xlu0 %5573
    %5575 = vrot.lane.b32.xlu0 %v5394, 32
    %v5576 = vpop.permute.xlu0 %5575
    %5577 = vrot.lane.b32.xlu0 %v5395, 32
    %v5578 = vpop.permute.xlu0 %5577
    %5579 = vrot.lane.b32.xlu0 %v5396, 32
    %v5580 = vpop.permute.xlu0 %5579
    %5581 = vrot.lane.b32.xlu0 %v5397, 32
    %v5582 = vpop.permute.xlu0 %5581
    %5583 = vrot.lane.b32.xlu0 %v5398, 32
    %v5584 = vpop.permute.xlu0 %5583
    %5585 = vrot.lane.b32.xlu0 %v5399, 32
    %v5586 = vpop.permute.xlu0 %5585
    %5587 = vrot.lane.b32.xlu0 %v5400, 32
    %v5588 = vpop.permute.xlu0 %5587
    %5589 = vrot.lane.b32.xlu0 %v5401, 32
    %v5590 = vpop.permute.xlu0 %5589
    %5591 = vrot.lane.b32.xlu0 %v5402, 32
    %v5592 = vpop.permute.xlu0 %5591
    %5593 = vrot.lane.b32.xlu0 %v5403, 32
    %v5594 = vpop.permute.xlu0 %5593
    %5595 = vrot.lane.b32.xlu0 %v5404, 32
    %v5596 = vpop.permute.xlu0 %5595
    %5661 = vst.msk [vmem:[#allocation4 + $0x8] sm:$0xff] %vm4378, %v5470
    %5662 = vst.msk [vmem:[#allocation4 + $0x20] sm:$0xff] %vm4378, %v5472
    %5663 = vst.msk [vmem:[#allocation4 + $0x38] sm:$0xff] %vm4378, %v5474
    %5664 = vst.msk [vmem:[#allocation4 + $0x50] sm:$0xff] %vm4378, %v5476
    %5665 = vst.msk [vmem:[#allocation4 + $0x68] sm:$0xff] %vm4378, %v5478
    %5666 = vst.msk [vmem:[#allocation4 + $0x80] sm:$0xff] %vm4378, %v5480
    %5667 = vst.msk [vmem:[#allocation4 + $0x98] sm:$0xff] %vm4378, %v5482
    %5668 = vst.msk [vmem:[#allocation4 + $0xb0] sm:$0xff] %vm4378, %v5484
    %5669 = vst.msk [vmem:[#allocation4 + $0xc8] sm:$0xff] %vm4378, %v5486
    %5670 = vst.msk [vmem:[#allocation4 + $0xe0] sm:$0xff] %vm4378, %v5488
    %5671 = vst.msk [vmem:[#allocation4 + $0xf8] sm:$0xff] %vm4378, %v5490
    %5672 = vst.msk [vmem:[#allocation4 + $0x110] sm:$0xff] %vm4378, %v5492
    %5673 = vst.msk [vmem:[#allocation4 + $0x128] sm:$0xff] %vm4378, %v5494
    %5674 = vst.msk [vmem:[#allocation4 + $0x140] sm:$0xff] %vm4378, %v5496
    %5675 = vst.msk [vmem:[#allocation4 + $0x158] sm:$0xff] %vm4378, %v5498
    %5676 = vst.msk [vmem:[#allocation4 + $0x170] sm:$0xff] %vm4378, %v5500
    %5677 = vst.msk [vmem:[#allocation4 + $0x188] sm:$0xff] %vm4378, %v5502
    %5678 = vst.msk [vmem:[#allocation4 + $0x1a0] sm:$0xff] %vm4378, %v5504
    %5679 = vst.msk [vmem:[#allocation4 + $0x1b8] sm:$0xff] %vm4378, %v5506
    %5680 = vst.msk [vmem:[#allocation4 + $0x1d0] sm:$0xff] %vm4378, %v5508
    %5681 = vst.msk [vmem:[#allocation4 + $0x1e8] sm:$0xff] %vm4378, %v5510
    %5682 = vst.msk [vmem:[#allocation4 + $0x200] sm:$0xff] %vm4378, %v5512
    %5683 = vst.msk [vmem:[#allocation4 + $0x218] sm:$0xff] %vm4378, %v5514
    %5684 = vst.msk [vmem:[#allocation4 + $0x230] sm:$0xff] %vm4378, %v5516
    %5685 = vst.msk [vmem:[#allocation4 + $0x248] sm:$0xff] %vm4378, %v5518
    %5686 = vst.msk [vmem:[#allocation4 + $0x260] sm:$0xff] %vm4378, %v5520
    %5687 = vst.msk [vmem:[#allocation4 + $0x278] sm:$0xff] %vm4378, %v5522
    %5688 = vst.msk [vmem:[#allocation4 + $0x290] sm:$0xff] %vm4378, %v5524
    %5689 = vst.msk [vmem:[#allocation4 + $0x2a8] sm:$0xff] %vm4378, %v5526
    %5690 = vst.msk [vmem:[#allocation4 + $0x2c0] sm:$0xff] %vm4378, %v5528
    %5691 = vst.msk [vmem:[#allocation4 + $0x2d8] sm:$0xff] %vm4378, %v5530
    %5692 = vst.msk [vmem:[#allocation4 + $0x2f0] sm:$0xff] %vm4378, %v5532
    %5693 = vst.msk [vmem:[#allocation4 + $0x308] sm:$0xff] %vm4378, %v5534
    %5694 = vst.msk [vmem:[#allocation4 + $0x320] sm:$0xff] %vm4378, %v5536
    %5695 = vst.msk [vmem:[#allocation4 + $0x338] sm:$0xff] %vm4378, %v5538
    %5696 = vst.msk [vmem:[#allocation4 + $0x350] sm:$0xff] %vm4378, %v5540
    %5697 = vst.msk [vmem:[#allocation4 + $0x368] sm:$0xff] %vm4378, %v5542
    %5698 = vst.msk [vmem:[#allocation4 + $0x380] sm:$0xff] %vm4378, %v5544
    %5699 = vst.msk [vmem:[#allocation4 + $0x398] sm:$0xff] %vm4378, %v5546
    %5700 = vst.msk [vmem:[#allocation4 + $0x3b0] sm:$0xff] %vm4378, %v5548
    %5701 = vst.msk [vmem:[#allocation4 + $0x3c8] sm:$0xff] %vm4378, %v5550
    %5702 = vst.msk [vmem:[#allocation4 + $0x3e0] sm:$0xff] %vm4378, %v5552
    %5703 = vst.msk [vmem:[#allocation4 + $0x3f8] sm:$0xff] %vm4378, %v5554
    %5704 = vst.msk [vmem:[#allocation4 + $0x410] sm:$0xff] %vm4378, %v5556
    %5705 = vst.msk [vmem:[#allocation4 + $0x428] sm:$0xff] %vm4378, %v5558
    %5706 = vst.msk [vmem:[#allocation4 + $0x440] sm:$0xff] %vm4378, %v5560
    %5707 = vst.msk [vmem:[#allocation4 + $0x458] sm:$0xff] %vm4378, %v5562
    %5708 = vst.msk [vmem:[#allocation4 + $0x470] sm:$0xff] %vm4378, %v5564
    %5709 = vst.msk [vmem:[#allocation4 + $0x488] sm:$0xff] %vm4378, %v5566
    %5710 = vst.msk [vmem:[#allocation4 + $0x4a0] sm:$0xff] %vm4378, %v5568
    %5711 = vst.msk [vmem:[#allocation4 + $0x4b8] sm:$0xff] %vm4378, %v5570
    %5712 = vst.msk [vmem:[#allocation4 + $0x4d0] sm:$0xff] %vm4378, %v5572
    %5713 = vst.msk [vmem:[#allocation4 + $0x4e8] sm:$0xff] %vm4378, %v5574
    %5714 = vst.msk [vmem:[#allocation4 + $0x500] sm:$0xff] %vm4378, %v5576
    %5715 = vst.msk [vmem:[#allocation4 + $0x518] sm:$0xff] %vm4378, %v5578
    %5716 = vst.msk [vmem:[#allocation4 + $0x530] sm:$0xff] %vm4378, %v5580
    %5717 = vst.msk [vmem:[#allocation4 + $0x548] sm:$0xff] %vm4378, %v5582
    %5718 = vst.msk [vmem:[#allocation4 + $0x560] sm:$0xff] %vm4378, %v5584
    %5719 = vst.msk [vmem:[#allocation4 + $0x578] sm:$0xff] %vm4378, %v5586
    %5720 = vst.msk [vmem:[#allocation4 + $0x590] sm:$0xff] %vm4378, %v5588
    %5721 = vst.msk [vmem:[#allocation4 + $0x5a8] sm:$0xff] %vm4378, %v5590
    %5722 = vst.msk [vmem:[#allocation4 + $0x5c0] sm:$0xff] %vm4378, %v5592
    %5723 = vst.msk [vmem:[#allocation4 + $0x5d8] sm:$0xff] %vm4378, %v5594
    %5724 = vst.msk [vmem:[#allocation4 + $0x5f0] sm:$0xff] %vm4378, %v5596
    %s5725 = scalar_lea.vmem [#allocation3], 48
    %v5726 = vld [vmem:[%s5725] sm:$0xff]
    %v5727 = vld [vmem:[%s5725 + $0x8] sm:$0xff]
    %v5728 = vld [vmem:[%s5725 + $0x18] sm:$0xff]
    %v5729 = vld [vmem:[%s5725 + $0x20] sm:$0xff]
    %v5730 = vld [vmem:[%s5725 + $0x30] sm:$0xff]
    %v5731 = vld [vmem:[%s5725 + $0x38] sm:$0xff]
    %v5732 = vld [vmem:[%s5725 + $0x48] sm:$0xff]
    %v5733 = vld [vmem:[%s5725 + $0x50] sm:$0xff]
    %v5734 = vld [vmem:[%s5725 + $0x60] sm:$0xff]
    %v5735 = vld [vmem:[%s5725 + $0x68] sm:$0xff]
    %v5736 = vld [vmem:[%s5725 + $0x78] sm:$0xff]
    %v5737 = vld [vmem:[%s5725 + $0x80] sm:$0xff]
    %v5738 = vld [vmem:[%s5725 + $0x90] sm:$0xff]
    %v5739 = vld [vmem:[%s5725 + $0x98] sm:$0xff]
    %v5740 = vld [vmem:[%s5725 + $0xa8] sm:$0xff]
    %v5741 = vld [vmem:[%s5725 + $0xb0] sm:$0xff]
    %v5742 = vld [vmem:[%s5725 + $0xc0] sm:$0xff]
    %v5743 = vld [vmem:[%s5725 + $0xc8] sm:$0xff]
    %v5744 = vld [vmem:[%s5725 + $0xd8] sm:$0xff]
    %v5745 = vld [vmem:[%s5725 + $0xe0] sm:$0xff]
    %v5746 = vld [vmem:[%s5725 + $0xf0] sm:$0xff]
    %v5747 = vld [vmem:[%s5725 + $0xf8] sm:$0xff]
    %v5748 = vld [vmem:[%s5725 + $0x108] sm:$0xff]
    %v5749 = vld [vmem:[%s5725 + $0x110] sm:$0xff]
    %v5750 = vld [vmem:[%s5725 + $0x120] sm:$0xff]
    %v5751 = vld [vmem:[%s5725 + $0x128] sm:$0xff]
    %v5752 = vld [vmem:[%s5725 + $0x138] sm:$0xff]
    %v5753 = vld [vmem:[%s5725 + $0x140] sm:$0xff]
    %v5754 = vld [vmem:[%s5725 + $0x150] sm:$0xff]
    %v5755 = vld [vmem:[%s5725 + $0x158] sm:$0xff]
    %v5756 = vld [vmem:[%s5725 + $0x168] sm:$0xff]
    %v5757 = vld [vmem:[%s5725 + $0x170] sm:$0xff]
    %v5758 = vld [vmem:[%s5725 + $0x1b0] sm:$0xff]
    %v5759 = vld [vmem:[%s5725 + $0x1b8] sm:$0xff]
    %v5760 = vld [vmem:[%s5725 + $0x1c8] sm:$0xff]
    %v5761 = vld [vmem:[%s5725 + $0x1d0] sm:$0xff]
    %v5762 = vld [vmem:[%s5725 + $0x1e0] sm:$0xff]
    %v5763 = vld [vmem:[%s5725 + $0x1e8] sm:$0xff]
    %v5764 = vld [vmem:[%s5725 + $0x1f8] sm:$0xff]
    %v5765 = vld [vmem:[%s5725 + $0x200] sm:$0xff]
    %v5766 = vld [vmem:[%s5725 + $0x210] sm:$0xff]
    %v5767 = vld [vmem:[%s5725 + $0x218] sm:$0xff]
    %v5768 = vld [vmem:[%s5725 + $0x228] sm:$0xff]
    %v5769 = vld [vmem:[%s5725 + $0x230] sm:$0xff]
    %v5770 = vld [vmem:[%s5725 + $0x240] sm:$0xff]
    %v5771 = vld [vmem:[%s5725 + $0x248] sm:$0xff]
    %v5772 = vld [vmem:[%s5725 + $0x258] sm:$0xff]
    %v5773 = vld [vmem:[%s5725 + $0x260] sm:$0xff]
    %v5774 = vld [vmem:[%s5725 + $0x270] sm:$0xff]
    %v5775 = vld [vmem:[%s5725 + $0x278] sm:$0xff]
    %v5776 = vld [vmem:[%s5725 + $0x288] sm:$0xff]
    %v5777 = vld [vmem:[%s5725 + $0x290] sm:$0xff]
    %v5778 = vld [vmem:[%s5725 + $0x2a0] sm:$0xff]
    %v5779 = vld [vmem:[%s5725 + $0x2a8] sm:$0xff]
    %v5780 = vld [vmem:[%s5725 + $0x2b8] sm:$0xff]
    %v5781 = vld [vmem:[%s5725 + $0x2c0] sm:$0xff]
    %v5782 = vld [vmem:[%s5725 + $0x2d0] sm:$0xff]
    %v5783 = vld [vmem:[%s5725 + $0x2d8] sm:$0xff]
    %v5784 = vld [vmem:[%s5725 + $0x2e8] sm:$0xff]
    %v5785 = vld [vmem:[%s5725 + $0x2f0] sm:$0xff]
    %v5786 = vld [vmem:[%s5725 + $0x300] sm:$0xff]
    %v5787 = vld [vmem:[%s5725 + $0x308] sm:$0xff]
    %v5788 = vld [vmem:[%s5725 + $0x318] sm:$0xff]
    %v5789 = vld [vmem:[%s5725 + $0x320] sm:$0xff]
    %5854 = vrot.lane.b32.xlu0 %v5726, 64
    %v5855 = vpop.permute.xlu0 %5854
    %5856 = vrot.lane.b32.xlu0 %v5727, 64
    %v5857 = vpop.permute.xlu0 %5856
    %5858 = vrot.lane.b32.xlu0 %v5728, 64
    %v5859 = vpop.permute.xlu0 %5858
    %5860 = vrot.lane.b32.xlu0 %v5729, 64
    %v5861 = vpop.permute.xlu0 %5860
    %5862 = vrot.lane.b32.xlu0 %v5730, 64
    %v5863 = vpop.permute.xlu0 %5862
    %5864 = vrot.lane.b32.xlu0 %v5731, 64
    %v5865 = vpop.permute.xlu0 %5864
    %5866 = vrot.lane.b32.xlu0 %v5732, 64
    %v5867 = vpop.permute.xlu0 %5866
    %5868 = vrot.lane.b32.xlu0 %v5733, 64
    %v5869 = vpop.permute.xlu0 %5868
    %5870 = vrot.lane.b32.xlu0 %v5734, 64
    %v5871 = vpop.permute.xlu0 %5870
    %5872 = vrot.lane.b32.xlu0 %v5735, 64
    %v5873 = vpop.permute.xlu0 %5872
    %5874 = vrot.lane.b32.xlu0 %v5736, 64
    %v5875 = vpop.permute.xlu0 %5874
    %5876 = vrot.lane.b32.xlu0 %v5737, 64
    %v5877 = vpop.permute.xlu0 %5876
    %5878 = vrot.lane.b32.xlu0 %v5738, 64
    %v5879 = vpop.permute.xlu0 %5878
    %5880 = vrot.lane.b32.xlu0 %v5739, 64
    %v5881 = vpop.permute.xlu0 %5880
    %5882 = vrot.lane.b32.xlu0 %v5740, 64
    %v5883 = vpop.permute.xlu0 %5882
    %5884 = vrot.lane.b32.xlu0 %v5741, 64
    %v5885 = vpop.permute.xlu0 %5884
    %5886 = vrot.lane.b32.xlu0 %v5742, 64
    %v5887 = vpop.permute.xlu0 %5886
    %5888 = vrot.lane.b32.xlu0 %v5743, 64
    %v5889 = vpop.permute.xlu0 %5888
    %5890 = vrot.lane.b32.xlu0 %v5744, 64
    %v5891 = vpop.permute.xlu0 %5890
    %5892 = vrot.lane.b32.xlu0 %v5745, 64
    %v5893 = vpop.permute.xlu0 %5892
    %5894 = vrot.lane.b32.xlu0 %v5746, 64
    %v5895 = vpop.permute.xlu0 %5894
    %5896 = vrot.lane.b32.xlu0 %v5747, 64
    %v5897 = vpop.permute.xlu0 %5896
    %5898 = vrot.lane.b32.xlu0 %v5748, 64
    %v5899 = vpop.permute.xlu0 %5898
    %5900 = vrot.lane.b32.xlu0 %v5749, 64
    %v5901 = vpop.permute.xlu0 %5900
    %5902 = vrot.lane.b32.xlu0 %v5750, 64
    %v5903 = vpop.permute.xlu0 %5902
    %5904 = vrot.lane.b32.xlu0 %v5751, 64
    %v5905 = vpop.permute.xlu0 %5904
    %5906 = vrot.lane.b32.xlu0 %v5752, 64
    %v5907 = vpop.permute.xlu0 %5906
    %5908 = vrot.lane.b32.xlu0 %v5753, 64
    %v5909 = vpop.permute.xlu0 %5908
    %5910 = vrot.lane.b32.xlu0 %v5754, 64
    %v5911 = vpop.permute.xlu0 %5910
    %5912 = vrot.lane.b32.xlu0 %v5755, 64
    %v5913 = vpop.permute.xlu0 %5912
    %5914 = vrot.lane.b32.xlu0 %v5756, 64
    %v5915 = vpop.permute.xlu0 %5914
    %5916 = vrot.lane.b32.xlu0 %v5757, 64
    %v5917 = vpop.permute.xlu0 %5916
    %5918 = vrot.lane.b32.xlu0 %v5758, 64
    %v5919 = vpop.permute.xlu0 %5918
    %5920 = vrot.lane.b32.xlu0 %v5759, 64
    %v5921 = vpop.permute.xlu0 %5920
    %5922 = vrot.lane.b32.xlu0 %v5760, 64
    %v5923 = vpop.permute.xlu0 %5922
    %5924 = vrot.lane.b32.xlu0 %v5761, 64
    %v5925 = vpop.permute.xlu0 %5924
    %5926 = vrot.lane.b32.xlu0 %v5762, 64
    %v5927 = vpop.permute.xlu0 %5926
    %5928 = vrot.lane.b32.xlu0 %v5763, 64
    %v5929 = vpop.permute.xlu0 %5928
    %5930 = vrot.lane.b32.xlu0 %v5764, 64
    %v5931 = vpop.permute.xlu0 %5930
    %5932 = vrot.lane.b32.xlu0 %v5765, 64
    %v5933 = vpop.permute.xlu0 %5932
    %5934 = vrot.lane.b32.xlu0 %v5766, 64
    %v5935 = vpop.permute.xlu0 %5934
    %5936 = vrot.lane.b32.xlu0 %v5767, 64
    %v5937 = vpop.permute.xlu0 %5936
    %5938 = vrot.lane.b32.xlu0 %v5768, 64
    %v5939 = vpop.permute.xlu0 %5938
    %5940 = vrot.lane.b32.xlu0 %v5769, 64
    %v5941 = vpop.permute.xlu0 %5940
    %5942 = vrot.lane.b32.xlu0 %v5770, 64
    %v5943 = vpop.permute.xlu0 %5942
    %5944 = vrot.lane.b32.xlu0 %v5771, 64
    %v5945 = vpop.permute.xlu0 %5944
    %5946 = vrot.lane.b32.xlu0 %v5772, 64
    %v5947 = vpop.permute.xlu0 %5946
    %5948 = vrot.lane.b32.xlu0 %v5773, 64
    %v5949 = vpop.permute.xlu0 %5948
    %5950 = vrot.lane.b32.xlu0 %v5774, 64
    %v5951 = vpop.permute.xlu0 %5950
    %5952 = vrot.lane.b32.xlu0 %v5775, 64
    %v5953 = vpop.permute.xlu0 %5952
    %5954 = vrot.lane.b32.xlu0 %v5776, 64
    %v5955 = vpop.permute.xlu0 %5954
    %5956 = vrot.lane.b32.xlu0 %v5777, 64
    %v5957 = vpop.permute.xlu0 %5956
    %5958 = vrot.lane.b32.xlu0 %v5778, 64
    %v5959 = vpop.permute.xlu0 %5958
    %5960 = vrot.lane.b32.xlu0 %v5779, 64
    %v5961 = vpop.permute.xlu0 %5960
    %5962 = vrot.lane.b32.xlu0 %v5780, 64
    %v5963 = vpop.permute.xlu0 %5962
    %5964 = vrot.lane.b32.xlu0 %v5781, 64
    %v5965 = vpop.permute.xlu0 %5964
    %5966 = vrot.lane.b32.xlu0 %v5782, 64
    %v5967 = vpop.permute.xlu0 %5966
    %5968 = vrot.lane.b32.xlu0 %v5783, 64
    %v5969 = vpop.permute.xlu0 %5968
    %5970 = vrot.lane.b32.xlu0 %v5784, 64
    %v5971 = vpop.permute.xlu0 %5970
    %5972 = vrot.lane.b32.xlu0 %v5785, 64
    %v5973 = vpop.permute.xlu0 %5972
    %5974 = vrot.lane.b32.xlu0 %v5786, 64
    %v5975 = vpop.permute.xlu0 %5974
    %5976 = vrot.lane.b32.xlu0 %v5787, 64
    %v5977 = vpop.permute.xlu0 %5976
    %5978 = vrot.lane.b32.xlu0 %v5788, 64
    %v5979 = vpop.permute.xlu0 %5978
    %5980 = vrot.lane.b32.xlu0 %v5789, 64
    %v5981 = vpop.permute.xlu0 %5980
    %6046 = vst.msk [vmem:[#allocation4 + $0x8] sm:$0xff] %vm4763, %v5855
    %6047 = vst.msk [vmem:[#allocation4 + $0x20] sm:$0xff] %vm4763, %v5857
    %6048 = vst.msk [vmem:[#allocation4 + $0x38] sm:$0xff] %vm4763, %v5859
    %6049 = vst.msk [vmem:[#allocation4 + $0x50] sm:$0xff] %vm4763, %v5861
    %6050 = vst.msk [vmem:[#allocation4 + $0x68] sm:$0xff] %vm4763, %v5863
    %6051 = vst.msk [vmem:[#allocation4 + $0x80] sm:$0xff] %vm4763, %v5865
    %6052 = vst.msk [vmem:[#allocation4 + $0x98] sm:$0xff] %vm4763, %v5867
    %6053 = vst.msk [vmem:[#allocation4 + $0xb0] sm:$0xff] %vm4763, %v5869
    %6054 = vst.msk [vmem:[#allocation4 + $0xc8] sm:$0xff] %vm4763, %v5871
    %6055 = vst.msk [vmem:[#allocation4 + $0xe0] sm:$0xff] %vm4763, %v5873
    %6056 = vst.msk [vmem:[#allocation4 + $0xf8] sm:$0xff] %vm4763, %v5875
    %6057 = vst.msk [vmem:[#allocation4 + $0x110] sm:$0xff] %vm4763, %v5877
    %6058 = vst.msk [vmem:[#allocation4 + $0x128] sm:$0xff] %vm4763, %v5879
    %6059 = vst.msk [vmem:[#allocation4 + $0x140] sm:$0xff] %vm4763, %v5881
    %6060 = vst.msk [vmem:[#allocation4 + $0x158] sm:$0xff] %vm4763, %v5883
    %6061 = vst.msk [vmem:[#allocation4 + $0x170] sm:$0xff] %vm4763, %v5885
    %6062 = vst.msk [vmem:[#allocation4 + $0x188] sm:$0xff] %vm4763, %v5887
    %6063 = vst.msk [vmem:[#allocation4 + $0x1a0] sm:$0xff] %vm4763, %v5889
    %6064 = vst.msk [vmem:[#allocation4 + $0x1b8] sm:$0xff] %vm4763, %v5891
    %6065 = vst.msk [vmem:[#allocation4 + $0x1d0] sm:$0xff] %vm4763, %v5893
    %6066 = vst.msk [vmem:[#allocation4 + $0x1e8] sm:$0xff] %vm4763, %v5895
    %6067 = vst.msk [vmem:[#allocation4 + $0x200] sm:$0xff] %vm4763, %v5897
    %6068 = vst.msk [vmem:[#allocation4 + $0x218] sm:$0xff] %vm4763, %v5899
    %6069 = vst.msk [vmem:[#allocation4 + $0x230] sm:$0xff] %vm4763, %v5901
    %6070 = vst.msk [vmem:[#allocation4 + $0x248] sm:$0xff] %vm4763, %v5903
    %6071 = vst.msk [vmem:[#allocation4 + $0x260] sm:$0xff] %vm4763, %v5905
    %6072 = vst.msk [vmem:[#allocation4 + $0x278] sm:$0xff] %vm4763, %v5907
    %6073 = vst.msk [vmem:[#allocation4 + $0x290] sm:$0xff] %vm4763, %v5909
    %6074 = vst.msk [vmem:[#allocation4 + $0x2a8] sm:$0xff] %vm4763, %v5911
    %6075 = vst.msk [vmem:[#allocation4 + $0x2c0] sm:$0xff] %vm4763, %v5913
    %6076 = vst.msk [vmem:[#allocation4 + $0x2d8] sm:$0xff] %vm4763, %v5915
    %6077 = vst.msk [vmem:[#allocation4 + $0x2f0] sm:$0xff] %vm4763, %v5917
    %6078 = vst.msk [vmem:[#allocation4 + $0x308] sm:$0xff] %vm4763, %v5919
    %6079 = vst.msk [vmem:[#allocation4 + $0x320] sm:$0xff] %vm4763, %v5921
    %6080 = vst.msk [vmem:[#allocation4 + $0x338] sm:$0xff] %vm4763, %v5923
    %6081 = vst.msk [vmem:[#allocation4 + $0x350] sm:$0xff] %vm4763, %v5925
    %6082 = vst.msk [vmem:[#allocation4 + $0x368] sm:$0xff] %vm4763, %v5927
    %6083 = vst.msk [vmem:[#allocation4 + $0x380] sm:$0xff] %vm4763, %v5929
    %6084 = vst.msk [vmem:[#allocation4 + $0x398] sm:$0xff] %vm4763, %v5931
    %6085 = vst.msk [vmem:[#allocation4 + $0x3b0] sm:$0xff] %vm4763, %v5933
    %6086 = vst.msk [vmem:[#allocation4 + $0x3c8] sm:$0xff] %vm4763, %v5935
    %6087 = vst.msk [vmem:[#allocation4 + $0x3e0] sm:$0xff] %vm4763, %v5937
    %6088 = vst.msk [vmem:[#allocation4 + $0x3f8] sm:$0xff] %vm4763, %v5939
    %6089 = vst.msk [vmem:[#allocation4 + $0x410] sm:$0xff] %vm4763, %v5941
    %6090 = vst.msk [vmem:[#allocation4 + $0x428] sm:$0xff] %vm4763, %v5943
    %6091 = vst.msk [vmem:[#allocation4 + $0x440] sm:$0xff] %vm4763, %v5945
    %6092 = vst.msk [vmem:[#allocation4 + $0x458] sm:$0xff] %vm4763, %v5947
    %6093 = vst.msk [vmem:[#allocation4 + $0x470] sm:$0xff] %vm4763, %v5949
    %6094 = vst.msk [vmem:[#allocation4 + $0x488] sm:$0xff] %vm4763, %v5951
    %6095 = vst.msk [vmem:[#allocation4 + $0x4a0] sm:$0xff] %vm4763, %v5953
    %6096 = vst.msk [vmem:[#allocation4 + $0x4b8] sm:$0xff] %vm4763, %v5955
    %6097 = vst.msk [vmem:[#allocation4 + $0x4d0] sm:$0xff] %vm4763, %v5957
    %6098 = vst.msk [vmem:[#allocation4 + $0x4e8] sm:$0xff] %vm4763, %v5959
    %6099 = vst.msk [vmem:[#allocation4 + $0x500] sm:$0xff] %vm4763, %v5961
    %6100 = vst.msk [vmem:[#allocation4 + $0x518] sm:$0xff] %vm4763, %v5963
    %6101 = vst.msk [vmem:[#allocation4 + $0x530] sm:$0xff] %vm4763, %v5965
    %6102 = vst.msk [vmem:[#allocation4 + $0x548] sm:$0xff] %vm4763, %v5967
    %6103 = vst.msk [vmem:[#allocation4 + $0x560] sm:$0xff] %vm4763, %v5969
    %6104 = vst.msk [vmem:[#allocation4 + $0x578] sm:$0xff] %vm4763, %v5971
    %6105 = vst.msk [vmem:[#allocation4 + $0x590] sm:$0xff] %vm4763, %v5973
    %6106 = vst.msk [vmem:[#allocation4 + $0x5a8] sm:$0xff] %vm4763, %v5975
    %6107 = vst.msk [vmem:[#allocation4 + $0x5c0] sm:$0xff] %vm4763, %v5977
    %6108 = vst.msk [vmem:[#allocation4 + $0x5d8] sm:$0xff] %vm4763, %v5979
    %6109 = vst.msk [vmem:[#allocation4 + $0x5f0] sm:$0xff] %vm4763, %v5981
    %v6110 = vld [vmem:[%s5725 + $0x1] sm:$0xff]
    %v6111 = vld [vmem:[%s5725 + $0x9] sm:$0xff]
    %v6112 = vld [vmem:[%s5725 + $0x19] sm:$0xff]
    %v6113 = vld [vmem:[%s5725 + $0x21] sm:$0xff]
    %v6114 = vld [vmem:[%s5725 + $0x31] sm:$0xff]
    %v6115 = vld [vmem:[%s5725 + $0x39] sm:$0xff]
    %v6116 = vld [vmem:[%s5725 + $0x49] sm:$0xff]
    %v6117 = vld [vmem:[%s5725 + $0x51] sm:$0xff]
    %v6118 = vld [vmem:[%s5725 + $0x61] sm:$0xff]
    %v6119 = vld [vmem:[%s5725 + $0x69] sm:$0xff]
    %v6120 = vld [vmem:[%s5725 + $0x79] sm:$0xff]
    %v6121 = vld [vmem:[%s5725 + $0x81] sm:$0xff]
    %v6122 = vld [vmem:[%s5725 + $0x91] sm:$0xff]
    %v6123 = vld [vmem:[%s5725 + $0x99] sm:$0xff]
    %v6124 = vld [vmem:[%s5725 + $0xa9] sm:$0xff]
    %v6125 = vld [vmem:[%s5725 + $0xb1] sm:$0xff]
    %v6126 = vld [vmem:[%s5725 + $0xc1] sm:$0xff]
    %v6127 = vld [vmem:[%s5725 + $0xc9] sm:$0xff]
    %v6128 = vld [vmem:[%s5725 + $0xd9] sm:$0xff]
    %v6129 = vld [vmem:[%s5725 + $0xe1] sm:$0xff]
    %v6130 = vld [vmem:[%s5725 + $0xf1] sm:$0xff]
    %v6131 = vld [vmem:[%s5725 + $0xf9] sm:$0xff]
    %v6132 = vld [vmem:[%s5725 + $0x109] sm:$0xff]
    %v6133 = vld [vmem:[%s5725 + $0x111] sm:$0xff]
    %v6134 = vld [vmem:[%s5725 + $0x121] sm:$0xff]
    %v6135 = vld [vmem:[%s5725 + $0x129] sm:$0xff]
    %v6136 = vld [vmem:[%s5725 + $0x139] sm:$0xff]
    %v6137 = vld [vmem:[%s5725 + $0x141] sm:$0xff]
    %v6138 = vld [vmem:[%s5725 + $0x151] sm:$0xff]
    %v6139 = vld [vmem:[%s5725 + $0x159] sm:$0xff]
    %v6140 = vld [vmem:[%s5725 + $0x169] sm:$0xff]
    %v6141 = vld [vmem:[%s5725 + $0x171] sm:$0xff]
    %v6142 = vld [vmem:[%s5725 + $0x1b1] sm:$0xff]
    %v6143 = vld [vmem:[%s5725 + $0x1b9] sm:$0xff]
    %v6144 = vld [vmem:[%s5725 + $0x1c9] sm:$0xff]
    %v6145 = vld [vmem:[%s5725 + $0x1d1] sm:$0xff]
    %v6146 = vld [vmem:[%s5725 + $0x1e1] sm:$0xff]
    %v6147 = vld [vmem:[%s5725 + $0x1e9] sm:$0xff]
    %v6148 = vld [vmem:[%s5725 + $0x1f9] sm:$0xff]
    %v6149 = vld [vmem:[%s5725 + $0x201] sm:$0xff]
    %v6150 = vld [vmem:[%s5725 + $0x211] sm:$0xff]
    %v6151 = vld [vmem:[%s5725 + $0x219] sm:$0xff]
    %v6152 = vld [vmem:[%s5725 + $0x229] sm:$0xff]
    %v6153 = vld [vmem:[%s5725 + $0x231] sm:$0xff]
    %v6154 = vld [vmem:[%s5725 + $0x241] sm:$0xff]
    %v6155 = vld [vmem:[%s5725 + $0x249] sm:$0xff]
    %v6156 = vld [vmem:[%s5725 + $0x259] sm:$0xff]
    %v6157 = vld [vmem:[%s5725 + $0x261] sm:$0xff]
    %v6158 = vld [vmem:[%s5725 + $0x271] sm:$0xff]
    %v6159 = vld [vmem:[%s5725 + $0x279] sm:$0xff]
    %v6160 = vld [vmem:[%s5725 + $0x289] sm:$0xff]
    %v6161 = vld [vmem:[%s5725 + $0x291] sm:$0xff]
    %v6162 = vld [vmem:[%s5725 + $0x2a1] sm:$0xff]
    %v6163 = vld [vmem:[%s5725 + $0x2a9] sm:$0xff]
    %v6164 = vld [vmem:[%s5725 + $0x2b9] sm:$0xff]
    %v6165 = vld [vmem:[%s5725 + $0x2c1] sm:$0xff]
    %v6166 = vld [vmem:[%s5725 + $0x2d1] sm:$0xff]
    %v6167 = vld [vmem:[%s5725 + $0x2d9] sm:$0xff]
    %v6168 = vld [vmem:[%s5725 + $0x2e9] sm:$0xff]
    %v6169 = vld [vmem:[%s5725 + $0x2f1] sm:$0xff]
    %v6170 = vld [vmem:[%s5725 + $0x301] sm:$0xff]
    %v6171 = vld [vmem:[%s5725 + $0x309] sm:$0xff]
    %v6172 = vld [vmem:[%s5725 + $0x319] sm:$0xff]
    %v6173 = vld [vmem:[%s5725 + $0x321] sm:$0xff]
    %6238 = vrot.lane.b32.xlu0 %v6110, 96
    %v6239 = vpop.permute.xlu0 %6238
    %6240 = vrot.lane.b32.xlu0 %v6111, 96
    %v6241 = vpop.permute.xlu0 %6240
    %6242 = vrot.lane.b32.xlu0 %v6112, 96
    %v6243 = vpop.permute.xlu0 %6242
    %6244 = vrot.lane.b32.xlu0 %v6113, 96
    %v6245 = vpop.permute.xlu0 %6244
    %6246 = vrot.lane.b32.xlu0 %v6114, 96
    %v6247 = vpop.permute.xlu0 %6246
    %6248 = vrot.lane.b32.xlu0 %v6115, 96
    %v6249 = vpop.permute.xlu0 %6248
    %6250 = vrot.lane.b32.xlu0 %v6116, 96
    %v6251 = vpop.permute.xlu0 %6250
    %6252 = vrot.lane.b32.xlu0 %v6117, 96
    %v6253 = vpop.permute.xlu0 %6252
    %6254 = vrot.lane.b32.xlu0 %v6118, 96
    %v6255 = vpop.permute.xlu0 %6254
    %6256 = vrot.lane.b32.xlu0 %v6119, 96
    %v6257 = vpop.permute.xlu0 %6256
    %6258 = vrot.lane.b32.xlu0 %v6120, 96
    %v6259 = vpop.permute.xlu0 %6258
    %6260 = vrot.lane.b32.xlu0 %v6121, 96
    %v6261 = vpop.permute.xlu0 %6260
    %6262 = vrot.lane.b32.xlu0 %v6122, 96
    %v6263 = vpop.permute.xlu0 %6262
    %6264 = vrot.lane.b32.xlu0 %v6123, 96
    %v6265 = vpop.permute.xlu0 %6264
    %6266 = vrot.lane.b32.xlu0 %v6124, 96
    %v6267 = vpop.permute.xlu0 %6266
    %6268 = vrot.lane.b32.xlu0 %v6125, 96
    %v6269 = vpop.permute.xlu0 %6268
    %6270 = vrot.lane.b32.xlu0 %v6126, 96
    %v6271 = vpop.permute.xlu0 %6270
    %6272 = vrot.lane.b32.xlu0 %v6127, 96
    %v6273 = vpop.permute.xlu0 %6272
    %6274 = vrot.lane.b32.xlu0 %v6128, 96
    %v6275 = vpop.permute.xlu0 %6274
    %6276 = vrot.lane.b32.xlu0 %v6129, 96
    %v6277 = vpop.permute.xlu0 %6276
    %6278 = vrot.lane.b32.xlu0 %v6130, 96
    %v6279 = vpop.permute.xlu0 %6278
    %6280 = vrot.lane.b32.xlu0 %v6131, 96
    %v6281 = vpop.permute.xlu0 %6280
    %6282 = vrot.lane.b32.xlu0 %v6132, 96
    %v6283 = vpop.permute.xlu0 %6282
    %6284 = vrot.lane.b32.xlu0 %v6133, 96
    %v6285 = vpop.permute.xlu0 %6284
    %6286 = vrot.lane.b32.xlu0 %v6134, 96
    %v6287 = vpop.permute.xlu0 %6286
    %6288 = vrot.lane.b32.xlu0 %v6135, 96
    %v6289 = vpop.permute.xlu0 %6288
    %6290 = vrot.lane.b32.xlu0 %v6136, 96
    %v6291 = vpop.permute.xlu0 %6290
    %6292 = vrot.lane.b32.xlu0 %v6137, 96
    %v6293 = vpop.permute.xlu0 %6292
    %6294 = vrot.lane.b32.xlu0 %v6138, 96
    %v6295 = vpop.permute.xlu0 %6294
    %6296 = vrot.lane.b32.xlu0 %v6139, 96
    %v6297 = vpop.permute.xlu0 %6296
    %6298 = vrot.lane.b32.xlu0 %v6140, 96
    %v6299 = vpop.permute.xlu0 %6298
    %6300 = vrot.lane.b32.xlu0 %v6141, 96
    %v6301 = vpop.permute.xlu0 %6300
    %6302 = vrot.lane.b32.xlu0 %v6142, 96
    %v6303 = vpop.permute.xlu0 %6302
    %6304 = vrot.lane.b32.xlu0 %v6143, 96
    %v6305 = vpop.permute.xlu0 %6304
    %6306 = vrot.lane.b32.xlu0 %v6144, 96
    %v6307 = vpop.permute.xlu0 %6306
    %6308 = vrot.lane.b32.xlu0 %v6145, 96
    %v6309 = vpop.permute.xlu0 %6308
    %6310 = vrot.lane.b32.xlu0 %v6146, 96
    %v6311 = vpop.permute.xlu0 %6310
    %6312 = vrot.lane.b32.xlu0 %v6147, 96
    %v6313 = vpop.permute.xlu0 %6312
    %6314 = vrot.lane.b32.xlu0 %v6148, 96
    %v6315 = vpop.permute.xlu0 %6314
    %6316 = vrot.lane.b32.xlu0 %v6149, 96
    %v6317 = vpop.permute.xlu0 %6316
    %6318 = vrot.lane.b32.xlu0 %v6150, 96
    %v6319 = vpop.permute.xlu0 %6318
    %6320 = vrot.lane.b32.xlu0 %v6151, 96
    %v6321 = vpop.permute.xlu0 %6320
    %6322 = vrot.lane.b32.xlu0 %v6152, 96
    %v6323 = vpop.permute.xlu0 %6322
    %6324 = vrot.lane.b32.xlu0 %v6153, 96
    %v6325 = vpop.permute.xlu0 %6324
    %6326 = vrot.lane.b32.xlu0 %v6154, 96
    %v6327 = vpop.permute.xlu0 %6326
    %6328 = vrot.lane.b32.xlu0 %v6155, 96
    %v6329 = vpop.permute.xlu0 %6328
    %6330 = vrot.lane.b32.xlu0 %v6156, 96
    %v6331 = vpop.permute.xlu0 %6330
    %6332 = vrot.lane.b32.xlu0 %v6157, 96
    %v6333 = vpop.permute.xlu0 %6332
    %6334 = vrot.lane.b32.xlu0 %v6158, 96
    %v6335 = vpop.permute.xlu0 %6334
    %6336 = vrot.lane.b32.xlu0 %v6159, 96
    %v6337 = vpop.permute.xlu0 %6336
    %6338 = vrot.lane.b32.xlu0 %v6160, 96
    %v6339 = vpop.permute.xlu0 %6338
    %6340 = vrot.lane.b32.xlu0 %v6161, 96
    %v6341 = vpop.permute.xlu0 %6340
    %6342 = vrot.lane.b32.xlu0 %v6162, 96
    %v6343 = vpop.permute.xlu0 %6342
    %6344 = vrot.lane.b32.xlu0 %v6163, 96
    %v6345 = vpop.permute.xlu0 %6344
    %6346 = vrot.lane.b32.xlu0 %v6164, 96
    %v6347 = vpop.permute.xlu0 %6346
    %6348 = vrot.lane.b32.xlu0 %v6165, 96
    %v6349 = vpop.permute.xlu0 %6348
    %6350 = vrot.lane.b32.xlu0 %v6166, 96
    %v6351 = vpop.permute.xlu0 %6350
    %6352 = vrot.lane.b32.xlu0 %v6167, 96
    %v6353 = vpop.permute.xlu0 %6352
    %6354 = vrot.lane.b32.xlu0 %v6168, 96
    %v6355 = vpop.permute.xlu0 %6354
    %6356 = vrot.lane.b32.xlu0 %v6169, 96
    %v6357 = vpop.permute.xlu0 %6356
    %6358 = vrot.lane.b32.xlu0 %v6170, 96
    %v6359 = vpop.permute.xlu0 %6358
    %6360 = vrot.lane.b32.xlu0 %v6171, 96
    %v6361 = vpop.permute.xlu0 %6360
    %6362 = vrot.lane.b32.xlu0 %v6172, 96
    %v6363 = vpop.permute.xlu0 %6362
    %6364 = vrot.lane.b32.xlu0 %v6173, 96
    %v6365 = vpop.permute.xlu0 %6364
    %6430 = vst.msk [vmem:[#allocation4 + $0x8] sm:$0xff] %vm5148, %v6239
    %6431 = vst.msk [vmem:[#allocation4 + $0x20] sm:$0xff] %vm5148, %v6241
    %6432 = vst.msk [vmem:[#allocation4 + $0x38] sm:$0xff] %vm5148, %v6243
    %6433 = vst.msk [vmem:[#allocation4 + $0x50] sm:$0xff] %vm5148, %v6245
    %6434 = vst.msk [vmem:[#allocation4 + $0x68] sm:$0xff] %vm5148, %v6247
    %6435 = vst.msk [vmem:[#allocation4 + $0x80] sm:$0xff] %vm5148, %v6249
    %6436 = vst.msk [vmem:[#allocation4 + $0x98] sm:$0xff] %vm5148, %v6251
    %6437 = vst.msk [vmem:[#allocation4 + $0xb0] sm:$0xff] %vm5148, %v6253
    %6438 = vst.msk [vmem:[#allocation4 + $0xc8] sm:$0xff] %vm5148, %v6255
    %6439 = vst.msk [vmem:[#allocation4 + $0xe0] sm:$0xff] %vm5148, %v6257
    %6440 = vst.msk [vmem:[#allocation4 + $0xf8] sm:$0xff] %vm5148, %v6259
    %6441 = vst.msk [vmem:[#allocation4 + $0x110] sm:$0xff] %vm5148, %v6261
    %6442 = vst.msk [vmem:[#allocation4 + $0x128] sm:$0xff] %vm5148, %v6263
    %6443 = vst.msk [vmem:[#allocation4 + $0x140] sm:$0xff] %vm5148, %v6265
    %6444 = vst.msk [vmem:[#allocation4 + $0x158] sm:$0xff] %vm5148, %v6267
    %6445 = vst.msk [vmem:[#allocation4 + $0x170] sm:$0xff] %vm5148, %v6269
    %6446 = vst.msk [vmem:[#allocation4 + $0x188] sm:$0xff] %vm5148, %v6271
    %6447 = vst.msk [vmem:[#allocation4 + $0x1a0] sm:$0xff] %vm5148, %v6273
    %6448 = vst.msk [vmem:[#allocation4 + $0x1b8] sm:$0xff] %vm5148, %v6275
    %6449 = vst.msk [vmem:[#allocation4 + $0x1d0] sm:$0xff] %vm5148, %v6277
    %6450 = vst.msk [vmem:[#allocation4 + $0x1e8] sm:$0xff] %vm5148, %v6279
    %6451 = vst.msk [vmem:[#allocation4 + $0x200] sm:$0xff] %vm5148, %v6281
    %6452 = vst.msk [vmem:[#allocation4 + $0x218] sm:$0xff] %vm5148, %v6283
    %6453 = vst.msk [vmem:[#allocation4 + $0x230] sm:$0xff] %vm5148, %v6285
    %6454 = vst.msk [vmem:[#allocation4 + $0x248] sm:$0xff] %vm5148, %v6287
    %6455 = vst.msk [vmem:[#allocation4 + $0x260] sm:$0xff] %vm5148, %v6289
    %6456 = vst.msk [vmem:[#allocation4 + $0x278] sm:$0xff] %vm5148, %v6291
    %6457 = vst.msk [vmem:[#allocation4 + $0x290] sm:$0xff] %vm5148, %v6293
    %6458 = vst.msk [vmem:[#allocation4 + $0x2a8] sm:$0xff] %vm5148, %v6295
    %6459 = vst.msk [vmem:[#allocation4 + $0x2c0] sm:$0xff] %vm5148, %v6297
    %6460 = vst.msk [vmem:[#allocation4 + $0x2d8] sm:$0xff] %vm5148, %v6299
    %6461 = vst.msk [vmem:[#allocation4 + $0x2f0] sm:$0xff] %vm5148, %v6301
    %6462 = vst.msk [vmem:[#allocation4 + $0x308] sm:$0xff] %vm5148, %v6303
    %6463 = vst.msk [vmem:[#allocation4 + $0x320] sm:$0xff] %vm5148, %v6305
    %6464 = vst.msk [vmem:[#allocation4 + $0x338] sm:$0xff] %vm5148, %v6307
    %6465 = vst.msk [vmem:[#allocation4 + $0x350] sm:$0xff] %vm5148, %v6309
    %6466 = vst.msk [vmem:[#allocation4 + $0x368] sm:$0xff] %vm5148, %v6311
    %6467 = vst.msk [vmem:[#allocation4 + $0x380] sm:$0xff] %vm5148, %v6313
    %6468 = vst.msk [vmem:[#allocation4 + $0x398] sm:$0xff] %vm5148, %v6315
    %6469 = vst.msk [vmem:[#allocation4 + $0x3b0] sm:$0xff] %vm5148, %v6317
    %6470 = vst.msk [vmem:[#allocation4 + $0x3c8] sm:$0xff] %vm5148, %v6319
    %6471 = vst.msk [vmem:[#allocation4 + $0x3e0] sm:$0xff] %vm5148, %v6321
    %6472 = vst.msk [vmem:[#allocation4 + $0x3f8] sm:$0xff] %vm5148, %v6323
    %6473 = vst.msk [vmem:[#allocation4 + $0x410] sm:$0xff] %vm5148, %v6325
    %6474 = vst.msk [vmem:[#allocation4 + $0x428] sm:$0xff] %vm5148, %v6327
    %6475 = vst.msk [vmem:[#allocation4 + $0x440] sm:$0xff] %vm5148, %v6329
    %6476 = vst.msk [vmem:[#allocation4 + $0x458] sm:$0xff] %vm5148, %v6331
    %6477 = vst.msk [vmem:[#allocation4 + $0x470] sm:$0xff] %vm5148, %v6333
    %6478 = vst.msk [vmem:[#allocation4 + $0x488] sm:$0xff] %vm5148, %v6335
    %6479 = vst.msk [vmem:[#allocation4 + $0x4a0] sm:$0xff] %vm5148, %v6337
    %6480 = vst.msk [vmem:[#allocation4 + $0x4b8] sm:$0xff] %vm5148, %v6339
    %6481 = vst.msk [vmem:[#allocation4 + $0x4d0] sm:$0xff] %vm5148, %v6341
    %6482 = vst.msk [vmem:[#allocation4 + $0x4e8] sm:$0xff] %vm5148, %v6343
    %6483 = vst.msk [vmem:[#allocation4 + $0x500] sm:$0xff] %vm5148, %v6345
    %6484 = vst.msk [vmem:[#allocation4 + $0x518] sm:$0xff] %vm5148, %v6347
    %6485 = vst.msk [vmem:[#allocation4 + $0x530] sm:$0xff] %vm5148, %v6349
    %6486 = vst.msk [vmem:[#allocation4 + $0x548] sm:$0xff] %vm5148, %v6351
    %6487 = vst.msk [vmem:[#allocation4 + $0x560] sm:$0xff] %vm5148, %v6353
    %6488 = vst.msk [vmem:[#allocation4 + $0x578] sm:$0xff] %vm5148, %v6355
    %6489 = vst.msk [vmem:[#allocation4 + $0x590] sm:$0xff] %vm5148, %v6357
    %6490 = vst.msk [vmem:[#allocation4 + $0x5a8] sm:$0xff] %vm5148, %v6359
    %6491 = vst.msk [vmem:[#allocation4 + $0x5c0] sm:$0xff] %vm5148, %v6361
    %6492 = vst.msk [vmem:[#allocation4 + $0x5d8] sm:$0xff] %vm5148, %v6363
    %6493 = vst.msk [vmem:[#allocation4 + $0x5f0] sm:$0xff] %vm5148, %v6365
    %v6494 = vld [vmem:[%s5725 + $0x2] sm:$0xff]
    %v6495 = vld [vmem:[%s5725 + $0xa] sm:$0xff]
    %v6496 = vld [vmem:[%s5725 + $0x1a] sm:$0xff]
    %v6497 = vld [vmem:[%s5725 + $0x22] sm:$0xff]
    %v6498 = vld [vmem:[%s5725 + $0x32] sm:$0xff]
    %v6499 = vld [vmem:[%s5725 + $0x3a] sm:$0xff]
    %v6500 = vld [vmem:[%s5725 + $0x4a] sm:$0xff]
    %v6501 = vld [vmem:[%s5725 + $0x52] sm:$0xff]
    %v6502 = vld [vmem:[%s5725 + $0x62] sm:$0xff]
    %v6503 = vld [vmem:[%s5725 + $0x6a] sm:$0xff]
    %v6504 = vld [vmem:[%s5725 + $0x7a] sm:$0xff]
    %v6505 = vld [vmem:[%s5725 + $0x82] sm:$0xff]
    %v6506 = vld [vmem:[%s5725 + $0x92] sm:$0xff]
    %v6507 = vld [vmem:[%s5725 + $0x9a] sm:$0xff]
    %v6508 = vld [vmem:[%s5725 + $0xaa] sm:$0xff]
    %v6509 = vld [vmem:[%s5725 + $0xb2] sm:$0xff]
    %v6510 = vld [vmem:[%s5725 + $0xc2] sm:$0xff]
    %v6511 = vld [vmem:[%s5725 + $0xca] sm:$0xff]
    %v6512 = vld [vmem:[%s5725 + $0xda] sm:$0xff]
    %v6513 = vld [vmem:[%s5725 + $0xe2] sm:$0xff]
    %v6514 = vld [vmem:[%s5725 + $0xf2] sm:$0xff]
    %v6515 = vld [vmem:[%s5725 + $0xfa] sm:$0xff]
    %v6516 = vld [vmem:[%s5725 + $0x10a] sm:$0xff]
    %v6517 = vld [vmem:[%s5725 + $0x112] sm:$0xff]
    %v6518 = vld [vmem:[%s5725 + $0x122] sm:$0xff]
    %v6519 = vld [vmem:[%s5725 + $0x12a] sm:$0xff]
    %v6520 = vld [vmem:[%s5725 + $0x13a] sm:$0xff]
    %v6521 = vld [vmem:[%s5725 + $0x142] sm:$0xff]
    %v6522 = vld [vmem:[%s5725 + $0x152] sm:$0xff]
    %v6523 = vld [vmem:[%s5725 + $0x15a] sm:$0xff]
    %v6524 = vld [vmem:[%s5725 + $0x16a] sm:$0xff]
    %v6525 = vld [vmem:[%s5725 + $0x172] sm:$0xff]
    %v6526 = vld [vmem:[%s5725 + $0x1b2] sm:$0xff]
    %v6527 = vld [vmem:[%s5725 + $0x1ba] sm:$0xff]
    %v6528 = vld [vmem:[%s5725 + $0x1ca] sm:$0xff]
    %v6529 = vld [vmem:[%s5725 + $0x1d2] sm:$0xff]
    %v6530 = vld [vmem:[%s5725 + $0x1e2] sm:$0xff]
    %v6531 = vld [vmem:[%s5725 + $0x1ea] sm:$0xff]
    %v6532 = vld [vmem:[%s5725 + $0x1fa] sm:$0xff]
    %v6533 = vld [vmem:[%s5725 + $0x202] sm:$0xff]
    %v6534 = vld [vmem:[%s5725 + $0x212] sm:$0xff]
    %v6535 = vld [vmem:[%s5725 + $0x21a] sm:$0xff]
    %v6536 = vld [vmem:[%s5725 + $0x22a] sm:$0xff]
    %v6537 = vld [vmem:[%s5725 + $0x232] sm:$0xff]
    %v6538 = vld [vmem:[%s5725 + $0x242] sm:$0xff]
    %v6539 = vld [vmem:[%s5725 + $0x24a] sm:$0xff]
    %v6540 = vld [vmem:[%s5725 + $0x25a] sm:$0xff]
    %v6541 = vld [vmem:[%s5725 + $0x262] sm:$0xff]
    %v6542 = vld [vmem:[%s5725 + $0x272] sm:$0xff]
    %v6543 = vld [vmem:[%s5725 + $0x27a] sm:$0xff]
    %v6544 = vld [vmem:[%s5725 + $0x28a] sm:$0xff]
    %v6545 = vld [vmem:[%s5725 + $0x292] sm:$0xff]
    %v6546 = vld [vmem:[%s5725 + $0x2a2] sm:$0xff]
    %v6547 = vld [vmem:[%s5725 + $0x2aa] sm:$0xff]
    %v6548 = vld [vmem:[%s5725 + $0x2ba] sm:$0xff]
    %v6549 = vld [vmem:[%s5725 + $0x2c2] sm:$0xff]
    %v6550 = vld [vmem:[%s5725 + $0x2d2] sm:$0xff]
    %v6551 = vld [vmem:[%s5725 + $0x2da] sm:$0xff]
    %v6552 = vld [vmem:[%s5725 + $0x2ea] sm:$0xff]
    %v6553 = vld [vmem:[%s5725 + $0x2f2] sm:$0xff]
    %v6554 = vld [vmem:[%s5725 + $0x302] sm:$0xff]
    %v6555 = vld [vmem:[%s5725 + $0x30a] sm:$0xff]
    %v6556 = vld [vmem:[%s5725 + $0x31a] sm:$0xff]
    %v6557 = vld [vmem:[%s5725 + $0x322] sm:$0xff]
    %6558 = vst.msk [vmem:[#allocation4 + $0x10] sm:$0xff] %vm299, %v6494
    %6559 = vst.msk [vmem:[#allocation4 + $0x28] sm:$0xff] %vm299, %v6495
    %6560 = vst.msk [vmem:[#allocation4 + $0x40] sm:$0xff] %vm299, %v6496
    %6561 = vst.msk [vmem:[#allocation4 + $0x58] sm:$0xff] %vm299, %v6497
    %6562 = vst.msk [vmem:[#allocation4 + $0x70] sm:$0xff] %vm299, %v6498
    %6563 = vst.msk [vmem:[#allocation4 + $0x88] sm:$0xff] %vm299, %v6499
    %6564 = vst.msk [vmem:[#allocation4 + $0xa0] sm:$0xff] %vm299, %v6500
    %6565 = vst.msk [vmem:[#allocation4 + $0xb8] sm:$0xff] %vm299, %v6501
    %6566 = vst.msk [vmem:[#allocation4 + $0xd0] sm:$0xff] %vm299, %v6502
    %6567 = vst.msk [vmem:[#allocation4 + $0xe8] sm:$0xff] %vm299, %v6503
    %6568 = vst.msk [vmem:[#allocation4 + $0x100] sm:$0xff] %vm299, %v6504
    %6569 = vst.msk [vmem:[#allocation4 + $0x118] sm:$0xff] %vm299, %v6505
    %6570 = vst.msk [vmem:[#allocation4 + $0x130] sm:$0xff] %vm299, %v6506
    %6571 = vst.msk [vmem:[#allocation4 + $0x148] sm:$0xff] %vm299, %v6507
    %6572 = vst.msk [vmem:[#allocation4 + $0x160] sm:$0xff] %vm299, %v6508
    %6573 = vst.msk [vmem:[#allocation4 + $0x178] sm:$0xff] %vm299, %v6509
    %6574 = vst.msk [vmem:[#allocation4 + $0x190] sm:$0xff] %vm299, %v6510
    %6575 = vst.msk [vmem:[#allocation4 + $0x1a8] sm:$0xff] %vm299, %v6511
    %6576 = vst.msk [vmem:[#allocation4 + $0x1c0] sm:$0xff] %vm299, %v6512
    %6577 = vst.msk [vmem:[#allocation4 + $0x1d8] sm:$0xff] %vm299, %v6513
    %6578 = vst.msk [vmem:[#allocation4 + $0x1f0] sm:$0xff] %vm299, %v6514
    %6579 = vst.msk [vmem:[#allocation4 + $0x208] sm:$0xff] %vm299, %v6515
    %6580 = vst.msk [vmem:[#allocation4 + $0x220] sm:$0xff] %vm299, %v6516
    %6581 = vst.msk [vmem:[#allocation4 + $0x238] sm:$0xff] %vm299, %v6517
    %6582 = vst.msk [vmem:[#allocation4 + $0x250] sm:$0xff] %vm299, %v6518
    %6583 = vst.msk [vmem:[#allocation4 + $0x268] sm:$0xff] %vm299, %v6519
    %6584 = vst.msk [vmem:[#allocation4 + $0x280] sm:$0xff] %vm299, %v6520
    %6585 = vst.msk [vmem:[#allocation4 + $0x298] sm:$0xff] %vm299, %v6521
    %6586 = vst.msk [vmem:[#allocation4 + $0x2b0] sm:$0xff] %vm299, %v6522
    %6587 = vst.msk [vmem:[#allocation4 + $0x2c8] sm:$0xff] %vm299, %v6523
    %6588 = vst.msk [vmem:[#allocation4 + $0x2e0] sm:$0xff] %vm299, %v6524
    %6589 = vst.msk [vmem:[#allocation4 + $0x2f8] sm:$0xff] %vm299, %v6525
    %6590 = vst.msk [vmem:[#allocation4 + $0x310] sm:$0xff] %vm299, %v6526
    %6591 = vst.msk [vmem:[#allocation4 + $0x328] sm:$0xff] %vm299, %v6527
    %6592 = vst.msk [vmem:[#allocation4 + $0x340] sm:$0xff] %vm299, %v6528
    %6593 = vst.msk [vmem:[#allocation4 + $0x358] sm:$0xff] %vm299, %v6529
    %6594 = vst.msk [vmem:[#allocation4 + $0x370] sm:$0xff] %vm299, %v6530
    %6595 = vst.msk [vmem:[#allocation4 + $0x388] sm:$0xff] %vm299, %v6531
    %6596 = vst.msk [vmem:[#allocation4 + $0x3a0] sm:$0xff] %vm299, %v6532
    %6597 = vst.msk [vmem:[#allocation4 + $0x3b8] sm:$0xff] %vm299, %v6533
    %6598 = vst.msk [vmem:[#allocation4 + $0x3d0] sm:$0xff] %vm299, %v6534
    %6599 = vst.msk [vmem:[#allocation4 + $0x3e8] sm:$0xff] %vm299, %v6535
    %6600 = vst.msk [vmem:[#allocation4 + $0x400] sm:$0xff] %vm299, %v6536
    %6601 = vst.msk [vmem:[#allocation4 + $0x418] sm:$0xff] %vm299, %v6537
    %6602 = vst.msk [vmem:[#allocation4 + $0x430] sm:$0xff] %vm299, %v6538
    %6603 = vst.msk [vmem:[#allocation4 + $0x448] sm:$0xff] %vm299, %v6539
    %6604 = vst.msk [vmem:[#allocation4 + $0x460] sm:$0xff] %vm299, %v6540
    %6605 = vst.msk [vmem:[#allocation4 + $0x478] sm:$0xff] %vm299, %v6541
    %6606 = vst.msk [vmem:[#allocation4 + $0x490] sm:$0xff] %vm299, %v6542
    %6607 = vst.msk [vmem:[#allocation4 + $0x4a8] sm:$0xff] %vm299, %v6543
    %6608 = vst.msk [vmem:[#allocation4 + $0x4c0] sm:$0xff] %vm299, %v6544
    %6609 = vst.msk [vmem:[#allocation4 + $0x4d8] sm:$0xff] %vm299, %v6545
    %6610 = vst.msk [vmem:[#allocation4 + $0x4f0] sm:$0xff] %vm299, %v6546
    %6611 = vst.msk [vmem:[#allocation4 + $0x508] sm:$0xff] %vm299, %v6547
    %6612 = vst.msk [vmem:[#allocation4 + $0x520] sm:$0xff] %vm299, %v6548
    %6613 = vst.msk [vmem:[#allocation4 + $0x538] sm:$0xff] %vm299, %v6549
    %6614 = vst.msk [vmem:[#allocation4 + $0x550] sm:$0xff] %vm299, %v6550
    %6615 = vst.msk [vmem:[#allocation4 + $0x568] sm:$0xff] %vm299, %v6551
    %6616 = vst.msk [vmem:[#allocation4 + $0x580] sm:$0xff] %vm299, %v6552
    %6617 = vst.msk [vmem:[#allocation4 + $0x598] sm:$0xff] %vm299, %v6553
    %6618 = vst.msk [vmem:[#allocation4 + $0x5b0] sm:$0xff] %vm299, %v6554
    %6619 = vst.msk [vmem:[#allocation4 + $0x5c8] sm:$0xff] %vm299, %v6555
    %6620 = vst.msk [vmem:[#allocation4 + $0x5e0] sm:$0xff] %vm299, %v6556
    %6621 = vst.msk [vmem:[#allocation4 + $0x5f8] sm:$0xff] %vm299, %v6557
    %v6622 = vld [vmem:[#allocation4] sm:$0xff]
    %v6623 = vld [vmem:[#allocation4 + $0x8] sm:$0xff]
    %v6624 = vld [vmem:[#allocation4 + $0x10] sm:$0xff]
    %v6625 = vld [vmem:[#allocation4 + $0x18] sm:$0xff]
    %v6626 = vld [vmem:[#allocation4 + $0x20] sm:$0xff]
    %v6627 = vld [vmem:[#allocation4 + $0x28] sm:$0xff]
    %v6628 = vld [vmem:[#allocation4 + $0x30] sm:$0xff]
    %v6629 = vld [vmem:[#allocation4 + $0x38] sm:$0xff]
    %v6630 = vld [vmem:[#allocation4 + $0x40] sm:$0xff]
    %v6631 = vld [vmem:[#allocation4 + $0x48] sm:$0xff]
    %v6632 = vld [vmem:[#allocation4 + $0x50] sm:$0xff]
    %v6633 = vld [vmem:[#allocation4 + $0x58] sm:$0xff]
    %v6634 = vld [vmem:[#allocation4 + $0x60] sm:$0xff]
    %v6635 = vld [vmem:[#allocation4 + $0x68] sm:$0xff]
    %v6636 = vld [vmem:[#allocation4 + $0x70] sm:$0xff]
    %v6637 = vld [vmem:[#allocation4 + $0x78] sm:$0xff]
    %v6638 = vld [vmem:[#allocation4 + $0x80] sm:$0xff]
    %v6639 = vld [vmem:[#allocation4 + $0x88] sm:$0xff]
    %v6640 = vld [vmem:[#allocation4 + $0x90] sm:$0xff]
    %v6641 = vld [vmem:[#allocation4 + $0x98] sm:$0xff]
    %v6642 = vld [vmem:[#allocation4 + $0xa0] sm:$0xff]
    %v6643 = vld [vmem:[#allocation4 + $0xa8] sm:$0xff]
    %v6644 = vld [vmem:[#allocation4 + $0xb0] sm:$0xff]
    %v6645 = vld [vmem:[#allocation4 + $0xb8] sm:$0xff]
    %v6646 = vld [vmem:[#allocation4 + $0xc0] sm:$0xff]
    %v6647 = vld [vmem:[#allocation4 + $0xc8] sm:$0xff]
    %v6648 = vld [vmem:[#allocation4 + $0xd0] sm:$0xff]
    %v6649 = vld [vmem:[#allocation4 + $0xd8] sm:$0xff]
    %v6650 = vld [vmem:[#allocation4 + $0xe0] sm:$0xff]
    %v6651 = vld [vmem:[#allocation4 + $0xe8] sm:$0xff]
    %v6652 = vld [vmem:[#allocation4 + $0xf0] sm:$0xff]
    %v6653 = vld [vmem:[#allocation4 + $0xf8] sm:$0xff]
    %v6654 = vld [vmem:[#allocation4 + $0x100] sm:$0xff]
    %v6655 = vld [vmem:[#allocation4 + $0x108] sm:$0xff]
    %v6656 = vld [vmem:[#allocation4 + $0x110] sm:$0xff]
    %v6657 = vld [vmem:[#allocation4 + $0x118] sm:$0xff]
    %v6658 = vld [vmem:[#allocation4 + $0x120] sm:$0xff]
    %v6659 = vld [vmem:[#allocation4 + $0x128] sm:$0xff]
    %v6660 = vld [vmem:[#allocation4 + $0x130] sm:$0xff]
    %v6661 = vld [vmem:[#allocation4 + $0x138] sm:$0xff]
    %v6662 = vld [vmem:[#allocation4 + $0x140] sm:$0xff]
    %v6663 = vld [vmem:[#allocation4 + $0x148] sm:$0xff]
    %v6664 = vld [vmem:[#allocation4 + $0x150] sm:$0xff]
    %v6665 = vld [vmem:[#allocation4 + $0x158] sm:$0xff]
    %v6666 = vld [vmem:[#allocation4 + $0x160] sm:$0xff]
    %v6667 = vld [vmem:[#allocation4 + $0x168] sm:$0xff]
    %v6668 = vld [vmem:[#allocation4 + $0x170] sm:$0xff]
    %v6669 = vld [vmem:[#allocation4 + $0x178] sm:$0xff]
    %v6670 = vld [vmem:[#allocation4 + $0x180] sm:$0xff]
    %v6671 = vld [vmem:[#allocation4 + $0x188] sm:$0xff]
    %v6672 = vld [vmem:[#allocation4 + $0x190] sm:$0xff]
    %v6673 = vld [vmem:[#allocation4 + $0x198] sm:$0xff]
    %v6674 = vld [vmem:[#allocation4 + $0x1a0] sm:$0xff]
    %v6675 = vld [vmem:[#allocation4 + $0x1a8] sm:$0xff]
    %v6676 = vld [vmem:[#allocation4 + $0x1b0] sm:$0xff]
    %v6677 = vld [vmem:[#allocation4 + $0x1b8] sm:$0xff]
    %v6678 = vld [vmem:[#allocation4 + $0x1c0] sm:$0xff]
    %v6679 = vld [vmem:[#allocation4 + $0x1c8] sm:$0xff]
    %v6680 = vld [vmem:[#allocation4 + $0x1d0] sm:$0xff]
    %v6681 = vld [vmem:[#allocation4 + $0x1d8] sm:$0xff]
    %v6682 = vld [vmem:[#allocation4 + $0x1e0] sm:$0xff]
    %v6683 = vld [vmem:[#allocation4 + $0x1e8] sm:$0xff]
    %v6684 = vld [vmem:[#allocation4 + $0x1f0] sm:$0xff]
    %v6685 = vld [vmem:[#allocation4 + $0x1f8] sm:$0xff]
    %v6686 = vld [vmem:[#allocation4 + $0x200] sm:$0xff]
    %v6687 = vld [vmem:[#allocation4 + $0x208] sm:$0xff]
    %v6688 = vld [vmem:[#allocation4 + $0x210] sm:$0xff]
    %v6689 = vld [vmem:[#allocation4 + $0x218] sm:$0xff]
    %v6690 = vld [vmem:[#allocation4 + $0x220] sm:$0xff]
    %v6691 = vld [vmem:[#allocation4 + $0x228] sm:$0xff]
    %v6692 = vld [vmem:[#allocation4 + $0x230] sm:$0xff]
    %v6693 = vld [vmem:[#allocation4 + $0x238] sm:$0xff]
    %v6694 = vld [vmem:[#allocation4 + $0x240] sm:$0xff]
    %v6695 = vld [vmem:[#allocation4 + $0x248] sm:$0xff]
    %v6696 = vld [vmem:[#allocation4 + $0x250] sm:$0xff]
    %v6697 = vld [vmem:[#allocation4 + $0x258] sm:$0xff]
    %v6698 = vld [vmem:[#allocation4 + $0x260] sm:$0xff]
    %v6699 = vld [vmem:[#allocation4 + $0x268] sm:$0xff]
    %v6700 = vld [vmem:[#allocation4 + $0x270] sm:$0xff]
    %v6701 = vld [vmem:[#allocation4 + $0x278] sm:$0xff]
    %v6702 = vld [vmem:[#allocation4 + $0x280] sm:$0xff]
    %v6703 = vld [vmem:[#allocation4 + $0x288] sm:$0xff]
    %v6704 = vld [vmem:[#allocation4 + $0x290] sm:$0xff]
    %v6705 = vld [vmem:[#allocation4 + $0x298] sm:$0xff]
    %v6706 = vld [vmem:[#allocation4 + $0x2a0] sm:$0xff]
    %v6707 = vld [vmem:[#allocation4 + $0x2a8] sm:$0xff]
    %v6708 = vld [vmem:[#allocation4 + $0x2b0] sm:$0xff]
    %v6709 = vld [vmem:[#allocation4 + $0x2b8] sm:$0xff]
    %v6710 = vld [vmem:[#allocation4 + $0x2c0] sm:$0xff]
    %v6711 = vld [vmem:[#allocation4 + $0x2c8] sm:$0xff]
    %v6712 = vld [vmem:[#allocation4 + $0x2d0] sm:$0xff]
    %v6713 = vld [vmem:[#allocation4 + $0x2d8] sm:$0xff]
    %v6714 = vld [vmem:[#allocation4 + $0x2e0] sm:$0xff]
    %v6715 = vld [vmem:[#allocation4 + $0x2e8] sm:$0xff]
    %v6716 = vld [vmem:[#allocation4 + $0x2f0] sm:$0xff]
    %v6717 = vld [vmem:[#allocation4 + $0x2f8] sm:$0xff]
    %v6718 = vld [vmem:[#allocation4 + $0x300] sm:$0xff]
    %v6719 = vld [vmem:[#allocation4 + $0x308] sm:$0xff]
    %v6720 = vld [vmem:[#allocation4 + $0x310] sm:$0xff]
    %v6721 = vld [vmem:[#allocation4 + $0x318] sm:$0xff]
    %v6722 = vld [vmem:[#allocation4 + $0x320] sm:$0xff]
    %v6723 = vld [vmem:[#allocation4 + $0x328] sm:$0xff]
    %v6724 = vld [vmem:[#allocation4 + $0x330] sm:$0xff]
    %v6725 = vld [vmem:[#allocation4 + $0x338] sm:$0xff]
    %v6726 = vld [vmem:[#allocation4 + $0x340] sm:$0xff]
    %v6727 = vld [vmem:[#allocation4 + $0x348] sm:$0xff]
    %v6728 = vld [vmem:[#allocation4 + $0x350] sm:$0xff]
    %v6729 = vld [vmem:[#allocation4 + $0x358] sm:$0xff]
    %v6730 = vld [vmem:[#allocation4 + $0x360] sm:$0xff]
    %v6731 = vld [vmem:[#allocation4 + $0x368] sm:$0xff]
    %v6732 = vld [vmem:[#allocation4 + $0x370] sm:$0xff]
    %v6733 = vld [vmem:[#allocation4 + $0x378] sm:$0xff]
    %v6734 = vld [vmem:[#allocation4 + $0x380] sm:$0xff]
    %v6735 = vld [vmem:[#allocation4 + $0x388] sm:$0xff]
    %v6736 = vld [vmem:[#allocation4 + $0x390] sm:$0xff]
    %v6737 = vld [vmem:[#allocation4 + $0x398] sm:$0xff]
    %v6738 = vld [vmem:[#allocation4 + $0x3a0] sm:$0xff]
    %v6739 = vld [vmem:[#allocation4 + $0x3a8] sm:$0xff]
    %v6740 = vld [vmem:[#allocation4 + $0x3b0] sm:$0xff]
    %v6741 = vld [vmem:[#allocation4 + $0x3b8] sm:$0xff]
    %v6742 = vld [vmem:[#allocation4 + $0x3c0] sm:$0xff]
    %v6743 = vld [vmem:[#allocation4 + $0x3c8] sm:$0xff]
    %v6744 = vld [vmem:[#allocation4 + $0x3d0] sm:$0xff]
    %v6745 = vld [vmem:[#allocation4 + $0x3d8] sm:$0xff]
    %v6746 = vld [vmem:[#allocation4 + $0x3e0] sm:$0xff]
    %v6747 = vld [vmem:[#allocation4 + $0x3e8] sm:$0xff]
    %v6748 = vld [vmem:[#allocation4 + $0x3f0] sm:$0xff]
    %v6749 = vld [vmem:[#allocation4 + $0x3f8] sm:$0xff]
    %v6750 = vld [vmem:[#allocation4 + $0x400] sm:$0xff]
    %v6751 = vld [vmem:[#allocation4 + $0x408] sm:$0xff]
    %v6752 = vld [vmem:[#allocation4 + $0x410] sm:$0xff]
    %v6753 = vld [vmem:[#allocation4 + $0x418] sm:$0xff]
    %v6754 = vld [vmem:[#allocation4 + $0x420] sm:$0xff]
    %v6755 = vld [vmem:[#allocation4 + $0x428] sm:$0xff]
    %v6756 = vld [vmem:[#allocation4 + $0x430] sm:$0xff]
    %v6757 = vld [vmem:[#allocation4 + $0x438] sm:$0xff]
    %v6758 = vld [vmem:[#allocation4 + $0x440] sm:$0xff]
    %v6759 = vld [vmem:[#allocation4 + $0x448] sm:$0xff]
    %v6760 = vld [vmem:[#allocation4 + $0x450] sm:$0xff]
    %v6761 = vld [vmem:[#allocation4 + $0x458] sm:$0xff]
    %v6762 = vld [vmem:[#allocation4 + $0x460] sm:$0xff]
    %v6763 = vld [vmem:[#allocation4 + $0x468] sm:$0xff]
    %v6764 = vld [vmem:[#allocation4 + $0x470] sm:$0xff]
    %v6765 = vld [vmem:[#allocation4 + $0x478] sm:$0xff]
    %v6766 = vld [vmem:[#allocation4 + $0x480] sm:$0xff]
    %v6767 = vld [vmem:[#allocation4 + $0x488] sm:$0xff]
    %v6768 = vld [vmem:[#allocation4 + $0x490] sm:$0xff]
    %v6769 = vld [vmem:[#allocation4 + $0x498] sm:$0xff]
    %v6770 = vld [vmem:[#allocation4 + $0x4a0] sm:$0xff]
    %v6771 = vld [vmem:[#allocation4 + $0x4a8] sm:$0xff]
    %v6772 = vld [vmem:[#allocation4 + $0x4b0] sm:$0xff]
    %v6773 = vld [vmem:[#allocation4 + $0x4b8] sm:$0xff]
    %v6774 = vld [vmem:[#allocation4 + $0x4c0] sm:$0xff]
    %v6775 = vld [vmem:[#allocation4 + $0x4c8] sm:$0xff]
    %v6776 = vld [vmem:[#allocation4 + $0x4d0] sm:$0xff]
    %v6777 = vld [vmem:[#allocation4 + $0x4d8] sm:$0xff]
    %v6778 = vld [vmem:[#allocation4 + $0x4e0] sm:$0xff]
    %v6779 = vld [vmem:[#allocation4 + $0x4e8] sm:$0xff]
    %v6780 = vld [vmem:[#allocation4 + $0x4f0] sm:$0xff]
    %v6781 = vld [vmem:[#allocation4 + $0x4f8] sm:$0xff]
    %v6782 = vld [vmem:[#allocation4 + $0x500] sm:$0xff]
    %v6783 = vld [vmem:[#allocation4 + $0x508] sm:$0xff]
    %v6784 = vld [vmem:[#allocation4 + $0x510] sm:$0xff]
    %v6785 = vld [vmem:[#allocation4 + $0x518] sm:$0xff]
    %v6786 = vld [vmem:[#allocation4 + $0x520] sm:$0xff]
    %v6787 = vld [vmem:[#allocation4 + $0x528] sm:$0xff]
    %v6788 = vld [vmem:[#allocation4 + $0x530] sm:$0xff]
    %v6789 = vld [vmem:[#allocation4 + $0x538] sm:$0xff]
    %v6790 = vld [vmem:[#allocation4 + $0x540] sm:$0xff]
    %v6791 = vld [vmem:[#allocation4 + $0x548] sm:$0xff]
    %v6792 = vld [vmem:[#allocation4 + $0x550] sm:$0xff]
    %v6793 = vld [vmem:[#allocation4 + $0x558] sm:$0xff]
    %v6794 = vld [vmem:[#allocation4 + $0x560] sm:$0xff]
    %v6795 = vld [vmem:[#allocation4 + $0x568] sm:$0xff]
    %v6796 = vld [vmem:[#allocation4 + $0x570] sm:$0xff]
    %v6797 = vld [vmem:[#allocation4 + $0x578] sm:$0xff]
    %v6798 = vld [vmem:[#allocation4 + $0x580] sm:$0xff]
    %v6799 = vld [vmem:[#allocation4 + $0x588] sm:$0xff]
    %v6800 = vld [vmem:[#allocation4 + $0x590] sm:$0xff]
    %v6801 = vld [vmem:[#allocation4 + $0x598] sm:$0xff]
    %v6802 = vld [vmem:[#allocation4 + $0x5a0] sm:$0xff]
    %v6803 = vld [vmem:[#allocation4 + $0x5a8] sm:$0xff]
    %v6804 = vld [vmem:[#allocation4 + $0x5b0] sm:$0xff]
    %v6805 = vld [vmem:[#allocation4 + $0x5b8] sm:$0xff]
    %v6806 = vld [vmem:[#allocation4 + $0x5c0] sm:$0xff]
    %v6807 = vld [vmem:[#allocation4 + $0x5c8] sm:$0xff]
    %v6808 = vld [vmem:[#allocation4 + $0x5d0] sm:$0xff]
    %v6809 = vld [vmem:[#allocation4 + $0x5d8] sm:$0xff]
    %v6810 = vld [vmem:[#allocation4 + $0x5e0] sm:$0xff]
    %v6811 = vld [vmem:[#allocation4 + $0x5e8] sm:$0xff]
    %v6812 = vld [vmem:[#allocation4 + $0x5f0] sm:$0xff]
    %v6813 = vld [vmem:[#allocation4 + $0x5f8] sm:$0xff]
    %v6814 = vld [vmem:[%s3] sm:$0xff]
    %v6815 = vld [vmem:[%s3 + $0x8] sm:$0xff]
    %v6816 = vld [vmem:[%s3 + $0x10] sm:$0xff]
    %v6817 = vld [vmem:[%s3 + $0x18] sm:$0xff]
    %v6818 = vld [vmem:[%s3 + $0x20] sm:$0xff]
    %v6819 = vld [vmem:[%s3 + $0x28] sm:$0xff]
    %v6820 = vld [vmem:[%s3 + $0x30] sm:$0xff]
    %v6821 = vld [vmem:[%s3 + $0x38] sm:$0xff]
    %v6822 = vld [vmem:[%s3 + $0x40] sm:$0xff]
    %v6823 = vld [vmem:[%s3 + $0x48] sm:$0xff]
    %v6824 = vld [vmem:[%s3 + $0x50] sm:$0xff]
    %v6825 = vld [vmem:[%s3 + $0x58] sm:$0xff]
    %v6826 = vld [vmem:[%s3 + $0x60] sm:$0xff]
    %v6827 = vld [vmem:[%s3 + $0x68] sm:$0xff]
    %v6828 = vld [vmem:[%s3 + $0x70] sm:$0xff]
    %v6829 = vld [vmem:[%s3 + $0x78] sm:$0xff]
    %v6830 = vld [vmem:[%s3 + $0x80] sm:$0xff]
    %v6831 = vld [vmem:[%s3 + $0x88] sm:$0xff]
    %v6832 = vld [vmem:[%s3 + $0x90] sm:$0xff]
    %v6833 = vld [vmem:[%s3 + $0x98] sm:$0xff]
    %v6834 = vld [vmem:[%s3 + $0xa0] sm:$0xff]
    %v6835 = vld [vmem:[%s3 + $0xa8] sm:$0xff]
    %v6836 = vld [vmem:[%s3 + $0xb0] sm:$0xff]
    %v6837 = vld [vmem:[%s3 + $0xb8] sm:$0xff]
    %v6838 = vld [vmem:[%s3 + $0xc0] sm:$0xff]
    %v6839 = vld [vmem:[%s3 + $0xc8] sm:$0xff]
    %v6840 = vld [vmem:[%s3 + $0xd0] sm:$0xff]
    %v6841 = vld [vmem:[%s3 + $0xd8] sm:$0xff]
    %v6842 = vld [vmem:[%s3 + $0xe0] sm:$0xff]
    %v6843 = vld [vmem:[%s3 + $0xe8] sm:$0xff]
    %v6844 = vld [vmem:[%s3 + $0xf0] sm:$0xff]
    %v6845 = vld [vmem:[%s3 + $0xf8] sm:$0xff]
    %v6846 = vld [vmem:[%s3 + $0x100] sm:$0xff]
    %v6847 = vld [vmem:[%s3 + $0x108] sm:$0xff]
    %v6848 = vld [vmem:[%s3 + $0x110] sm:$0xff]
    %v6849 = vld [vmem:[%s3 + $0x118] sm:$0xff]
    %v6850 = vld [vmem:[%s4] sm:$0x1]
    %v6852 = vlaneseq
    %v6853 = vshrl.u32 %v6852, 7
    %v6854 = vsub.s32 0, %v6853
    %v6855 = vrot.slane %v6850, %v6854
    %v6858 = vsel %vm299, %v6624, 0
    %v6861 = vsel %vm299, %v6627, 0
    %v6864 = vsel %vm299, %v6630, 0
    %v6867 = vsel %vm299, %v6633, 0
    %v6870 = vsel %vm299, %v6636, 0
    %v6873 = vsel %vm299, %v6639, 0
    %v6876 = vsel %vm299, %v6642, 0
    %v6879 = vsel %vm299, %v6645, 0
    %v6882 = vsel %vm299, %v6648, 0
    %v6885 = vsel %vm299, %v6651, 0
    %v6888 = vsel %vm299, %v6654, 0
    %v6891 = vsel %vm299, %v6657, 0
    %v6894 = vsel %vm299, %v6660, 0
    %v6897 = vsel %vm299, %v6663, 0
    %v6900 = vsel %vm299, %v6666, 0
    %v6903 = vsel %vm299, %v6669, 0
    %v6906 = vsel %vm299, %v6672, 0
    %v6909 = vsel %vm299, %v6675, 0
    %v6912 = vsel %vm299, %v6678, 0
    %v6915 = vsel %vm299, %v6681, 0
    %v6918 = vsel %vm299, %v6684, 0
    %v6921 = vsel %vm299, %v6687, 0
    %v6924 = vsel %vm299, %v6690, 0
    %v6927 = vsel %vm299, %v6693, 0
    %v6930 = vsel %vm299, %v6696, 0
    %v6933 = vsel %vm299, %v6699, 0
    %v6936 = vsel %vm299, %v6702, 0
    %v6939 = vsel %vm299, %v6705, 0
    %v6942 = vsel %vm299, %v6708, 0
    %v6945 = vsel %vm299, %v6711, 0
    %v6948 = vsel %vm299, %v6714, 0
    %v6951 = vsel %vm299, %v6717, 0
    %v6954 = vsel %vm299, %v6720, 0
    %v6957 = vsel %vm299, %v6723, 0
    %v6960 = vsel %vm299, %v6726, 0
    %v6963 = vsel %vm299, %v6729, 0
    %v6966 = vsel %vm299, %v6732, 0
    %v6969 = vsel %vm299, %v6735, 0
    %v6972 = vsel %vm299, %v6738, 0
    %v6975 = vsel %vm299, %v6741, 0
    %v6978 = vsel %vm299, %v6744, 0
    %v6981 = vsel %vm299, %v6747, 0
    %v6984 = vsel %vm299, %v6750, 0
    %v6987 = vsel %vm299, %v6753, 0
    %v6990 = vsel %vm299, %v6756, 0
    %v6993 = vsel %vm299, %v6759, 0
    %v6996 = vsel %vm299, %v6762, 0
    %v6999 = vsel %vm299, %v6765, 0
    %v7002 = vsel %vm299, %v6768, 0
    %v7005 = vsel %vm299, %v6771, 0
    %v7008 = vsel %vm299, %v6774, 0
    %v7011 = vsel %vm299, %v6777, 0
    %v7014 = vsel %vm299, %v6780, 0
    %v7017 = vsel %vm299, %v6783, 0
    %v7020 = vsel %vm299, %v6786, 0
    %v7023 = vsel %vm299, %v6789, 0
    %v7026 = vsel %vm299, %v6792, 0
    %v7029 = vsel %vm299, %v6795, 0
    %v7032 = vsel %vm299, %v6798, 0
    %v7035 = vsel %vm299, %v6801, 0
    %v7038 = vsel %vm299, %v6804, 0
    %v7041 = vsel %vm299, %v6807, 0
    %v7044 = vsel %vm299, %v6810, 0
    %v7047 = vsel %vm299, %v6813, 0
    %7049 = vmatprep.subr.mxu0 0.0
    %7050 = vmatpush1.msra.mxu0 %v6814
    %7051 = vmatprep.subr.mxu0 0.0
    %7052 = vmatpush1.msra.mxu0 %v6815
    %7053 = vmatprep.subr.mxu0 0.0
    %7054 = vmatpush1.msra.mxu0 %v6816
    %7055 = vmatprep.subr.mxu0 0.0
    %7056 = vmatpush1.msra.mxu0 %v6817
    %7057 = vmatprep.subr.mxu0 0.0
    %7058 = vmatpush1.msra.mxu0 %v6818
    %7059 = vmatprep.subr.mxu0 0.0
    %7060 = vmatpush1.msra.mxu0 %v6819
    %7061 = vmatprep.subr.mxu0 0.0
    %7062 = vmatpush1.msra.mxu0 %v6820
    %7063 = vmatprep.subr.mxu0 0.0
    %7064 = vmatpush1.msra.mxu0 %v6821
    %7065 = vmatprep.subr.mxu0 0.0
    %7066 = vmatpush1.msra.mxu0 %v6822
    %7067 = vmatprep.subr.mxu0 0.0
    %7068 = vmatpush1.msra.mxu0 %v6823
    %7069 = vmatprep.subr.mxu0 0.0
    %7070 = vmatpush1.msra.mxu0 %v6824
    %7071 = vmatprep.subr.mxu0 0.0
    %7072 = vmatpush1.msra.mxu0 %v6825
    %7073 = vmatprep.subr.mxu0 0.0
    %7074 = vmatpush1.msra.mxu0 %v6826
    %7075 = vmatprep.subr.mxu0 0.0
    %7076 = vmatpush1.msra.mxu0 %v6827
    %7077 = vmatprep.subr.mxu0 0.0
    %7078 = vmatpush1.msra.mxu0 %v6828
    %7079 = vmatprep.subr.mxu0 0.0
    %7080 = vmatpush1.msra.mxu0 %v6829
    %7081 = vmatprep.subr.mxu0 0.0
    %7082 = vmatpush1.msra.mxu0 %v6830
    %7083 = vmatprep.subr.mxu0 0.0
    %7084 = vmatpush1.msra.mxu0 %v6831
    %7085 = vmatprep.subr.mxu0 0.0
    %7086 = vmatpush1.msra.mxu0 %v6832
    %7087 = vmatprep.subr.mxu0 0.0
    %7088 = vmatpush1.msra.mxu0 %v6833
    %7089 = vmatprep.subr.mxu0 0.0
    %7090 = vmatpush1.msra.mxu0 %v6834
    %7091 = vmatprep.subr.mxu0 0.0
    %7092 = vmatpush1.msra.mxu0 %v6835
    %7093 = vmatprep.subr.mxu0 0.0
    %7094 = vmatpush1.msra.mxu0 %v6836
    %7095 = vmatprep.subr.mxu0 0.0
    %7096 = vmatpush1.msra.mxu0 %v6837
    %7097 = vmatprep.subr.mxu0 0.0
    %7098 = vmatpush1.msra.mxu0 %v6838
    %7099 = vmatprep.subr.mxu0 0.0
    %7100 = vmatpush1.msra.mxu0 %v6839
    %7101 = vmatprep.subr.mxu0 0.0
    %7102 = vmatpush1.msra.mxu0 %v6840
    %7103 = vmatprep.subr.mxu0 0.0
    %7104 = vmatpush1.msra.mxu0 %v6841
    %7105 = vmatprep.subr.mxu0 0.0
    %7106 = vmatpush1.msra.mxu0 %v6842
    %7107 = vmatprep.subr.mxu0 0.0
    %7108 = vmatpush1.msra.mxu0 %v6843
    %7109 = vmatprep.subr.mxu0 0.0
    %7110 = vmatpush1.msra.mxu0 %v6844
    %7111 = vmatprep.subr.mxu0 0.0
    %7112 = vmatpush1.msra.mxu0 %v6845
    %7113 = vmatprep.mubr.f32.mxu0 %v6623
    %7114 = vmatmul.mubr.f32.gmra.mrb[0].mxu0 %v6622
    %v7115 = vpop.f32.mrb[0].mxu0
    %v7116 = vadd.f32 %v6855, %v7115
    %v7117 = vpop.f32.mrb[0].mxu0
    %7118 = vmatprep.mubr.f32.mxu0 %v6626
    %7119 = vmatmul.mubr.f32.gmra.mrb[0].mxu0 %v6625
    %v7120 = vpop.f32.mrb[0].mxu0
    %v7121 = vadd.f32 %v6855, %v7120
    %v7122 = vpop.f32.mrb[0].mxu0
    %7123 = vmatprep.mubr.f32.mxu0 %v6629
    %7124 = vmatmul.mubr.f32.gmra.mrb[0].mxu0 %v6628
    %v7125 = vpop.f32.mrb[0].mxu0
    %v7126 = vadd.f32 %v6855, %v7125
    %v7127 = vpop.f32.mrb[0].mxu0
    %7128 = vmatprep.mubr.f32.mxu0 %v6632
    %7129 = vmatmul.mubr.f32.gmra.mrb[0].mxu0 %v6631
    %v7130 = vpop.f32.mrb[0].mxu0
    %v7131 = vadd.f32 %v6855, %v7130
    %v7132 = vpop.f32.mrb[0].mxu0
    %7133 = vmatprep.mubr.f32.mxu0 %v6635
    %7134 = vmatmul.mubr.f32.gmra.mrb[0].mxu0 %v6634
    %v7135 = vpop.f32.mrb[0].mxu0
    %v7136 = vadd.f32 %v6855, %v7135
    %v7137 = vpop.f32.mrb[0].mxu0
    %7138 = vmatprep.mubr.f32.mxu0 %v6638
    %7139 = vmatmul.mubr.f32.gmra.mrb[0].mxu0 %v6637
    %v7140 = vpop.f32.mrb[0].mxu0
    %v7141 = vadd.f32 %v6855, %v7140
    %v7142 = vpop.f32.mrb[0].mxu0
    %7143 = vmatprep.mubr.f32.mxu0 %v6641
    %7144 = vmatmul.mubr.f32.gmra.mrb[0].mxu0 %v6640
    %v7145 = vpop.f32.mrb[0].mxu0
    %v7146 = vadd.f32 %v6855, %v7145
    %v7147 = vpop.f32.mrb[0].mxu0
    %7148 = vmatprep.mubr.f32.mxu0 %v6644
    %7149 = vmatmul.mubr.f32.gmra.mrb[0].mxu0 %v6643
    %v7150 = vpop.f32.mrb[0].mxu0
    %v7151 = vadd.f32 %v6855, %v7150
    %v7152 = vpop.f32.mrb[0].mxu0
    %7153 = vmatprep.mubr.f32.mxu0 %v6647
    %7154 = vmatmul.mubr.f32.gmra.mrb[0].mxu0 %v6646
    %v7155 = vpop.f32.mrb[0].mxu0
    %v7156 = vadd.f32 %v6855, %v7155
    %v7157 = vpop.f32.mrb[0].mxu0
    %7158 = vmatprep.mubr.f32.mxu0 %v6650
    %7159 = vmatmul.mubr.f32.gmra.mrb[0].mxu0 %v6649
    %v7160 = vpop.f32.mrb[0].mxu0
    %v7161 = vadd.f32 %v6855, %v7160
    %v7162 = vpop.f32.mrb[0].mxu0
    %7163 = vmatprep.mubr.f32.mxu0 %v6653
    %7164 = vmatmul.mubr.f32.gmra.mrb[0].mxu0 %v6652
    %v7165 = vpop.f32.mrb[0].mxu0
    %v7166 = vadd.f32 %v6855, %v7165
    %v7167 = vpop.f32.mrb[0].mxu0
    %7168 = vmatprep.mubr.f32.mxu0 %v6656
    %7169 = vmatmul.mubr.f32.gmra.mrb[0].mxu0 %v6655
    %v7170 = vpop.f32.mrb[0].mxu0
    %v7171 = vadd.f32 %v6855, %v7170
    %v7172 = vpop.f32.mrb[0].mxu0
    %7173 = vmatprep.mubr.f32.mxu0 %v6659
    %7174 = vmatmul.mubr.f32.gmra.mrb[0].mxu0 %v6658
    %v7175 = vpop.f32.mrb[0].mxu0
    %v7176 = vadd.f32 %v6855, %v7175
    %v7177 = vpop.f32.mrb[0].mxu0
    %7178 = vmatprep.mubr.f32.mxu0 %v6662
    %7179 = vmatmul.mubr.f32.gmra.mrb[0].mxu0 %v6661
    %v7180 = vpop.f32.mrb[0].mxu0
    %v7181 = vadd.f32 %v6855, %v7180
    %v7182 = vpop.f32.mrb[0].mxu0
    %7183 = vmatprep.mubr.f32.mxu0 %v6665
    %7184 = vmatmul.mubr.f32.gmra.mrb[0].mxu0 %v6664
    %v7185 = vpop.f32.mrb[0].mxu0
    %v7186 = vadd.f32 %v6855, %v7185
    %v7187 = vpop.f32.mrb[0].mxu0
    %7188 = vmatprep.mubr.f32.mxu0 %v6668
    %7189 = vmatmul.mubr.f32.gmra.mrb[0].mxu0 %v6667
    %v7190 = vpop.f32.mrb[0].mxu0
    %v7191 = vadd.f32 %v6855, %v7190
    %v7192 = vpop.f32.mrb[0].mxu0
    %7193 = vmatprep.mubr.f32.mxu0 %v6671
    %7194 = vmatmul.mubr.f32.gmra.mrb[0].mxu0 %v6670
    %v7195 = vpop.f32.mrb[0].mxu0
    %v7196 = vadd.f32 %v6855, %v7195
    %v7197 = vpop.f32.mrb[0].mxu0
    %7198 = vmatprep.mubr.f32.mxu0 %v6674
    %7199 = vmatmul.mubr.f32.gmra.mrb[0].mxu0 %v6673
    %v7200 = vpop.f32.mrb[0].mxu0
    %v7201 = vadd.f32 %v6855, %v7200
    %v7202 = vpop.f32.mrb[0].mxu0
    %7203 = vmatprep.mubr.f32.mxu0 %v6677
    %7204 = vmatmul.mubr.f32.gmra.mrb[0].mxu0 %v6676
    %v7205 = vpop.f32.mrb[0].mxu0
    %v7206 = vadd.f32 %v6855, %v7205
    %v7207 = vpop.f32.mrb[0].mxu0
    %7208 = vmatprep.mubr.f32.mxu0 %v6680
    %7209 = vmatmul.mubr.f32.gmra.mrb[0].mxu0 %v6679
    %v7210 = vpop.f32.mrb[0].mxu0
    %v7211 = vadd.f32 %v6855, %v7210
    %v7212 = vpop.f32.mrb[0].mxu0
    %7213 = vmatprep.mubr.f32.mxu0 %v6683
    %7214 = vmatmul.mubr.f32.gmra.mrb[0].mxu0 %v6682
    %v7215 = vpop.f32.mrb[0].mxu0
    %v7216 = vadd.f32 %v6855, %v7215
    %v7217 = vpop.f32.mrb[0].mxu0
    %7218 = vmatprep.mubr.f32.mxu0 %v6686
    %7219 = vmatmul.mubr.f32.gmra.mrb[0].mxu0 %v6685
    %v7220 = vpop.f32.mrb[0].mxu0
    %v7221 = vadd.f32 %v6855, %v7220
    %v7222 = vpop.f32.mrb[0].mxu0
    %7223 = vmatprep.mubr.f32.mxu0 %v6689
    %7224 = vmatmul.mubr.f32.gmra.mrb[0].mxu0 %v6688
    %v7225 = vpop.f32.mrb[0].mxu0
    %v7226 = vadd.f32 %v6855, %v7225
    %v7227 = vpop.f32.mrb[0].mxu0
    %7228 = vmatprep.mubr.f32.mxu0 %v6692
    %7229 = vmatmul.mubr.f32.gmra.mrb[0].mxu0 %v6691
    %v7230 = vpop.f32.mrb[0].mxu0
    %v7231 = vadd.f32 %v6855, %v7230
    %v7232 = vpop.f32.mrb[0].mxu0
    %7233 = vmatprep.mubr.f32.mxu0 %v6695
    %7234 = vmatmul.mubr.f32.gmra.mrb[0].mxu0 %v6694
    %v7235 = vpop.f32.mrb[0].mxu0
    %v7236 = vadd.f32 %v6855, %v7235
    %v7237 = vpop.f32.mrb[0].mxu0
    %7238 = vmatprep.mubr.f32.mxu0 %v6698
    %7239 = vmatmul.mubr.f32.gmra.mrb[0].mxu0 %v6697
    %v7240 = vpop.f32.mrb[0].mxu0
    %v7241 = vadd.f32 %v6855, %v7240
    %v7242 = vpop.f32.mrb[0].mxu0
    %7243 = vmatprep.mubr.f32.mxu0 %v6701
    %7244 = vmatmul.mubr.f32.gmra.mrb[0].mxu0 %v6700
    %v7245 = vpop.f32.mrb[0].mxu0
    %v7246 = vadd.f32 %v6855, %v7245
    %v7247 = vpop.f32.mrb[0].mxu0
    %7248 = vmatprep.mubr.f32.mxu0 %v6704
    %7249 = vmatmul.mubr.f32.gmra.mrb[0].mxu0 %v6703
    %v7250 = vpop.f32.mrb[0].mxu0
    %v7251 = vadd.f32 %v6855, %v7250
    %v7252 = vpop.f32.mrb[0].mxu0
    %7253 = vmatprep.mubr.f32.mxu0 %v6707
    %7254 = vmatmul.mubr.f32.gmra.mrb[0].mxu0 %v6706
    %v7255 = vpop.f32.mrb[0].mxu0
    %v7256 = vadd.f32 %v6855, %v7255
    %v7257 = vpop.f32.mrb[0].mxu0
    %7258 = vmatprep.mubr.f32.mxu0 %v6710
    %7259 = vmatmul.mubr.f32.gmra.mrb[0].mxu0 %v6709
    %v7260 = vpop.f32.mrb[0].mxu0
    %v7261 = vadd.f32 %v6855, %v7260
    %v7262 = vpop.f32.mrb[0].mxu0
    %7263 = vmatprep.mubr.f32.mxu0 %v6713
    %7264 = vmatmul.mubr.f32.gmra.mrb[0].mxu0 %v6712
    %v7265 = vpop.f32.mrb[0].mxu0
    %v7266 = vadd.f32 %v6855, %v7265
    %v7267 = vpop.f32.mrb[0].mxu0
    %7268 = vmatprep.mubr.f32.mxu0 %v6716
    %7269 = vmatmul.mubr.f32.gmra.mrb[0].mxu0 %v6715
    %v7270 = vpop.f32.mrb[0].mxu0
    %v7271 = vadd.f32 %v6855, %v7270
    %v7272 = vpop.f32.mrb[0].mxu0
    %7273 = vmatprep.mubr.f32.mxu0 %v6719
    %7274 = vmatmul.mubr.f32.gmra.mrb[0].mxu0 %v6718
    %v7275 = vpop.f32.mrb[0].mxu0
    %v7276 = vadd.f32 %v6855, %v7275
    %v7277 = vpop.f32.mrb[0].mxu0
    %7278 = vmatprep.mubr.f32.mxu0 %v6722
    %7279 = vmatmul.mubr.f32.gmra.mrb[0].mxu0 %v6721
    %v7280 = vpop.f32.mrb[0].mxu0
    %v7281 = vadd.f32 %v6855, %v7280
    %v7282 = vpop.f32.mrb[0].mxu0
    %7283 = vmatprep.mubr.f32.mxu0 %v6725
    %7284 = vmatmul.mubr.f32.gmra.mrb[0].mxu0 %v6724
    %v7285 = vpop.f32.mrb[0].mxu0
    %v7286 = vadd.f32 %v6855, %v7285
    %v7287 = vpop.f32.mrb[0].mxu0
    %7288 = vmatprep.mubr.f32.mxu0 %v6728
    %7289 = vmatmul.mubr.f32.gmra.mrb[0].mxu0 %v6727
    %v7290 = vpop.f32.mrb[0].mxu0
    %v7291 = vadd.f32 %v6855, %v7290
    %v7292 = vpop.f32.mrb[0].mxu0
    %7293 = vmatprep.mubr.f32.mxu0 %v6731
    %7294 = vmatmul.mubr.f32.gmra.mrb[0].mxu0 %v6730
    %v7295 = vpop.f32.mrb[0].mxu0
    %v7296 = vadd.f32 %v6855, %v7295
    %v7297 = vpop.f32.mrb[0].mxu0
    %7298 = vmatprep.mubr.f32.mxu0 %v6734
    %7299 = vmatmul.mubr.f32.gmra.mrb[0].mxu0 %v6733
    %v7300 = vpop.f32.mrb[0].mxu0
    %v7301 = vadd.f32 %v6855, %v7300
    %v7302 = vpop.f32.mrb[0].mxu0
    %7303 = vmatprep.mubr.f32.mxu0 %v6737
    %7304 = vmatmul.mubr.f32.gmra.mrb[0].mxu0 %v6736
    %v7305 = vpop.f32.mrb[0].mxu0
    %v7306 = vadd.f32 %v6855, %v7305
    %v7307 = vpop.f32.mrb[0].mxu0
    %7308 = vmatprep.mubr.f32.mxu0 %v6740
    %7309 = vmatmul.mubr.f32.gmra.mrb[0].mxu0 %v6739
    %v7310 = vpop.f32.mrb[0].mxu0
    %v7311 = vadd.f32 %v6855, %v7310
    %v7312 = vpop.f32.mrb[0].mxu0
    %7313 = vmatprep.mubr.f32.mxu0 %v6743
    %7314 = vmatmul.mubr.f32.gmra.mrb[0].mxu0 %v6742
    %v7315 = vpop.f32.mrb[0].mxu0
    %v7316 = vadd.f32 %v6855, %v7315
    %v7317 = vpop.f32.mrb[0].mxu0
    %7318 = vmatprep.mubr.f32.mxu0 %v6746
    %7319 = vmatmul.mubr.f32.gmra.mrb[0].mxu0 %v6745
    %v7320 = vpop.f32.mrb[0].mxu0
    %v7321 = vadd.f32 %v6855, %v7320
    %v7322 = vpop.f32.mrb[0].mxu0
    %7323 = vmatprep.mubr.f32.mxu0 %v6749
    %7324 = vmatmul.mubr.f32.gmra.mrb[0].mxu0 %v6748
    %v7325 = vpop.f32.mrb[0].mxu0
    %v7326 = vadd.f32 %v6855, %v7325
    %v7327 = vpop.f32.mrb[0].mxu0
    %7328 = vmatprep.mubr.f32.mxu0 %v6752
    %7329 = vmatmul.mubr.f32.gmra.mrb[0].mxu0 %v6751
    %v7330 = vpop.f32.mrb[0].mxu0
    %v7331 = vadd.f32 %v6855, %v7330
    %v7332 = vpop.f32.mrb[0].mxu0
    %7333 = vmatprep.mubr.f32.mxu0 %v6755
    %7334 = vmatmul.mubr.f32.gmra.mrb[0].mxu0 %v6754
    %v7335 = vpop.f32.mrb[0].mxu0
    %v7336 = vadd.f32 %v6855, %v7335
    %v7337 = vpop.f32.mrb[0].mxu0
    %7338 = vmatprep.mubr.f32.mxu0 %v6758
    %7339 = vmatmul.mubr.f32.gmra.mrb[0].mxu0 %v6757
    %v7340 = vpop.f32.mrb[0].mxu0
    %v7341 = vadd.f32 %v6855, %v7340
    %v7342 = vpop.f32.mrb[0].mxu0
    %7343 = vmatprep.mubr.f32.mxu0 %v6761
    %7344 = vmatmul.mubr.f32.gmra.mrb[0].mxu0 %v6760
    %v7345 = vpop.f32.mrb[0].mxu0
    %v7346 = vadd.f32 %v6855, %v7345
    %v7347 = vpop.f32.mrb[0].mxu0
    %7348 = vmatprep.mubr.f32.mxu0 %v6764
    %7349 = vmatmul.mubr.f32.gmra.mrb[0].mxu0 %v6763
    %v7350 = vpop.f32.mrb[0].mxu0
    %v7351 = vadd.f32 %v6855, %v7350
    %v7352 = vpop.f32.mrb[0].mxu0
    %7353 = vmatprep.mubr.f32.mxu0 %v6767
    %7354 = vmatmul.mubr.f32.gmra.mrb[0].mxu0 %v6766
    %v7355 = vpop.f32.mrb[0].mxu0
    %v7356 = vadd.f32 %v6855, %v7355
    %v7357 = vpop.f32.mrb[0].mxu0
    %7358 = vmatprep.mubr.f32.mxu0 %v6770
    %7359 = vmatmul.mubr.f32.gmra.mrb[0].mxu0 %v6769
    %v7360 = vpop.f32.mrb[0].mxu0
    %v7361 = vadd.f32 %v6855, %v7360
    %v7362 = vpop.f32.mrb[0].mxu0
    %7363 = vmatprep.mubr.f32.mxu0 %v6773
    %7364 = vmatmul.mubr.f32.gmra.mrb[0].mxu0 %v6772
    %v7365 = vpop.f32.mrb[0].mxu0
    %v7366 = vadd.f32 %v6855, %v7365
    %v7367 = vpop.f32.mrb[0].mxu0
    %7368 = vmatprep.mubr.f32.mxu0 %v6776
    %7369 = vmatmul.mubr.f32.gmra.mrb[0].mxu0 %v6775
    %v7370 = vpop.f32.mrb[0].mxu0
    %v7371 = vadd.f32 %v6855, %v7370
    %v7372 = vpop.f32.mrb[0].mxu0
    %7373 = vmatprep.mubr.f32.mxu0 %v6779
    %7374 = vmatmul.mubr.f32.gmra.mrb[0].mxu0 %v6778
    %v7375 = vpop.f32.mrb[0].mxu0
    %v7376 = vadd.f32 %v6855, %v7375
    %v7377 = vpop.f32.mrb[0].mxu0
    %7378 = vmatprep.mubr.f32.mxu0 %v6782
    %7379 = vmatmul.mubr.f32.gmra.mrb[0].mxu0 %v6781
    %v7380 = vpop.f32.mrb[0].mxu0
    %v7381 = vadd.f32 %v6855, %v7380
    %v7382 = vpop.f32.mrb[0].mxu0
    %7383 = vmatprep.mubr.f32.mxu0 %v6785
    %7384 = vmatmul.mubr.f32.gmra.mrb[0].mxu0 %v6784
    %v7385 = vpop.f32.mrb[0].mxu0
    %v7386 = vadd.f32 %v6855, %v7385
    %v7387 = vpop.f32.mrb[0].mxu0
    %7388 = vmatprep.mubr.f32.mxu0 %v6788
    %7389 = vmatmul.mubr.f32.gmra.mrb[0].mxu0 %v6787
    %v7390 = vpop.f32.mrb[0].mxu0
    %v7391 = vadd.f32 %v6855, %v7390
    %v7392 = vpop.f32.mrb[0].mxu0
    %7393 = vmatprep.mubr.f32.mxu0 %v6791
    %7394 = vmatmul.mubr.f32.gmra.mrb[0].mxu0 %v6790
    %v7395 = vpop.f32.mrb[0].mxu0
    %v7396 = vadd.f32 %v6855, %v7395
    %v7397 = vpop.f32.mrb[0].mxu0
    %7398 = vmatprep.mubr.f32.mxu0 %v6794
    %7399 = vmatmul.mubr.f32.gmra.mrb[0].mxu0 %v6793
    %v7400 = vpop.f32.mrb[0].mxu0
    %v7401 = vadd.f32 %v6855, %v7400
    %v7402 = vpop.f32.mrb[0].mxu0
    %7403 = vmatprep.mubr.f32.mxu0 %v6797
    %7404 = vmatmul.mubr.f32.gmra.mrb[0].mxu0 %v6796
    %v7405 = vpop.f32.mrb[0].mxu0
    %v7406 = vadd.f32 %v6855, %v7405
    %v7407 = vpop.f32.mrb[0].mxu0
    %7408 = vmatprep.mubr.f32.mxu0 %v6800
    %7409 = vmatmul.mubr.f32.gmra.mrb[0].mxu0 %v6799
    %v7410 = vpop.f32.mrb[0].mxu0
    %v7411 = vadd.f32 %v6855, %v7410
    %v7412 = vpop.f32.mrb[0].mxu0
    %7413 = vmatprep.mubr.f32.mxu0 %v6803
    %7414 = vmatmul.mubr.f32.gmra.mrb[0].mxu0 %v6802
    %v7415 = vpop.f32.mrb[0].mxu0
    %v7416 = vadd.f32 %v6855, %v7415
    %v7417 = vpop.f32.mrb[0].mxu0
    %7418 = vmatprep.mubr.f32.mxu0 %v6806
    %7419 = vmatmul.mubr.f32.gmra.mrb[0].mxu0 %v6805
    %v7420 = vpop.f32.mrb[0].mxu0
    %v7421 = vadd.f32 %v6855, %v7420
    %v7422 = vpop.f32.mrb[0].mxu0
    %7423 = vmatprep.mubr.f32.mxu0 %v6809
    %7424 = vmatmul.mubr.f32.gmra.mrb[0].mxu0 %v6808
    %v7425 = vpop.f32.mrb[0].mxu0
    %v7426 = vadd.f32 %v6855, %v7425
    %v7427 = vpop.f32.mrb[0].mxu0
    %7428 = vmatprep.mubr.f32.mxu0 %v6812
    %7429 = vmatmul.mubr.f32.gmra.mrb[0].mxu0 %v6811
    %v7430 = vpop.f32.mrb[0].mxu0
    %v7431 = vadd.f32 %v6855, %v7430
    %v7432 = vpop.f32.mrb[0].mxu0
    %7433 = vdwg.mxu0
    %7434 = vmatprep.subr.mxu0 0.0
    %7435 = vmatpush1.msra.mxu0 %v6846
    %7436 = vmatprep.subr.mxu0 0.0
    %7437 = vmatpush1.msra.mxu0 %v6847
    %7438 = vmatprep.subr.mxu0 0.0
    %7439 = vmatpush1.msra.mxu0 %v6848
    %7440 = vmatprep.subr.mxu0 0.0
    %7441 = vmatpush1.msra.mxu0 %v6849
    %7442 = vmatprep.subr.mxu0 0.0
    %7443 = vmatpush1.msra.mxu0 0.0
    %7444 = vmatprep.subr.mxu0 0.0
    %7445 = vmatpush1.msra.mxu0 0.0
    %7446 = vmatprep.subr.mxu0 0.0
    %7447 = vmatpush1.msra.mxu0 0.0
    %7448 = vmatprep.subr.mxu0 0.0
    %7449 = vmatpush1.msra.mxu0 0.0
    %7450 = vmatprep.subr.mxu0 0.0
    %7451 = vmatpush1.msra.mxu0 0.0
    %7452 = vmatprep.subr.mxu0 0.0
    %7453 = vmatpush1.msra.mxu0 0.0
    %7454 = vmatprep.subr.mxu0 0.0
    %7455 = vmatpush1.msra.mxu0 0.0
    %7456 = vmatprep.subr.mxu0 0.0
    %7457 = vmatpush1.msra.mxu0 0.0
    %7458 = vmatprep.subr.mxu0 0.0
    %7459 = vmatpush1.msra.mxu0 0.0
    %7460 = vmatprep.subr.mxu0 0.0
    %7461 = vmatpush1.msra.mxu0 0.0
    %7462 = vmatprep.subr.mxu0 0.0
    %7463 = vmatpush1.msra.mxu0 0.0
    %7464 = vmatprep.subr.mxu0 0.0
    %7465 = vmatpush1.msra.mxu0 0.0
    %7466 = vmatprep.subr.mxu0 0.0
    %7467 = vmatpush1.msra.mxu0 0.0
    %7468 = vmatprep.subr.mxu0 0.0
    %7469 = vmatpush1.msra.mxu0 0.0
    %7470 = vmatprep.subr.mxu0 0.0
    %7471 = vmatpush1.msra.mxu0 0.0
    %7472 = vmatprep.subr.mxu0 0.0
    %7473 = vmatpush1.msra.mxu0 0.0
    %7474 = vmatprep.subr.mxu0 0.0
    %7475 = vmatpush1.msra.mxu0 0.0
    %7476 = vmatprep.subr.mxu0 0.0
    %7477 = vmatpush1.msra.mxu0 0.0
    %7478 = vmatprep.subr.mxu0 0.0
    %7479 = vmatpush1.msra.mxu0 0.0
    %7480 = vmatprep.subr.mxu0 0.0
    %7481 = vmatpush1.msra.mxu0 0.0
    %7482 = vmatprep.subr.mxu0 0.0
    %7483 = vmatpush1.msra.mxu0 0.0
    %7484 = vmatprep.subr.mxu0 0.0
    %7485 = vmatpush1.msra.mxu0 0.0
    %7486 = vmatprep.subr.mxu0 0.0
    %7487 = vmatpush1.msra.mxu0 0.0
    %7488 = vmatprep.subr.mxu0 0.0
    %7489 = vmatpush1.msra.mxu0 0.0
    %7490 = vmatprep.subr.mxu0 0.0
    %7491 = vmatpush1.msra.mxu0 0.0
    %7492 = vmatprep.subr.mxu0 0.0
    %7493 = vmatpush1.msra.mxu0 0.0
    %7494 = vmatprep.subr.mxu0 0.0
    %7495 = vmatpush1.msra.mxu0 0.0
    %7496 = vmatprep.subr.mxu0 0.0
    %7497 = vmatpush1.msra.mxu0 0.0
    %7498 = vmatprep.mubr.f32.mxu0 0.0
    %7499 = vmatmul.mubr.f32.gmra.mrb[0].mxu0 %v6858
    %v7500 = vpop.f32.mrb[0].mxu0
    %v7501 = vadd.f32 %v7116, %v7500
    %v7502 = vpop.f32.mrb[0].mxu0
    %7503 = vmatprep.mubr.f32.mxu0 0.0
    %7504 = vmatmul.mubr.f32.gmra.mrb[0].mxu0 %v6861
    %v7505 = vpop.f32.mrb[0].mxu0
    %v7506 = vadd.f32 %v7121, %v7505
    %v7507 = vpop.f32.mrb[0].mxu0
    %7508 = vmatprep.mubr.f32.mxu0 0.0
    %7509 = vmatmul.mubr.f32.gmra.mrb[0].mxu0 %v6864
    %v7510 = vpop.f32.mrb[0].mxu0
    %v7511 = vadd.f32 %v7126, %v7510
    %v7512 = vpop.f32.mrb[0].mxu0
    %7513 = vmatprep.mubr.f32.mxu0 0.0
    %7514 = vmatmul.mubr.f32.gmra.mrb[0].mxu0 %v6867
    %v7515 = vpop.f32.mrb[0].mxu0
    %v7516 = vadd.f32 %v7131, %v7515
    %v7517 = vpop.f32.mrb[0].mxu0
    %7518 = vmatprep.mubr.f32.mxu0 0.0
    %7519 = vmatmul.mubr.f32.gmra.mrb[0].mxu0 %v6870
    %v7520 = vpop.f32.mrb[0].mxu0
    %v7521 = vadd.f32 %v7136, %v7520
    %v7522 = vpop.f32.mrb[0].mxu0
    %7523 = vmatprep.mubr.f32.mxu0 0.0
    %7524 = vmatmul.mubr.f32.gmra.mrb[0].mxu0 %v6873
    %v7525 = vpop.f32.mrb[0].mxu0
    %v7526 = vadd.f32 %v7141, %v7525
    %v7527 = vpop.f32.mrb[0].mxu0
    %7528 = vmatprep.mubr.f32.mxu0 0.0
    %7529 = vmatmul.mubr.f32.gmra.mrb[0].mxu0 %v6876
    %v7530 = vpop.f32.mrb[0].mxu0
    %v7531 = vadd.f32 %v7146, %v7530
    %v7532 = vpop.f32.mrb[0].mxu0
    %7533 = vmatprep.mubr.f32.mxu0 0.0
    %7534 = vmatmul.mubr.f32.gmra.mrb[0].mxu0 %v6879
    %v7535 = vpop.f32.mrb[0].mxu0
    %v7536 = vadd.f32 %v7151, %v7535
    %v7537 = vpop.f32.mrb[0].mxu0
    %7538 = vmatprep.mubr.f32.mxu0 0.0
    %7539 = vmatmul.mubr.f32.gmra.mrb[0].mxu0 %v6882
    %v7540 = vpop.f32.mrb[0].mxu0
    %v7541 = vadd.f32 %v7156, %v7540
    %v7542 = vpop.f32.mrb[0].mxu0
    %7543 = vmatprep.mubr.f32.mxu0 0.0
    %7544 = vmatmul.mubr.f32.gmra.mrb[0].mxu0 %v6885
    %v7545 = vpop.f32.mrb[0].mxu0
    %v7546 = vadd.f32 %v7161, %v7545
    %v7547 = vpop.f32.mrb[0].mxu0
    %7548 = vmatprep.mubr.f32.mxu0 0.0
    %7549 = vmatmul.mubr.f32.gmra.mrb[0].mxu0 %v6888
    %v7550 = vpop.f32.mrb[0].mxu0
    %v7551 = vadd.f32 %v7166, %v7550
    %v7552 = vpop.f32.mrb[0].mxu0
    %7553 = vmatprep.mubr.f32.mxu0 0.0
    %7554 = vmatmul.mubr.f32.gmra.mrb[0].mxu0 %v6891
    %v7555 = vpop.f32.mrb[0].mxu0
    %v7556 = vadd.f32 %v7171, %v7555
    %v7557 = vpop.f32.mrb[0].mxu0
    %7558 = vmatprep.mubr.f32.mxu0 0.0
    %7559 = vmatmul.mubr.f32.gmra.mrb[0].mxu0 %v6894
    %v7560 = vpop.f32.mrb[0].mxu0
    %v7561 = vadd.f32 %v7176, %v7560
    %v7562 = vpop.f32.mrb[0].mxu0
    %7563 = vmatprep.mubr.f32.mxu0 0.0
    %7564 = vmatmul.mubr.f32.gmra.mrb[0].mxu0 %v6897
    %v7565 = vpop.f32.mrb[0].mxu0
    %v7566 = vadd.f32 %v7181, %v7565
    %v7567 = vpop.f32.mrb[0].mxu0
    %7568 = vmatprep.mubr.f32.mxu0 0.0
    %7569 = vmatmul.mubr.f32.gmra.mrb[0].mxu0 %v6900
    %v7570 = vpop.f32.mrb[0].mxu0
    %v7571 = vadd.f32 %v7186, %v7570
    %v7572 = vpop.f32.mrb[0].mxu0
    %7573 = vmatprep.mubr.f32.mxu0 0.0
    %7574 = vmatmul.mubr.f32.gmra.mrb[0].mxu0 %v6903
    %v7575 = vpop.f32.mrb[0].mxu0
    %v7576 = vadd.f32 %v7191, %v7575
    %v7577 = vpop.f32.mrb[0].mxu0
    %7578 = vmatprep.mubr.f32.mxu0 0.0
    %7579 = vmatmul.mubr.f32.gmra.mrb[0].mxu0 %v6906
    %v7580 = vpop.f32.mrb[0].mxu0
    %v7581 = vadd.f32 %v7196, %v7580
    %v7582 = vpop.f32.mrb[0].mxu0
    %7583 = vmatprep.mubr.f32.mxu0 0.0
    %7584 = vmatmul.mubr.f32.gmra.mrb[0].mxu0 %v6909
    %v7585 = vpop.f32.mrb[0].mxu0
    %v7586 = vadd.f32 %v7201, %v7585
    %v7587 = vpop.f32.mrb[0].mxu0
    %7588 = vmatprep.mubr.f32.mxu0 0.0
    %7589 = vmatmul.mubr.f32.gmra.mrb[0].mxu0 %v6912
    %v7590 = vpop.f32.mrb[0].mxu0
    %v7591 = vadd.f32 %v7206, %v7590
    %v7592 = vpop.f32.mrb[0].mxu0
    %7593 = vmatprep.mubr.f32.mxu0 0.0
    %7594 = vmatmul.mubr.f32.gmra.mrb[0].mxu0 %v6915
    %v7595 = vpop.f32.mrb[0].mxu0
    %v7596 = vadd.f32 %v7211, %v7595
    %v7597 = vpop.f32.mrb[0].mxu0
    %7598 = vmatprep.mubr.f32.mxu0 0.0
    %7599 = vmatmul.mubr.f32.gmra.mrb[0].mxu0 %v6918
    %v7600 = vpop.f32.mrb[0].mxu0
    %v7601 = vadd.f32 %v7216, %v7600
    %v7602 = vpop.f32.mrb[0].mxu0
    %7603 = vmatprep.mubr.f32.mxu0 0.0
    %7604 = vmatmul.mubr.f32.gmra.mrb[0].mxu0 %v6921
    %v7605 = vpop.f32.mrb[0].mxu0
    %v7606 = vadd.f32 %v7221, %v7605
    %v7607 = vpop.f32.mrb[0].mxu0
    %7608 = vmatprep.mubr.f32.mxu0 0.0
    %7609 = vmatmul.mubr.f32.gmra.mrb[0].mxu0 %v6924
    %v7610 = vpop.f32.mrb[0].mxu0
    %v7611 = vadd.f32 %v7226, %v7610
    %v7612 = vpop.f32.mrb[0].mxu0
    %7613 = vmatprep.mubr.f32.mxu0 0.0
    %7614 = vmatmul.mubr.f32.gmra.mrb[0].mxu0 %v6927
    %v7615 = vpop.f32.mrb[0].mxu0
    %v7616 = vadd.f32 %v7231, %v7615
    %v7617 = vpop.f32.mrb[0].mxu0
    %7618 = vmatprep.mubr.f32.mxu0 0.0
    %7619 = vmatmul.mubr.f32.gmra.mrb[0].mxu0 %v6930
    %v7620 = vpop.f32.mrb[0].mxu0
    %v7621 = vadd.f32 %v7236, %v7620
    %v7622 = vpop.f32.mrb[0].mxu0
    %7623 = vmatprep.mubr.f32.mxu0 0.0
    %7624 = vmatmul.mubr.f32.gmra.mrb[0].mxu0 %v6933
    %v7625 = vpop.f32.mrb[0].mxu0
    %v7626 = vadd.f32 %v7241, %v7625
    %v7627 = vpop.f32.mrb[0].mxu0
    %7628 = vmatprep.mubr.f32.mxu0 0.0
    %7629 = vmatmul.mubr.f32.gmra.mrb[0].mxu0 %v6936
    %v7630 = vpop.f32.mrb[0].mxu0
    %v7631 = vadd.f32 %v7246, %v7630
    %v7632 = vpop.f32.mrb[0].mxu0
    %7633 = vmatprep.mubr.f32.mxu0 0.0
    %7634 = vmatmul.mubr.f32.gmra.mrb[0].mxu0 %v6939
    %v7635 = vpop.f32.mrb[0].mxu0
    %v7636 = vadd.f32 %v7251, %v7635
    %v7637 = vpop.f32.mrb[0].mxu0
    %7638 = vmatprep.mubr.f32.mxu0 0.0
    %7639 = vmatmul.mubr.f32.gmra.mrb[0].mxu0 %v6942
    %v7640 = vpop.f32.mrb[0].mxu0
    %v7641 = vadd.f32 %v7256, %v7640
    %v7642 = vpop.f32.mrb[0].mxu0
    %7643 = vmatprep.mubr.f32.mxu0 0.0
    %7644 = vmatmul.mubr.f32.gmra.mrb[0].mxu0 %v6945
    %v7645 = vpop.f32.mrb[0].mxu0
    %v7646 = vadd.f32 %v7261, %v7645
    %v7647 = vpop.f32.mrb[0].mxu0
    %7648 = vmatprep.mubr.f32.mxu0 0.0
    %7649 = vmatmul.mubr.f32.gmra.mrb[0].mxu0 %v6948
    %v7650 = vpop.f32.mrb[0].mxu0
    %v7651 = vadd.f32 %v7266, %v7650
    %v7652 = vpop.f32.mrb[0].mxu0
    %7653 = vmatprep.mubr.f32.mxu0 0.0
    %7654 = vmatmul.mubr.f32.gmra.mrb[0].mxu0 %v6951
    %v7655 = vpop.f32.mrb[0].mxu0
    %v7656 = vadd.f32 %v7271, %v7655
    %v7657 = vpop.f32.mrb[0].mxu0
    %7658 = vmatprep.mubr.f32.mxu0 0.0
    %7659 = vmatmul.mubr.f32.gmra.mrb[0].mxu0 %v6954
    %v7660 = vpop.f32.mrb[0].mxu0
    %v7661 = vadd.f32 %v7276, %v7660
    %v7662 = vpop.f32.mrb[0].mxu0
    %7663 = vmatprep.mubr.f32.mxu0 0.0
    %7664 = vmatmul.mubr.f32.gmra.mrb[0].mxu0 %v6957
    %v7665 = vpop.f32.mrb[0].mxu0
    %v7666 = vadd.f32 %v7281, %v7665
    %v7667 = vpop.f32.mrb[0].mxu0
    %7668 = vmatprep.mubr.f32.mxu0 0.0
    %7669 = vmatmul.mubr.f32.gmra.mrb[0].mxu0 %v6960
    %v7670 = vpop.f32.mrb[0].mxu0
    %v7671 = vadd.f32 %v7286, %v7670
    %v7672 = vpop.f32.mrb[0].mxu0
    %7673 = vmatprep.mubr.f32.mxu0 0.0
    %7674 = vmatmul.mubr.f32.gmra.mrb[0].mxu0 %v6963
    %v7675 = vpop.f32.mrb[0].mxu0
    %v7676 = vadd.f32 %v7291, %v7675
    %v7677 = vpop.f32.mrb[0].mxu0
    %7678 = vmatprep.mubr.f32.mxu0 0.0
    %7679 = vmatmul.mubr.f32.gmra.mrb[0].mxu0 %v6966
    %v7680 = vpop.f32.mrb[0].mxu0
    %v7681 = vadd.f32 %v7296, %v7680
    %v7682 = vpop.f32.mrb[0].mxu0
    %7683 = vmatprep.mubr.f32.mxu0 0.0
    %7684 = vmatmul.mubr.f32.gmra.mrb[0].mxu0 %v6969
    %v7685 = vpop.f32.mrb[0].mxu0
    %v7686 = vadd.f32 %v7301, %v7685
    %v7687 = vpop.f32.mrb[0].mxu0
    %7688 = vmatprep.mubr.f32.mxu0 0.0
    %7689 = vmatmul.mubr.f32.gmra.mrb[0].mxu0 %v6972
    %v7690 = vpop.f32.mrb[0].mxu0
    %v7691 = vadd.f32 %v7306, %v7690
    %v7692 = vpop.f32.mrb[0].mxu0
    %7693 = vmatprep.mubr.f32.mxu0 0.0
    %7694 = vmatmul.mubr.f32.gmra.mrb[0].mxu0 %v6975
    %v7695 = vpop.f32.mrb[0].mxu0
    %v7696 = vadd.f32 %v7311, %v7695
    %v7697 = vpop.f32.mrb[0].mxu0
    %7698 = vmatprep.mubr.f32.mxu0 0.0
    %7699 = vmatmul.mubr.f32.gmra.mrb[0].mxu0 %v6978
    %v7700 = vpop.f32.mrb[0].mxu0
    %v7701 = vadd.f32 %v7316, %v7700
    %v7702 = vpop.f32.mrb[0].mxu0
    %7703 = vmatprep.mubr.f32.mxu0 0.0
    %7704 = vmatmul.mubr.f32.gmra.mrb[0].mxu0 %v6981
    %v7705 = vpop.f32.mrb[0].mxu0
    %v7706 = vadd.f32 %v7321, %v7705
    %v7707 = vpop.f32.mrb[0].mxu0
    %7708 = vmatprep.mubr.f32.mxu0 0.0
    %7709 = vmatmul.mubr.f32.gmra.mrb[0].mxu0 %v6984
    %v7710 = vpop.f32.mrb[0].mxu0
    %v7711 = vadd.f32 %v7326, %v7710
    %v7712 = vpop.f32.mrb[0].mxu0
    %7713 = vmatprep.mubr.f32.mxu0 0.0
    %7714 = vmatmul.mubr.f32.gmra.mrb[0].mxu0 %v6987
    %v7715 = vpop.f32.mrb[0].mxu0
    %v7716 = vadd.f32 %v7331, %v7715
    %v7717 = vpop.f32.mrb[0].mxu0
    %7718 = vmatprep.mubr.f32.mxu0 0.0
    %7719 = vmatmul.mubr.f32.gmra.mrb[0].mxu0 %v6990
    %v7720 = vpop.f32.mrb[0].mxu0
    %v7721 = vadd.f32 %v7336, %v7720
    %v7722 = vpop.f32.mrb[0].mxu0
    %7723 = vmatprep.mubr.f32.mxu0 0.0
    %7724 = vmatmul.mubr.f32.gmra.mrb[0].mxu0 %v6993
    %v7725 = vpop.f32.mrb[0].mxu0
    %v7726 = vadd.f32 %v7341, %v7725
    %v7727 = vpop.f32.mrb[0].mxu0
    %7728 = vmatprep.mubr.f32.mxu0 0.0
    %7729 = vmatmul.mubr.f32.gmra.mrb[0].mxu0 %v6996
    %v7730 = vpop.f32.mrb[0].mxu0
    %v7731 = vadd.f32 %v7346, %v7730
    %v7732 = vpop.f32.mrb[0].mxu0
    %7733 = vmatprep.mubr.f32.mxu0 0.0
    %7734 = vmatmul.mubr.f32.gmra.mrb[0].mxu0 %v6999
    %v7735 = vpop.f32.mrb[0].mxu0
    %v7736 = vadd.f32 %v7351, %v7735
    %v7737 = vpop.f32.mrb[0].mxu0
    %7738 = vmatprep.mubr.f32.mxu0 0.0
    %7739 = vmatmul.mubr.f32.gmra.mrb[0].mxu0 %v7002
    %v7740 = vpop.f32.mrb[0].mxu0
    %v7741 = vadd.f32 %v7356, %v7740
    %v7742 = vpop.f32.mrb[0].mxu0
    %7743 = vmatprep.mubr.f32.mxu0 0.0
    %7744 = vmatmul.mubr.f32.gmra.mrb[0].mxu0 %v7005
    %v7745 = vpop.f32.mrb[0].mxu0
    %v7746 = vadd.f32 %v7361, %v7745
    %v7747 = vpop.f32.mrb[0].mxu0
    %7748 = vmatprep.mubr.f32.mxu0 0.0
    %7749 = vmatmul.mubr.f32.gmra.mrb[0].mxu0 %v7008
    %v7750 = vpop.f32.mrb[0].mxu0
    %v7751 = vadd.f32 %v7366, %v7750
    %v7752 = vpop.f32.mrb[0].mxu0
    %7753 = vmatprep.mubr.f32.mxu0 0.0
    %7754 = vmatmul.mubr.f32.gmra.mrb[0].mxu0 %v7011
    %v7755 = vpop.f32.mrb[0].mxu0
    %v7756 = vadd.f32 %v7371, %v7755
    %v7757 = vpop.f32.mrb[0].mxu0
    %7758 = vmatprep.mubr.f32.mxu0 0.0
    %7759 = vmatmul.mubr.f32.gmra.mrb[0].mxu0 %v7014
    %v7760 = vpop.f32.mrb[0].mxu0
    %v7761 = vadd.f32 %v7376, %v7760
    %v7762 = vpop.f32.mrb[0].mxu0
    %7763 = vmatprep.mubr.f32.mxu0 0.0
    %7764 = vmatmul.mubr.f32.gmra.mrb[0].mxu0 %v7017
    %v7765 = vpop.f32.mrb[0].mxu0
    %v7766 = vadd.f32 %v7381, %v7765
    %v7767 = vpop.f32.mrb[0].mxu0
    %7768 = vmatprep.mubr.f32.mxu0 0.0
    %7769 = vmatmul.mubr.f32.gmra.mrb[0].mxu0 %v7020
    %v7770 = vpop.f32.mrb[0].mxu0
    %v7771 = vadd.f32 %v7386, %v7770
    %v7772 = vpop.f32.mrb[0].mxu0
    %7773 = vmatprep.mubr.f32.mxu0 0.0
    %7774 = vmatmul.mubr.f32.gmra.mrb[0].mxu0 %v7023
    %v7775 = vpop.f32.mrb[0].mxu0
    %v7776 = vadd.f32 %v7391, %v7775
    %v7777 = vpop.f32.mrb[0].mxu0
    %7778 = vmatprep.mubr.f32.mxu0 0.0
    %7779 = vmatmul.mubr.f32.gmra.mrb[0].mxu0 %v7026
    %v7780 = vpop.f32.mrb[0].mxu0
    %v7781 = vadd.f32 %v7396, %v7780
    %v7782 = vpop.f32.mrb[0].mxu0
    %7783 = vmatprep.mubr.f32.mxu0 0.0
    %7784 = vmatmul.mubr.f32.gmra.mrb[0].mxu0 %v7029
    %v7785 = vpop.f32.mrb[0].mxu0
    %v7786 = vadd.f32 %v7401, %v7785
    %v7787 = vpop.f32.mrb[0].mxu0
    %7788 = vmatprep.mubr.f32.mxu0 0.0
    %7789 = vmatmul.mubr.f32.gmra.mrb[0].mxu0 %v7032
    %v7790 = vpop.f32.mrb[0].mxu0
    %v7791 = vadd.f32 %v7406, %v7790
    %v7792 = vpop.f32.mrb[0].mxu0
    %7793 = vmatprep.mubr.f32.mxu0 0.0
    %7794 = vmatmul.mubr.f32.gmra.mrb[0].mxu0 %v7035
    %v7795 = vpop.f32.mrb[0].mxu0
    %v7796 = vadd.f32 %v7411, %v7795
    %v7797 = vpop.f32.mrb[0].mxu0
    %7798 = vmatprep.mubr.f32.mxu0 0.0
    %7799 = vmatmul.mubr.f32.gmra.mrb[0].mxu0 %v7038
    %v7800 = vpop.f32.mrb[0].mxu0
    %v7801 = vadd.f32 %v7416, %v7800
    %v7802 = vpop.f32.mrb[0].mxu0
    %7803 = vmatprep.mubr.f32.mxu0 0.0
    %7804 = vmatmul.mubr.f32.gmra.mrb[0].mxu0 %v7041
    %v7805 = vpop.f32.mrb[0].mxu0
    %v7806 = vadd.f32 %v7421, %v7805
    %v7807 = vpop.f32.mrb[0].mxu0
    %7808 = vmatprep.mubr.f32.mxu0 0.0
    %7809 = vmatmul.mubr.f32.gmra.mrb[0].mxu0 %v7044
    %v7810 = vpop.f32.mrb[0].mxu0
    %v7811 = vadd.f32 %v7426, %v7810
    %v7812 = vpop.f32.mrb[0].mxu0
    %7813 = vmatprep.mubr.f32.mxu0 0.0
    %7814 = vmatmul.mubr.f32.gmra.mrb[0].mxu0 %v7047
    %v7815 = vpop.f32.mrb[0].mxu0
    %v7816 = vadd.f32 %v7431, %v7815
    %v7817 = vpop.f32.mrb[0].mxu0
    %7818 = vdwg.mxu0
    %v7819 = vmax.f32 %v7501, 0.0
    %v7820 = vmax.f32 %v7506, 0.0
    %v7821 = vmax.f32 %v7511, 0.0
    %v7822 = vmax.f32 %v7516, 0.0
    %v7823 = vmax.f32 %v7521, 0.0
    %v7824 = vmax.f32 %v7526, 0.0
    %v7825 = vmax.f32 %v7531, 0.0
    %v7826 = vmax.f32 %v7536, 0.0
    %v7827 = vmax.f32 %v7541, 0.0
    %v7828 = vmax.f32 %v7546, 0.0
    %v7829 = vmax.f32 %v7551, 0.0
    %v7830 = vmax.f32 %v7556, 0.0
    %v7831 = vmax.f32 %v7561, 0.0
    %v7832 = vmax.f32 %v7566, 0.0
    %v7833 = vmax.f32 %v7571, 0.0
    %v7834 = vmax.f32 %v7576, 0.0
    %v7835 = vmax.f32 %v7581, 0.0
    %v7836 = vmax.f32 %v7586, 0.0
    %v7837 = vmax.f32 %v7591, 0.0
    %v7838 = vmax.f32 %v7596, 0.0
    %v7839 = vmax.f32 %v7601, 0.0
    %v7840 = vmax.f32 %v7606, 0.0
    %v7841 = vmax.f32 %v7611, 0.0
    %v7842 = vmax.f32 %v7616, 0.0
    %v7843 = vmax.f32 %v7621, 0.0
    %v7844 = vmax.f32 %v7626, 0.0
    %v7845 = vmax.f32 %v7631, 0.0
    %v7846 = vmax.f32 %v7636, 0.0
    %v7847 = vmax.f32 %v7641, 0.0
    %v7848 = vmax.f32 %v7646, 0.0
    %v7849 = vmax.f32 %v7651, 0.0
    %v7850 = vmax.f32 %v7656, 0.0
    %v7851 = vmax.f32 %v7661, 0.0
    %v7852 = vmax.f32 %v7666, 0.0
    %v7853 = vmax.f32 %v7671, 0.0
    %v7854 = vmax.f32 %v7676, 0.0
    %v7855 = vmax.f32 %v7681, 0.0
    %v7856 = vmax.f32 %v7686, 0.0
    %v7857 = vmax.f32 %v7691, 0.0
    %v7858 = vmax.f32 %v7696, 0.0
    %v7859 = vmax.f32 %v7701, 0.0
    %v7860 = vmax.f32 %v7706, 0.0
    %v7861 = vmax.f32 %v7711, 0.0
    %v7862 = vmax.f32 %v7716, 0.0
    %v7863 = vmax.f32 %v7721, 0.0
    %v7864 = vmax.f32 %v7726, 0.0
    %v7865 = vmax.f32 %v7731, 0.0
    %v7866 = vmax.f32 %v7736, 0.0
    %v7867 = vmax.f32 %v7741, 0.0
    %v7868 = vmax.f32 %v7746, 0.0
    %v7869 = vmax.f32 %v7751, 0.0
    %v7870 = vmax.f32 %v7756, 0.0
    %v7871 = vmax.f32 %v7761, 0.0
    %v7872 = vmax.f32 %v7766, 0.0
    %v7873 = vmax.f32 %v7771, 0.0
    %v7874 = vmax.f32 %v7776, 0.0
    %v7875 = vmax.f32 %v7781, 0.0
    %v7876 = vmax.f32 %v7786, 0.0
    %v7877 = vmax.f32 %v7791, 0.0
    %v7878 = vmax.f32 %v7796, 0.0
    %v7879 = vmax.f32 %v7801, 0.0
    %v7880 = vmax.f32 %v7806, 0.0
    %v7881 = vmax.f32 %v7811, 0.0
    %v7882 = vmax.f32 %v7816, 0.0
    %vm7883 = vcmask 523264
    %7884 = vst.msk [vmem:[#allocation5] sm:$0xff] %vm7883, %v7819
    %7885 = vst.msk [vmem:[#allocation5 + $0x8] sm:$0xff] %vm7883, %v7820
    %7886 = vst.msk [vmem:[#allocation5 + $0x10] sm:$0xff] %vm7883, %v7821
    %7887 = vst.msk [vmem:[#allocation5 + $0x18] sm:$0xff] %vm7883, %v7822
    %7888 = vst.msk [vmem:[#allocation5 + $0x20] sm:$0xff] %vm7883, %v7823
    %7889 = vst.msk [vmem:[#allocation5 + $0x28] sm:$0xff] %vm7883, %v7824
    %7890 = vst.msk [vmem:[#allocation5 + $0x30] sm:$0xff] %vm7883, %v7825
    %7891 = vst.msk [vmem:[#allocation5 + $0x38] sm:$0xff] %vm7883, %v7826
    %7892 = vst.msk [vmem:[#allocation5 + $0x40] sm:$0xff] %vm7883, %v7827
    %7893 = vst.msk [vmem:[#allocation5 + $0x48] sm:$0xff] %vm7883, %v7828
    %7894 = vst.msk [vmem:[#allocation5 + $0x50] sm:$0xff] %vm7883, %v7829
    %7895 = vst.msk [vmem:[#allocation5 + $0x58] sm:$0xff] %vm7883, %v7830
    %7896 = vst.msk [vmem:[#allocation5 + $0x60] sm:$0xff] %vm7883, %v7831
    %7897 = vst.msk [vmem:[#allocation5 + $0x68] sm:$0xff] %vm7883, %v7832
    %7898 = vst.msk [vmem:[#allocation5 + $0x70] sm:$0xff] %vm7883, %v7833
    %7899 = vst.msk [vmem:[#allocation5 + $0x78] sm:$0xff] %vm7883, %v7834
    %7900 = vst.msk [vmem:[#allocation5 + $0x80] sm:$0xff] %vm7883, %v7835
    %7901 = vst.msk [vmem:[#allocation5 + $0x88] sm:$0xff] %vm7883, %v7836
    %7902 = vst.msk [vmem:[#allocation5 + $0x90] sm:$0xff] %vm7883, %v7837
    %7903 = vst.msk [vmem:[#allocation5 + $0x98] sm:$0xff] %vm7883, %v7838
    %7904 = vst.msk [vmem:[#allocation5 + $0xa0] sm:$0xff] %vm7883, %v7839
    %7905 = vst.msk [vmem:[#allocation5 + $0xa8] sm:$0xff] %vm7883, %v7840
    %7906 = vst.msk [vmem:[#allocation5 + $0xb0] sm:$0xff] %vm7883, %v7841
    %7907 = vst.msk [vmem:[#allocation5 + $0xb8] sm:$0xff] %vm7883, %v7842
    %7908 = vst.msk [vmem:[#allocation5 + $0xc0] sm:$0xff] %vm7883, %v7843
    %7909 = vst.msk [vmem:[#allocation5 + $0xc8] sm:$0xff] %vm7883, %v7844
    %7910 = vst.msk [vmem:[#allocation5 + $0xd0] sm:$0xff] %vm7883, %v7845
    %7911 = vst.msk [vmem:[#allocation5 + $0xd8] sm:$0xff] %vm7883, %v7846
    %7912 = vst.msk [vmem:[#allocation5 + $0xe0] sm:$0xff] %vm7883, %v7847
    %7913 = vst.msk [vmem:[#allocation5 + $0xe8] sm:$0xff] %vm7883, %v7848
    %7914 = vst.msk [vmem:[#allocation5 + $0xf0] sm:$0xff] %vm7883, %v7849
    %7915 = vst.msk [vmem:[#allocation5 + $0xf8] sm:$0xff] %vm7883, %v7850
    %7916 = vst.msk [vmem:[#allocation5 + $0x100] sm:$0xff] %vm7883, %v7851
    %7917 = vst.msk [vmem:[#allocation5 + $0x108] sm:$0xff] %vm7883, %v7852
    %7918 = vst.msk [vmem:[#allocation5 + $0x110] sm:$0xff] %vm7883, %v7853
    %7919 = vst.msk [vmem:[#allocation5 + $0x118] sm:$0xff] %vm7883, %v7854
    %7920 = vst.msk [vmem:[#allocation5 + $0x120] sm:$0xff] %vm7883, %v7855
    %7921 = vst.msk [vmem:[#allocation5 + $0x128] sm:$0xff] %vm7883, %v7856
    %7922 = vst.msk [vmem:[#allocation5 + $0x130] sm:$0xff] %vm7883, %v7857
    %7923 = vst.msk [vmem:[#allocation5 + $0x138] sm:$0xff] %vm7883, %v7858
    %7924 = vst.msk [vmem:[#allocation5 + $0x140] sm:$0xff] %vm7883, %v7859
    %7925 = vst.msk [vmem:[#allocation5 + $0x148] sm:$0xff] %vm7883, %v7860
    %7926 = vst.msk [vmem:[#allocation5 + $0x150] sm:$0xff] %vm7883, %v7861
    %7927 = vst.msk [vmem:[#allocation5 + $0x158] sm:$0xff] %vm7883, %v7862
    %7928 = vst.msk [vmem:[#allocation5 + $0x160] sm:$0xff] %vm7883, %v7863
    %7929 = vst.msk [vmem:[#allocation5 + $0x168] sm:$0xff] %vm7883, %v7864
    %7930 = vst.msk [vmem:[#allocation5 + $0x170] sm:$0xff] %vm7883, %v7865
    %7931 = vst.msk [vmem:[#allocation5 + $0x178] sm:$0xff] %vm7883, %v7866
    %7932 = vst.msk [vmem:[#allocation5 + $0x180] sm:$0xff] %vm7883, %v7867
    %7933 = vst.msk [vmem:[#allocation5 + $0x188] sm:$0xff] %vm7883, %v7868
    %7934 = vst.msk [vmem:[#allocation5 + $0x190] sm:$0xff] %vm7883, %v7869
    %7935 = vst.msk [vmem:[#allocation5 + $0x198] sm:$0xff] %vm7883, %v7870
    %7936 = vst.msk [vmem:[#allocation5 + $0x1a0] sm:$0xff] %vm7883, %v7871
    %7937 = vst.msk [vmem:[#allocation5 + $0x1a8] sm:$0xff] %vm7883, %v7872
    %7938 = vst.msk [vmem:[#allocation5 + $0x1b0] sm:$0xff] %vm7883, %v7873
    %7939 = vst.msk [vmem:[#allocation5 + $0x1b8] sm:$0xff] %vm7883, %v7874
    %7940 = vst.msk [vmem:[#allocation5 + $0x1c0] sm:$0xff] %vm7883, %v7875
    %7941 = vst.msk [vmem:[#allocation5 + $0x1c8] sm:$0xff] %vm7883, %v7876
    %7942 = vst.msk [vmem:[#allocation5 + $0x1d0] sm:$0xff] %vm7883, %v7877
    %7943 = vst.msk [vmem:[#allocation5 + $0x1d8] sm:$0xff] %vm7883, %v7878
    %7944 = vst.msk [vmem:[#allocation5 + $0x1e0] sm:$0xff] %vm7883, %v7879
    %7945 = vst.msk [vmem:[#allocation5 + $0x1e8] sm:$0xff] %vm7883, %v7880
    %7946 = vst.msk [vmem:[#allocation5 + $0x1f0] sm:$0xff] %vm7883, %v7881
    %7947 = vst.msk [vmem:[#allocation5 + $0x1f8] sm:$0xff] %vm7883, %v7882
    %7948 = vst.msk [vmem:[#allocation6] sm:$0xff] %vm7883, 0.0
    %vm7949 = vcmask 517120
    %7950 = vst.msk [vmem:[#allocation6 + $0x8] sm:$0x3] %vm7949, 0.0
    %7951 = vst.msk [vmem:[#allocation6 + $0x10] sm:$0xff] %vm7883, 0.0
    %7952 = vst.msk [vmem:[#allocation6 + $0x18] sm:$0x3] %vm7949, 0.0
    %7953 = vst.msk [vmem:[#allocation6 + $0x20] sm:$0xff] %vm7883, 0.0
    %7954 = vst.msk [vmem:[#allocation6 + $0x28] sm:$0x3] %vm7949, 0.0
    %7955 = vst.msk [vmem:[#allocation6 + $0x30] sm:$0xff] %vm7883, 0.0
    %7956 = vst.msk [vmem:[#allocation6 + $0x38] sm:$0x3] %vm7949, 0.0
    %7957 = vst.msk [vmem:[#allocation6 + $0x40] sm:$0xff] %vm7883, 0.0
    %7958 = vst.msk [vmem:[#allocation6 + $0x48] sm:$0x3] %vm7949, 0.0
    %7959 = vst.msk [vmem:[#allocation6 + $0x50] sm:$0xff] %vm7883, 0.0
    %7960 = vst.msk [vmem:[#allocation6 + $0x58] sm:$0x3] %vm7949, 0.0
    %7961 = vst.msk [vmem:[#allocation6 + $0x60] sm:$0xff] %vm7883, 0.0
    %7962 = vst.msk [vmem:[#allocation6 + $0x68] sm:$0x3] %vm7949, 0.0
    %7963 = vst.msk [vmem:[#allocation6 + $0x70] sm:$0xff] %vm7883, 0.0
    %7964 = vst.msk [vmem:[#allocation6 + $0x78] sm:$0x3] %vm7949, 0.0
    %7965 = vst.msk [vmem:[#allocation6 + $0x80] sm:$0xff] %vm7883, 0.0
    %7966 = vst.msk [vmem:[#allocation6 + $0x88] sm:$0x3] %vm7949, 0.0
    %7967 = vst.msk [vmem:[#allocation6 + $0x90] sm:$0xff] %vm7883, 0.0
    %7968 = vst.msk [vmem:[#allocation6 + $0x98] sm:$0x3] %vm7949, 0.0
    %7969 = vst.msk [vmem:[#allocation6 + $0xa0] sm:$0xff] %vm7883, 0.0
    %7970 = vst.msk [vmem:[#allocation6 + $0xa8] sm:$0x3] %vm7949, 0.0
    %7971 = vst.msk [vmem:[#allocation6 + $0xb0] sm:$0xff] %vm7883, 0.0
    %7972 = vst.msk [vmem:[#allocation6 + $0xb8] sm:$0x3] %vm7949, 0.0
    %7973 = vst.msk [vmem:[#allocation6 + $0xc0] sm:$0xff] %vm7883, 0.0
    %7974 = vst.msk [vmem:[#allocation6 + $0xc8] sm:$0x3] %vm7949, 0.0
    %7975 = vst.msk [vmem:[#allocation6 + $0xd0] sm:$0xff] %vm7883, 0.0
    %7976 = vst.msk [vmem:[#allocation6 + $0xd8] sm:$0x3] %vm7949, 0.0
    %7977 = vst.msk [vmem:[#allocation6 + $0xe0] sm:$0xff] %vm7883, 0.0
    %7978 = vst.msk [vmem:[#allocation6 + $0xe8] sm:$0x3] %vm7949, 0.0
    %7979 = vst.msk [vmem:[#allocation6 + $0xf0] sm:$0xff] %vm7883, 0.0
    %7980 = vst.msk [vmem:[#allocation6 + $0xf8] sm:$0x3] %vm7949, 0.0
    %7981 = vst.msk [vmem:[#allocation6 + $0x100] sm:$0xff] %vm7883, 0.0
    %7982 = vst.msk [vmem:[#allocation6 + $0x108] sm:$0x3] %vm7949, 0.0
    %7983 = vst.msk [vmem:[#allocation6 + $0x110] sm:$0xff] %vm7883, 0.0
    %7984 = vst.msk [vmem:[#allocation6 + $0x118] sm:$0x3] %vm7949, 0.0
    %7985 = vst.msk [vmem:[#allocation6 + $0x120] sm:$0xff] %vm7883, 0.0
    %7986 = vst.msk [vmem:[#allocation6 + $0x128] sm:$0x3] %vm7949, 0.0
    %7987 = vst.msk [vmem:[#allocation6 + $0x130] sm:$0xff] %vm7883, 0.0
    %7988 = vst.msk [vmem:[#allocation6 + $0x138] sm:$0x3] %vm7949, 0.0
    %v7989 = vld [vmem:[#allocation5] ss:$2 sm:$0xff]
    %s7990 = scalar_lea.vmem [#allocation5], 16
    %v7991 = vld [vmem:[%s7990] ss:$2 sm:$0xff]
    %s7992 = scalar_lea.vmem [#allocation5], 32
    %v7993 = vld [vmem:[%s7992] ss:$2 sm:$0xff]
    %s7994 = scalar_lea.vmem [#allocation5], 48
    %v7995 = vld [vmem:[%s7994] ss:$2 sm:$0xff]
    %s7996 = scalar_lea.vmem [#allocation5], 64
    %v7997 = vld [vmem:[%s7996] ss:$2 sm:$0xff]
    %s7998 = scalar_lea.vmem [#allocation5], 80
    %v7999 = vld [vmem:[%s7998] ss:$2 sm:$0xff]
    %s8000 = scalar_lea.vmem [#allocation5], 96
    %v8001 = vld [vmem:[%s8000] ss:$2 sm:$0xff]
    %s8002 = scalar_lea.vmem [#allocation5], 112
    %v8003 = vld [vmem:[%s8002] ss:$2 sm:$0xff]
    %s8004 = scalar_lea.vmem [#allocation5], 128
    %v8005 = vld [vmem:[%s8004] ss:$2 sm:$0xff]
    %s8006 = scalar_lea.vmem [#allocation5], 144
    %v8007 = vld [vmem:[%s8006] ss:$2 sm:$0xff]
    %s8008 = scalar_lea.vmem [#allocation5], 160
    %v8009 = vld [vmem:[%s8008] ss:$2 sm:$0xff]
    %s8010 = scalar_lea.vmem [#allocation5], 176
    %v8011 = vld [vmem:[%s8010] ss:$2 sm:$0xff]
    %s8012 = scalar_lea.vmem [#allocation5], 192
    %v8013 = vld [vmem:[%s8012] ss:$2 sm:$0xff]
    %s8014 = scalar_lea.vmem [#allocation5], 208
    %v8015 = vld [vmem:[%s8014] ss:$2 sm:$0xff]
    %s8016 = scalar_lea.vmem [#allocation5], 224
    %v8017 = vld [vmem:[%s8016] ss:$2 sm:$0xff]
    %s8018 = scalar_lea.vmem [#allocation5], 240
    %v8019 = vld [vmem:[%s8018] ss:$2 sm:$0xff]
    %s8020 = scalar_lea.vmem [#allocation5], 256
    %v8021 = vld [vmem:[%s8020] ss:$2 sm:$0xff]
    %s8022 = scalar_lea.vmem [#allocation5], 272
    %v8023 = vld [vmem:[%s8022] ss:$2 sm:$0xff]
    %s8024 = scalar_lea.vmem [#allocation5], 288
    %v8025 = vld [vmem:[%s8024] ss:$2 sm:$0xff]
    %s8026 = scalar_lea.vmem [#allocation5], 304
    %v8027 = vld [vmem:[%s8026] ss:$2 sm:$0xff]
    %s8028 = scalar_lea.vmem [#allocation5], 320
    %v8029 = vld [vmem:[%s8028] ss:$2 sm:$0xff]
    %s8030 = scalar_lea.vmem [#allocation5], 336
    %v8031 = vld [vmem:[%s8030] ss:$2 sm:$0xff]
    %s8032 = scalar_lea.vmem [#allocation5], 352
    %v8033 = vld [vmem:[%s8032] ss:$2 sm:$0xff]
    %s8034 = scalar_lea.vmem [#allocation5], 368
    %v8035 = vld [vmem:[%s8034] ss:$2 sm:$0xff]
    %s8036 = scalar_lea.vmem [#allocation5], 384
    %v8037 = vld [vmem:[%s8036] ss:$2 sm:$0xff]
    %s8038 = scalar_lea.vmem [#allocation5], 400
    %v8039 = vld [vmem:[%s8038] ss:$2 sm:$0xff]
    %s8040 = scalar_lea.vmem [#allocation5], 416
    %v8041 = vld [vmem:[%s8040] ss:$2 sm:$0xff]
    %s8042 = scalar_lea.vmem [#allocation5], 432
    %v8043 = vld [vmem:[%s8042] ss:$2 sm:$0xff]
    %s8044 = scalar_lea.vmem [#allocation5], 448
    %v8045 = vld [vmem:[%s8044] ss:$2 sm:$0xff]
    %s8046 = scalar_lea.vmem [#allocation5], 464
    %v8047 = vld [vmem:[%s8046] ss:$2 sm:$0xff]
    %s8048 = scalar_lea.vmem [#allocation5], 480
    %v8049 = vld [vmem:[%s8048] ss:$2 sm:$0xff]
    %s8050 = scalar_lea.vmem [#allocation5], 496
    %v8051 = vld [vmem:[%s8050] ss:$2 sm:$0xff]
    %s8052 = scalar_lea.vmem [#allocation5], 1
    %v8053 = vld [vmem:[%s8052] ss:$2 sm:$0xff]
    %s8054 = scalar_lea.vmem [#allocation5], 17
    %v8055 = vld [vmem:[%s8054] ss:$2 sm:$0xff]
    %s8056 = scalar_lea.vmem [#allocation5], 33
    %v8057 = vld [vmem:[%s8056] ss:$2 sm:$0xff]
    %s8058 = scalar_lea.vmem [#allocation5], 49
    %v8059 = vld [vmem:[%s8058] ss:$2 sm:$0xff]
    %s8060 = scalar_lea.vmem [#allocation5], 65
    %v8061 = vld [vmem:[%s8060] ss:$2 sm:$0xff]
    %s8062 = scalar_lea.vmem [#allocation5], 81
    %v8063 = vld [vmem:[%s8062] ss:$2 sm:$0xff]
    %s8064 = scalar_lea.vmem [#allocation5], 97
    %v8065 = vld [vmem:[%s8064] ss:$2 sm:$0xff]
    %s8066 = scalar_lea.vmem [#allocation5], 113
    %v8067 = vld [vmem:[%s8066] ss:$2 sm:$0xff]
    %s8068 = scalar_lea.vmem [#allocation5], 129
    %v8069 = vld [vmem:[%s8068] ss:$2 sm:$0xff]
    %s8070 = scalar_lea.vmem [#allocation5], 145
    %v8071 = vld [vmem:[%s8070] ss:$2 sm:$0xff]
    %s8072 = scalar_lea.vmem [#allocation5], 161
    %v8073 = vld [vmem:[%s8072] ss:$2 sm:$0xff]
    %s8074 = scalar_lea.vmem [#allocation5], 177
    %v8075 = vld [vmem:[%s8074] ss:$2 sm:$0xff]
    %s8076 = scalar_lea.vmem [#allocation5], 193
    %v8077 = vld [vmem:[%s8076] ss:$2 sm:$0xff]
    %s8078 = scalar_lea.vmem [#allocation5], 209
    %v8079 = vld [vmem:[%s8078] ss:$2 sm:$0xff]
    %s8080 = scalar_lea.vmem [#allocation5], 225
    %v8081 = vld [vmem:[%s8080] ss:$2 sm:$0xff]
    %s8082 = scalar_lea.vmem [#allocation5], 241
    %v8083 = vld [vmem:[%s8082] ss:$2 sm:$0xff]
    %s8084 = scalar_lea.vmem [#allocation5], 257
    %v8085 = vld [vmem:[%s8084] ss:$2 sm:$0xff]
    %s8086 = scalar_lea.vmem [#allocation5], 273
    %v8087 = vld [vmem:[%s8086] ss:$2 sm:$0xff]
    %s8088 = scalar_lea.vmem [#allocation5], 289
    %v8089 = vld [vmem:[%s8088] ss:$2 sm:$0xff]
    %s8090 = scalar_lea.vmem [#allocation5], 305
    %v8091 = vld [vmem:[%s8090] ss:$2 sm:$0xff]
    %s8092 = scalar_lea.vmem [#allocation5], 321
    %v8093 = vld [vmem:[%s8092] ss:$2 sm:$0xff]
    %s8094 = scalar_lea.vmem [#allocation5], 337
    %v8095 = vld [vmem:[%s8094] ss:$2 sm:$0xff]
    %s8096 = scalar_lea.vmem [#allocation5], 353
    %v8097 = vld [vmem:[%s8096] ss:$2 sm:$0xff]
    %s8098 = scalar_lea.vmem [#allocation5], 369
    %v8099 = vld [vmem:[%s8098] ss:$2 sm:$0xff]
    %s8100 = scalar_lea.vmem [#allocation5], 385
    %v8101 = vld [vmem:[%s8100] ss:$2 sm:$0xff]
    %s8102 = scalar_lea.vmem [#allocation5], 401
    %v8103 = vld [vmem:[%s8102] ss:$2 sm:$0xff]
    %s8104 = scalar_lea.vmem [#allocation5], 417
    %v8105 = vld [vmem:[%s8104] ss:$2 sm:$0xff]
    %s8106 = scalar_lea.vmem [#allocation5], 433
    %v8107 = vld [vmem:[%s8106] ss:$2 sm:$0xff]
    %s8108 = scalar_lea.vmem [#allocation5], 449
    %v8109 = vld [vmem:[%s8108] ss:$2 sm:$0xff]
    %s8110 = scalar_lea.vmem [#allocation5], 465
    %v8111 = vld [vmem:[%s8110] ss:$2 sm:$0xff]
    %s8112 = scalar_lea.vmem [#allocation5], 481
    %v8113 = vld [vmem:[%s8112] ss:$2 sm:$0xff]
    %s8114 = scalar_lea.vmem [#allocation5], 497
    %v8115 = vld [vmem:[%s8114] ss:$2 sm:$0xff]
    %v8116 = vmax.f32 %v7989, %v8053
    %v8117 = vmax.f32 %v7991, %v8055
    %v8118 = vmax.f32 %v7993, %v8057
    %v8119 = vmax.f32 %v7995, %v8059
    %v8120 = vmax.f32 %v7997, %v8061
    %v8121 = vmax.f32 %v7999, %v8063
    %v8122 = vmax.f32 %v8001, %v8065
    %v8123 = vmax.f32 %v8003, %v8067
    %v8124 = vmax.f32 %v8005, %v8069
    %v8125 = vmax.f32 %v8007, %v8071
    %v8126 = vmax.f32 %v8009, %v8073
    %v8127 = vmax.f32 %v8011, %v8075
    %v8128 = vmax.f32 %v8013, %v8077
    %v8129 = vmax.f32 %v8015, %v8079
    %v8130 = vmax.f32 %v8017, %v8081
    %v8131 = vmax.f32 %v8019, %v8083
    %v8132 = vmax.f32 %v8021, %v8085
    %v8133 = vmax.f32 %v8023, %v8087
    %v8134 = vmax.f32 %v8025, %v8089
    %v8135 = vmax.f32 %v8027, %v8091
    %v8136 = vmax.f32 %v8029, %v8093
    %v8137 = vmax.f32 %v8031, %v8095
    %v8138 = vmax.f32 %v8033, %v8097
    %v8139 = vmax.f32 %v8035, %v8099
    %v8140 = vmax.f32 %v8037, %v8101
    %v8141 = vmax.f32 %v8039, %v8103
    %v8142 = vmax.f32 %v8041, %v8105
    %v8143 = vmax.f32 %v8043, %v8107
    %v8144 = vmax.f32 %v8045, %v8109
    %v8145 = vmax.f32 %v8047, %v8111
    %v8146 = vmax.f32 %v8049, %v8113
    %v8147 = vmax.f32 %v8051, %v8115
    %v8148 = vsel %vm7883, %v8116, -inf
    %v8149 = vsel %vm7883, %v8117, -inf
    %v8150 = vmax.f32 %v8148, %v8149
    %v8151 = vsel %vm7883, %v8118, -inf
    %v8152 = vsel %vm7883, %v8119, -inf
    %v8153 = vmax.f32 %v8151, %v8152
    %v8154 = vsel %vm7883, %v8120, -inf
    %v8155 = vsel %vm7883, %v8121, -inf
    %v8156 = vmax.f32 %v8154, %v8155
    %v8157 = vsel %vm7883, %v8122, -inf
    %v8158 = vsel %vm7883, %v8123, -inf
    %v8159 = vmax.f32 %v8157, %v8158
    %v8160 = vsel %vm7883, %v8124, -inf
    %v8161 = vsel %vm7883, %v8125, -inf
    %v8162 = vmax.f32 %v8160, %v8161
    %v8163 = vsel %vm7883, %v8126, -inf
    %v8164 = vsel %vm7883, %v8127, -inf
    %v8165 = vmax.f32 %v8163, %v8164
    %v8166 = vsel %vm7883, %v8128, -inf
    %v8167 = vsel %vm7883, %v8129, -inf
    %v8168 = vmax.f32 %v8166, %v8167
    %v8169 = vsel %vm7883, %v8130, -inf
    %v8170 = vsel %vm7883, %v8131, -inf
    %v8171 = vmax.f32 %v8169, %v8170
    %v8172 = vsel %vm7883, %v8132, -inf
    %v8173 = vsel %vm7883, %v8133, -inf
    %v8174 = vmax.f32 %v8172, %v8173
    %v8175 = vsel %vm7883, %v8134, -inf
    %v8176 = vsel %vm7883, %v8135, -inf
    %v8177 = vmax.f32 %v8175, %v8176
    %v8178 = vsel %vm7883, %v8136, -inf
    %v8179 = vsel %vm7883, %v8137, -inf
    %v8180 = vmax.f32 %v8178, %v8179
    %v8181 = vsel %vm7883, %v8138, -inf
    %v8182 = vsel %vm7883, %v8139, -inf
    %v8183 = vmax.f32 %v8181, %v8182
    %v8184 = vsel %vm7883, %v8140, -inf
    %v8185 = vsel %vm7883, %v8141, -inf
    %v8186 = vmax.f32 %v8184, %v8185
    %v8187 = vsel %vm7883, %v8142, -inf
    %v8188 = vsel %vm7883, %v8143, -inf
    %v8189 = vmax.f32 %v8187, %v8188
    %v8190 = vsel %vm7883, %v8144, -inf
    %v8191 = vsel %vm7883, %v8145, -inf
    %v8192 = vmax.f32 %v8190, %v8191
    %v8193 = vsel %vm7883, %v8146, -inf
    %v8194 = vsel %vm7883, %v8147, -inf
    %v8195 = vmax.f32 %v8193, %v8194
    %s8196 = scalar_lea.vmem [#allocation6], 16
    %8197 = vst.msk [vmem:[%s8196 + $0x1] sm:$0xff] %vm7883, %v8150
    %8198 = vst.msk [vmem:[%s8196 + $0x11] sm:$0xff] %vm7883, %v8153
    %8199 = vst.msk [vmem:[%s8196 + $0x21] sm:$0xff] %vm7883, %v8156
    %8200 = vst.msk [vmem:[%s8196 + $0x31] sm:$0xff] %vm7883, %v8159
    %8201 = vst.msk [vmem:[%s8196 + $0x41] sm:$0xff] %vm7883, %v8162
    %8202 = vst.msk [vmem:[%s8196 + $0x51] sm:$0xff] %vm7883, %v8165
    %8203 = vst.msk [vmem:[%s8196 + $0x61] sm:$0xff] %vm7883, %v8168
    %8204 = vst.msk [vmem:[%s8196 + $0x71] sm:$0xff] %vm7883, %v8171
    %8205 = vst.msk [vmem:[%s8196 + $0xa1] sm:$0xff] %vm7883, %v8174
    %8206 = vst.msk [vmem:[%s8196 + $0xb1] sm:$0xff] %vm7883, %v8177
    %8207 = vst.msk [vmem:[%s8196 + $0xc1] sm:$0xff] %vm7883, %v8180
    %8208 = vst.msk [vmem:[%s8196 + $0xd1] sm:$0xff] %vm7883, %v8183
    %8209 = vst.msk [vmem:[%s8196 + $0xe1] sm:$0xff] %vm7883, %v8186
    %8210 = vst.msk [vmem:[%s8196 + $0xf1] sm:$0xff] %vm7883, %v8189
    %8211 = vst.msk [vmem:[%s8196 + $0x101] sm:$0xff] %vm7883, %v8192
    %8212 = vst.msk [vmem:[%s8196 + $0x111] sm:$0xff] %vm7883, %v8195
    %v8213 = vld [vmem:[#allocation6] sm:$0xff]
    %v8214 = vld [vmem:[#allocation6 + $0x10] sm:$0xff]
    %v8215 = vld [vmem:[#allocation6 + $0x20] sm:$0xff]
    %v8216 = vld [vmem:[#allocation6 + $0x30] sm:$0xff]
    %v8217 = vld [vmem:[#allocation6 + $0x40] sm:$0xff]
    %v8218 = vld [vmem:[#allocation6 + $0x50] sm:$0xff]
    %v8219 = vld [vmem:[#allocation6 + $0x60] sm:$0xff]
    %v8220 = vld [vmem:[#allocation6 + $0x70] sm:$0xff]
    %v8221 = vld [vmem:[#allocation6 + $0xa0] sm:$0xff]
    %v8222 = vld [vmem:[#allocation6 + $0xb0] sm:$0xff]
    %v8223 = vld [vmem:[#allocation6 + $0xc0] sm:$0xff]
    %v8224 = vld [vmem:[#allocation6 + $0xd0] sm:$0xff]
    %v8225 = vld [vmem:[#allocation6 + $0xe0] sm:$0xff]
    %v8226 = vld [vmem:[#allocation6 + $0xf0] sm:$0xff]
    %v8227 = vld [vmem:[#allocation6 + $0x100] sm:$0xff]
    %v8228 = vld [vmem:[#allocation6 + $0x110] sm:$0xff]
    %8229 = vst.msk [vmem:[#allocation7] sm:$0xff] %vm7883, %v8213
    %8230 = vst.msk [vmem:[#allocation7 + $0x28] sm:$0xff] %vm7883, %v8214
    %8231 = vst.msk [vmem:[#allocation7 + $0x50] sm:$0xff] %vm7883, %v8215
    %8232 = vst.msk [vmem:[#allocation7 + $0x78] sm:$0xff] %vm7883, %v8216
    %8233 = vst.msk [vmem:[#allocation7 + $0xa0] sm:$0xff] %vm7883, %v8217
    %8234 = vst.msk [vmem:[#allocation7 + $0xc8] sm:$0xff] %vm7883, %v8218
    %8235 = vst.msk [vmem:[#allocation7 + $0xf0] sm:$0xff] %vm7883, %v8219
    %8236 = vst.msk [vmem:[#allocation7 + $0x118] sm:$0xff] %vm7883, %v8220
    %8237 = vst.msk [vmem:[#allocation7 + $0x140] sm:$0xff] %vm7883, %v8221
    %8238 = vst.msk [vmem:[#allocation7 + $0x168] sm:$0xff] %vm7883, %v8222
    %8239 = vst.msk [vmem:[#allocation7 + $0x190] sm:$0xff] %vm7883, %v8223
    %8240 = vst.msk [vmem:[#allocation7 + $0x1b8] sm:$0xff] %vm7883, %v8224
    %8241 = vst.msk [vmem:[#allocation7 + $0x1e0] sm:$0xff] %vm7883, %v8225
    %8242 = vst.msk [vmem:[#allocation7 + $0x208] sm:$0xff] %vm7883, %v8226
    %8243 = vst.msk [vmem:[#allocation7 + $0x230] sm:$0xff] %vm7883, %v8227
    %8244 = vst.msk [vmem:[#allocation7 + $0x258] sm:$0xff] %vm7883, %v8228
    %v8245 = vld [vmem:[#allocation6 + $0x1] sm:$0xff]
    %v8246 = vld [vmem:[#allocation6 + $0x11] sm:$0xff]
    %v8247 = vld [vmem:[#allocation6 + $0x21] sm:$0xff]
    %v8248 = vld [vmem:[#allocation6 + $0x31] sm:$0xff]
    %v8249 = vld [vmem:[#allocation6 + $0x41] sm:$0xff]
    %v8250 = vld [vmem:[#allocation6 + $0x51] sm:$0xff]
    %v8251 = vld [vmem:[#allocation6 + $0x61] sm:$0xff]
    %v8252 = vld [vmem:[#allocation6 + $0x71] sm:$0xff]
    %v8253 = vld [vmem:[#allocation6 + $0xa1] sm:$0xff]
    %v8254 = vld [vmem:[#allocation6 + $0xb1] sm:$0xff]
    %v8255 = vld [vmem:[#allocation6 + $0xc1] sm:$0xff]
    %v8256 = vld [vmem:[#allocation6 + $0xd1] sm:$0xff]
    %v8257 = vld [vmem:[#allocation6 + $0xe1] sm:$0xff]
    %v8258 = vld [vmem:[#allocation6 + $0xf1] sm:$0xff]
    %v8259 = vld [vmem:[#allocation6 + $0x101] sm:$0xff]
    %v8260 = vld [vmem:[#allocation6 + $0x111] sm:$0xff]
    %8277 = vrot.lane.b32.xlu0 %v8245, 64
    %v8278 = vpop.permute.xlu0 %8277
    %8279 = vrot.lane.b32.xlu0 %v8246, 64
    %v8280 = vpop.permute.xlu0 %8279
    %8281 = vrot.lane.b32.xlu0 %v8247, 64
    %v8282 = vpop.permute.xlu0 %8281
    %8283 = vrot.lane.b32.xlu0 %v8248, 64
    %v8284 = vpop.permute.xlu0 %8283
    %8285 = vrot.lane.b32.xlu0 %v8249, 64
    %v8286 = vpop.permute.xlu0 %8285
    %8287 = vrot.lane.b32.xlu0 %v8250, 64
    %v8288 = vpop.permute.xlu0 %8287
    %8289 = vrot.lane.b32.xlu0 %v8251, 64
    %v8290 = vpop.permute.xlu0 %8289
    %8291 = vrot.lane.b32.xlu0 %v8252, 64
    %v8292 = vpop.permute.xlu0 %8291
    %8293 = vrot.lane.b32.xlu0 %v8253, 64
    %v8294 = vpop.permute.xlu0 %8293
    %8295 = vrot.lane.b32.xlu0 %v8254, 64
    %v8296 = vpop.permute.xlu0 %8295
    %8297 = vrot.lane.b32.xlu0 %v8255, 64
    %v8298 = vpop.permute.xlu0 %8297
    %8299 = vrot.lane.b32.xlu0 %v8256, 64
    %v8300 = vpop.permute.xlu0 %8299
    %8301 = vrot.lane.b32.xlu0 %v8257, 64
    %v8302 = vpop.permute.xlu0 %8301
    %8303 = vrot.lane.b32.xlu0 %v8258, 64
    %v8304 = vpop.permute.xlu0 %8303
    %8305 = vrot.lane.b32.xlu0 %v8259, 64
    %v8306 = vpop.permute.xlu0 %8305
    %8307 = vrot.lane.b32.xlu0 %v8260, 64
    %v8308 = vpop.permute.xlu0 %8307
    %vm8325 = vcmask 1048064
    %8326 = vst.msk [vmem:[#allocation7] sm:$0xff] %vm8325, %v8278
    %8327 = vst.msk [vmem:[#allocation7 + $0x28] sm:$0xff] %vm8325, %v8280
    %8328 = vst.msk [vmem:[#allocation7 + $0x50] sm:$0xff] %vm8325, %v8282
    %8329 = vst.msk [vmem:[#allocation7 + $0x78] sm:$0xff] %vm8325, %v8284
    %8330 = vst.msk [vmem:[#allocation7 + $0xa0] sm:$0xff] %vm8325, %v8286
    %8331 = vst.msk [vmem:[#allocation7 + $0xc8] sm:$0xff] %vm8325, %v8288
    %8332 = vst.msk [vmem:[#allocation7 + $0xf0] sm:$0xff] %vm8325, %v8290
    %8333 = vst.msk [vmem:[#allocation7 + $0x118] sm:$0xff] %vm8325, %v8292
    %8334 = vst.msk [vmem:[#allocation7 + $0x140] sm:$0xff] %vm8325, %v8294
    %8335 = vst.msk [vmem:[#allocation7 + $0x168] sm:$0xff] %vm8325, %v8296
    %8336 = vst.msk [vmem:[#allocation7 + $0x190] sm:$0xff] %vm8325, %v8298
    %8337 = vst.msk [vmem:[#allocation7 + $0x1b8] sm:$0xff] %vm8325, %v8300
    %8338 = vst.msk [vmem:[#allocation7 + $0x1e0] sm:$0xff] %vm8325, %v8302
    %8339 = vst.msk [vmem:[#allocation7 + $0x208] sm:$0xff] %vm8325, %v8304
    %8340 = vst.msk [vmem:[#allocation7 + $0x230] sm:$0xff] %vm8325, %v8306
    %8341 = vst.msk [vmem:[#allocation7 + $0x258] sm:$0xff] %vm8325, %v8308
    %v8342 = vld [vmem:[#allocation6 + $0x2] sm:$0xff]
    %v8343 = vld [vmem:[#allocation6 + $0x12] sm:$0xff]
    %v8344 = vld [vmem:[#allocation6 + $0x22] sm:$0xff]
    %v8345 = vld [vmem:[#allocation6 + $0x32] sm:$0xff]
    %v8346 = vld [vmem:[#allocation6 + $0x42] sm:$0xff]
    %v8347 = vld [vmem:[#allocation6 + $0x52] sm:$0xff]
    %v8348 = vld [vmem:[#allocation6 + $0x62] sm:$0xff]
    %v8349 = vld [vmem:[#allocation6 + $0x72] sm:$0xff]
    %v8350 = vld [vmem:[#allocation6 + $0xa2] sm:$0xff]
    %v8351 = vld [vmem:[#allocation6 + $0xb2] sm:$0xff]
    %v8352 = vld [vmem:[#allocation6 + $0xc2] sm:$0xff]
    %v8353 = vld [vmem:[#allocation6 + $0xd2] sm:$0xff]
    %v8354 = vld [vmem:[#allocation6 + $0xe2] sm:$0xff]
    %v8355 = vld [vmem:[#allocation6 + $0xf2] sm:$0xff]
    %v8356 = vld [vmem:[#allocation6 + $0x102] sm:$0xff]
    %v8357 = vld [vmem:[#allocation6 + $0x112] sm:$0xff]
    %8358 = vst.msk [vmem:[#allocation7 + $0x8] sm:$0xff] %vm7883, %v8342
    %8359 = vst.msk [vmem:[#allocation7 + $0x30] sm:$0xff] %vm7883, %v8343
    %8360 = vst.msk [vmem:[#allocation7 + $0x58] sm:$0xff] %vm7883, %v8344
    %8361 = vst.msk [vmem:[#allocation7 + $0x80] sm:$0xff] %vm7883, %v8345
    %8362 = vst.msk [vmem:[#allocation7 + $0xa8] sm:$0xff] %vm7883, %v8346
    %8363 = vst.msk [vmem:[#allocation7 + $0xd0] sm:$0xff] %vm7883, %v8347
    %8364 = vst.msk [vmem:[#allocation7 + $0xf8] sm:$0xff] %vm7883, %v8348
    %8365 = vst.msk [vmem:[#allocation7 + $0x120] sm:$0xff] %vm7883, %v8349
    %8366 = vst.msk [vmem:[#allocation7 + $0x148] sm:$0xff] %vm7883, %v8350
    %8367 = vst.msk [vmem:[#allocation7 + $0x170] sm:$0xff] %vm7883, %v8351
    %8368 = vst.msk [vmem:[#allocation7 + $0x198] sm:$0xff] %vm7883, %v8352
    %8369 = vst.msk [vmem:[#allocation7 + $0x1c0] sm:$0xff] %vm7883, %v8353
    %8370 = vst.msk [vmem:[#allocation7 + $0x1e8] sm:$0xff] %vm7883, %v8354
    %8371 = vst.msk [vmem:[#allocation7 + $0x210] sm:$0xff] %vm7883, %v8355
    %8372 = vst.msk [vmem:[#allocation7 + $0x238] sm:$0xff] %vm7883, %v8356
    %8373 = vst.msk [vmem:[#allocation7 + $0x260] sm:$0xff] %vm7883, %v8357
    %v8374 = vld [vmem:[%s8196] sm:$0xff]
    %v8375 = vld [vmem:[%s8196 + $0x10] sm:$0xff]
    %v8376 = vld [vmem:[%s8196 + $0x20] sm:$0xff]
    %v8377 = vld [vmem:[%s8196 + $0x30] sm:$0xff]
    %v8378 = vld [vmem:[%s8196 + $0x40] sm:$0xff]
    %v8379 = vld [vmem:[%s8196 + $0x50] sm:$0xff]
    %v8380 = vld [vmem:[%s8196 + $0x60] sm:$0xff]
    %v8381 = vld [vmem:[%s8196 + $0x70] sm:$0xff]
    %v8382 = vld [vmem:[%s8196 + $0xa0] sm:$0xff]
    %v8383 = vld [vmem:[%s8196 + $0xb0] sm:$0xff]
    %v8384 = vld [vmem:[%s8196 + $0xc0] sm:$0xff]
    %v8385 = vld [vmem:[%s8196 + $0xd0] sm:$0xff]
    %v8386 = vld [vmem:[%s8196 + $0xe0] sm:$0xff]
    %v8387 = vld [vmem:[%s8196 + $0xf0] sm:$0xff]
    %v8388 = vld [vmem:[%s8196 + $0x100] sm:$0xff]
    %v8389 = vld [vmem:[%s8196 + $0x110] sm:$0xff]
    %8406 = vrot.lane.b32.xlu0 %v8374, 64
    %v8407 = vpop.permute.xlu0 %8406
    %8408 = vrot.lane.b32.xlu0 %v8375, 64
    %v8409 = vpop.permute.xlu0 %8408
    %8410 = vrot.lane.b32.xlu0 %v8376, 64
    %v8411 = vpop.permute.xlu0 %8410
    %8412 = vrot.lane.b32.xlu0 %v8377, 64
    %v8413 = vpop.permute.xlu0 %8412
    %8414 = vrot.lane.b32.xlu0 %v8378, 64
    %v8415 = vpop.permute.xlu0 %8414
    %8416 = vrot.lane.b32.xlu0 %v8379, 64
    %v8417 = vpop.permute.xlu0 %8416
    %8418 = vrot.lane.b32.xlu0 %v8380, 64
    %v8419 = vpop.permute.xlu0 %8418
    %8420 = vrot.lane.b32.xlu0 %v8381, 64
    %v8421 = vpop.permute.xlu0 %8420
    %8422 = vrot.lane.b32.xlu0 %v8382, 64
    %v8423 = vpop.permute.xlu0 %8422
    %8424 = vrot.lane.b32.xlu0 %v8383, 64
    %v8425 = vpop.permute.xlu0 %8424
    %8426 = vrot.lane.b32.xlu0 %v8384, 64
    %v8427 = vpop.permute.xlu0 %8426
    %8428 = vrot.lane.b32.xlu0 %v8385, 64
    %v8429 = vpop.permute.xlu0 %8428
    %8430 = vrot.lane.b32.xlu0 %v8386, 64
    %v8431 = vpop.permute.xlu0 %8430
    %8432 = vrot.lane.b32.xlu0 %v8387, 64
    %v8433 = vpop.permute.xlu0 %8432
    %8434 = vrot.lane.b32.xlu0 %v8388, 64
    %v8435 = vpop.permute.xlu0 %8434
    %8436 = vrot.lane.b32.xlu0 %v8389, 64
    %v8437 = vpop.permute.xlu0 %8436
    %8454 = vst.msk [vmem:[#allocation7 + $0x8] sm:$0xff] %vm8325, %v8407
    %8455 = vst.msk [vmem:[#allocation7 + $0x30] sm:$0xff] %vm8325, %v8409
    %8456 = vst.msk [vmem:[#allocation7 + $0x58] sm:$0xff] %vm8325, %v8411
    %8457 = vst.msk [vmem:[#allocation7 + $0x80] sm:$0xff] %vm8325, %v8413
    %8458 = vst.msk [vmem:[#allocation7 + $0xa8] sm:$0xff] %vm8325, %v8415
    %8459 = vst.msk [vmem:[#allocation7 + $0xd0] sm:$0xff] %vm8325, %v8417
    %8460 = vst.msk [vmem:[#allocation7 + $0xf8] sm:$0xff] %vm8325, %v8419
    %8461 = vst.msk [vmem:[#allocation7 + $0x120] sm:$0xff] %vm8325, %v8421
    %8462 = vst.msk [vmem:[#allocation7 + $0x148] sm:$0xff] %vm8325, %v8423
    %8463 = vst.msk [vmem:[#allocation7 + $0x170] sm:$0xff] %vm8325, %v8425
    %8464 = vst.msk [vmem:[#allocation7 + $0x198] sm:$0xff] %vm8325, %v8427
    %8465 = vst.msk [vmem:[#allocation7 + $0x1c0] sm:$0xff] %vm8325, %v8429
    %8466 = vst.msk [vmem:[#allocation7 + $0x1e8] sm:$0xff] %vm8325, %v8431
    %8467 = vst.msk [vmem:[#allocation7 + $0x210] sm:$0xff] %vm8325, %v8433
    %8468 = vst.msk [vmem:[#allocation7 + $0x238] sm:$0xff] %vm8325, %v8435
    %8469 = vst.msk [vmem:[#allocation7 + $0x260] sm:$0xff] %vm8325, %v8437
    %v8470 = vld [vmem:[%s8196 + $0x1] sm:$0xff]
    %v8471 = vld [vmem:[%s8196 + $0x11] sm:$0xff]
    %v8472 = vld [vmem:[%s8196 + $0x21] sm:$0xff]
    %v8473 = vld [vmem:[%s8196 + $0x31] sm:$0xff]
    %v8474 = vld [vmem:[%s8196 + $0x41] sm:$0xff]
    %v8475 = vld [vmem:[%s8196 + $0x51] sm:$0xff]
    %v8476 = vld [vmem:[%s8196 + $0x61] sm:$0xff]
    %v8477 = vld [vmem:[%s8196 + $0x71] sm:$0xff]
    %v8478 = vld [vmem:[%s8196 + $0xa1] sm:$0xff]
    %v8479 = vld [vmem:[%s8196 + $0xb1] sm:$0xff]
    %v8480 = vld [vmem:[%s8196 + $0xc1] sm:$0xff]
    %v8481 = vld [vmem:[%s8196 + $0xd1] sm:$0xff]
    %v8482 = vld [vmem:[%s8196 + $0xe1] sm:$0xff]
    %v8483 = vld [vmem:[%s8196 + $0xf1] sm:$0xff]
    %v8484 = vld [vmem:[%s8196 + $0x101] sm:$0xff]
    %v8485 = vld [vmem:[%s8196 + $0x111] sm:$0xff]
    %8486 = vst.msk [vmem:[#allocation7 + $0x10] sm:$0xff] %vm7883, %v8470
    %8487 = vst.msk [vmem:[#allocation7 + $0x38] sm:$0xff] %vm7883, %v8471
    %8488 = vst.msk [vmem:[#allocation7 + $0x60] sm:$0xff] %vm7883, %v8472
    %8489 = vst.msk [vmem:[#allocation7 + $0x88] sm:$0xff] %vm7883, %v8473
    %8490 = vst.msk [vmem:[#allocation7 + $0xb0] sm:$0xff] %vm7883, %v8474
    %8491 = vst.msk [vmem:[#allocation7 + $0xd8] sm:$0xff] %vm7883, %v8475
    %8492 = vst.msk [vmem:[#allocation7 + $0x100] sm:$0xff] %vm7883, %v8476
    %8493 = vst.msk [vmem:[#allocation7 + $0x128] sm:$0xff] %vm7883, %v8477
    %8494 = vst.msk [vmem:[#allocation7 + $0x150] sm:$0xff] %vm7883, %v8478
    %8495 = vst.msk [vmem:[#allocation7 + $0x178] sm:$0xff] %vm7883, %v8479
    %8496 = vst.msk [vmem:[#allocation7 + $0x1a0] sm:$0xff] %vm7883, %v8480
    %8497 = vst.msk [vmem:[#allocation7 + $0x1c8] sm:$0xff] %vm7883, %v8481
    %8498 = vst.msk [vmem:[#allocation7 + $0x1f0] sm:$0xff] %vm7883, %v8482
    %8499 = vst.msk [vmem:[#allocation7 + $0x218] sm:$0xff] %vm7883, %v8483
    %8500 = vst.msk [vmem:[#allocation7 + $0x240] sm:$0xff] %vm7883, %v8484
    %8501 = vst.msk [vmem:[#allocation7 + $0x268] sm:$0xff] %vm7883, %v8485
    %v8502 = vld [vmem:[%s8196 + $0x2] sm:$0xff]
    %v8503 = vld [vmem:[%s8196 + $0x12] sm:$0xff]
    %v8504 = vld [vmem:[%s8196 + $0x22] sm:$0xff]
    %v8505 = vld [vmem:[%s8196 + $0x32] sm:$0xff]
    %v8506 = vld [vmem:[%s8196 + $0x42] sm:$0xff]
    %v8507 = vld [vmem:[%s8196 + $0x52] sm:$0xff]
    %v8508 = vld [vmem:[%s8196 + $0x62] sm:$0xff]
    %v8509 = vld [vmem:[%s8196 + $0x72] sm:$0xff]
    %v8510 = vld [vmem:[%s8196 + $0xa2] sm:$0xff]
    %v8511 = vld [vmem:[%s8196 + $0xb2] sm:$0xff]
    %v8512 = vld [vmem:[%s8196 + $0xc2] sm:$0xff]
    %v8513 = vld [vmem:[%s8196 + $0xd2] sm:$0xff]
    %v8514 = vld [vmem:[%s8196 + $0xe2] sm:$0xff]
    %v8515 = vld [vmem:[%s8196 + $0xf2] sm:$0xff]
    %v8516 = vld [vmem:[%s8196 + $0x102] sm:$0xff]
    %v8517 = vld [vmem:[%s8196 + $0x112] sm:$0xff]
    %8534 = vrot.lane.b32.xlu0 %v8502, 64
    %v8535 = vpop.permute.xlu0 %8534
    %8536 = vrot.lane.b32.xlu0 %v8503, 64
    %v8537 = vpop.permute.xlu0 %8536
    %8538 = vrot.lane.b32.xlu0 %v8504, 64
    %v8539 = vpop.permute.xlu0 %8538
    %8540 = vrot.lane.b32.xlu0 %v8505, 64
    %v8541 = vpop.permute.xlu0 %8540
    %8542 = vrot.lane.b32.xlu0 %v8506, 64
    %v8543 = vpop.permute.xlu0 %8542
    %8544 = vrot.lane.b32.xlu0 %v8507, 64
    %v8545 = vpop.permute.xlu0 %8544
    %8546 = vrot.lane.b32.xlu0 %v8508, 64
    %v8547 = vpop.permute.xlu0 %8546
    %8548 = vrot.lane.b32.xlu0 %v8509, 64
    %v8549 = vpop.permute.xlu0 %8548
    %8550 = vrot.lane.b32.xlu0 %v8510, 64
    %v8551 = vpop.permute.xlu0 %8550
    %8552 = vrot.lane.b32.xlu0 %v8511, 64
    %v8553 = vpop.permute.xlu0 %8552
    %8554 = vrot.lane.b32.xlu0 %v8512, 64
    %v8555 = vpop.permute.xlu0 %8554
    %8556 = vrot.lane.b32.xlu0 %v8513, 64
    %v8557 = vpop.permute.xlu0 %8556
    %8558 = vrot.lane.b32.xlu0 %v8514, 64
    %v8559 = vpop.permute.xlu0 %8558
    %8560 = vrot.lane.b32.xlu0 %v8515, 64
    %v8561 = vpop.permute.xlu0 %8560
    %8562 = vrot.lane.b32.xlu0 %v8516, 64
    %v8563 = vpop.permute.xlu0 %8562
    %8564 = vrot.lane.b32.xlu0 %v8517, 64
    %v8565 = vpop.permute.xlu0 %8564
    %8582 = vst.msk [vmem:[#allocation7 + $0x10] sm:$0xff] %vm8325, %v8535
    %8583 = vst.msk [vmem:[#allocation7 + $0x38] sm:$0xff] %vm8325, %v8537
    %8584 = vst.msk [vmem:[#allocation7 + $0x60] sm:$0xff] %vm8325, %v8539
    %8585 = vst.msk [vmem:[#allocation7 + $0x88] sm:$0xff] %vm8325, %v8541
    %8586 = vst.msk [vmem:[#allocation7 + $0xb0] sm:$0xff] %vm8325, %v8543
    %8587 = vst.msk [vmem:[#allocation7 + $0xd8] sm:$0xff] %vm8325, %v8545
    %8588 = vst.msk [vmem:[#allocation7 + $0x100] sm:$0xff] %vm8325, %v8547
    %8589 = vst.msk [vmem:[#allocation7 + $0x128] sm:$0xff] %vm8325, %v8549
    %8590 = vst.msk [vmem:[#allocation7 + $0x150] sm:$0xff] %vm8325, %v8551
    %8591 = vst.msk [vmem:[#allocation7 + $0x178] sm:$0xff] %vm8325, %v8553
    %8592 = vst.msk [vmem:[#allocation7 + $0x1a0] sm:$0xff] %vm8325, %v8555
    %8593 = vst.msk [vmem:[#allocation7 + $0x1c8] sm:$0xff] %vm8325, %v8557
    %8594 = vst.msk [vmem:[#allocation7 + $0x1f0] sm:$0xff] %vm8325, %v8559
    %8595 = vst.msk [vmem:[#allocation7 + $0x218] sm:$0xff] %vm8325, %v8561
    %8596 = vst.msk [vmem:[#allocation7 + $0x240] sm:$0xff] %vm8325, %v8563
    %8597 = vst.msk [vmem:[#allocation7 + $0x268] sm:$0xff] %vm8325, %v8565
    %s8598 = scalar_lea.vmem [#allocation6], 32
    %v8599 = vld [vmem:[%s8598] sm:$0xff]
    %v8600 = vld [vmem:[%s8598 + $0x10] sm:$0xff]
    %v8601 = vld [vmem:[%s8598 + $0x20] sm:$0xff]
    %v8602 = vld [vmem:[%s8598 + $0x30] sm:$0xff]
    %v8603 = vld [vmem:[%s8598 + $0x40] sm:$0xff]
    %v8604 = vld [vmem:[%s8598 + $0x50] sm:$0xff]
    %v8605 = vld [vmem:[%s8598 + $0x60] sm:$0xff]
    %v8606 = vld [vmem:[%s8598 + $0x70] sm:$0xff]
    %v8607 = vld [vmem:[%s8598 + $0xa0] sm:$0xff]
    %v8608 = vld [vmem:[%s8598 + $0xb0] sm:$0xff]
    %v8609 = vld [vmem:[%s8598 + $0xc0] sm:$0xff]
    %v8610 = vld [vmem:[%s8598 + $0xd0] sm:$0xff]
    %v8611 = vld [vmem:[%s8598 + $0xe0] sm:$0xff]
    %v8612 = vld [vmem:[%s8598 + $0xf0] sm:$0xff]
    %v8613 = vld [vmem:[%s8598 + $0x100] sm:$0xff]
    %v8614 = vld [vmem:[%s8598 + $0x110] sm:$0xff]
    %8615 = vst.msk [vmem:[#allocation7 + $0x18] sm:$0xff] %vm7883, %v8599
    %8616 = vst.msk [vmem:[#allocation7 + $0x40] sm:$0xff] %vm7883, %v8600
    %8617 = vst.msk [vmem:[#allocation7 + $0x68] sm:$0xff] %vm7883, %v8601
    %8618 = vst.msk [vmem:[#allocation7 + $0x90] sm:$0xff] %vm7883, %v8602
    %8619 = vst.msk [vmem:[#allocation7 + $0xb8] sm:$0xff] %vm7883, %v8603
    %8620 = vst.msk [vmem:[#allocation7 + $0xe0] sm:$0xff] %vm7883, %v8604
    %8621 = vst.msk [vmem:[#allocation7 + $0x108] sm:$0xff] %vm7883, %v8605
    %8622 = vst.msk [vmem:[#allocation7 + $0x130] sm:$0xff] %vm7883, %v8606
    %8623 = vst.msk [vmem:[#allocation7 + $0x158] sm:$0xff] %vm7883, %v8607
    %8624 = vst.msk [vmem:[#allocation7 + $0x180] sm:$0xff] %vm7883, %v8608
    %8625 = vst.msk [vmem:[#allocation7 + $0x1a8] sm:$0xff] %vm7883, %v8609
    %8626 = vst.msk [vmem:[#allocation7 + $0x1d0] sm:$0xff] %vm7883, %v8610
    %8627 = vst.msk [vmem:[#allocation7 + $0x1f8] sm:$0xff] %vm7883, %v8611
    %8628 = vst.msk [vmem:[#allocation7 + $0x220] sm:$0xff] %vm7883, %v8612
    %8629 = vst.msk [vmem:[#allocation7 + $0x248] sm:$0xff] %vm7883, %v8613
    %8630 = vst.msk [vmem:[#allocation7 + $0x270] sm:$0xff] %vm7883, %v8614
    %v8631 = vld [vmem:[%s8598 + $0x1] sm:$0xff]
    %v8632 = vld [vmem:[%s8598 + $0x11] sm:$0xff]
    %v8633 = vld [vmem:[%s8598 + $0x21] sm:$0xff]
    %v8634 = vld [vmem:[%s8598 + $0x31] sm:$0xff]
    %v8635 = vld [vmem:[%s8598 + $0x41] sm:$0xff]
    %v8636 = vld [vmem:[%s8598 + $0x51] sm:$0xff]
    %v8637 = vld [vmem:[%s8598 + $0x61] sm:$0xff]
    %v8638 = vld [vmem:[%s8598 + $0x71] sm:$0xff]
    %v8639 = vld [vmem:[%s8598 + $0xa1] sm:$0xff]
    %v8640 = vld [vmem:[%s8598 + $0xb1] sm:$0xff]
    %v8641 = vld [vmem:[%s8598 + $0xc1] sm:$0xff]
    %v8642 = vld [vmem:[%s8598 + $0xd1] sm:$0xff]
    %v8643 = vld [vmem:[%s8598 + $0xe1] sm:$0xff]
    %v8644 = vld [vmem:[%s8598 + $0xf1] sm:$0xff]
    %v8645 = vld [vmem:[%s8598 + $0x101] sm:$0xff]
    %v8646 = vld [vmem:[%s8598 + $0x111] sm:$0xff]
    %8663 = vrot.lane.b32.xlu0 %v8631, 64
    %v8664 = vpop.permute.xlu0 %8663
    %8665 = vrot.lane.b32.xlu0 %v8632, 64
    %v8666 = vpop.permute.xlu0 %8665
    %8667 = vrot.lane.b32.xlu0 %v8633, 64
    %v8668 = vpop.permute.xlu0 %8667
    %8669 = vrot.lane.b32.xlu0 %v8634, 64
    %v8670 = vpop.permute.xlu0 %8669
    %8671 = vrot.lane.b32.xlu0 %v8635, 64
    %v8672 = vpop.permute.xlu0 %8671
    %8673 = vrot.lane.b32.xlu0 %v8636, 64
    %v8674 = vpop.permute.xlu0 %8673
    %8675 = vrot.lane.b32.xlu0 %v8637, 64
    %v8676 = vpop.permute.xlu0 %8675
    %8677 = vrot.lane.b32.xlu0 %v8638, 64
    %v8678 = vpop.permute.xlu0 %8677
    %8679 = vrot.lane.b32.xlu0 %v8639, 64
    %v8680 = vpop.permute.xlu0 %8679
    %8681 = vrot.lane.b32.xlu0 %v8640, 64
    %v8682 = vpop.permute.xlu0 %8681
    %8683 = vrot.lane.b32.xlu0 %v8641, 64
    %v8684 = vpop.permute.xlu0 %8683
    %8685 = vrot.lane.b32.xlu0 %v8642, 64
    %v8686 = vpop.permute.xlu0 %8685
    %8687 = vrot.lane.b32.xlu0 %v8643, 64
    %v8688 = vpop.permute.xlu0 %8687
    %8689 = vrot.lane.b32.xlu0 %v8644, 64
    %v8690 = vpop.permute.xlu0 %8689
    %8691 = vrot.lane.b32.xlu0 %v8645, 64
    %v8692 = vpop.permute.xlu0 %8691
    %8693 = vrot.lane.b32.xlu0 %v8646, 64
    %v8694 = vpop.permute.xlu0 %8693
    %8711 = vst.msk [vmem:[#allocation7 + $0x18] sm:$0xff] %vm8325, %v8664
    %8712 = vst.msk [vmem:[#allocation7 + $0x40] sm:$0xff] %vm8325, %v8666
    %8713 = vst.msk [vmem:[#allocation7 + $0x68] sm:$0xff] %vm8325, %v8668
    %8714 = vst.msk [vmem:[#allocation7 + $0x90] sm:$0xff] %vm8325, %v8670
    %8715 = vst.msk [vmem:[#allocation7 + $0xb8] sm:$0xff] %vm8325, %v8672
    %8716 = vst.msk [vmem:[#allocation7 + $0xe0] sm:$0xff] %vm8325, %v8674
    %8717 = vst.msk [vmem:[#allocation7 + $0x108] sm:$0xff] %vm8325, %v8676
    %8718 = vst.msk [vmem:[#allocation7 + $0x130] sm:$0xff] %vm8325, %v8678
    %8719 = vst.msk [vmem:[#allocation7 + $0x158] sm:$0xff] %vm8325, %v8680
    %8720 = vst.msk [vmem:[#allocation7 + $0x180] sm:$0xff] %vm8325, %v8682
    %8721 = vst.msk [vmem:[#allocation7 + $0x1a8] sm:$0xff] %vm8325, %v8684
    %8722 = vst.msk [vmem:[#allocation7 + $0x1d0] sm:$0xff] %vm8325, %v8686
    %8723 = vst.msk [vmem:[#allocation7 + $0x1f8] sm:$0xff] %vm8325, %v8688
    %8724 = vst.msk [vmem:[#allocation7 + $0x220] sm:$0xff] %vm8325, %v8690
    %8725 = vst.msk [vmem:[#allocation7 + $0x248] sm:$0xff] %vm8325, %v8692
    %8726 = vst.msk [vmem:[#allocation7 + $0x270] sm:$0xff] %vm8325, %v8694
    %v8727 = vld [vmem:[%s8598 + $0x2] sm:$0xff]
    %v8728 = vld [vmem:[%s8598 + $0x12] sm:$0xff]
    %v8729 = vld [vmem:[%s8598 + $0x22] sm:$0xff]
    %v8730 = vld [vmem:[%s8598 + $0x32] sm:$0xff]
    %v8731 = vld [vmem:[%s8598 + $0x42] sm:$0xff]
    %v8732 = vld [vmem:[%s8598 + $0x52] sm:$0xff]
    %v8733 = vld [vmem:[%s8598 + $0x62] sm:$0xff]
    %v8734 = vld [vmem:[%s8598 + $0x72] sm:$0xff]
    %v8735 = vld [vmem:[%s8598 + $0xa2] sm:$0xff]
    %v8736 = vld [vmem:[%s8598 + $0xb2] sm:$0xff]
    %v8737 = vld [vmem:[%s8598 + $0xc2] sm:$0xff]
    %v8738 = vld [vmem:[%s8598 + $0xd2] sm:$0xff]
    %v8739 = vld [vmem:[%s8598 + $0xe2] sm:$0xff]
    %v8740 = vld [vmem:[%s8598 + $0xf2] sm:$0xff]
    %v8741 = vld [vmem:[%s8598 + $0x102] sm:$0xff]
    %v8742 = vld [vmem:[%s8598 + $0x112] sm:$0xff]
    %8743 = vst.msk [vmem:[#allocation7 + $0x20] sm:$0xff] %vm7883, %v8727
    %8744 = vst.msk [vmem:[#allocation7 + $0x48] sm:$0xff] %vm7883, %v8728
    %8745 = vst.msk [vmem:[#allocation7 + $0x70] sm:$0xff] %vm7883, %v8729
    %8746 = vst.msk [vmem:[#allocation7 + $0x98] sm:$0xff] %vm7883, %v8730
    %8747 = vst.msk [vmem:[#allocation7 + $0xc0] sm:$0xff] %vm7883, %v8731
    %8748 = vst.msk [vmem:[#allocation7 + $0xe8] sm:$0xff] %vm7883, %v8732
    %8749 = vst.msk [vmem:[#allocation7 + $0x110] sm:$0xff] %vm7883, %v8733
    %8750 = vst.msk [vmem:[#allocation7 + $0x138] sm:$0xff] %vm7883, %v8734
    %8751 = vst.msk [vmem:[#allocation7 + $0x160] sm:$0xff] %vm7883, %v8735
    %8752 = vst.msk [vmem:[#allocation7 + $0x188] sm:$0xff] %vm7883, %v8736
    %8753 = vst.msk [vmem:[#allocation7 + $0x1b0] sm:$0xff] %vm7883, %v8737
    %8754 = vst.msk [vmem:[#allocation7 + $0x1d8] sm:$0xff] %vm7883, %v8738
    %8755 = vst.msk [vmem:[#allocation7 + $0x200] sm:$0xff] %vm7883, %v8739
    %8756 = vst.msk [vmem:[#allocation7 + $0x228] sm:$0xff] %vm7883, %v8740
    %8757 = vst.msk [vmem:[#allocation7 + $0x250] sm:$0xff] %vm7883, %v8741
    %8758 = vst.msk [vmem:[#allocation7 + $0x278] sm:$0xff] %vm7883, %v8742
    %v8759 = vld [vmem:[#allocation7] sm:$0xff]
    %v8760 = vld [vmem:[#allocation7 + $0x8] sm:$0xff]
    %v8761 = vld [vmem:[#allocation7 + $0x10] sm:$0xff]
    %v8762 = vld [vmem:[#allocation7 + $0x18] sm:$0xff]
    %v8763 = vld [vmem:[#allocation7 + $0x20] sm:$0xff]
    %v8764 = vld [vmem:[#allocation7 + $0x28] sm:$0xff]
    %v8765 = vld [vmem:[#allocation7 + $0x30] sm:$0xff]
    %v8766 = vld [vmem:[#allocation7 + $0x38] sm:$0xff]
    %v8767 = vld [vmem:[#allocation7 + $0x40] sm:$0xff]
    %v8768 = vld [vmem:[#allocation7 + $0x48] sm:$0xff]
    %v8769 = vld [vmem:[#allocation7 + $0x50] sm:$0xff]
    %v8770 = vld [vmem:[#allocation7 + $0x58] sm:$0xff]
    %v8771 = vld [vmem:[#allocation7 + $0x60] sm:$0xff]
    %v8772 = vld [vmem:[#allocation7 + $0x68] sm:$0xff]
    %v8773 = vld [vmem:[#allocation7 + $0x70] sm:$0xff]
    %v8774 = vld [vmem:[#allocation7 + $0x78] sm:$0xff]
    %v8775 = vld [vmem:[#allocation7 + $0x80] sm:$0xff]
    %v8776 = vld [vmem:[#allocation7 + $0x88] sm:$0xff]
    %v8777 = vld [vmem:[#allocation7 + $0x90] sm:$0xff]
    %v8778 = vld [vmem:[#allocation7 + $0x98] sm:$0xff]
    %v8779 = vld [vmem:[#allocation7 + $0xa0] sm:$0xff]
    %v8780 = vld [vmem:[#allocation7 + $0xa8] sm:$0xff]
    %v8781 = vld [vmem:[#allocation7 + $0xb0] sm:$0xff]
    %v8782 = vld [vmem:[#allocation7 + $0xb8] sm:$0xff]
    %v8783 = vld [vmem:[#allocation7 + $0xc0] sm:$0xff]
    %v8784 = vld [vmem:[#allocation7 + $0xc8] sm:$0xff]
    %v8785 = vld [vmem:[#allocation7 + $0xd0] sm:$0xff]
    %v8786 = vld [vmem:[#allocation7 + $0xd8] sm:$0xff]
    %v8787 = vld [vmem:[#allocation7 + $0xe0] sm:$0xff]
    %v8788 = vld [vmem:[#allocation7 + $0xe8] sm:$0xff]
    %v8789 = vld [vmem:[#allocation7 + $0xf0] sm:$0xff]
    %v8790 = vld [vmem:[#allocation7 + $0xf8] sm:$0xff]
    %v8791 = vld [vmem:[#allocation7 + $0x100] sm:$0xff]
    %v8792 = vld [vmem:[#allocation7 + $0x108] sm:$0xff]
    %v8793 = vld [vmem:[#allocation7 + $0x110] sm:$0xff]
    %v8794 = vld [vmem:[#allocation7 + $0x118] sm:$0xff]
    %v8795 = vld [vmem:[#allocation7 + $0x120] sm:$0xff]
    %v8796 = vld [vmem:[#allocation7 + $0x128] sm:$0xff]
    %v8797 = vld [vmem:[#allocation7 + $0x130] sm:$0xff]
    %v8798 = vld [vmem:[#allocation7 + $0x138] sm:$0xff]
    %v8799 = vld [vmem:[#allocation7 + $0x140] sm:$0xff]
    %v8800 = vld [vmem:[#allocation7 + $0x148] sm:$0xff]
    %v8801 = vld [vmem:[#allocation7 + $0x150] sm:$0xff]
    %v8802 = vld [vmem:[#allocation7 + $0x158] sm:$0xff]
    %v8803 = vld [vmem:[#allocation7 + $0x160] sm:$0xff]
    %v8804 = vld [vmem:[#allocation7 + $0x168] sm:$0xff]
    %v8805 = vld [vmem:[#allocation7 + $0x170] sm:$0xff]
    %v8806 = vld [vmem:[#allocation7 + $0x178] sm:$0xff]
    %v8807 = vld [vmem:[#allocation7 + $0x180] sm:$0xff]
    %v8808 = vld [vmem:[#allocation7 + $0x188] sm:$0xff]
    %v8809 = vld [vmem:[#allocation7 + $0x190] sm:$0xff]
    %v8810 = vld [vmem:[#allocation7 + $0x198] sm:$0xff]
    %v8811 = vld [vmem:[#allocation7 + $0x1a0] sm:$0xff]
    %v8812 = vld [vmem:[#allocation7 + $0x1a8] sm:$0xff]
    %v8813 = vld [vmem:[#allocation7 + $0x1b0] sm:$0xff]
    %v8814 = vld [vmem:[#allocation7 + $0x1b8] sm:$0xff]
    %v8815 = vld [vmem:[#allocation7 + $0x1c0] sm:$0xff]
    %v8816 = vld [vmem:[#allocation7 + $0x1c8] sm:$0xff]
    %v8817 = vld [vmem:[#allocation7 + $0x1d0] sm:$0xff]
    %v8818 = vld [vmem:[#allocation7 + $0x1d8] sm:$0xff]
    %v8819 = vld [vmem:[#allocation7 + $0x1e0] sm:$0xff]
    %v8820 = vld [vmem:[#allocation7 + $0x1e8] sm:$0xff]
    %v8821 = vld [vmem:[#allocation7 + $0x1f0] sm:$0xff]
    %v8822 = vld [vmem:[#allocation7 + $0x1f8] sm:$0xff]
    %v8823 = vld [vmem:[#allocation7 + $0x200] sm:$0xff]
    %v8824 = vld [vmem:[#allocation7 + $0x208] sm:$0xff]
    %v8825 = vld [vmem:[#allocation7 + $0x210] sm:$0xff]
    %v8826 = vld [vmem:[#allocation7 + $0x218] sm:$0xff]
    %v8827 = vld [vmem:[#allocation7 + $0x220] sm:$0xff]
    %v8828 = vld [vmem:[#allocation7 + $0x228] sm:$0xff]
    %v8829 = vld [vmem:[#allocation7 + $0x230] sm:$0xff]
    %v8830 = vld [vmem:[#allocation7 + $0x238] sm:$0xff]
    %v8831 = vld [vmem:[#allocation7 + $0x240] sm:$0xff]
    %v8832 = vld [vmem:[#allocation7 + $0x248] sm:$0xff]
    %v8833 = vld [vmem:[#allocation7 + $0x250] sm:$0xff]
    %v8834 = vld [vmem:[#allocation7 + $0x258] sm:$0xff]
    %v8835 = vld [vmem:[#allocation7 + $0x260] sm:$0xff]
    %v8836 = vld [vmem:[#allocation7 + $0x268] sm:$0xff]
    %v8837 = vld [vmem:[#allocation7 + $0x270] sm:$0xff]
    %v8838 = vld [vmem:[#allocation7 + $0x278] sm:$0xff]
    %v8839 = vld [vmem:[%s5] sm:$0xff]
    %v8840 = vld [vmem:[%s5 + $0x8] sm:$0xff]
    %v8841 = vld [vmem:[%s5 + $0x10] sm:$0xff]
    %v8842 = vld [vmem:[%s5 + $0x18] sm:$0xff]
    %v8843 = vld [vmem:[%s5 + $0x20] sm:$0xff]
    %v8844 = vld [vmem:[%s5 + $0x28] sm:$0xff]
    %v8845 = vld [vmem:[%s5 + $0x30] sm:$0xff]
    %v8846 = vld [vmem:[%s5 + $0x38] sm:$0xff]
    %v8847 = vld [vmem:[%s5 + $0x40] sm:$0xff]
    %v8848 = vld [vmem:[%s5 + $0x48] sm:$0xff]
    %v8849 = vld [vmem:[%s5 + $0x50] sm:$0xff]
    %v8850 = vld [vmem:[%s5 + $0x58] sm:$0xff]
    %v8851 = vld [vmem:[%s5 + $0x60] sm:$0xff]
    %v8852 = vld [vmem:[%s5 + $0x68] sm:$0xff]
    %v8853 = vld [vmem:[%s5 + $0x70] sm:$0xff]
    %v8854 = vld [vmem:[%s5 + $0x78] sm:$0xff]
    %v8855 = vld [vmem:[%s5 + $0x80] sm:$0xff]
    %v8856 = vld [vmem:[%s5 + $0x88] sm:$0xff]
    %v8857 = vld [vmem:[%s5 + $0x90] sm:$0xff]
    %v8858 = vld [vmem:[%s5 + $0x98] sm:$0xff]
    %v8859 = vld [vmem:[%s5 + $0xa0] sm:$0xff]
    %v8860 = vld [vmem:[%s5 + $0xa8] sm:$0xff]
    %v8861 = vld [vmem:[%s5 + $0xb0] sm:$0xff]
    %v8862 = vld [vmem:[%s5 + $0xb8] sm:$0xff]
    %v8863 = vld [vmem:[%s5 + $0xc0] sm:$0xff]
    %v8864 = vld [vmem:[%s5 + $0xc8] sm:$0xff]
    %v8865 = vld [vmem:[%s5 + $0xd0] sm:$0xff]
    %v8866 = vld [vmem:[%s5 + $0xd8] sm:$0xff]
    %v8867 = vld [vmem:[%s5 + $0xe0] sm:$0xff]
    %v8868 = vld [vmem:[%s5 + $0xe8] sm:$0xff]
    %v8869 = vld [vmem:[%s5 + $0xf0] sm:$0xff]
    %v8870 = vld [vmem:[%s5 + $0xf8] sm:$0xff]
    %v8871 = vld [vmem:[%s5 + $0x100] sm:$0xff]
    %v8872 = vld [vmem:[%s5 + $0x108] sm:$0xff]
    %v8873 = vld [vmem:[%s5 + $0x110] sm:$0xff]
    %v8874 = vld [vmem:[%s5 + $0x118] sm:$0xff]
    %v8875 = vld [vmem:[%s5 + $0x120] sm:$0xff]
    %v8876 = vld [vmem:[%s5 + $0x128] sm:$0xff]
    %v8877 = vld [vmem:[%s5 + $0x130] sm:$0xff]
    %v8878 = vld [vmem:[%s5 + $0x138] sm:$0xff]
    %v8879 = vld [vmem:[%s5 + $0x140] sm:$0xff]
    %v8880 = vld [vmem:[%s5 + $0x148] sm:$0xff]
    %v8881 = vld [vmem:[%s5 + $0x150] sm:$0xff]
    %v8882 = vld [vmem:[%s5 + $0x158] sm:$0xff]
    %v8883 = vld [vmem:[%s5 + $0x160] sm:$0xff]
    %v8884 = vld [vmem:[%s5 + $0x168] sm:$0xff]
    %v8885 = vld [vmem:[%s5 + $0x170] sm:$0xff]
    %v8886 = vld [vmem:[%s5 + $0x178] sm:$0xff]
    %v8887 = vld [vmem:[%s5 + $0x180] sm:$0xff]
    %v8888 = vld [vmem:[%s5 + $0x188] sm:$0xff]
    %v8889 = vld [vmem:[%s5 + $0x190] sm:$0xff]
    %v8890 = vld [vmem:[%s5 + $0x198] sm:$0xff]
    %v8891 = vld [vmem:[%s5 + $0x1a0] sm:$0xff]
    %v8892 = vld [vmem:[%s5 + $0x1a8] sm:$0xff]
    %v8893 = vld [vmem:[%s5 + $0x1b0] sm:$0xff]
    %v8894 = vld [vmem:[%s5 + $0x1b8] sm:$0xff]
    %v8895 = vld [vmem:[%s5 + $0x1c0] sm:$0xff]
    %v8896 = vld [vmem:[%s5 + $0x1c8] sm:$0xff]
    %v8897 = vld [vmem:[%s5 + $0x1d0] sm:$0xff]
    %v8898 = vld [vmem:[%s5 + $0x1d8] sm:$0xff]
    %v8899 = vld [vmem:[%s5 + $0x1e0] sm:$0xff]
    %v8900 = vld [vmem:[%s5 + $0x1e8] sm:$0xff]
    %v8901 = vld [vmem:[%s5 + $0x1f0] sm:$0xff]
    %v8902 = vld [vmem:[%s5 + $0x1f8] sm:$0xff]
    %v8903 = vld [vmem:[%s5 + $0x200] sm:$0xff]
    %v8904 = vld [vmem:[%s5 + $0x208] sm:$0xff]
    %v8905 = vld [vmem:[%s5 + $0x210] sm:$0xff]
    %v8906 = vld [vmem:[%s5 + $0x218] sm:$0xff]
    %v8907 = vld [vmem:[%s5 + $0x220] sm:$0xff]
    %v8908 = vld [vmem:[%s5 + $0x228] sm:$0xff]
    %v8909 = vld [vmem:[%s5 + $0x230] sm:$0xff]
    %v8910 = vld [vmem:[%s5 + $0x238] sm:$0xff]
    %v8911 = vld [vmem:[%s6] sm:$0x1]
    %v8913 = vlaneseq
    %v8914 = vshrl.u32 %v8913, 7
    %v8915 = vsub.s32 0, %v8914
    %v8916 = vrot.slane %v8911, %v8915
    %v8919 = vsel %vm7883, %v8763, 0
    %v8922 = vsel %vm7883, %v8768, 0
    %v8925 = vsel %vm7883, %v8773, 0
    %v8928 = vsel %vm7883, %v8778, 0
    %v8931 = vsel %vm7883, %v8783, 0
    %v8934 = vsel %vm7883, %v8788, 0
    %v8937 = vsel %vm7883, %v8793, 0
    %v8940 = vsel %vm7883, %v8798, 0
    %v8943 = vsel %vm7883, %v8803, 0
    %v8946 = vsel %vm7883, %v8808, 0
    %v8949 = vsel %vm7883, %v8813, 0
    %v8952 = vsel %vm7883, %v8818, 0
    %v8955 = vsel %vm7883, %v8823, 0
    %v8958 = vsel %vm7883, %v8828, 0
    %v8961 = vsel %vm7883, %v8833, 0
    %v8964 = vsel %vm7883, %v8838, 0
    %8966 = vmatprep.subr.mxu0 0.0
    %8967 = vmatpush1.msra.mxu0 %v8839
    %8968 = vmatprep.subr.mxu0 0.0
    %8969 = vmatpush1.msra.mxu0 %v8840
    %8970 = vmatprep.subr.mxu0 0.0
    %8971 = vmatpush1.msra.mxu0 %v8841
    %8972 = vmatprep.subr.mxu0 0.0
    %8973 = vmatpush1.msra.mxu0 %v8842
    %8974 = vmatprep.subr.mxu0 0.0
    %8975 = vmatpush1.msra.mxu0 %v8843
    %8976 = vmatprep.subr.mxu0 0.0
    %8977 = vmatpush1.msra.mxu0 %v8844
    %8978 = vmatprep.subr.mxu0 0.0
    %8979 = vmatpush1.msra.mxu0 %v8845
    %8980 = vmatprep.subr.mxu0 0.0
    %8981 = vmatpush1.msra.mxu0 %v8846
    %8982 = vmatprep.subr.mxu0 0.0
    %8983 = vmatpush1.msra.mxu0 %v8847
    %8984 = vmatprep.subr.mxu0 0.0
    %8985 = vmatpush1.msra.mxu0 %v8848
    %8986 = vmatprep.subr.mxu0 0.0
    %8987 = vmatpush1.msra.mxu0 %v8849
    %8988 = vmatprep.subr.mxu0 0.0
    %8989 = vmatpush1.msra.mxu0 %v8850
    %8990 = vmatprep.subr.mxu0 0.0
    %8991 = vmatpush1.msra.mxu0 %v8851
    %8992 = vmatprep.subr.mxu0 0.0
    %8993 = vmatpush1.msra.mxu0 %v8852
    %8994 = vmatprep.subr.mxu0 0.0
    %8995 = vmatpush1.msra.mxu0 %v8853
    %8996 = vmatprep.subr.mxu0 0.0
    %8997 = vmatpush1.msra.mxu0 %v8854
    %8998 = vmatprep.subr.mxu0 0.0
    %8999 = vmatpush1.msra.mxu0 %v8855
    %9000 = vmatprep.subr.mxu0 0.0
    %9001 = vmatpush1.msra.mxu0 %v8856
    %9002 = vmatprep.subr.mxu0 0.0
    %9003 = vmatpush1.msra.mxu0 %v8857
    %9004 = vmatprep.subr.mxu0 0.0
    %9005 = vmatpush1.msra.mxu0 %v8858
    %9006 = vmatprep.subr.mxu0 0.0
    %9007 = vmatpush1.msra.mxu0 %v8859
    %9008 = vmatprep.subr.mxu0 0.0
    %9009 = vmatpush1.msra.mxu0 %v8860
    %9010 = vmatprep.subr.mxu0 0.0
    %9011 = vmatpush1.msra.mxu0 %v8861
    %9012 = vmatprep.subr.mxu0 0.0
    %9013 = vmatpush1.msra.mxu0 %v8862
    %9014 = vmatprep.subr.mxu0 0.0
    %9015 = vmatpush1.msra.mxu0 %v8863
    %9016 = vmatprep.subr.mxu0 0.0
    %9017 = vmatpush1.msra.mxu0 %v8864
    %9018 = vmatprep.subr.mxu0 0.0
    %9019 = vmatpush1.msra.mxu0 %v8865
    %9020 = vmatprep.subr.mxu0 0.0
    %9021 = vmatpush1.msra.mxu0 %v8866
    %9022 = vmatprep.subr.mxu0 0.0
    %9023 = vmatpush1.msra.mxu0 %v8867
    %9024 = vmatprep.subr.mxu0 0.0
    %9025 = vmatpush1.msra.mxu0 %v8868
    %9026 = vmatprep.subr.mxu0 0.0
    %9027 = vmatpush1.msra.mxu0 %v8869
    %9028 = vmatprep.subr.mxu0 0.0
    %9029 = vmatpush1.msra.mxu0 %v8870
    %9030 = vmatprep.mubr.f32.mxu0 %v8760
    %9031 = vmatmul.mubr.f32.gmra.mrb[0].mxu0 %v8759
    %v9032 = vpop.f32.mrb[0].mxu0
    %v9033 = vadd.f32 %v8916, %v9032
    %v9034 = vpop.f32.mrb[0].mxu0
    %9035 = vmatprep.mubr.f32.mxu0 %v8765
    %9036 = vmatmul.mubr.f32.gmra.mrb[0].mxu0 %v8764
    %v9037 = vpop.f32.mrb[0].mxu0
    %v9038 = vadd.f32 %v8916, %v9037
    %v9039 = vpop.f32.mrb[0].mxu0
    %9040 = vmatprep.mubr.f32.mxu0 %v8770
    %9041 = vmatmul.mubr.f32.gmra.mrb[0].mxu0 %v8769
    %v9042 = vpop.f32.mrb[0].mxu0
    %v9043 = vadd.f32 %v8916, %v9042
    %v9044 = vpop.f32.mrb[0].mxu0
    %9045 = vmatprep.mubr.f32.mxu0 %v8775
    %9046 = vmatmul.mubr.f32.gmra.mrb[0].mxu0 %v8774
    %v9047 = vpop.f32.mrb[0].mxu0
    %v9048 = vadd.f32 %v8916, %v9047
    %v9049 = vpop.f32.mrb[0].mxu0
    %9050 = vmatprep.mubr.f32.mxu0 %v8780
    %9051 = vmatmul.mubr.f32.gmra.mrb[0].mxu0 %v8779
    %v9052 = vpop.f32.mrb[0].mxu0
    %v9053 = vadd.f32 %v8916, %v9052
    %v9054 = vpop.f32.mrb[0].mxu0
    %9055 = vmatprep.mubr.f32.mxu0 %v8785
    %9056 = vmatmul.mubr.f32.gmra.mrb[0].mxu0 %v8784
    %v9057 = vpop.f32.mrb[0].mxu0
    %v9058 = vadd.f32 %v8916, %v9057
    %v9059 = vpop.f32.mrb[0].mxu0
    %9060 = vmatprep.mubr.f32.mxu0 %v8790
    %9061 = vmatmul.mubr.f32.gmra.mrb[0].mxu0 %v8789
    %v9062 = vpop.f32.mrb[0].mxu0
    %v9063 = vadd.f32 %v8916, %v9062
    %v9064 = vpop.f32.mrb[0].mxu0
    %9065 = vmatprep.mubr.f32.mxu0 %v8795
    %9066 = vmatmul.mubr.f32.gmra.mrb[0].mxu0 %v8794
    %v9067 = vpop.f32.mrb[0].mxu0
    %v9068 = vadd.f32 %v8916, %v9067
    %v9069 = vpop.f32.mrb[0].mxu0
    %9070 = vmatprep.mubr.f32.mxu0 %v8800
    %9071 = vmatmul.mubr.f32.gmra.mrb[0].mxu0 %v8799
    %v9072 = vpop.f32.mrb[0].mxu0
    %v9073 = vadd.f32 %v8916, %v9072
    %v9074 = vpop.f32.mrb[0].mxu0
    %9075 = vmatprep.mubr.f32.mxu0 %v8805
    %9076 = vmatmul.mubr.f32.gmra.mrb[0].mxu0 %v8804
    %v9077 = vpop.f32.mrb[0].mxu0
    %v9078 = vadd.f32 %v8916, %v9077
    %v9079 = vpop.f32.mrb[0].mxu0
    %9080 = vmatprep.mubr.f32.mxu0 %v8810
    %9081 = vmatmul.mubr.f32.gmra.mrb[0].mxu0 %v8809
    %v9082 = vpop.f32.mrb[0].mxu0
    %v9083 = vadd.f32 %v8916, %v9082
    %v9084 = vpop.f32.mrb[0].mxu0
    %9085 = vmatprep.mubr.f32.mxu0 %v8815
    %9086 = vmatmul.mubr.f32.gmra.mrb[0].mxu0 %v8814
    %v9087 = vpop.f32.mrb[0].mxu0
    %v9088 = vadd.f32 %v8916, %v9087
    %v9089 = vpop.f32.mrb[0].mxu0
    %9090 = vmatprep.mubr.f32.mxu0 %v8820
    %9091 = vmatmul.mubr.f32.gmra.mrb[0].mxu0 %v8819
    %v9092 = vpop.f32.mrb[0].mxu0
    %v9093 = vadd.f32 %v8916, %v9092
    %v9094 = vpop.f32.mrb[0].mxu0
    %9095 = vmatprep.mubr.f32.mxu0 %v8825
    %9096 = vmatmul.mubr.f32.gmra.mrb[0].mxu0 %v8824
    %v9097 = vpop.f32.mrb[0].mxu0
    %v9098 = vadd.f32 %v8916, %v9097
    %v9099 = vpop.f32.mrb[0].mxu0
    %9100 = vmatprep.mubr.f32.mxu0 %v8830
    %9101 = vmatmul.mubr.f32.gmra.mrb[0].mxu0 %v8829
    %v9102 = vpop.f32.mrb[0].mxu0
    %v9103 = vadd.f32 %v8916, %v9102
    %v9104 = vpop.f32.mrb[0].mxu0
    %9105 = vmatprep.mubr.f32.mxu0 %v8835
    %9106 = vmatmul.mubr.f32.gmra.mrb[0].mxu0 %v8834
    %v9107 = vpop.f32.mrb[0].mxu0
    %v9108 = vadd.f32 %v8916, %v9107
    %v9109 = vpop.f32.mrb[0].mxu0
    %9110 = vdwg.mxu0
    %9111 = vmatprep.subr.mxu0 0.0
    %9112 = vmatpush1.msra.mxu0 %v8871
    %9113 = vmatprep.subr.mxu0 0.0
    %9114 = vmatpush1.msra.mxu0 %v8872
    %9115 = vmatprep.subr.mxu0 0.0
    %9116 = vmatpush1.msra.mxu0 %v8873
    %9117 = vmatprep.subr.mxu0 0.0
    %9118 = vmatpush1.msra.mxu0 %v8874
    %9119 = vmatprep.subr.mxu0 0.0
    %9120 = vmatpush1.msra.mxu0 %v8875
    %9121 = vmatprep.subr.mxu0 0.0
    %9122 = vmatpush1.msra.mxu0 %v8876
    %9123 = vmatprep.subr.mxu0 0.0
    %9124 = vmatpush1.msra.mxu0 %v8877
    %9125 = vmatprep.subr.mxu0 0.0
    %9126 = vmatpush1.msra.mxu0 %v8878
    %9127 = vmatprep.subr.mxu0 0.0
    %9128 = vmatpush1.msra.mxu0 %v8879
    %9129 = vmatprep.subr.mxu0 0.0
    %9130 = vmatpush1.msra.mxu0 %v8880
    %9131 = vmatprep.subr.mxu0 0.0
    %9132 = vmatpush1.msra.mxu0 %v8881
    %9133 = vmatprep.subr.mxu0 0.0
    %9134 = vmatpush1.msra.mxu0 %v8882
    %9135 = vmatprep.subr.mxu0 0.0
    %9136 = vmatpush1.msra.mxu0 %v8883
    %9137 = vmatprep.subr.mxu0 0.0
    %9138 = vmatpush1.msra.mxu0 %v8884
    %9139 = vmatprep.subr.mxu0 0.0
    %9140 = vmatpush1.msra.mxu0 %v8885
    %9141 = vmatprep.subr.mxu0 0.0
    %9142 = vmatpush1.msra.mxu0 %v8886
    %9143 = vmatprep.subr.mxu0 0.0
    %9144 = vmatpush1.msra.mxu0 %v8887
    %9145 = vmatprep.subr.mxu0 0.0
    %9146 = vmatpush1.msra.mxu0 %v8888
    %9147 = vmatprep.subr.mxu0 0.0
    %9148 = vmatpush1.msra.mxu0 %v8889
    %9149 = vmatprep.subr.mxu0 0.0
    %9150 = vmatpush1.msra.mxu0 %v8890
    %9151 = vmatprep.subr.mxu0 0.0
    %9152 = vmatpush1.msra.mxu0 %v8891
    %9153 = vmatprep.subr.mxu0 0.0
    %9154 = vmatpush1.msra.mxu0 %v8892
    %9155 = vmatprep.subr.mxu0 0.0
    %9156 = vmatpush1.msra.mxu0 %v8893
    %9157 = vmatprep.subr.mxu0 0.0
    %9158 = vmatpush1.msra.mxu0 %v8894
    %9159 = vmatprep.subr.mxu0 0.0
    %9160 = vmatpush1.msra.mxu0 %v8895
    %9161 = vmatprep.subr.mxu0 0.0
    %9162 = vmatpush1.msra.mxu0 %v8896
    %9163 = vmatprep.subr.mxu0 0.0
    %9164 = vmatpush1.msra.mxu0 %v8897
    %9165 = vmatprep.subr.mxu0 0.0
    %9166 = vmatpush1.msra.mxu0 %v8898
    %9167 = vmatprep.subr.mxu0 0.0
    %9168 = vmatpush1.msra.mxu0 %v8899
    %9169 = vmatprep.subr.mxu0 0.0
    %9170 = vmatpush1.msra.mxu0 %v8900
    %9171 = vmatprep.subr.mxu0 0.0
    %9172 = vmatpush1.msra.mxu0 %v8901
    %9173 = vmatprep.subr.mxu0 0.0
    %9174 = vmatpush1.msra.mxu0 %v8902
    %9175 = vmatprep.mubr.f32.mxu0 %v8762
    %9176 = vmatmul.mubr.f32.gmra.mrb[0].mxu0 %v8761
    %v9177 = vpop.f32.mrb[0].mxu0
    %v9178 = vadd.f32 %v9033, %v9177
    %v9179 = vpop.f32.mrb[0].mxu0
    %9180 = vmatprep.mubr.f32.mxu0 %v8767
    %9181 = vmatmul.mubr.f32.gmra.mrb[0].mxu0 %v8766
    %v9182 = vpop.f32.mrb[0].mxu0
    %v9183 = vadd.f32 %v9038, %v9182
    %v9184 = vpop.f32.mrb[0].mxu0
    %9185 = vmatprep.mubr.f32.mxu0 %v8772
    %9186 = vmatmul.mubr.f32.gmra.mrb[0].mxu0 %v8771
    %v9187 = vpop.f32.mrb[0].mxu0
    %v9188 = vadd.f32 %v9043, %v9187
    %v9189 = vpop.f32.mrb[0].mxu0
    %9190 = vmatprep.mubr.f32.mxu0 %v8777
    %9191 = vmatmul.mubr.f32.gmra.mrb[0].mxu0 %v8776
    %v9192 = vpop.f32.mrb[0].mxu0
    %v9193 = vadd.f32 %v9048, %v9192
    %v9194 = vpop.f32.mrb[0].mxu0
    %9195 = vmatprep.mubr.f32.mxu0 %v8782
    %9196 = vmatmul.mubr.f32.gmra.mrb[0].mxu0 %v8781
    %v9197 = vpop.f32.mrb[0].mxu0
    %v9198 = vadd.f32 %v9053, %v9197
    %v9199 = vpop.f32.mrb[0].mxu0
    %9200 = vmatprep.mubr.f32.mxu0 %v8787
    %9201 = vmatmul.mubr.f32.gmra.mrb[0].mxu0 %v8786
    %v9202 = vpop.f32.mrb[0].mxu0
    %v9203 = vadd.f32 %v9058, %v9202
    %v9204 = vpop.f32.mrb[0].mxu0
    %9205 = vmatprep.mubr.f32.mxu0 %v8792
    %9206 = vmatmul.mubr.f32.gmra.mrb[0].mxu0 %v8791
    %v9207 = vpop.f32.mrb[0].mxu0
    %v9208 = vadd.f32 %v9063, %v9207
    %v9209 = vpop.f32.mrb[0].mxu0
    %9210 = vmatprep.mubr.f32.mxu0 %v8797
    %9211 = vmatmul.mubr.f32.gmra.mrb[0].mxu0 %v8796
    %v9212 = vpop.f32.mrb[0].mxu0
    %v9213 = vadd.f32 %v9068, %v9212
    %v9214 = vpop.f32.mrb[0].mxu0
    %9215 = vmatprep.mubr.f32.mxu0 %v8802
    %9216 = vmatmul.mubr.f32.gmra.mrb[0].mxu0 %v8801
    %v9217 = vpop.f32.mrb[0].mxu0
    %v9218 = vadd.f32 %v9073, %v9217
    %v9219 = vpop.f32.mrb[0].mxu0
    %9220 = vmatprep.mubr.f32.mxu0 %v8807
    %9221 = vmatmul.mubr.f32.gmra.mrb[0].mxu0 %v8806
    %v9222 = vpop.f32.mrb[0].mxu0
    %v9223 = vadd.f32 %v9078, %v9222
    %v9224 = vpop.f32.mrb[0].mxu0
    %9225 = vmatprep.mubr.f32.mxu0 %v8812
    %9226 = vmatmul.mubr.f32.gmra.mrb[0].mxu0 %v8811
    %v9227 = vpop.f32.mrb[0].mxu0
    %v9228 = vadd.f32 %v9083, %v9227
    %v9229 = vpop.f32.mrb[0].mxu0
    %9230 = vmatprep.mubr.f32.mxu0 %v8817
    %9231 = vmatmul.mubr.f32.gmra.mrb[0].mxu0 %v8816
    %v9232 = vpop.f32.mrb[0].mxu0
    %v9233 = vadd.f32 %v9088, %v9232
    %v9234 = vpop.f32.mrb[0].mxu0
    %9235 = vmatprep.mubr.f32.mxu0 %v8822
    %9236 = vmatmul.mubr.f32.gmra.mrb[0].mxu0 %v8821
    %v9237 = vpop.f32.mrb[0].mxu0
    %v9238 = vadd.f32 %v9093, %v9237
    %v9239 = vpop.f32.mrb[0].mxu0
    %9240 = vmatprep.mubr.f32.mxu0 %v8827
    %9241 = vmatmul.mubr.f32.gmra.mrb[0].mxu0 %v8826
    %v9242 = vpop.f32.mrb[0].mxu0
    %v9243 = vadd.f32 %v9098, %v9242
    %v9244 = vpop.f32.mrb[0].mxu0
    %9245 = vmatprep.mubr.f32.mxu0 %v8832
    %9246 = vmatmul.mubr.f32.gmra.mrb[0].mxu0 %v8831
    %v9247 = vpop.f32.mrb[0].mxu0
    %v9248 = vadd.f32 %v9103, %v9247
    %v9249 = vpop.f32.mrb[0].mxu0
    %9250 = vmatprep.mubr.f32.mxu0 %v8837
    %9251 = vmatmul.mubr.f32.gmra.mrb[0].mxu0 %v8836
    %v9252 = vpop.f32.mrb[0].mxu0
    %v9253 = vadd.f32 %v9108, %v9252
    %v9254 = vpop.f32.mrb[0].mxu0
    %9255 = vdwg.mxu0
    %9256 = vmatprep.subr.mxu0 0.0
    %9257 = vmatpush1.msra.mxu0 %v8903
    %9258 = vmatprep.subr.mxu0 0.0
    %9259 = vmatpush1.msra.mxu0 %v8904
    %9260 = vmatprep.subr.mxu0 0.0
    %9261 = vmatpush1.msra.mxu0 %v8905
    %9262 = vmatprep.subr.mxu0 0.0
    %9263 = vmatpush1.msra.mxu0 %v8906
    %9264 = vmatprep.subr.mxu0 0.0
    %9265 = vmatpush1.msra.mxu0 %v8907
    %9266 = vmatprep.subr.mxu0 0.0
    %9267 = vmatpush1.msra.mxu0 %v8908
    %9268 = vmatprep.subr.mxu0 0.0
    %9269 = vmatpush1.msra.mxu0 %v8909
    %9270 = vmatprep.subr.mxu0 0.0
    %9271 = vmatpush1.msra.mxu0 %v8910
    %9272 = vmatprep.subr.mxu0 0.0
    %9273 = vmatpush1.msra.mxu0 0.0
    %9274 = vmatprep.subr.mxu0 0.0
    %9275 = vmatpush1.msra.mxu0 0.0
    %9276 = vmatprep.subr.mxu0 0.0
    %9277 = vmatpush1.msra.mxu0 0.0
    %9278 = vmatprep.subr.mxu0 0.0
    %9279 = vmatpush1.msra.mxu0 0.0
    %9280 = vmatprep.subr.mxu0 0.0
    %9281 = vmatpush1.msra.mxu0 0.0
    %9282 = vmatprep.subr.mxu0 0.0
    %9283 = vmatpush1.msra.mxu0 0.0
    %9284 = vmatprep.subr.mxu0 0.0
    %9285 = vmatpush1.msra.mxu0 0.0
    %9286 = vmatprep.subr.mxu0 0.0
    %9287 = vmatpush1.msra.mxu0 0.0
    %9288 = vmatprep.subr.mxu0 0.0
    %9289 = vmatpush1.msra.mxu0 0.0
    %9290 = vmatprep.subr.mxu0 0.0
    %9291 = vmatpush1.msra.mxu0 0.0
    %9292 = vmatprep.subr.mxu0 0.0
    %9293 = vmatpush1.msra.mxu0 0.0
    %9294 = vmatprep.subr.mxu0 0.0
    %9295 = vmatpush1.msra.mxu0 0.0
    %9296 = vmatprep.subr.mxu0 0.0
    %9297 = vmatpush1.msra.mxu0 0.0
    %9298 = vmatprep.subr.mxu0 0.0
    %9299 = vmatpush1.msra.mxu0 0.0
    %9300 = vmatprep.subr.mxu0 0.0
    %9301 = vmatpush1.msra.mxu0 0.0
    %9302 = vmatprep.subr.mxu0 0.0
    %9303 = vmatpush1.msra.mxu0 0.0
    %9304 = vmatprep.subr.mxu0 0.0
    %9305 = vmatpush1.msra.mxu0 0.0
    %9306 = vmatprep.subr.mxu0 0.0
    %9307 = vmatpush1.msra.mxu0 0.0
    %9308 = vmatprep.subr.mxu0 0.0
    %9309 = vmatpush1.msra.mxu0 0.0
    %9310 = vmatprep.subr.mxu0 0.0
    %9311 = vmatpush1.msra.mxu0 0.0
    %9312 = vmatprep.subr.mxu0 0.0
    %9313 = vmatpush1.msra.mxu0 0.0
    %9314 = vmatprep.subr.mxu0 0.0
    %9315 = vmatpush1.msra.mxu0 0.0
    %9316 = vmatprep.subr.mxu0 0.0
    %9317 = vmatpush1.msra.mxu0 0.0
    %9318 = vmatprep.subr.mxu0 0.0
    %9319 = vmatpush1.msra.mxu0 0.0
    %9320 = vmatprep.mubr.f32.mxu0 0.0
    %9321 = vmatmul.mubr.f32.gmra.mrb[0].mxu0 %v8919
    %v9322 = vpop.f32.mrb[0].mxu0
    %v9323 = vadd.f32 %v9178, %v9322
    %v9324 = vpop.f32.mrb[0].mxu0
    %9325 = vmatprep.mubr.f32.mxu0 0.0
    %9326 = vmatmul.mubr.f32.gmra.mrb[0].mxu0 %v8922
    %v9327 = vpop.f32.mrb[0].mxu0
    %v9328 = vadd.f32 %v9183, %v9327
    %v9329 = vpop.f32.mrb[0].mxu0
    %9330 = vmatprep.mubr.f32.mxu0 0.0
    %9331 = vmatmul.mubr.f32.gmra.mrb[0].mxu0 %v8925
    %v9332 = vpop.f32.mrb[0].mxu0
    %v9333 = vadd.f32 %v9188, %v9332
    %v9334 = vpop.f32.mrb[0].mxu0
    %9335 = vmatprep.mubr.f32.mxu0 0.0
    %9336 = vmatmul.mubr.f32.gmra.mrb[0].mxu0 %v8928
    %v9337 = vpop.f32.mrb[0].mxu0
    %v9338 = vadd.f32 %v9193, %v9337
    %v9339 = vpop.f32.mrb[0].mxu0
    %9340 = vmatprep.mubr.f32.mxu0 0.0
    %9341 = vmatmul.mubr.f32.gmra.mrb[0].mxu0 %v8931
    %v9342 = vpop.f32.mrb[0].mxu0
    %v9343 = vadd.f32 %v9198, %v9342
    %v9344 = vpop.f32.mrb[0].mxu0
    %9345 = vmatprep.mubr.f32.mxu0 0.0
    %9346 = vmatmul.mubr.f32.gmra.mrb[0].mxu0 %v8934
    %v9347 = vpop.f32.mrb[0].mxu0
    %v9348 = vadd.f32 %v9203, %v9347
    %v9349 = vpop.f32.mrb[0].mxu0
    %9350 = vmatprep.mubr.f32.mxu0 0.0
    %9351 = vmatmul.mubr.f32.gmra.mrb[0].mxu0 %v8937
    %v9352 = vpop.f32.mrb[0].mxu0
    %v9353 = vadd.f32 %v9208, %v9352
    %v9354 = vpop.f32.mrb[0].mxu0
    %9355 = vmatprep.mubr.f32.mxu0 0.0
    %9356 = vmatmul.mubr.f32.gmra.mrb[0].mxu0 %v8940
    %v9357 = vpop.f32.mrb[0].mxu0
    %v9358 = vadd.f32 %v9213, %v9357
    %v9359 = vpop.f32.mrb[0].mxu0
    %9360 = vmatprep.mubr.f32.mxu0 0.0
    %9361 = vmatmul.mubr.f32.gmra.mrb[0].mxu0 %v8943
    %v9362 = vpop.f32.mrb[0].mxu0
    %v9363 = vadd.f32 %v9218, %v9362
    %v9364 = vpop.f32.mrb[0].mxu0
    %9365 = vmatprep.mubr.f32.mxu0 0.0
    %9366 = vmatmul.mubr.f32.gmra.mrb[0].mxu0 %v8946
    %v9367 = vpop.f32.mrb[0].mxu0
    %v9368 = vadd.f32 %v9223, %v9367
    %v9369 = vpop.f32.mrb[0].mxu0
    %9370 = vmatprep.mubr.f32.mxu0 0.0
    %9371 = vmatmul.mubr.f32.gmra.mrb[0].mxu0 %v8949
    %v9372 = vpop.f32.mrb[0].mxu0
    %v9373 = vadd.f32 %v9228, %v9372
    %v9374 = vpop.f32.mrb[0].mxu0
    %9375 = vmatprep.mubr.f32.mxu0 0.0
    %9376 = vmatmul.mubr.f32.gmra.mrb[0].mxu0 %v8952
    %v9377 = vpop.f32.mrb[0].mxu0
    %v9378 = vadd.f32 %v9233, %v9377
    %v9379 = vpop.f32.mrb[0].mxu0
    %9380 = vmatprep.mubr.f32.mxu0 0.0
    %9381 = vmatmul.mubr.f32.gmra.mrb[0].mxu0 %v8955
    %v9382 = vpop.f32.mrb[0].mxu0
    %v9383 = vadd.f32 %v9238, %v9382
    %v9384 = vpop.f32.mrb[0].mxu0
    %9385 = vmatprep.mubr.f32.mxu0 0.0
    %9386 = vmatmul.mubr.f32.gmra.mrb[0].mxu0 %v8958
    %v9387 = vpop.f32.mrb[0].mxu0
    %v9388 = vadd.f32 %v9243, %v9387
    %v9389 = vpop.f32.mrb[0].mxu0
    %9390 = vmatprep.mubr.f32.mxu0 0.0
    %9391 = vmatmul.mubr.f32.gmra.mrb[0].mxu0 %v8961
    %v9392 = vpop.f32.mrb[0].mxu0
    %v9393 = vadd.f32 %v9248, %v9392
    %v9394 = vpop.f32.mrb[0].mxu0
    %9395 = vmatprep.mubr.f32.mxu0 0.0
    %9396 = vmatmul.mubr.f32.gmra.mrb[0].mxu0 %v8964
    %v9397 = vpop.f32.mrb[0].mxu0
    %v9398 = vadd.f32 %v9253, %v9397
    %v9399 = vpop.f32.mrb[0].mxu0
    %9400 = vdwg.mxu0
    %v9401 = vmax.f32 %v9323, 0.0
    %v9402 = vmax.f32 %v9328, 0.0
    %v9403 = vmax.f32 %v9333, 0.0
    %v9404 = vmax.f32 %v9338, 0.0
    %v9405 = vmax.f32 %v9343, 0.0
    %v9406 = vmax.f32 %v9348, 0.0
    %v9407 = vmax.f32 %v9353, 0.0
    %v9408 = vmax.f32 %v9358, 0.0
    %v9409 = vmax.f32 %v9363, 0.0
    %v9410 = vmax.f32 %v9368, 0.0
    %v9411 = vmax.f32 %v9373, 0.0
    %v9412 = vmax.f32 %v9378, 0.0
    %v9413 = vmax.f32 %v9383, 0.0
    %v9414 = vmax.f32 %v9388, 0.0
    %v9415 = vmax.f32 %v9393, 0.0
    %v9416 = vmax.f32 %v9398, 0.0
    %9417 = vst.msk [vmem:[#allocation8] sm:$0xff] %vm7883, %v9401
    %9418 = vst.msk [vmem:[#allocation8 + $0x8] sm:$0xff] %vm7883, %v9402
    %9419 = vst.msk [vmem:[#allocation8 + $0x10] sm:$0xff] %vm7883, %v9403
    %9420 = vst.msk [vmem:[#allocation8 + $0x18] sm:$0xff] %vm7883, %v9404
    %9421 = vst.msk [vmem:[#allocation8 + $0x20] sm:$0xff] %vm7883, %v9405
    %9422 = vst.msk [vmem:[#allocation8 + $0x28] sm:$0xff] %vm7883, %v9406
    %9423 = vst.msk [vmem:[#allocation8 + $0x30] sm:$0xff] %vm7883, %v9407
    %9424 = vst.msk [vmem:[#allocation8 + $0x38] sm:$0xff] %vm7883, %v9408
    %9425 = vst.msk [vmem:[#allocation8 + $0x40] sm:$0xff] %vm7883, %v9409
    %9426 = vst.msk [vmem:[#allocation8 + $0x48] sm:$0xff] %vm7883, %v9410
    %9427 = vst.msk [vmem:[#allocation8 + $0x50] sm:$0xff] %vm7883, %v9411
    %9428 = vst.msk [vmem:[#allocation8 + $0x58] sm:$0xff] %vm7883, %v9412
    %9429 = vst.msk [vmem:[#allocation8 + $0x60] sm:$0xff] %vm7883, %v9413
    %9430 = vst.msk [vmem:[#allocation8 + $0x68] sm:$0xff] %vm7883, %v9414
    %9431 = vst.msk [vmem:[#allocation8 + $0x70] sm:$0xff] %vm7883, %v9415
    %9432 = vst.msk [vmem:[#allocation8 + $0x78] sm:$0xff] %vm7883, %v9416
    %v9433 = vld [vmem:[#allocation8] ss:$2 sm:$0xf]
    %s9434 = scalar_lea.vmem [#allocation8], 8
    %v9435 = vld [vmem:[%s9434] ss:$2 sm:$0xf]
    %s9436 = scalar_lea.vmem [#allocation8], 16
    %v9437 = vld [vmem:[%s9436] ss:$2 sm:$0xf]
    %s9438 = scalar_lea.vmem [#allocation8], 24
    %v9439 = vld [vmem:[%s9438] ss:$2 sm:$0xf]
    %s9440 = scalar_lea.vmem [#allocation8], 32
    %v9441 = vld [vmem:[%s9440] ss:$2 sm:$0xf]
    %s9442 = scalar_lea.vmem [#allocation8], 40
    %v9443 = vld [vmem:[%s9442] ss:$2 sm:$0xf]
    %s9444 = scalar_lea.vmem [#allocation8], 48
    %v9445 = vld [vmem:[%s9444] ss:$2 sm:$0xf]
    %s9446 = scalar_lea.vmem [#allocation8], 56
    %v9447 = vld [vmem:[%s9446] ss:$2 sm:$0xf]
    %s9448 = scalar_lea.vmem [#allocation8], 64
    %v9449 = vld [vmem:[%s9448] ss:$2 sm:$0xf]
    %s9450 = scalar_lea.vmem [#allocation8], 72
    %v9451 = vld [vmem:[%s9450] ss:$2 sm:$0xf]
    %s9452 = scalar_lea.vmem [#allocation8], 80
    %v9453 = vld [vmem:[%s9452] ss:$2 sm:$0xf]
    %s9454 = scalar_lea.vmem [#allocation8], 88
    %v9455 = vld [vmem:[%s9454] ss:$2 sm:$0xf]
    %s9456 = scalar_lea.vmem [#allocation8], 96
    %v9457 = vld [vmem:[%s9456] ss:$2 sm:$0xf]
    %s9458 = scalar_lea.vmem [#allocation8], 104
    %v9459 = vld [vmem:[%s9458] ss:$2 sm:$0xf]
    %s9460 = scalar_lea.vmem [#allocation8], 112
    %v9461 = vld [vmem:[%s9460] ss:$2 sm:$0xf]
    %s9462 = scalar_lea.vmem [#allocation8], 120
    %v9463 = vld [vmem:[%s9462] ss:$2 sm:$0xf]
    %s9464 = scalar_lea.vmem [#allocation8], 1
    %v9465 = vld [vmem:[%s9464] ss:$2 sm:$0xf]
    %s9466 = scalar_lea.vmem [#allocation8], 9
    %v9467 = vld [vmem:[%s9466] ss:$2 sm:$0xf]
    %s9468 = scalar_lea.vmem [#allocation8], 17
    %v9469 = vld [vmem:[%s9468] ss:$2 sm:$0xf]
    %s9470 = scalar_lea.vmem [#allocation8], 25
    %v9471 = vld [vmem:[%s9470] ss:$2 sm:$0xf]
    %s9472 = scalar_lea.vmem [#allocation8], 33
    %v9473 = vld [vmem:[%s9472] ss:$2 sm:$0xf]
    %s9474 = scalar_lea.vmem [#allocation8], 41
    %v9475 = vld [vmem:[%s9474] ss:$2 sm:$0xf]
    %s9476 = scalar_lea.vmem [#allocation8], 49
    %v9477 = vld [vmem:[%s9476] ss:$2 sm:$0xf]
    %s9478 = scalar_lea.vmem [#allocation8], 57
    %v9479 = vld [vmem:[%s9478] ss:$2 sm:$0xf]
    %s9480 = scalar_lea.vmem [#allocation8], 65
    %v9481 = vld [vmem:[%s9480] ss:$2 sm:$0xf]
    %s9482 = scalar_lea.vmem [#allocation8], 73
    %v9483 = vld [vmem:[%s9482] ss:$2 sm:$0xf]
    %s9484 = scalar_lea.vmem [#allocation8], 81
    %v9485 = vld [vmem:[%s9484] ss:$2 sm:$0xf]
    %s9486 = scalar_lea.vmem [#allocation8], 89
    %v9487 = vld [vmem:[%s9486] ss:$2 sm:$0xf]
    %s9488 = scalar_lea.vmem [#allocation8], 97
    %v9489 = vld [vmem:[%s9488] ss:$2 sm:$0xf]
    %s9490 = scalar_lea.vmem [#allocation8], 105
    %v9491 = vld [vmem:[%s9490] ss:$2 sm:$0xf]
    %s9492 = scalar_lea.vmem [#allocation8], 113
    %v9493 = vld [vmem:[%s9492] ss:$2 sm:$0xf]
    %s9494 = scalar_lea.vmem [#allocation8], 121
    %v9495 = vld [vmem:[%s9494] ss:$2 sm:$0xf]
    %v9496 = vmax.f32 %v9433, %v9465
    %v9497 = vmax.f32 %v9435, %v9467
    %v9498 = vmax.f32 %v9437, %v9469
    %v9499 = vmax.f32 %v9439, %v9471
    %v9500 = vmax.f32 %v9441, %v9473
    %v9501 = vmax.f32 %v9443, %v9475
    %v9502 = vmax.f32 %v9445, %v9477
    %v9503 = vmax.f32 %v9447, %v9479
    %v9504 = vmax.f32 %v9449, %v9481
    %v9505 = vmax.f32 %v9451, %v9483
    %v9506 = vmax.f32 %v9453, %v9485
    %v9507 = vmax.f32 %v9455, %v9487
    %v9508 = vmax.f32 %v9457, %v9489
    %v9509 = vmax.f32 %v9459, %v9491
    %v9510 = vmax.f32 %v9461, %v9493
    %v9511 = vmax.f32 %v9463, %v9495
    %vm9512 = vcmask 519168
    %v9513 = vsel %vm9512, %v9496, -inf
    %v9514 = vsel %vm9512, %v9497, -inf
    %v9515 = vmax.f32 %v9513, %v9514
    %v9516 = vsel %vm9512, %v9498, -inf
    %v9517 = vsel %vm9512, %v9499, -inf
    %v9518 = vmax.f32 %v9516, %v9517
    %v9519 = vsel %vm9512, %v9500, -inf
    %v9520 = vsel %vm9512, %v9501, -inf
    %v9521 = vmax.f32 %v9519, %v9520
    %v9522 = vsel %vm9512, %v9502, -inf
    %v9523 = vsel %vm9512, %v9503, -inf
    %v9524 = vmax.f32 %v9522, %v9523
    %v9525 = vsel %vm9512, %v9504, -inf
    %v9526 = vsel %vm9512, %v9505, -inf
    %v9527 = vmax.f32 %v9525, %v9526
    %v9528 = vsel %vm9512, %v9506, -inf
    %v9529 = vsel %vm9512, %v9507, -inf
    %v9530 = vmax.f32 %v9528, %v9529
    %v9531 = vsel %vm9512, %v9508, -inf
    %v9532 = vsel %vm9512, %v9509, -inf
    %v9533 = vmax.f32 %v9531, %v9532
    %v9534 = vsel %vm9512, %v9510, -inf
    %v9535 = vsel %vm9512, %v9511, -inf
    %v9536 = vmax.f32 %v9534, %v9535
    %v9540 = vunpack.c.l.s4 1983009808
    %v9541 = vunpack.c.0.s8 %v9540
    %v9542 = vlaneseq
    %v9543 = vshrl.u32 %v9542, 7
    %v9544 = vsub.s32 %v9541, %v9543
    %v9545 = vrot.slane %v9515, %v9544
    %v9547 = vunpack.c.l.s4 1983009808
    %v9548 = vunpack.c.0.s8 %v9547
    %v9549 = vlaneseq
    %v9550 = vshrl.u32 %v9549, 7
    %v9551 = vsub.s32 %v9548, %v9550
    %v9552 = vrot.slane %v9527, %v9551
    %vm9553 = vcmask 1044484
    %v9554 = vsel %vm9553, %v9545, %v9545
    %vm9555 = vcmask 1046534
    %v9556 = vsel %vm9555, %v9545, %v9554
    %v9557 = vrot.slane %v9552, 7
    %vm9558 = vcmask 1041409
    %v9559 = vsel %vm9558, %v9557, %v9556
    %vm9560 = vcmask 1043459
    %v9561 = vsel %vm9560, %v9557, %v9559
    %vm9562 = vcmask 1045509
    %v9563 = vsel %vm9562, %v9557, %v9561
    %vm9564 = vcmask 1047559
    %v9565 = vsel %vm9564, %v9557, %v9563
    %9567 = vst.msk [vmem:[%s8] sm:$0x3] %vm7949, %v9565
    %v9568 = vrot.slane %v9545, 1
    %v9569 = vsel %vm9553, %v9568, %v9568
    %v9570 = vsel %vm9555, %v9568, %v9569
    %v9571 = vsel %vm9558, %v9552, %v9570
    %v9572 = vsel %vm9560, %v9552, %v9571
    %v9573 = vsel %vm9562, %v9552, %v9572
    %v9574 = vsel %vm9564, %v9552, %v9573
    %9575 = vrot.lane.b32.xlu0 %v9574, 64
    %v9576 = vpop.permute.xlu0 %9575
    %vm9578 = vcmask 1041920
    %9579 = vst.msk [vmem:[%s8] sm:$0x3] %vm9578, %v9576
    %v9580 = vcombine.high %v9545, %v9545
    %v9581 = vcombine.high %v9552, %v9552
    %v9582 = vsel %vm9553, %v9580, %v9580
    %v9583 = vsel %vm9555, %v9580, %v9582
    %v9584 = vrot.slane %v9581, 7
    %v9585 = vsel %vm9558, %v9584, %v9583
    %v9586 = vsel %vm9560, %v9584, %v9585
    %v9587 = vsel %vm9562, %v9584, %v9586
    %v9588 = vsel %vm9564, %v9584, %v9587
    %9590 = vst.msk [vmem:[%s8 + $0x2] sm:$0x3] %vm7949, %v9588
    %v9591 = vrot.slane %v9580, 1
    %v9592 = vsel %vm9553, %v9591, %v9591
    %v9593 = vsel %vm9555, %v9591, %v9592
    %v9594 = vsel %vm9558, %v9581, %v9593
    %v9595 = vsel %vm9560, %v9581, %v9594
    %v9596 = vsel %vm9562, %v9581, %v9595
    %v9597 = vsel %vm9564, %v9581, %v9596
    %9598 = vrot.lane.b32.xlu0 %v9597, 64
    %v9599 = vpop.permute.xlu0 %9598
    %9601 = vst.msk [vmem:[%s8 + $0x2] sm:$0x3] %vm9578, %v9599
    %v9605 = vunpack.c.l.s4 1983009808
    %v9606 = vunpack.c.0.s8 %v9605
    %v9607 = vlaneseq
    %v9608 = vshrl.u32 %v9607, 7
    %v9609 = vsub.s32 %v9606, %v9608
    %v9610 = vrot.slane %v9518, %v9609
    %v9612 = vunpack.c.l.s4 1983009808
    %v9613 = vunpack.c.0.s8 %v9612
    %v9614 = vlaneseq
    %v9615 = vshrl.u32 %v9614, 7
    %v9616 = vsub.s32 %v9613, %v9615
    %v9617 = vrot.slane %v9530, %v9616
    %v9618 = vsel %vm9553, %v9610, %v9610
    %v9619 = vsel %vm9555, %v9610, %v9618
    %v9620 = vrot.slane %v9617, 7
    %v9621 = vsel %vm9558, %v9620, %v9619
    %v9622 = vsel %vm9560, %v9620, %v9621
    %v9623 = vsel %vm9562, %v9620, %v9622
    %v9624 = vsel %vm9564, %v9620, %v9623
    %9626 = vst.msk [vmem:[%s8 + $0x4] sm:$0x3] %vm7949, %v9624
    %v9627 = vrot.slane %v9610, 1
    %v9628 = vsel %vm9553, %v9627, %v9627
    %v9629 = vsel %vm9555, %v9627, %v9628
    %v9630 = vsel %vm9558, %v9617, %v9629
    %v9631 = vsel %vm9560, %v9617, %v9630
    %v9632 = vsel %vm9562, %v9617, %v9631
    %v9633 = vsel %vm9564, %v9617, %v9632
    %9634 = vrot.lane.b32.xlu0 %v9633, 64
    %v9635 = vpop.permute.xlu0 %9634
    %9637 = vst.msk [vmem:[%s8 + $0x4] sm:$0x3] %vm9578, %v9635
    %v9638 = vcombine.high %v9610, %v9610
    %v9639 = vcombine.high %v9617, %v9617
    %v9640 = vsel %vm9553, %v9638, %v9638
    %v9641 = vsel %vm9555, %v9638, %v9640
    %v9642 = vrot.slane %v9639, 7
    %v9643 = vsel %vm9558, %v9642, %v9641
    %v9644 = vsel %vm9560, %v9642, %v9643
    %v9645 = vsel %vm9562, %v9642, %v9644
    %v9646 = vsel %vm9564, %v9642, %v9645
    %9648 = vst.msk [vmem:[%s8 + $0x6] sm:$0x3] %vm7949, %v9646
    %v9649 = vrot.slane %v9638, 1
    %v9650 = vsel %vm9553, %v9649, %v9649
    %v9651 = vsel %vm9555, %v9649, %v9650
    %v9652 = vsel %vm9558, %v9639, %v9651
    %v9653 = vsel %vm9560, %v9639, %v9652
    %v9654 = vsel %vm9562, %v9639, %v9653
    %v9655 = vsel %vm9564, %v9639, %v9654
    %9656 = vrot.lane.b32.xlu0 %v9655, 64
    %v9657 = vpop.permute.xlu0 %9656
    %9659 = vst.msk [vmem:[%s8 + $0x6] sm:$0x3] %vm9578, %v9657
    %v9663 = vunpack.c.l.s4 1983009808
    %v9664 = vunpack.c.0.s8 %v9663
    %v9665 = vlaneseq
    %v9666 = vshrl.u32 %v9665, 7
    %v9667 = vsub.s32 %v9664, %v9666
    %v9668 = vrot.slane %v9521, %v9667
    %v9670 = vunpack.c.l.s4 1983009808
    %v9671 = vunpack.c.0.s8 %v9670
    %v9672 = vlaneseq
    %v9673 = vshrl.u32 %v9672, 7
    %v9674 = vsub.s32 %v9671, %v9673
    %v9675 = vrot.slane %v9533, %v9674
    %v9676 = vsel %vm9553, %v9668, %v9668
    %v9677 = vsel %vm9555, %v9668, %v9676
    %v9678 = vrot.slane %v9675, 7
    %v9679 = vsel %vm9558, %v9678, %v9677
    %v9680 = vsel %vm9560, %v9678, %v9679
    %v9681 = vsel %vm9562, %v9678, %v9680
    %v9682 = vsel %vm9564, %v9678, %v9681
    %9684 = vst.msk [vmem:[%s8 + $0x8] sm:$0x3] %vm7949, %v9682
    %v9685 = vrot.slane %v9668, 1
    %v9686 = vsel %vm9553, %v9685, %v9685
    %v9687 = vsel %vm9555, %v9685, %v9686
    %v9688 = vsel %vm9558, %v9675, %v9687
    %v9689 = vsel %vm9560, %v9675, %v9688
    %v9690 = vsel %vm9562, %v9675, %v9689
    %v9691 = vsel %vm9564, %v9675, %v9690
    %9692 = vrot.lane.b32.xlu0 %v9691, 64
    %v9693 = vpop.permute.xlu0 %9692
    %9695 = vst.msk [vmem:[%s8 + $0x8] sm:$0x3] %vm9578, %v9693
    %v9696 = vcombine.high %v9668, %v9668
    %v9697 = vcombine.high %v9675, %v9675
    %v9698 = vsel %vm9553, %v9696, %v9696
    %v9699 = vsel %vm9555, %v9696, %v9698
    %v9700 = vrot.slane %v9697, 7
    %v9701 = vsel %vm9558, %v9700, %v9699
    %v9702 = vsel %vm9560, %v9700, %v9701
    %v9703 = vsel %vm9562, %v9700, %v9702
    %v9704 = vsel %vm9564, %v9700, %v9703
    %9706 = vst.msk [vmem:[%s8 + $0xa] sm:$0x3] %vm7949, %v9704
    %v9707 = vrot.slane %v9696, 1
    %v9708 = vsel %vm9553, %v9707, %v9707
    %v9709 = vsel %vm9555, %v9707, %v9708
    %v9710 = vsel %vm9558, %v9697, %v9709
    %v9711 = vsel %vm9560, %v9697, %v9710
    %v9712 = vsel %vm9562, %v9697, %v9711
    %v9713 = vsel %vm9564, %v9697, %v9712
    %9714 = vrot.lane.b32.xlu0 %v9713, 64
    %v9715 = vpop.permute.xlu0 %9714
    %9717 = vst.msk [vmem:[%s8 + $0xa] sm:$0x3] %vm9578, %v9715
    %v9721 = vunpack.c.l.s4 1983009808
    %v9722 = vunpack.c.0.s8 %v9721
    %v9723 = vlaneseq
    %v9724 = vshrl.u32 %v9723, 7
    %v9725 = vsub.s32 %v9722, %v9724
    %v9726 = vrot.slane %v9524, %v9725
    %v9728 = vunpack.c.l.s4 1983009808
    %v9729 = vunpack.c.0.s8 %v9728
    %v9730 = vlaneseq
    %v9731 = vshrl.u32 %v9730, 7
    %v9732 = vsub.s32 %v9729, %v9731
    %v9733 = vrot.slane %v9536, %v9732
    %v9734 = vsel %vm9553, %v9726, %v9726
    %v9735 = vsel %vm9555, %v9726, %v9734
    %v9736 = vrot.slane %v9733, 7
    %v9737 = vsel %vm9558, %v9736, %v9735
    %v9738 = vsel %vm9560, %v9736, %v9737
    %v9739 = vsel %vm9562, %v9736, %v9738
    %v9740 = vsel %vm9564, %v9736, %v9739
    %9742 = vst.msk [vmem:[%s8 + $0xc] sm:$0x3] %vm7949, %v9740
    %v9743 = vrot.slane %v9726, 1
    %v9744 = vsel %vm9553, %v9743, %v9743
    %v9745 = vsel %vm9555, %v9743, %v9744
    %v9746 = vsel %vm9558, %v9733, %v9745
    %v9747 = vsel %vm9560, %v9733, %v9746
    %v9748 = vsel %vm9562, %v9733, %v9747
    %v9749 = vsel %vm9564, %v9733, %v9748
    %9750 = vrot.lane.b32.xlu0 %v9749, 64
    %v9751 = vpop.permute.xlu0 %9750
    %9753 = vst.msk [vmem:[%s8 + $0xc] sm:$0x3] %vm9578, %v9751
    %v9754 = vcombine.high %v9726, %v9726
    %v9755 = vcombine.high %v9733, %v9733
    %v9756 = vsel %vm9553, %v9754, %v9754
    %v9757 = vsel %vm9555, %v9754, %v9756
    %v9758 = vrot.slane %v9755, 7
    %v9759 = vsel %vm9558, %v9758, %v9757
    %v9760 = vsel %vm9560, %v9758, %v9759
    %v9761 = vsel %vm9562, %v9758, %v9760
    %v9762 = vsel %vm9564, %v9758, %v9761
    %9764 = vst.msk [vmem:[%s8 + $0xe] sm:$0x3] %vm7949, %v9762
    %v9765 = vrot.slane %v9754, 1
    %v9766 = vsel %vm9553, %v9765, %v9765
    %v9767 = vsel %vm9555, %v9765, %v9766
    %v9768 = vsel %vm9558, %v9755, %v9767
    %v9769 = vsel %vm9560, %v9755, %v9768
    %v9770 = vsel %vm9562, %v9755, %v9769
    %v9771 = vsel %vm9564, %v9755, %v9770
    %9772 = vrot.lane.b32.xlu0 %v9771, 64
    %v9773 = vpop.permute.xlu0 %9772
    %9775 = vst.msk [vmem:[%s8 + $0xe] sm:$0x3] %vm9578, %v9773
    %v9776 = vld [vmem:[%s8] sm:$0xff]
    %v9777 = vld [vmem:[%s8 + $0x8] sm:$0xff]
    %v9778 = vld [vmem:[%s7] sm:$0xff]
    %v9779 = vld [vmem:[%s7 + $0x8] sm:$0xff]
    %v9780 = vld [vmem:[%s7 + $0x10] sm:$0xff]
    %v9781 = vld [vmem:[%s7 + $0x18] sm:$0xff]
    %v9782 = vld [vmem:[%s7 + $0x20] sm:$0xff]
    %v9783 = vld [vmem:[%s7 + $0x28] sm:$0xff]
    %v9784 = vld [vmem:[%s7 + $0x30] sm:$0xff]
    %v9785 = vld [vmem:[%s7 + $0x38] sm:$0xff]
    %v9786 = vld [vmem:[%s7 + $0x40] sm:$0xff]
    %v9787 = vld [vmem:[%s7 + $0x48] sm:$0xff]
    %v9788 = vld [vmem:[%s7 + $0x50] sm:$0xff]
    %v9789 = vld [vmem:[%s7 + $0x58] sm:$0xff]
    %v9790 = vld [vmem:[%s7 + $0x60] sm:$0xff]
    %v9791 = vld [vmem:[%s7 + $0x68] sm:$0xff]
    %v9792 = vld [vmem:[%s7 + $0x70] sm:$0xff]
    %v9793 = vld [vmem:[%s7 + $0x78] sm:$0xff]
    %v9794 = vld [vmem:[%s7 + $0x80] sm:$0xff]
    %v9795 = vld [vmem:[%s7 + $0x88] sm:$0xff]
    %v9796 = vld [vmem:[%s7 + $0x90] sm:$0xff]
    %v9797 = vld [vmem:[%s7 + $0x98] sm:$0xff]
    %v9798 = vld [vmem:[%s7 + $0xa0] sm:$0xff]
    %v9799 = vld [vmem:[%s7 + $0xa8] sm:$0xff]
    %v9800 = vld [vmem:[%s7 + $0xb0] sm:$0xff]
    %v9801 = vld [vmem:[%s7 + $0xb8] sm:$0xff]
    %v9802 = vld [vmem:[%s7 + $0xc0] sm:$0xff]
    %v9803 = vld [vmem:[%s7 + $0xc8] sm:$0xff]
    %v9804 = vld [vmem:[%s7 + $0xd0] sm:$0xff]
    %v9805 = vld [vmem:[%s7 + $0xd8] sm:$0xff]
    %v9806 = vld [vmem:[%s7 + $0xe0] sm:$0xff]
    %v9807 = vld [vmem:[%s7 + $0xe8] sm:$0xff]
    %v9808 = vld [vmem:[%s7 + $0xf0] sm:$0xff]
    %v9809 = vld [vmem:[%s7 + $0xf8] sm:$0xff]
    %v9810 = vld [vmem:[%s7 + $0x100] sm:$0xff]
    %v9811 = vld [vmem:[%s7 + $0x108] sm:$0xff]
    %v9812 = vld [vmem:[%s7 + $0x110] sm:$0xff]
    %v9813 = vld [vmem:[%s7 + $0x118] sm:$0xff]
    %v9814 = vld [vmem:[%s7 + $0x120] sm:$0xff]
    %v9815 = vld [vmem:[%s7 + $0x128] sm:$0xff]
    %v9816 = vld [vmem:[%s7 + $0x130] sm:$0xff]
    %v9817 = vld [vmem:[%s7 + $0x138] sm:$0xff]
    %v9818 = vld [vmem:[%s7 + $0x140] sm:$0xff]
    %v9819 = vld [vmem:[%s7 + $0x148] sm:$0xff]
    %v9820 = vld [vmem:[%s7 + $0x150] sm:$0xff]
    %v9821 = vld [vmem:[%s7 + $0x158] sm:$0xff]
    %v9822 = vld [vmem:[%s7 + $0x160] sm:$0xff]
    %v9823 = vld [vmem:[%s7 + $0x168] sm:$0xff]
    %v9824 = vld [vmem:[%s7 + $0x170] sm:$0xff]
    %v9825 = vld [vmem:[%s7 + $0x178] sm:$0xff]
    %v9826 = vld [vmem:[%s7 + $0x180] sm:$0xff]
    %v9827 = vld [vmem:[%s7 + $0x188] sm:$0xff]
    %v9828 = vld [vmem:[%s7 + $0x190] sm:$0xff]
    %v9829 = vld [vmem:[%s7 + $0x198] sm:$0xff]
    %v9830 = vld [vmem:[%s7 + $0x1a0] sm:$0xff]
    %v9831 = vld [vmem:[%s7 + $0x1a8] sm:$0xff]
    %v9832 = vld [vmem:[%s7 + $0x1b0] sm:$0xff]
    %v9833 = vld [vmem:[%s7 + $0x1b8] sm:$0xff]
    %v9834 = vld [vmem:[%s7 + $0x1c0] sm:$0xff]
    %v9835 = vld [vmem:[%s7 + $0x1c8] sm:$0xff]
    %v9836 = vld [vmem:[%s7 + $0x1d0] sm:$0xff]
    %v9837 = vld [vmem:[%s7 + $0x1d8] sm:$0xff]
    %v9838 = vld [vmem:[%s7 + $0x1e0] sm:$0xff]
    %v9839 = vld [vmem:[%s7 + $0x1e8] sm:$0xff]
    %v9840 = vld [vmem:[%s7 + $0x1f0] sm:$0xff]
    %v9841 = vld [vmem:[%s7 + $0x1f8] sm:$0xff]
    %v9842 = vld [vmem:[%s7 + $0x200] sm:$0xff]
    %v9843 = vld [vmem:[%s7 + $0x208] sm:$0xff]
    %v9844 = vld [vmem:[%s7 + $0x210] sm:$0xff]
    %v9845 = vld [vmem:[%s7 + $0x218] sm:$0xff]
    %v9846 = vld [vmem:[%s7 + $0x220] sm:$0xff]
    %v9847 = vld [vmem:[%s7 + $0x228] sm:$0xff]
    %v9848 = vld [vmem:[%s7 + $0x230] sm:$0xff]
    %v9849 = vld [vmem:[%s7 + $0x238] sm:$0xff]
    %v9850 = vld [vmem:[%s7 + $0x240] sm:$0xff]
    %v9851 = vld [vmem:[%s7 + $0x248] sm:$0xff]
    %v9852 = vld [vmem:[%s7 + $0x250] sm:$0xff]
    %v9853 = vld [vmem:[%s7 + $0x258] sm:$0xff]
    %v9854 = vld [vmem:[%s7 + $0x260] sm:$0xff]
    %v9855 = vld [vmem:[%s7 + $0x268] sm:$0xff]
    %v9856 = vld [vmem:[%s7 + $0x270] sm:$0xff]
    %v9857 = vld [vmem:[%s7 + $0x278] sm:$0xff]
    %v9858 = vld [vmem:[%s7 + $0x280] sm:$0xff]
    %v9859 = vld [vmem:[%s7 + $0x288] sm:$0xff]
    %v9860 = vld [vmem:[%s7 + $0x290] sm:$0xff]
    %v9861 = vld [vmem:[%s7 + $0x298] sm:$0xff]
    %v9862 = vld [vmem:[%s7 + $0x2a0] sm:$0xff]
    %v9863 = vld [vmem:[%s7 + $0x2a8] sm:$0xff]
    %v9864 = vld [vmem:[%s7 + $0x2b0] sm:$0xff]
    %v9865 = vld [vmem:[%s7 + $0x2b8] sm:$0xff]
    %v9866 = vld [vmem:[%s7 + $0x2c0] sm:$0xff]
    %v9867 = vld [vmem:[%s7 + $0x2c8] sm:$0xff]
    %v9868 = vld [vmem:[%s7 + $0x2d0] sm:$0xff]
    %v9869 = vld [vmem:[%s7 + $0x2d8] sm:$0xff]
    %v9870 = vld [vmem:[%s7 + $0x2e0] sm:$0xff]
    %v9871 = vld [vmem:[%s7 + $0x2e8] sm:$0xff]
    %v9872 = vld [vmem:[%s7 + $0x2f0] sm:$0xff]
    %v9873 = vld [vmem:[%s7 + $0x2f8] sm:$0xff]
    %v9874 = vld [vmem:[%s7 + $0x300] sm:$0xff]
    %v9875 = vld [vmem:[%s7 + $0x308] sm:$0xff]
    %v9876 = vld [vmem:[%s7 + $0x310] sm:$0xff]
    %v9877 = vld [vmem:[%s7 + $0x318] sm:$0xff]
    %v9878 = vld [vmem:[%s7 + $0x320] sm:$0xff]
    %v9879 = vld [vmem:[%s7 + $0x328] sm:$0xff]
    %v9880 = vld [vmem:[%s7 + $0x330] sm:$0xff]
    %v9881 = vld [vmem:[%s7 + $0x338] sm:$0xff]
    %v9882 = vld [vmem:[%s7 + $0x340] sm:$0xff]
    %v9883 = vld [vmem:[%s7 + $0x348] sm:$0xff]
    %v9884 = vld [vmem:[%s7 + $0x350] sm:$0xff]
    %v9885 = vld [vmem:[%s7 + $0x358] sm:$0xff]
    %v9886 = vld [vmem:[%s7 + $0x360] sm:$0xff]
    %v9887 = vld [vmem:[%s7 + $0x368] sm:$0xff]
    %v9888 = vld [vmem:[%s7 + $0x370] sm:$0xff]
    %v9889 = vld [vmem:[%s7 + $0x378] sm:$0xff]
    %v9890 = vld [vmem:[%s7 + $0x380] sm:$0xff]
    %v9891 = vld [vmem:[%s7 + $0x388] sm:$0xff]
    %v9892 = vld [vmem:[%s7 + $0x390] sm:$0xff]
    %v9893 = vld [vmem:[%s7 + $0x398] sm:$0xff]
    %v9894 = vld [vmem:[%s7 + $0x3a0] sm:$0xff]
    %v9895 = vld [vmem:[%s7 + $0x3a8] sm:$0xff]
    %v9896 = vld [vmem:[%s7 + $0x3b0] sm:$0xff]
    %v9897 = vld [vmem:[%s7 + $0x3b8] sm:$0xff]
    %v9898 = vld [vmem:[%s7 + $0x3c0] sm:$0xff]
    %v9899 = vld [vmem:[%s7 + $0x3c8] sm:$0xff]
    %v9900 = vld [vmem:[%s7 + $0x3d0] sm:$0xff]
    %v9901 = vld [vmem:[%s7 + $0x3d8] sm:$0xff]
    %v9902 = vld [vmem:[%s7 + $0x3e0] sm:$0xff]
    %v9903 = vld [vmem:[%s7 + $0x3e8] sm:$0xff]
    %v9904 = vld [vmem:[%s7 + $0x3f0] sm:$0xff]
    %v9905 = vld [vmem:[%s7 + $0x3f8] sm:$0xff]
    %v9908 = vcombine.high %v9776, %v9776
    %v9910 = vunpack.c.l.s4 1983009808
    %v9911 = vunpack.c.0.s8 %v9910
    %v9912 = vlaneseq
    %v9913 = vshrl.u32 %v9912, 7
    %v9914 = vsub.s32 %v9911, %v9913
    %v9915 = vrot.slane %v9776, %v9914
    %v9917 = vunpack.c.l.s4 1983009808
    %v9918 = vunpack.c.0.s8 %v9917
    %v9919 = vlaneseq
    %v9920 = vshrl.u32 %v9919, 7
    %v9921 = vsub.s32 %v9918, %v9920
    %v9922 = vrot.slane %v9908, %v9921
    %v9923 = vcombine.high %v9915, %v9915
    %v9924 = vcombine.high %v9922, %v9922
    %v9925 = vcombine.high %v9777, %v9777
    %v9927 = vunpack.c.l.s4 1983009808
    %v9928 = vunpack.c.0.s8 %v9927
    %v9929 = vlaneseq
    %v9930 = vshrl.u32 %v9929, 7
    %v9931 = vsub.s32 %v9928, %v9930
    %v9932 = vrot.slane %v9777, %v9931
    %v9934 = vunpack.c.l.s4 1983009808
    %v9935 = vunpack.c.0.s8 %v9934
    %v9936 = vlaneseq
    %v9937 = vshrl.u32 %v9936, 7
    %v9938 = vsub.s32 %v9935, %v9937
    %v9939 = vrot.slane %v9925, %v9938
    %v9940 = vcombine.high %v9932, %v9932
    %v9941 = vcombine.high %v9939, %v9939
    %9950 = vmatprep.subr.mxu0 0.0
    %9951 = vmatpush1.msra.mxu0 %v9778
    %9952 = vmatprep.subr.mxu0 0.0
    %9953 = vmatpush1.msra.mxu0 %v9779
    %9954 = vmatprep.subr.mxu0 0.0
    %9955 = vmatpush1.msra.mxu0 %v9780
    %9956 = vmatprep.subr.mxu0 0.0
    %9957 = vmatpush1.msra.mxu0 %v9781
    %9958 = vmatprep.subr.mxu0 0.0
    %9959 = vmatpush1.msra.mxu0 %v9782
    %9960 = vmatprep.subr.mxu0 0.0
    %9961 = vmatpush1.msra.mxu0 %v9783
    %9962 = vmatprep.subr.mxu0 0.0
    %9963 = vmatpush1.msra.mxu0 %v9784
    %9964 = vmatprep.subr.mxu0 0.0
    %9965 = vmatpush1.msra.mxu0 %v9785
    %9966 = vmatprep.subr.mxu0 0.0
    %9967 = vmatpush1.msra.mxu0 %v9786
    %9968 = vmatprep.subr.mxu0 0.0
    %9969 = vmatpush1.msra.mxu0 %v9787
    %9970 = vmatprep.subr.mxu0 0.0
    %9971 = vmatpush1.msra.mxu0 %v9788
    %9972 = vmatprep.subr.mxu0 0.0
    %9973 = vmatpush1.msra.mxu0 %v9789
    %9974 = vmatprep.subr.mxu0 0.0
    %9975 = vmatpush1.msra.mxu0 %v9790
    %9976 = vmatprep.subr.mxu0 0.0
    %9977 = vmatpush1.msra.mxu0 %v9791
    %9978 = vmatprep.subr.mxu0 0.0
    %9979 = vmatpush1.msra.mxu0 %v9792
    %9980 = vmatprep.subr.mxu0 0.0
    %9981 = vmatpush1.msra.mxu0 %v9793
    %9982 = vmatprep.subr.mxu0 0.0
    %9983 = vmatpush1.msra.mxu0 %v9794
    %9984 = vmatprep.subr.mxu0 0.0
    %9985 = vmatpush1.msra.mxu0 %v9795
    %9986 = vmatprep.subr.mxu0 0.0
    %9987 = vmatpush1.msra.mxu0 %v9796
    %9988 = vmatprep.subr.mxu0 0.0
    %9989 = vmatpush1.msra.mxu0 %v9797
    %9990 = vmatprep.subr.mxu0 0.0
    %9991 = vmatpush1.msra.mxu0 %v9798
    %9992 = vmatprep.subr.mxu0 0.0
    %9993 = vmatpush1.msra.mxu0 %v9799
    %9994 = vmatprep.subr.mxu0 0.0
    %9995 = vmatpush1.msra.mxu0 %v9800
    %9996 = vmatprep.subr.mxu0 0.0
    %9997 = vmatpush1.msra.mxu0 %v9801
    %9998 = vmatprep.subr.mxu0 0.0
    %9999 = vmatpush1.msra.mxu0 %v9802
    %10000 = vmatprep.subr.mxu0 0.0
    %10001 = vmatpush1.msra.mxu0 %v9803
    %10002 = vmatprep.subr.mxu0 0.0
    %10003 = vmatpush1.msra.mxu0 %v9804
    %10004 = vmatprep.subr.mxu0 0.0
    %10005 = vmatpush1.msra.mxu0 %v9805
    %10006 = vmatprep.subr.mxu0 0.0
    %10007 = vmatpush1.msra.mxu0 %v9806
    %10008 = vmatprep.subr.mxu0 0.0
    %10009 = vmatpush1.msra.mxu0 %v9807
    %10010 = vmatprep.subr.mxu0 0.0
    %10011 = vmatpush1.msra.mxu0 %v9808
    %10012 = vmatprep.subr.mxu0 0.0
    %10013 = vmatpush1.msra.mxu0 %v9809
    %10014 = vmatprep.mubr.f32.mxu0 %v9923
    %10015 = vmatmul.mubr.f32.gmra.mrb[0].mxu0 %v9915
    %v10016 = vpop.f32.mrb[0].mxu0
    %v10017 = vadd.f32 0.0, %v10016
    %v10018 = vpop.f32.mrb[0].mxu0
    %10019 = vdwg.mxu0
    %10020 = vmatprep.subr.mxu0 0.0
    %10021 = vmatpush1.msra.mxu0 %v9810
    %10022 = vmatprep.subr.mxu0 0.0
    %10023 = vmatpush1.msra.mxu0 %v9811
    %10024 = vmatprep.subr.mxu0 0.0
    %10025 = vmatpush1.msra.mxu0 %v9812
    %10026 = vmatprep.subr.mxu0 0.0
    %10027 = vmatpush1.msra.mxu0 %v9813
    %10028 = vmatprep.subr.mxu0 0.0
    %10029 = vmatpush1.msra.mxu0 %v9814
    %10030 = vmatprep.subr.mxu0 0.0
    %10031 = vmatpush1.msra.mxu0 %v9815
    %10032 = vmatprep.subr.mxu0 0.0
    %10033 = vmatpush1.msra.mxu0 %v9816
    %10034 = vmatprep.subr.mxu0 0.0
    %10035 = vmatpush1.msra.mxu0 %v9817
    %10036 = vmatprep.subr.mxu0 0.0
    %10037 = vmatpush1.msra.mxu0 %v9818
    %10038 = vmatprep.subr.mxu0 0.0
    %10039 = vmatpush1.msra.mxu0 %v9819
    %10040 = vmatprep.subr.mxu0 0.0
    %10041 = vmatpush1.msra.mxu0 %v9820
    %10042 = vmatprep.subr.mxu0 0.0
    %10043 = vmatpush1.msra.mxu0 %v9821
    %10044 = vmatprep.subr.mxu0 0.0
    %10045 = vmatpush1.msra.mxu0 %v9822
    %10046 = vmatprep.subr.mxu0 0.0
    %10047 = vmatpush1.msra.mxu0 %v9823
    %10048 = vmatprep.subr.mxu0 0.0
    %10049 = vmatpush1.msra.mxu0 %v9824
    %10050 = vmatprep.subr.mxu0 0.0
    %10051 = vmatpush1.msra.mxu0 %v9825
    %10052 = vmatprep.subr.mxu0 0.0
    %10053 = vmatpush1.msra.mxu0 %v9826
    %10054 = vmatprep.subr.mxu0 0.0
    %10055 = vmatpush1.msra.mxu0 %v9827
    %10056 = vmatprep.subr.mxu0 0.0
    %10057 = vmatpush1.msra.mxu0 %v9828
    %10058 = vmatprep.subr.mxu0 0.0
    %10059 = vmatpush1.msra.mxu0 %v9829
    %10060 = vmatprep.subr.mxu0 0.0
    %10061 = vmatpush1.msra.mxu0 %v9830
    %10062 = vmatprep.subr.mxu0 0.0
    %10063 = vmatpush1.msra.mxu0 %v9831
    %10064 = vmatprep.subr.mxu0 0.0
    %10065 = vmatpush1.msra.mxu0 %v9832
    %10066 = vmatprep.subr.mxu0 0.0
    %10067 = vmatpush1.msra.mxu0 %v9833
    %10068 = vmatprep.subr.mxu0 0.0
    %10069 = vmatpush1.msra.mxu0 %v9834
    %10070 = vmatprep.subr.mxu0 0.0
    %10071 = vmatpush1.msra.mxu0 %v9835
    %10072 = vmatprep.subr.mxu0 0.0
    %10073 = vmatpush1.msra.mxu0 %v9836
    %10074 = vmatprep.subr.mxu0 0.0
    %10075 = vmatpush1.msra.mxu0 %v9837
    %10076 = vmatprep.subr.mxu0 0.0
    %10077 = vmatpush1.msra.mxu0 %v9838
    %10078 = vmatprep.subr.mxu0 0.0
    %10079 = vmatpush1.msra.mxu0 %v9839
    %10080 = vmatprep.subr.mxu0 0.0
    %10081 = vmatpush1.msra.mxu0 %v9840
    %10082 = vmatprep.subr.mxu0 0.0
    %10083 = vmatpush1.msra.mxu0 %v9841
    %10084 = vmatprep.mubr.f32.mxu0 %v9924
    %10085 = vmatmul.mubr.f32.gmra.mrb[0].mxu0 %v9922
    %v10086 = vpop.f32.mrb[0].mxu0
    %v10087 = vadd.f32 %v10017, %v10086
    %v10088 = vpop.f32.mrb[0].mxu0
    %10089 = vdwg.mxu0
    %10090 = vmatprep.subr.mxu0 0.0
    %10091 = vmatpush1.msra.mxu0 %v9842
    %10092 = vmatprep.subr.mxu0 0.0
    %10093 = vmatpush1.msra.mxu0 %v9843
    %10094 = vmatprep.subr.mxu0 0.0
    %10095 = vmatpush1.msra.mxu0 %v9844
    %10096 = vmatprep.subr.mxu0 0.0
    %10097 = vmatpush1.msra.mxu0 %v9845
    %10098 = vmatprep.subr.mxu0 0.0
    %10099 = vmatpush1.msra.mxu0 %v9846
    %10100 = vmatprep.subr.mxu0 0.0
    %10101 = vmatpush1.msra.mxu0 %v9847
    %10102 = vmatprep.subr.mxu0 0.0
    %10103 = vmatpush1.msra.mxu0 %v9848
    %10104 = vmatprep.subr.mxu0 0.0
    %10105 = vmatpush1.msra.mxu0 %v9849
    %10106 = vmatprep.subr.mxu0 0.0
    %10107 = vmatpush1.msra.mxu0 %v9850
    %10108 = vmatprep.subr.mxu0 0.0
    %10109 = vmatpush1.msra.mxu0 %v9851
    %10110 = vmatprep.subr.mxu0 0.0
    %10111 = vmatpush1.msra.mxu0 %v9852
    %10112 = vmatprep.subr.mxu0 0.0
    %10113 = vmatpush1.msra.mxu0 %v9853
    %10114 = vmatprep.subr.mxu0 0.0
    %10115 = vmatpush1.msra.mxu0 %v9854
    %10116 = vmatprep.subr.mxu0 0.0
    %10117 = vmatpush1.msra.mxu0 %v9855
    %10118 = vmatprep.subr.mxu0 0.0
    %10119 = vmatpush1.msra.mxu0 %v9856
    %10120 = vmatprep.subr.mxu0 0.0
    %10121 = vmatpush1.msra.mxu0 %v9857
    %10122 = vmatprep.subr.mxu0 0.0
    %10123 = vmatpush1.msra.mxu0 %v9858
    %10124 = vmatprep.subr.mxu0 0.0
    %10125 = vmatpush1.msra.mxu0 %v9859
    %10126 = vmatprep.subr.mxu0 0.0
    %10127 = vmatpush1.msra.mxu0 %v9860
    %10128 = vmatprep.subr.mxu0 0.0
    %10129 = vmatpush1.msra.mxu0 %v9861
    %10130 = vmatprep.subr.mxu0 0.0
    %10131 = vmatpush1.msra.mxu0 %v9862
    %10132 = vmatprep.subr.mxu0 0.0
    %10133 = vmatpush1.msra.mxu0 %v9863
    %10134 = vmatprep.subr.mxu0 0.0
    %10135 = vmatpush1.msra.mxu0 %v9864
    %10136 = vmatprep.subr.mxu0 0.0
    %10137 = vmatpush1.msra.mxu0 %v9865
    %10138 = vmatprep.subr.mxu0 0.0
    %10139 = vmatpush1.msra.mxu0 %v9866
    %10140 = vmatprep.subr.mxu0 0.0
    %10141 = vmatpush1.msra.mxu0 %v9867
    %10142 = vmatprep.subr.mxu0 0.0
    %10143 = vmatpush1.msra.mxu0 %v9868
    %10144 = vmatprep.subr.mxu0 0.0
    %10145 = vmatpush1.msra.mxu0 %v9869
    %10146 = vmatprep.subr.mxu0 0.0
    %10147 = vmatpush1.msra.mxu0 %v9870
    %10148 = vmatprep.subr.mxu0 0.0
    %10149 = vmatpush1.msra.mxu0 %v9871
    %10150 = vmatprep.subr.mxu0 0.0
    %10151 = vmatpush1.msra.mxu0 %v9872
    %10152 = vmatprep.subr.mxu0 0.0
    %10153 = vmatpush1.msra.mxu0 %v9873
    %10154 = vmatprep.mubr.f32.mxu0 %v9940
    %10155 = vmatmul.mubr.f32.gmra.mrb[0].mxu0 %v9932
    %v10156 = vpop.f32.mrb[0].mxu0
    %v10157 = vadd.f32 %v10087, %v10156
    %v10158 = vpop.f32.mrb[0].mxu0
    %10159 = vdwg.mxu0
    %10160 = vmatprep.subr.mxu0 0.0
    %10161 = vmatpush1.msra.mxu0 %v9874
    %10162 = vmatprep.subr.mxu0 0.0
    %10163 = vmatpush1.msra.mxu0 %v9875
    %10164 = vmatprep.subr.mxu0 0.0
    %10165 = vmatpush1.msra.mxu0 %v9876
    %10166 = vmatprep.subr.mxu0 0.0
    %10167 = vmatpush1.msra.mxu0 %v9877
    %10168 = vmatprep.subr.mxu0 0.0
    %10169 = vmatpush1.msra.mxu0 %v9878
    %10170 = vmatprep.subr.mxu0 0.0
    %10171 = vmatpush1.msra.mxu0 %v9879
    %10172 = vmatprep.subr.mxu0 0.0
    %10173 = vmatpush1.msra.mxu0 %v9880
    %10174 = vmatprep.subr.mxu0 0.0
    %10175 = vmatpush1.msra.mxu0 %v9881
    %10176 = vmatprep.subr.mxu0 0.0
    %10177 = vmatpush1.msra.mxu0 %v9882
    %10178 = vmatprep.subr.mxu0 0.0
    %10179 = vmatpush1.msra.mxu0 %v9883
    %10180 = vmatprep.subr.mxu0 0.0
    %10181 = vmatpush1.msra.mxu0 %v9884
    %10182 = vmatprep.subr.mxu0 0.0
    %10183 = vmatpush1.msra.mxu0 %v9885
    %10184 = vmatprep.subr.mxu0 0.0
    %10185 = vmatpush1.msra.mxu0 %v9886
    %10186 = vmatprep.subr.mxu0 0.0
    %10187 = vmatpush1.msra.mxu0 %v9887
    %10188 = vmatprep.subr.mxu0 0.0
    %10189 = vmatpush1.msra.mxu0 %v9888
    %10190 = vmatprep.subr.mxu0 0.0
    %10191 = vmatpush1.msra.mxu0 %v9889
    %10192 = vmatprep.subr.mxu0 0.0
    %10193 = vmatpush1.msra.mxu0 %v9890
    %10194 = vmatprep.subr.mxu0 0.0
    %10195 = vmatpush1.msra.mxu0 %v9891
    %10196 = vmatprep.subr.mxu0 0.0
    %10197 = vmatpush1.msra.mxu0 %v9892
    %10198 = vmatprep.subr.mxu0 0.0
    %10199 = vmatpush1.msra.mxu0 %v9893
    %10200 = vmatprep.subr.mxu0 0.0
    %10201 = vmatpush1.msra.mxu0 %v9894
    %10202 = vmatprep.subr.mxu0 0.0
    %10203 = vmatpush1.msra.mxu0 %v9895
    %10204 = vmatprep.subr.mxu0 0.0
    %10205 = vmatpush1.msra.mxu0 %v9896
    %10206 = vmatprep.subr.mxu0 0.0
    %10207 = vmatpush1.msra.mxu0 %v9897
    %10208 = vmatprep.subr.mxu0 0.0
    %10209 = vmatpush1.msra.mxu0 %v9898
    %10210 = vmatprep.subr.mxu0 0.0
    %10211 = vmatpush1.msra.mxu0 %v9899
    %10212 = vmatprep.subr.mxu0 0.0
    %10213 = vmatpush1.msra.mxu0 %v9900
    %10214 = vmatprep.subr.mxu0 0.0
    %10215 = vmatpush1.msra.mxu0 %v9901
    %10216 = vmatprep.subr.mxu0 0.0
    %10217 = vmatpush1.msra.mxu0 %v9902
    %10218 = vmatprep.subr.mxu0 0.0
    %10219 = vmatpush1.msra.mxu0 %v9903
    %10220 = vmatprep.subr.mxu0 0.0
    %10221 = vmatpush1.msra.mxu0 %v9904
    %10222 = vmatprep.subr.mxu0 0.0
    %10223 = vmatpush1.msra.mxu0 %v9905
    %10224 = vmatprep.mubr.f32.mxu0 %v9941
    %10225 = vmatmul.mubr.f32.gmra.mrb[0].mxu0 %v9939
    %v10226 = vpop.f32.mrb[0].mxu0
    %v10227 = vadd.f32 %v10157, %v10226
    %v10228 = vpop.f32.mrb[0].mxu0
    %10229 = vdwg.mxu0
    %10230 = vst [vmem:[#allocation9] sm:$0x3] %v10227
    // Predicated region
    $region34: #{tfcnn_forward.1} parent=1 // pred_check
      _
    $region35: #{tfcnn_forward.1} parent=1 // pred_check_branch
      %10232 = sbr.rel (0) target = $region37
    $region36: #{tfcnn_forward.1} parent=1 // pred_region
      _
    $region37: #{tfcnn_forward.1} parent=1 // pred_fallthru
      _
    // Predicated region
    $region38: #{tfcnn_forward.1} parent=1 // pred_check
      _
    $region39: #{tfcnn_forward.1} parent=1 // pred_check_branch
      %10234 = sbr.rel (0) target = $region41
    $region40: #{tfcnn_forward.1} parent=1 // pred_region
      %s10236 = ssub.s32 32, 32
      %10237 = vsyncadd [#allocation10], %s10236
      %s10239 = sshll.u32 [#allocation9], 4
      %s10240 = int_to_ptr.vmem [resolvable:$true] %s10239
      %10242 = dma.vmem_to_hbm [thread:$0]  %s10240, 32, %s9, [#allocation10]
    $region41: #{tfcnn_forward.1} parent=1 // pred_fallthru
      _
    // Predicated region
    $region42: #{tfcnn_forward.1} parent=1 // pred_check
      _
    $region43: #{tfcnn_forward.1} parent=1 // pred_check_branch
      %10244 = sbr.rel (0) target = $region45
    $region44: #{tfcnn_forward.1} parent=1 // pred_region
      _
    $region45: #{tfcnn_forward.1} parent=1 // pred_fallthru
      _
    // Predicated region
    $region46: #{tfcnn_forward.1} parent=1 // pred_check
      _
    $region47: #{tfcnn_forward.1} parent=1 // pred_check_branch
      %10246 = sbr.rel (0) target = $region49
    $region48: #{tfcnn_forward.1} parent=1 // pred_region
      %10247 = dma.done [#allocation10], 32
    $region49: #{tfcnn_forward.1} parent=1 // pred_fallthru
      _
    %10248 = vsyncpa [#allocation10], 1

</llo_original>
